<compile_context>
chip_gen: v7x
topology: tpu7x:2x2x1
jax: 0.10.0
libtpu: 0.0.40
codegen_flags: <defaults>
</compile_context>

<pallas_src>
import jax
import jax.numpy as jnp
from jax import lax
from jax.experimental import pallas as pl
from jax.experimental.pallas import tpu as pltpu

PAD_IDX = 0
LANE = 128
SUBLANE = 8
BATCH_CHUNK = 8          # batch rows per grid step (one sublane tile)
_UNROLL_MAX_STEPS = 32   # fully unroll the time loop up to this S


def _round_up(x, m):
    return ((x + m - 1) // m) * m


# --------------- fused kernel: bidirectional masked GRU + Attention0 ----------------
def _encoder_kernel(x_ref, len_ref, wih_ref, bih_ref,
                    whh_f_ref, bhn_f_ref, whh_b_ref, bhn_b_ref,
                    key_ref, wattn_ref,
                    hs_ref, ctx_ref, w_ref, gi_scr):
    # x_ref    : [S, BC, E]   bf16 time-major embeddings for this batch chunk
    # len_ref  : [BC, 1]      int32 valid lengths (padded rows -> 0)
    # wih_ref  : [E, 6*Hp]    bf16 gates [f_r, f_z, f_n, b_r, b_z, b_n]
    # bih_ref  : [1, 6*Hp]    f32  (b_ih with b_hr / b_hz already folded in)
    # whh_*    : [Hp, 3*Hp]   bf16 per direction ; bhn_* : [1, Hp] f32 (b_hn only)
    # key_ref  : [BC, KL, Ep] f32  averaged given-keyphrase embeddings (zero padded)
    # wattn_ref: [2*Hp, Ep]   bf16 padded attention weight (hs_pad @ wattn == hs @ W^T)
    # hs_ref   : [BC, S, 2*Hp] f32 padded GRU output (fwd lanes [0:Hp], bwd [Hp:2Hp])
    # ctx_ref  : [BC, S, Ep]  f32 attention context (real values in [:E])
    # w_ref    : [BC, S, KL]  f32 softmax attention weights
    # gi_scr   : [S*BC, 6*Hp] f32 hoisted input projection
    S, BC, E = x_ref.shape
    Hp = whh_f_ref.shape[0]
    Ep = wattn_ref.shape[1]

    # ---- prologue: hoisted input projection for BOTH directions (one MXU matmul) ----
    x_flat = x_ref[...].reshape(S * BC, E)
    gi_scr[...] = (jnp.dot(x_flat, wih_ref[...],
                           preferred_element_type=jnp.float32) + bih_ref[...])

    lengths = len_ref[...]                                   # [BC, 1] int32
    pad_row = jnp.full((BC, Hp), float(PAD_IDX), jnp.float32)  # hoisted (no per-step bcast)

    def gru_cell(gi, h, whh_ref, bhn_ref):
        # weights are read from VMEM refs inside the loop (no vreg pinning);
        # gate math stays f32 (v5e VPU has no bf16), matmul operands are bf16.
        gh = jnp.dot(h.astype(jnp.bfloat16), whh_ref[...],
                     preferred_element_type=jnp.float32)      # [BC, 3*Hp]
        r = jax.nn.sigmoid(gi[:, 0:Hp] + gh[:, 0:Hp])         # 128-lane aligned slices
        z = jax.nn.sigmoid(gi[:, Hp:2 * Hp] + gh[:, Hp:2 * Hp])
        n = jnp.tanh(gi[:, 2 * Hp:3 * Hp] + r * (gh[:, 2 * Hp:3 * Hp] + bhn_ref[...]))
        return (1.0 - z) * n + z * h

    def one_step(t_f, t_b, h_f, h_b, dynamic):
        if dynamic:
            row_f = pl.multiple_of(t_f * BC, BC)
            row_b = pl.multiple_of(t_b * BC, BC)
        else:
            row_f = t_f * BC
            row_b = t_b * BC
        # forward direction
        gi_f = gi_scr[pl.ds(row_f, BC), 0:3 * Hp]
        hf_new = gru_cell(gi_f, h_f, whh_f_ref, bhn_f_ref)
        v_f = lengths > t_f                                   # [BC, 1] bool
        h_f = jnp.where(v_f, hf_new, h_f)                     # packed-seq: freeze past length
        hs_ref[:, pl.ds(t_f, 1), 0:Hp] = jnp.where(v_f, hf_new, pad_row)[:, None, :]
        # backward direction: walks S-1..0; masking the padded tail reproduces
        # pack_padded_sequence's "start at position length-1" semantics exactly.
        gi_b = gi_scr[pl.ds(row_b, BC), 3 * Hp:6 * Hp]
        hb_new = gru_cell(gi_b, h_b, whh_b_ref, bhn_b_ref)
        v_b = lengths > t_b
        h_b = jnp.where(v_b, hb_new, h_b)
        hs_ref[:, pl.ds(t_b, 1), Hp:2 * Hp] = jnp.where(v_b, hb_new, pad_row)[:, None, :]
        return h_f, h_b

    h0 = jnp.zeros((BC, Hp), jnp.float32)
    if S <= _UNROLL_MAX_STEPS:
        # small S: full unroll -> static indices everywhere, LLO can overlap the
        # MXU push of step t+1 with the gate math of step t.
        h_f, h_b = h0, h0
        for i in range(S):
            h_f, h_b = one_step(i, S - 1 - i, h_f, h_b, dynamic=False)
    else:
        # large S: bounded live ranges / code size, modest unroll for scheduling.
        def body(i, carry):
            return one_step(i, S - 1 - i, carry[0], carry[1], dynamic=True)
        h_f, h_b = lax.fori_loop(0, S, body, (h0, h0), unroll=2)

    # ---- Attention0 epilogue ('general' score), fused on the VMEM-resident hs ----
    hs_all = hs_ref[...]                                      # [BC, S, 2*Hp] f32
    mat1 = jnp.dot(hs_all.reshape(BC * S, 2 * Hp).astype(jnp.bfloat16),
                   wattn_ref[...],
                   preferred_element_type=jnp.float32).reshape(BC, S, Ep)
    key = key_ref[...]                                        # [BC, KL, Ep] f32
    # scores[b, s, k] = mat1[b, s, :] . key[b, k, :]  (== bmm(mat1, key^T))
    scores = jnp.einsum('bse,bke->bsk', mat1, key,
                        preferred_element_type=jnp.float32)   # [BC, S, KL]
    m = jnp.max(scores, axis=-1, keepdims=True)
    e = jnp.exp(scores - m)
    p = e / jnp.sum(e, axis=-1, keepdims=True)                # exact softmax
    w_ref[...] = p
    ctx_ref[...] = jnp.einsum('bsk,bke->bse', p, key,
                              preferred_element_type=jnp.float32)  # [BC, S, Ep]


def _vmem_limit_bytes(S, BC, Hp, Ep, E, KL):
    """Derive the VMEM limit from actual buffer sizes, capped by chip capacity."""
    f32, bf16, i32 = 4, 2, 4
    need = (
        2 * S * BC * E * bf16                         # x (double-buffered)
        + 2 * BC * 1 * i32                            # lengths
        + 2 * BC * KL * Ep * f32                      # key
        + 2 * BC * S * 2 * Hp * f32                   # hs output block
        + 2 * BC * S * Ep * f32                       # ctx output block
        + 2 * BC * S * KL * f32                       # attn-weights output block
        + S * BC * 6 * Hp * f32                       # gi scratch
        + 2 * (E * 6 * Hp + 2 * Hp * 3 * Hp + 2 * Hp * Ep) * bf16   # weights
        + (BC * S * 2 * Hp + 2 * BC * S * Ep) * f32   # epilogue temporaries
    )
    need = int(need * 1.25) + (4 << 20)
    try:
        cap = int(getattr(pltpu.get_tpu_info(), "vmem_capacity_bytes", 64 << 20))
    except Exception:
        cap = 64 << 20                                # conservative (v7x physical)
    return max(min(need, (cap * 3) // 4), 32 << 20)


def _fused_encoder(x_tm, lens, key, packed, S, Bp, BC, Hp, Ep, E, KL):
    grid = (Bp // BC,)
    out_shape = (jax.ShapeDtypeStruct((Bp, S, 2 * Hp), jnp.float32),
                 jax.ShapeDtypeStruct((Bp, S, Ep), jnp.float32),
                 jax.ShapeDtypeStruct((Bp, S, KL), jnp.float32))
    in_specs = [
        pl.BlockSpec((S, BC, E), lambda b: (0, b, 0)),        # x (time-major, chunked batch)
        pl.BlockSpec((BC, 1), lambda b: (b, 0)),              # lengths
        pl.BlockSpec((E, 6 * Hp), lambda b: (0, 0)),          # W_ih (both dirs)
        pl.BlockSpec((1, 6 * Hp), lambda b: (0, 0)),          # folded bias
        pl.BlockSpec((Hp, 3 * Hp), lambda b: (0, 0)),         # W_hh fwd
        pl.BlockSpec((1, Hp), lambda b: (0, 0)),              # b_hn fwd
        pl.BlockSpec((Hp, 3 * Hp), lambda b: (0, 0)),         # W_hh bwd
        pl.BlockSpec((1, Hp), lambda b: (0, 0)),              # b_hn bwd
        pl.BlockSpec((BC, KL, Ep), lambda b: (b, 0, 0)),      # keyphrase keys
        pl.BlockSpec((2 * Hp, Ep), lambda b: (0, 0)),         # W_attn
    ]
    out_specs = (
        pl.BlockSpec((BC, S, 2 * Hp), lambda b: (b, 0, 0)),   # hidden states (batch-major)
        pl.BlockSpec((BC, S, Ep), lambda b: (b, 0, 0)),       # context
        pl.BlockSpec((BC, S, KL), lambda b: (b, 0, 0)),       # attn weights
    )
    return pl.pallas_call(
        _encoder_kernel,
        out_shape=out_shape,
        grid=grid,
        in_specs=in_specs,
        out_specs=out_specs,
        scratch_shapes=[pltpu.VMEM((S * BC, 6 * Hp), jnp.float32)],
        compiler_params=pltpu.CompilerParams(
            dimension_semantics=("parallel",),                # batch chunks -> 2 TCs on v7x
            vmem_limit_bytes=_vmem_limit_bytes(S, BC, Hp, Ep, E, KL)),
    )(x_tm, lens,
      packed["wih"], packed["bih"],
      packed["whh_f"], packed["bhn_f"], packed["whh_b"], packed["bhn_b"],
      key, packed["wattn"])


# ---------------- Full forward (thin glue in plain JAX) ----------------
def copy_rnn_encoder_forward(packed, src_tokens, src_lengths, given_tokens):
    emb = packed["embedding"]                                   # [V, E] f32
    dims = packed["dims"]
    H, Hp, E, Ep = dims["H"], dims["Hp"], dims["E"], dims["Ep"]
    B, S = src_tokens.shape
    KL = given_tokens.shape[2]
    BC = BATCH_CHUNK
    Bp = _round_up(max(B, BC), BC)

    # Embedding lookup built directly time-major (dropout is identity at inference).
    tok_tm = jnp.pad(jnp.transpose(src_tokens), ((0, 0), (0, Bp - B)),
                     constant_values=PAD_IDX)                    # [S, Bp] int32
    x_tm = jnp.take(emb, tok_tm, axis=0).astype(jnp.bfloat16)    # [S, Bp, E]
    lens = jnp.pad(src_lengths.astype(jnp.int32), (0, Bp - B)).reshape(Bp, 1)

    # Given keyphrase embeddings, mean over keyphrase axis (dim=1); keep f32 for numerics.
    given_embed = jnp.mean(jnp.take(emb, given_tokens, axis=0), axis=1)   # [B, KL, E]
    key = jnp.pad(given_embed, ((0, Bp - B), (0, 0), (0, Ep - E)))        # [Bp, KL, Ep]

    hs, ctx, attn_w = _fused_encoder(x_tm, lens, key, packed,
                                     S, Bp, BC, Hp, Ep, E, KL)

    # Only final-layout assembly remains in the wrapper (slices + one concat).
    hidden_states = jnp.concatenate([hs[:B, :, 0:H], hs[:B, :, Hp:Hp + H]],
                                    axis=-1)                     # [B, S, 2H]
    encoder_output = jnp.concatenate([ctx[:B, :, 0:E], hidden_states],
                                     axis=-1)                    # [B, S, E + 2H]
    encoder_padding_mask = (src_tokens == PAD_IDX)               # [B, S] bool
    # Reference overwrites the GRU final hidden with the last padded timestep.
    final_hiddens = encoder_output[:, -1, :][None]               # [1, B, E + 2H]
    return {"encoder_output": encoder_output,
            "encoder_padding_mask": encoder_padding_mask,
            "encoder_hidden": final_hiddens,
            "attn_weights": attn_w[:B]}


# ---------------- deterministic parameter init + TPU-friendly packing ----------------
def init_params(key, vocab_size, embed_dim, hidden_size):
    keys = jax.random.split(key, 10)
    s = 1.0 / float(hidden_size) ** 0.5

    def u(k, shape, scale):
        return jax.random.uniform(k, shape, jnp.float32, -scale, scale)

    return {
        "embedding": jax.random.normal(keys[0], (vocab_size, embed_dim), jnp.float32) * 0.1,
        # GRU weights stored pre-transposed: W_ih^T [E, 3H], W_hh^T [H, 3H]; gate order (r,z,n)
        "w_ih_f": u(keys[1], (embed_dim, 3 * hidden_size), s),
        "w_hh_f": u(keys[2], (hidden_size, 3 * hidden_size), s),
        "b_ih_f": u(keys[3], (3 * hidden_size,), s),
        "b_hh_f": u(keys[4], (3 * hidden_size,), s),
        "w_ih_b": u(keys[5], (embed_dim, 3 * hidden_size), s),
        "w_hh_b": u(keys[6], (hidden_size, 3 * hidden_size), s),
        "b_ih_b": u(keys[7], (3 * hidden_size,), s),
        "b_hh_b": u(keys[8], (3 * hidden_size,), s),
        # Attention0.attn = Linear(2H, E, bias=False); stored transposed [2H, E]
        "w_attn_t": u(keys[9], (2 * hidden_size, embed_dim), 1.0 / float(2 * hidden_size) ** 0.5),
        # TODO(synk): Attention0.output_proj exists in __init__ but is unused in forward.
    }


def pack_params(raw, hidden_size, embed_dim):
    """Pad/concat weights once into lane-aligned, MXU-friendly layouts."""
    H, E = hidden_size, embed_dim
    Hp = _round_up(max(H, LANE), LANE)
    Ep = _round_up(max(E, LANE), LANE)

    def pad_gates_ih(w):   # [E, 3H] -> [E, 3*Hp], each gate padded to Hp lanes
        w3 = jnp.pad(w.reshape(E, 3, H), ((0, 0), (0, 0), (0, Hp - H)))
        return w3.reshape(E, 3 * Hp)

    def pad_gates_hh(w):   # [H, 3H] -> [Hp, 3*Hp]
        w3 = jnp.pad(w.reshape(H, 3, H), ((0, Hp - H), (0, 0), (0, Hp - H)))
        return w3.reshape(Hp, 3 * Hp)

    def fold_bias(b_ih, b_hh):
        # b_hr / b_hz fold into the hoisted input projection bias; b_hn cannot
        # (PyTorch applies it inside r * (W_hn h + b_hn)).
        bi = b_ih.reshape(3, H)
        bh = b_hh.reshape(3, H)
        folded = jnp.stack([bi[0] + bh[0], bi[1] + bh[1], bi[2]], axis=0)
        folded = jnp.pad(folded, ((0, 0), (0, Hp - H)))
        return folded.reshape(1, 3 * Hp)

    def pad_bhn(b_hh):     # [3H] -> [1, Hp] (n-gate hidden bias only)
        return jnp.pad(b_hh.reshape(3, H)[2:3], ((0, 0), (0, Hp - H)))

    wih = jnp.concatenate([pad_gates_ih(raw["w_ih_f"]), pad_gates_ih(raw["w_ih_b"])],
                          axis=1).astype(jnp.bfloat16)                     # [E, 6*Hp]
    bih = jnp.concatenate([fold_bias(raw["b_ih_f"], raw["b_hh_f"]),
                           fold_bias(raw["b_ih_b"], raw["b_hh_b"])], axis=1)  # [1, 6*Hp]

    wattn = jnp.zeros((2 * Hp, Ep), jnp.float32)
    wattn = wattn.at[0:H, 0:E].set(raw["w_attn_t"][0:H])
    wattn = wattn.at[Hp:Hp + H, 0:E].set(raw["w_attn_t"][H:2 * H])

    return {
        "embedding": raw["embedding"],
        "wih": wih,
        "bih": bih,
        "whh_f": pad_gates_hh(raw["w_hh_f"]).astype(jnp.bfloat16),
        "whh_b": pad_gates_hh(raw["w_hh_b"]).astype(jnp.bfloat16),
        "bhn_f": pad_bhn(raw["b_hh_f"]),
        "bhn_b": pad_bhn(raw["b_hh_b"]),
        "wattn": wattn.astype(jnp.bfloat16),
        "dims": {"H": H, "Hp": Hp, "E": E, "Ep": Ep},
    }


if __name__ == "__main__":
    key = jax.random.PRNGKey(0)
    B, S, E, H = 2, 8, 32, 32
    V = 50
    NK, KL = 3, 4

    pkey, tkey, gkey = jax.random.split(key, 3)
    raw_params = init_params(pkey, V, E, H)
    packed = pack_params(raw_params, H, E)

    src_lengths = jnp.array([8, 5], dtype=jnp.int32)
    src_tokens = jax.random.randint(tkey, (B, S), 1, V)
    t_idx = jnp.arange(S)[None, :]
    src_tokens = jnp.where(t_idx < src_lengths[:, None], src_tokens, PAD_IDX).astype(jnp.int32)
    given_tokens = jax.random.randint(gkey, (B, NK, KL), 1, V).astype(jnp.int32)

    out = copy_rnn_encoder_forward(packed, src_tokens, src_lengths, given_tokens)
    jax.block_until_ready(out)

    assert out["encoder_output"].shape == (B, S, E + 2 * H)
    assert out["encoder_padding_mask"].shape == (B, S)
    assert out["encoder_hidden"].shape == (1, B, E + 2 * H)
    assert out["attn_weights"].shape == (B, S, KL)
    assert bool(jnp.all(jnp.isfinite(out["encoder_output"])))
    assert bool(jnp.all(jnp.isfinite(out["attn_weights"])))
    print("KERNEL_OK")
</pallas_src>

<mosaic_0001>
module attributes {stable_mosaic.version = 11 : i64} {
  func.func @_encoder_kernel(%arg0: i32, %arg1: memref<8x8x32xbf16, #tpu.memory_space<vmem>>, %arg2: memref<8x1xi32, #tpu.memory_space<vmem>>, %arg3: memref<32x768xbf16, #tpu.memory_space<vmem>>, %arg4: memref<1x768xf32, #tpu.memory_space<vmem>>, %arg5: memref<128x384xbf16, #tpu.memory_space<vmem>>, %arg6: memref<1x128xf32, #tpu.memory_space<vmem>>, %arg7: memref<128x384xbf16, #tpu.memory_space<vmem>>, %arg8: memref<1x128xf32, #tpu.memory_space<vmem>>, %arg9: memref<8x4x128xf32, #tpu.memory_space<vmem>>, %arg10: memref<256x128xbf16, #tpu.memory_space<vmem>>, %arg11: memref<8x8x256xf32, #tpu.memory_space<vmem>>, %arg12: memref<8x8x128xf32, #tpu.memory_space<vmem>>, %arg13: memref<8x8x4xf32, #tpu.memory_space<vmem>>, %arg14: memref<64x768xf32, #tpu.memory_space<vmem>>) attributes {dimension_semantics = [#tpu.dimension_semantics<parallel>], iteration_bounds = array<i64: 1>, scalar_prefetch = 0 : i64, scratch_operands = 1 : i64, tpu.core_type = #tpu.core_type<tc>, window_params = [{transform_indices = @transform_0, window_bounds = array<i64: 8, 8, 32>}, {transform_indices = @transform_1, window_bounds = array<i64: 8, 1>}, {pipeline_mode = #tpu.pipeline_mode<synchronous>, transform_indices = @transform_2, window_bounds = array<i64: 32, 768>}, {pipeline_mode = #tpu.pipeline_mode<synchronous>, transform_indices = @transform_3, window_bounds = array<i64: 1, 768>}, {pipeline_mode = #tpu.pipeline_mode<synchronous>, transform_indices = @transform_4, window_bounds = array<i64: 128, 384>}, {pipeline_mode = #tpu.pipeline_mode<synchronous>, transform_indices = @transform_5, window_bounds = array<i64: 1, 128>}, {pipeline_mode = #tpu.pipeline_mode<synchronous>, transform_indices = @transform_6, window_bounds = array<i64: 128, 384>}, {pipeline_mode = #tpu.pipeline_mode<synchronous>, transform_indices = @transform_7, window_bounds = array<i64: 1, 128>}, {transform_indices = @transform_8, window_bounds = array<i64: 8, 4, 128>}, {pipeline_mode = #tpu.pipeline_mode<synchronous>, transform_indices = @transform_9, window_bounds = array<i64: 256, 128>}, {transform_indices = @transform_10, window_bounds = array<i64: 8, 8, 256>}, {transform_indices = @transform_11, window_bounds = array<i64: 8, 8, 128>}, {transform_indices = @transform_12, window_bounds = array<i64: 8, 8, 4>}]} {
    %c0 = arith.constant 0 : index
    %c0_0 = arith.constant 0 : index
    %c0_1 = arith.constant 0 : index
    %0 = vector.load %arg1[%c0, %c0_0, %c0_1] : memref<8x8x32xbf16, #tpu.memory_space<vmem>>, vector<8x8x32xbf16>
    %1 = vector.shape_cast %0 : vector<8x8x32xbf16> to vector<64x32xbf16>
    %c0_2 = arith.constant 0 : index
    %c0_3 = arith.constant 0 : index
    %2 = vector.load %arg3[%c0_2, %c0_3] : memref<32x768xbf16, #tpu.memory_space<vmem>>, vector<32x768xbf16>
    %cst = arith.constant dense<0.000000e+00> : vector<64x768xf32>
    %3 = tpu.matmul %1, %2, %cst {dimension_numbers = #tpu.dot_dimension_numbers<[1], [0], [0], [1], [0, 0, 1, 1], [], []>} : vector<64x32xbf16>, vector<32x768xbf16>, vector<64x768xf32> -> vector<64x768xf32>
    %c0_4 = arith.constant 0 : index
    %c0_5 = arith.constant 0 : index
    %4 = vector.load %arg4[%c0_4, %c0_5] : memref<1x768xf32, #tpu.memory_space<vmem>>, vector<1x768xf32>
    %5 = vector.broadcast %4 : vector<1x768xf32> to vector<64x768xf32>
    %6 = arith.addf %3, %5 : vector<64x768xf32>
    %c0_6 = arith.constant 0 : index
    %c0_7 = arith.constant 0 : index
    %7 = vector.load %arg14[%c0_6, %c0_7] : memref<64x768xf32, #tpu.memory_space<vmem>>, vector<64x768xf32>
    tpu.vector_store %arg14[%c0_6, %c0_7], %6 {strides = array<i32>} : memref<64x768xf32, #tpu.memory_space<vmem>>, vector<64x768xf32>,
    %c0_8 = arith.constant 0 : index
    %c0_9 = arith.constant 0 : index
    %8 = vector.load %arg2[%c0_8, %c0_9] : memref<8x1xi32, #tpu.memory_space<vmem>>, vector<8x1xi32>
    %cst_10 = arith.constant 0.000000e+00 : f32
    %9 = vector.broadcast %cst_10 : f32 to vector<8x128xf32>
    %cst_11 = arith.constant 0.000000e+00 : f32
    %10 = vector.broadcast %cst_11 : f32 to vector<8x128xf32>
    %c0_12 = arith.constant 0 : index
    %c0_13 = arith.constant 0 : index
    %11 = vector.load %arg14[%c0_12, %c0_13] : memref<64x768xf32, #tpu.memory_space<vmem>>, vector<8x384xf32>
    %12 = arith.truncf %10 : vector<8x128xf32> to vector<8x128xbf16>
    %c0_14 = arith.constant 0 : index
    %c0_15 = arith.constant 0 : index
    %13 = vector.load %arg5[%c0_14, %c0_15] : memref<128x384xbf16, #tpu.memory_space<vmem>>, vector<128x384xbf16>
    %cst_16 = arith.constant dense<0.000000e+00> : vector<8x384xf32>
    %14 = tpu.matmul %12, %13, %cst_16 {dimension_numbers = #tpu.dot_dimension_numbers<[1], [0], [0], [1], [0, 0, 1, 1], [], []>} : vector<8x128xbf16>, vector<128x384xbf16>, vector<8x384xf32> -> vector<8x384xf32>
    %15 = vector.extract_strided_slice %11 {offsets = [0, 0], sizes = [8, 128], strides = [1, 1]} : vector<8x384xf32> to vector<8x128xf32>
    %16 = vector.extract_strided_slice %14 {offsets = [0, 0], sizes = [8, 128], strides = [1, 1]} : vector<8x384xf32> to vector<8x128xf32>
    %17 = arith.addf %15, %16 : vector<8x128xf32>
    %18 = arith.negf %17 : vector<8x128xf32>
    %19 = math.exp %18 : vector<8x128xf32>
    %cst_17 = arith.constant 1.000000e+00 : f32
    %20 = vector.broadcast %cst_17 : f32 to vector<8x128xf32>
    %21 = arith.addf %20, %19 : vector<8x128xf32>
    %22 = arith.divf %20, %21 : vector<8x128xf32>
    %23 = vector.extract_strided_slice %11 {offsets = [0, 128], sizes = [8, 128], strides = [1, 1]} : vector<8x384xf32> to vector<8x128xf32>
    %24 = vector.extract_strided_slice %14 {offsets = [0, 128], sizes = [8, 128], strides = [1, 1]} : vector<8x384xf32> to vector<8x128xf32>
    %25 = arith.addf %23, %24 : vector<8x128xf32>
    %26 = arith.negf %25 : vector<8x128xf32>
    %27 = math.exp %26 : vector<8x128xf32>
    %cst_18 = arith.constant 1.000000e+00 : f32
    %28 = vector.broadcast %cst_18 : f32 to vector<8x128xf32>
    %29 = arith.addf %28, %27 : vector<8x128xf32>
    %30 = arith.divf %28, %29 : vector<8x128xf32>
    %31 = vector.extract_strided_slice %11 {offsets = [0, 256], sizes = [8, 128], strides = [1, 1]} : vector<8x384xf32> to vector<8x128xf32>
    %32 = vector.extract_strided_slice %14 {offsets = [0, 256], sizes = [8, 128], strides = [1, 1]} : vector<8x384xf32> to vector<8x128xf32>
    %c0_19 = arith.constant 0 : index
    %c0_20 = arith.constant 0 : index
    %33 = vector.load %arg6[%c0_19, %c0_20] : memref<1x128xf32, #tpu.memory_space<vmem>>, vector<1x128xf32>
    %34 = vector.broadcast %33 : vector<1x128xf32> to vector<8x128xf32>
    %35 = arith.addf %32, %34 : vector<8x128xf32>
    %36 = arith.mulf %22, %35 : vector<8x128xf32>
    %37 = arith.addf %31, %36 : vector<8x128xf32>
    %38 = math.tanh %37 : vector<8x128xf32>
    %cst_21 = arith.constant 1.000000e+00 : f32
    %39 = vector.broadcast %cst_21 : f32 to vector<8x128xf32>
    %40 = arith.subf %39, %30 : vector<8x128xf32>
    %41 = arith.mulf %40, %38 : vector<8x128xf32>
    %42 = arith.mulf %30, %10 : vector<8x128xf32>
    %43 = arith.addf %41, %42 : vector<8x128xf32>
    %c0_i32 = arith.constant 0 : i32
    %44 = vector.broadcast %c0_i32 : i32 to vector<8x1xi32>
    %45 = arith.cmpi sgt, %8, %44 : vector<8x1xi32>
    %46 = vector.shape_cast %45 : vector<8x1xi1> to vector<8x1xi1>
    %47 = vector.broadcast %46 : vector<8x1xi1> to vector<8x128xi1>
    %48 = arith.select %47, %43, %10 : vector<8x128xi1>, vector<8x128xf32>
    %49 = vector.shape_cast %45 : vector<8x1xi1> to vector<8x1xi1>
    %50 = vector.broadcast %49 : vector<8x1xi1> to vector<8x128xi1>
    %51 = arith.select %50, %43, %9 : vector<8x128xi1>, vector<8x128xf32>
    %52 = vector.shape_cast %51 : vector<8x128xf32> to vector<8x1x128xf32>
    %c0_22 = arith.constant 0 : index
    %c0_23 = arith.constant 0 : index
    %c0_24 = arith.constant 0 : index
    %53 = vector.load %arg11[%c0_22, %c0_23, %c0_24] : memref<8x8x256xf32, #tpu.memory_space<vmem>>, vector<8x1x128xf32>
    tpu.vector_store %arg11[%c0_22, %c0_23, %c0_24], %52 {strides = array<i32>} : memref<8x8x256xf32, #tpu.memory_space<vmem>>, vector<8x1x128xf32>,
    %c56 = arith.constant 56 : index
    %c384 = arith.constant 384 : index
    %54 = vector.load %arg14[%c56, %c384] : memref<64x768xf32, #tpu.memory_space<vmem>>, vector<8x384xf32>
    %55 = arith.truncf %10 : vector<8x128xf32> to vector<8x128xbf16>
    %c0_25 = arith.constant 0 : index
    %c0_26 = arith.constant 0 : index
    %56 = vector.load %arg7[%c0_25, %c0_26] : memref<128x384xbf16, #tpu.memory_space<vmem>>, vector<128x384xbf16>
    %cst_27 = arith.constant dense<0.000000e+00> : vector<8x384xf32>
    %57 = tpu.matmul %55, %56, %cst_27 {dimension_numbers = #tpu.dot_dimension_numbers<[1], [0], [0], [1], [0, 0, 1, 1], [], []>} : vector<8x128xbf16>, vector<128x384xbf16>, vector<8x384xf32> -> vector<8x384xf32>
    %58 = vector.extract_strided_slice %54 {offsets = [0, 0], sizes = [8, 128], strides = [1, 1]} : vector<8x384xf32> to vector<8x128xf32>
    %59 = vector.extract_strided_slice %57 {offsets = [0, 0], sizes = [8, 128], strides = [1, 1]} : vector<8x384xf32> to vector<8x128xf32>
    %60 = arith.addf %58, %59 : vector<8x128xf32>
    %61 = arith.negf %60 : vector<8x128xf32>
    %62 = math.exp %61 : vector<8x128xf32>
    %cst_28 = arith.constant 1.000000e+00 : f32
    %63 = vector.broadcast %cst_28 : f32 to vector<8x128xf32>
    %64 = arith.addf %63, %62 : vector<8x128xf32>
    %65 = arith.divf %63, %64 : vector<8x128xf32>
    %66 = vector.extract_strided_slice %54 {offsets = [0, 128], sizes = [8, 128], strides = [1, 1]} : vector<8x384xf32> to vector<8x128xf32>
    %67 = vector.extract_strided_slice %57 {offsets = [0, 128], sizes = [8, 128], strides = [1, 1]} : vector<8x384xf32> to vector<8x128xf32>
    %68 = arith.addf %66, %67 : vector<8x128xf32>
    %69 = arith.negf %68 : vector<8x128xf32>
    %70 = math.exp %69 : vector<8x128xf32>
    %cst_29 = arith.constant 1.000000e+00 : f32
    %71 = vector.broadcast %cst_29 : f32 to vector<8x128xf32>
    %72 = arith.addf %71, %70 : vector<8x128xf32>
    %73 = arith.divf %71, %72 : vector<8x128xf32>
    %74 = vector.extract_strided_slice %54 {offsets = [0, 256], sizes = [8, 128], strides = [1, 1]} : vector<8x384xf32> to vector<8x128xf32>
    %75 = vector.extract_strided_slice %57 {offsets = [0, 256], sizes = [8, 128], strides = [1, 1]} : vector<8x384xf32> to vector<8x128xf32>
    %c0_30 = arith.constant 0 : index
    %c0_31 = arith.constant 0 : index
    %76 = vector.load %arg8[%c0_30, %c0_31] : memref<1x128xf32, #tpu.memory_space<vmem>>, vector<1x128xf32>
    %77 = vector.broadcast %76 : vector<1x128xf32> to vector<8x128xf32>
    %78 = arith.addf %75, %77 : vector<8x128xf32>
    %79 = arith.mulf %65, %78 : vector<8x128xf32>
    %80 = arith.addf %74, %79 : vector<8x128xf32>
    %81 = math.tanh %80 : vector<8x128xf32>
    %cst_32 = arith.constant 1.000000e+00 : f32
    %82 = vector.broadcast %cst_32 : f32 to vector<8x128xf32>
    %83 = arith.subf %82, %73 : vector<8x128xf32>
    %84 = arith.mulf %83, %81 : vector<8x128xf32>
    %85 = arith.mulf %73, %10 : vector<8x128xf32>
    %86 = arith.addf %84, %85 : vector<8x128xf32>
    %c7_i32 = arith.constant 7 : i32
    %87 = vector.broadcast %c7_i32 : i32 to vector<8x1xi32>
    %88 = arith.cmpi sgt, %8, %87 : vector<8x1xi32>
    %89 = vector.shape_cast %88 : vector<8x1xi1> to vector<8x1xi1>
    %90 = vector.broadcast %89 : vector<8x1xi1> to vector<8x128xi1>
    %91 = arith.select %90, %86, %10 : vector<8x128xi1>, vector<8x128xf32>
    %92 = vector.shape_cast %88 : vector<8x1xi1> to vector<8x1xi1>
    %93 = vector.broadcast %92 : vector<8x1xi1> to vector<8x128xi1>
    %94 = arith.select %93, %86, %9 : vector<8x128xi1>, vector<8x128xf32>
    %95 = vector.shape_cast %94 : vector<8x128xf32> to vector<8x1x128xf32>
    %c0_33 = arith.constant 0 : index
    %c7 = arith.constant 7 : index
    %c128 = arith.constant 128 : index
    %96 = vector.load %arg11[%c0_33, %c7, %c128] : memref<8x8x256xf32, #tpu.memory_space<vmem>>, vector<8x1x128xf32>
    tpu.vector_store %arg11[%c0_33, %c7, %c128], %95 {strides = array<i32>} : memref<8x8x256xf32, #tpu.memory_space<vmem>>, vector<8x1x128xf32>,
    %c8 = arith.constant 8 : index
    %c0_34 = arith.constant 0 : index
    %97 = vector.load %arg14[%c8, %c0_34] : memref<64x768xf32, #tpu.memory_space<vmem>>, vector<8x384xf32>
    %98 = arith.truncf %48 : vector<8x128xf32> to vector<8x128xbf16>
    %c0_35 = arith.constant 0 : index
    %c0_36 = arith.constant 0 : index
    %99 = vector.load %arg5[%c0_35, %c0_36] : memref<128x384xbf16, #tpu.memory_space<vmem>>, vector<128x384xbf16>
    %cst_37 = arith.constant dense<0.000000e+00> : vector<8x384xf32>
    %100 = tpu.matmul %98, %99, %cst_37 {dimension_numbers = #tpu.dot_dimension_numbers<[1], [0], [0], [1], [0, 0, 1, 1], [], []>} : vector<8x128xbf16>, vector<128x384xbf16>, vector<8x384xf32> -> vector<8x384xf32>
    %101 = vector.extract_strided_slice %97 {offsets = [0, 0], sizes = [8, 128], strides = [1, 1]} : vector<8x384xf32> to vector<8x128xf32>
    %102 = vector.extract_strided_slice %100 {offsets = [0, 0], sizes = [8, 128], strides = [1, 1]} : vector<8x384xf32> to vector<8x128xf32>
    %103 = arith.addf %101, %102 : vector<8x128xf32>
    %104 = arith.negf %103 : vector<8x128xf32>
    %105 = math.exp %104 : vector<8x128xf32>
    %cst_38 = arith.constant 1.000000e+00 : f32
    %106 = vector.broadcast %cst_38 : f32 to vector<8x128xf32>
    %107 = arith.addf %106, %105 : vector<8x128xf32>
    %108 = arith.divf %106, %107 : vector<8x128xf32>
    %109 = vector.extract_strided_slice %97 {offsets = [0, 128], sizes = [8, 128], strides = [1, 1]} : vector<8x384xf32> to vector<8x128xf32>
    %110 = vector.extract_strided_slice %100 {offsets = [0, 128], sizes = [8, 128], strides = [1, 1]} : vector<8x384xf32> to vector<8x128xf32>
    %111 = arith.addf %109, %110 : vector<8x128xf32>
    %112 = arith.negf %111 : vector<8x128xf32>
    %113 = math.exp %112 : vector<8x128xf32>
    %cst_39 = arith.constant 1.000000e+00 : f32
    %114 = vector.broadcast %cst_39 : f32 to vector<8x128xf32>
    %115 = arith.addf %114, %113 : vector<8x128xf32>
    %116 = arith.divf %114, %115 : vector<8x128xf32>
    %117 = vector.extract_strided_slice %97 {offsets = [0, 256], sizes = [8, 128], strides = [1, 1]} : vector<8x384xf32> to vector<8x128xf32>
    %118 = vector.extract_strided_slice %100 {offsets = [0, 256], sizes = [8, 128], strides = [1, 1]} : vector<8x384xf32> to vector<8x128xf32>
    %c0_40 = arith.constant 0 : index
    %c0_41 = arith.constant 0 : index
    %119 = vector.load %arg6[%c0_40, %c0_41] : memref<1x128xf32, #tpu.memory_space<vmem>>, vector<1x128xf32>
    %120 = vector.broadcast %119 : vector<1x128xf32> to vector<8x128xf32>
    %121 = arith.addf %118, %120 : vector<8x128xf32>
    %122 = arith.mulf %108, %121 : vector<8x128xf32>
    %123 = arith.addf %117, %122 : vector<8x128xf32>
    %124 = math.tanh %123 : vector<8x128xf32>
    %cst_42 = arith.constant 1.000000e+00 : f32
    %125 = vector.broadcast %cst_42 : f32 to vector<8x128xf32>
    %126 = arith.subf %125, %116 : vector<8x128xf32>
    %127 = arith.mulf %126, %124 : vector<8x128xf32>
    %128 = arith.mulf %116, %48 : vector<8x128xf32>
    %129 = arith.addf %127, %128 : vector<8x128xf32>
    %c1_i32 = arith.constant 1 : i32
    %130 = vector.broadcast %c1_i32 : i32 to vector<8x1xi32>
    %131 = arith.cmpi sgt, %8, %130 : vector<8x1xi32>
    %132 = vector.shape_cast %131 : vector<8x1xi1> to vector<8x1xi1>
    %133 = vector.broadcast %132 : vector<8x1xi1> to vector<8x128xi1>
    %134 = arith.select %133, %129, %48 : vector<8x128xi1>, vector<8x128xf32>
    %135 = vector.shape_cast %131 : vector<8x1xi1> to vector<8x1xi1>
    %136 = vector.broadcast %135 : vector<8x1xi1> to vector<8x128xi1>
    %137 = arith.select %136, %129, %9 : vector<8x128xi1>, vector<8x128xf32>
    %138 = vector.shape_cast %137 : vector<8x128xf32> to vector<8x1x128xf32>
    %c0_43 = arith.constant 0 : index
    %c1 = arith.constant 1 : index
    %c0_44 = arith.constant 0 : index
    %139 = vector.load %arg11[%c0_43, %c1, %c0_44] : memref<8x8x256xf32, #tpu.memory_space<vmem>>, vector<8x1x128xf32>
    tpu.vector_store %arg11[%c0_43, %c1, %c0_44], %138 {strides = array<i32>} : memref<8x8x256xf32, #tpu.memory_space<vmem>>, vector<8x1x128xf32>,
    %c48 = arith.constant 48 : index
    %c384_45 = arith.constant 384 : index
    %140 = vector.load %arg14[%c48, %c384_45] : memref<64x768xf32, #tpu.memory_space<vmem>>, vector<8x384xf32>
    %141 = arith.truncf %91 : vector<8x128xf32> to vector<8x128xbf16>
    %c0_46 = arith.constant 0 : index
    %c0_47 = arith.constant 0 : index
    %142 = vector.load %arg7[%c0_46, %c0_47] : memref<128x384xbf16, #tpu.memory_space<vmem>>, vector<128x384xbf16>
    %cst_48 = arith.constant dense<0.000000e+00> : vector<8x384xf32>
    %143 = tpu.matmul %141, %142, %cst_48 {dimension_numbers = #tpu.dot_dimension_numbers<[1], [0], [0], [1], [0, 0, 1, 1], [], []>} : vector<8x128xbf16>, vector<128x384xbf16>, vector<8x384xf32> -> vector<8x384xf32>
    %144 = vector.extract_strided_slice %140 {offsets = [0, 0], sizes = [8, 128], strides = [1, 1]} : vector<8x384xf32> to vector<8x128xf32>
    %145 = vector.extract_strided_slice %143 {offsets = [0, 0], sizes = [8, 128], strides = [1, 1]} : vector<8x384xf32> to vector<8x128xf32>
    %146 = arith.addf %144, %145 : vector<8x128xf32>
    %147 = arith.negf %146 : vector<8x128xf32>
    %148 = math.exp %147 : vector<8x128xf32>
    %cst_49 = arith.constant 1.000000e+00 : f32
    %149 = vector.broadcast %cst_49 : f32 to vector<8x128xf32>
    %150 = arith.addf %149, %148 : vector<8x128xf32>
    %151 = arith.divf %149, %150 : vector<8x128xf32>
    %152 = vector.extract_strided_slice %140 {offsets = [0, 128], sizes = [8, 128], strides = [1, 1]} : vector<8x384xf32> to vector<8x128xf32>
    %153 = vector.extract_strided_slice %143 {offsets = [0, 128], sizes = [8, 128], strides = [1, 1]} : vector<8x384xf32> to vector<8x128xf32>
    %154 = arith.addf %152, %153 : vector<8x128xf32>
    %155 = arith.negf %154 : vector<8x128xf32>
    %156 = math.exp %155 : vector<8x128xf32>
    %cst_50 = arith.constant 1.000000e+00 : f32
    %157 = vector.broadcast %cst_50 : f32 to vector<8x128xf32>
    %158 = arith.addf %157, %156 : vector<8x128xf32>
    %159 = arith.divf %157, %158 : vector<8x128xf32>
    %160 = vector.extract_strided_slice %140 {offsets = [0, 256], sizes = [8, 128], strides = [1, 1]} : vector<8x384xf32> to vector<8x128xf32>
    %161 = vector.extract_strided_slice %143 {offsets = [0, 256], sizes = [8, 128], strides = [1, 1]} : vector<8x384xf32> to vector<8x128xf32>
    %c0_51 = arith.constant 0 : index
    %c0_52 = arith.constant 0 : index
    %162 = vector.load %arg8[%c0_51, %c0_52] : memref<1x128xf32, #tpu.memory_space<vmem>>, vector<1x128xf32>
    %163 = vector.broadcast %162 : vector<1x128xf32> to vector<8x128xf32>
    %164 = arith.addf %161, %163 : vector<8x128xf32>
    %165 = arith.mulf %151, %164 : vector<8x128xf32>
    %166 = arith.addf %160, %165 : vector<8x128xf32>
    %167 = math.tanh %166 : vector<8x128xf32>
    %cst_53 = arith.constant 1.000000e+00 : f32
    %168 = vector.broadcast %cst_53 : f32 to vector<8x128xf32>
    %169 = arith.subf %168, %159 : vector<8x128xf32>
    %170 = arith.mulf %169, %167 : vector<8x128xf32>
    %171 = arith.mulf %159, %91 : vector<8x128xf32>
    %172 = arith.addf %170, %171 : vector<8x128xf32>
    %c6_i32 = arith.constant 6 : i32
    %173 = vector.broadcast %c6_i32 : i32 to vector<8x1xi32>
    %174 = arith.cmpi sgt, %8, %173 : vector<8x1xi32>
    %175 = vector.shape_cast %174 : vector<8x1xi1> to vector<8x1xi1>
    %176 = vector.broadcast %175 : vector<8x1xi1> to vector<8x128xi1>
    %177 = arith.select %176, %172, %91 : vector<8x128xi1>, vector<8x128xf32>
    %178 = vector.shape_cast %174 : vector<8x1xi1> to vector<8x1xi1>
    %179 = vector.broadcast %178 : vector<8x1xi1> to vector<8x128xi1>
    %180 = arith.select %179, %172, %9 : vector<8x128xi1>, vector<8x128xf32>
    %181 = vector.shape_cast %180 : vector<8x128xf32> to vector<8x1x128xf32>
    %c0_54 = arith.constant 0 : index
    %c6 = arith.constant 6 : index
    %c128_55 = arith.constant 128 : index
    %182 = vector.load %arg11[%c0_54, %c6, %c128_55] : memref<8x8x256xf32, #tpu.memory_space<vmem>>, vector<8x1x128xf32>
    tpu.vector_store %arg11[%c0_54, %c6, %c128_55], %181 {strides = array<i32>} : memref<8x8x256xf32, #tpu.memory_space<vmem>>, vector<8x1x128xf32>,
    %c16 = arith.constant 16 : index
    %c0_56 = arith.constant 0 : index
    %183 = vector.load %arg14[%c16, %c0_56] : memref<64x768xf32, #tpu.memory_space<vmem>>, vector<8x384xf32>
    %184 = arith.truncf %134 : vector<8x128xf32> to vector<8x128xbf16>
    %c0_57 = arith.constant 0 : index
    %c0_58 = arith.constant 0 : index
    %185 = vector.load %arg5[%c0_57, %c0_58] : memref<128x384xbf16, #tpu.memory_space<vmem>>, vector<128x384xbf16>
    %cst_59 = arith.constant dense<0.000000e+00> : vector<8x384xf32>
    %186 = tpu.matmul %184, %185, %cst_59 {dimension_numbers = #tpu.dot_dimension_numbers<[1], [0], [0], [1], [0, 0, 1, 1], [], []>} : vector<8x128xbf16>, vector<128x384xbf16>, vector<8x384xf32> -> vector<8x384xf32>
    %187 = vector.extract_strided_slice %183 {offsets = [0, 0], sizes = [8, 128], strides = [1, 1]} : vector<8x384xf32> to vector<8x128xf32>
    %188 = vector.extract_strided_slice %186 {offsets = [0, 0], sizes = [8, 128], strides = [1, 1]} : vector<8x384xf32> to vector<8x128xf32>
    %189 = arith.addf %187, %188 : vector<8x128xf32>
    %190 = arith.negf %189 : vector<8x128xf32>
    %191 = math.exp %190 : vector<8x128xf32>
    %cst_60 = arith.constant 1.000000e+00 : f32
    %192 = vector.broadcast %cst_60 : f32 to vector<8x128xf32>
    %193 = arith.addf %192, %191 : vector<8x128xf32>
    %194 = arith.divf %192, %193 : vector<8x128xf32>
    %195 = vector.extract_strided_slice %183 {offsets = [0, 128], sizes = [8, 128], strides = [1, 1]} : vector<8x384xf32> to vector<8x128xf32>
    %196 = vector.extract_strided_slice %186 {offsets = [0, 128], sizes = [8, 128], strides = [1, 1]} : vector<8x384xf32> to vector<8x128xf32>
    %197 = arith.addf %195, %196 : vector<8x128xf32>
    %198 = arith.negf %197 : vector<8x128xf32>
    %199 = math.exp %198 : vector<8x128xf32>
    %cst_61 = arith.constant 1.000000e+00 : f32
    %200 = vector.broadcast %cst_61 : f32 to vector<8x128xf32>
    %201 = arith.addf %200, %199 : vector<8x128xf32>
    %202 = arith.divf %200, %201 : vector<8x128xf32>
    %203 = vector.extract_strided_slice %183 {offsets = [0, 256], sizes = [8, 128], strides = [1, 1]} : vector<8x384xf32> to vector<8x128xf32>
    %204 = vector.extract_strided_slice %186 {offsets = [0, 256], sizes = [8, 128], strides = [1, 1]} : vector<8x384xf32> to vector<8x128xf32>
    %c0_62 = arith.constant 0 : index
    %c0_63 = arith.constant 0 : index
    %205 = vector.load %arg6[%c0_62, %c0_63] : memref<1x128xf32, #tpu.memory_space<vmem>>, vector<1x128xf32>
    %206 = vector.broadcast %205 : vector<1x128xf32> to vector<8x128xf32>
    %207 = arith.addf %204, %206 : vector<8x128xf32>
    %208 = arith.mulf %194, %207 : vector<8x128xf32>
    %209 = arith.addf %203, %208 : vector<8x128xf32>
    %210 = math.tanh %209 : vector<8x128xf32>
    %cst_64 = arith.constant 1.000000e+00 : f32
    %211 = vector.broadcast %cst_64 : f32 to vector<8x128xf32>
    %212 = arith.subf %211, %202 : vector<8x128xf32>
    %213 = arith.mulf %212, %210 : vector<8x128xf32>
    %214 = arith.mulf %202, %134 : vector<8x128xf32>
    %215 = arith.addf %213, %214 : vector<8x128xf32>
    %c2_i32 = arith.constant 2 : i32
    %216 = vector.broadcast %c2_i32 : i32 to vector<8x1xi32>
    %217 = arith.cmpi sgt, %8, %216 : vector<8x1xi32>
    %218 = vector.shape_cast %217 : vector<8x1xi1> to vector<8x1xi1>
    %219 = vector.broadcast %218 : vector<8x1xi1> to vector<8x128xi1>
    %220 = arith.select %219, %215, %134 : vector<8x128xi1>, vector<8x128xf32>
    %221 = vector.shape_cast %217 : vector<8x1xi1> to vector<8x1xi1>
    %222 = vector.broadcast %221 : vector<8x1xi1> to vector<8x128xi1>
    %223 = arith.select %222, %215, %9 : vector<8x128xi1>, vector<8x128xf32>
    %224 = vector.shape_cast %223 : vector<8x128xf32> to vector<8x1x128xf32>
    %c0_65 = arith.constant 0 : index
    %c2 = arith.constant 2 : index
    %c0_66 = arith.constant 0 : index
    %225 = vector.load %arg11[%c0_65, %c2, %c0_66] : memref<8x8x256xf32, #tpu.memory_space<vmem>>, vector<8x1x128xf32>
    tpu.vector_store %arg11[%c0_65, %c2, %c0_66], %224 {strides = array<i32>} : memref<8x8x256xf32, #tpu.memory_space<vmem>>, vector<8x1x128xf32>,
    %c40 = arith.constant 40 : index
    %c384_67 = arith.constant 384 : index
    %226 = vector.load %arg14[%c40, %c384_67] : memref<64x768xf32, #tpu.memory_space<vmem>>, vector<8x384xf32>
    %227 = arith.truncf %177 : vector<8x128xf32> to vector<8x128xbf16>
    %c0_68 = arith.constant 0 : index
    %c0_69 = arith.constant 0 : index
    %228 = vector.load %arg7[%c0_68, %c0_69] : memref<128x384xbf16, #tpu.memory_space<vmem>>, vector<128x384xbf16>
    %cst_70 = arith.constant dense<0.000000e+00> : vector<8x384xf32>
    %229 = tpu.matmul %227, %228, %cst_70 {dimension_numbers = #tpu.dot_dimension_numbers<[1], [0], [0], [1], [0, 0, 1, 1], [], []>} : vector<8x128xbf16>, vector<128x384xbf16>, vector<8x384xf32> -> vector<8x384xf32>
    %230 = vector.extract_strided_slice %226 {offsets = [0, 0], sizes = [8, 128], strides = [1, 1]} : vector<8x384xf32> to vector<8x128xf32>
    %231 = vector.extract_strided_slice %229 {offsets = [0, 0], sizes = [8, 128], strides = [1, 1]} : vector<8x384xf32> to vector<8x128xf32>
    %232 = arith.addf %230, %231 : vector<8x128xf32>
    %233 = arith.negf %232 : vector<8x128xf32>
    %234 = math.exp %233 : vector<8x128xf32>
    %cst_71 = arith.constant 1.000000e+00 : f32
    %235 = vector.broadcast %cst_71 : f32 to vector<8x128xf32>
    %236 = arith.addf %235, %234 : vector<8x128xf32>
    %237 = arith.divf %235, %236 : vector<8x128xf32>
    %238 = vector.extract_strided_slice %226 {offsets = [0, 128], sizes = [8, 128], strides = [1, 1]} : vector<8x384xf32> to vector<8x128xf32>
    %239 = vector.extract_strided_slice %229 {offsets = [0, 128], sizes = [8, 128], strides = [1, 1]} : vector<8x384xf32> to vector<8x128xf32>
    %240 = arith.addf %238, %239 : vector<8x128xf32>
    %241 = arith.negf %240 : vector<8x128xf32>
    %242 = math.exp %241 : vector<8x128xf32>
    %cst_72 = arith.constant 1.000000e+00 : f32
    %243 = vector.broadcast %cst_72 : f32 to vector<8x128xf32>
    %244 = arith.addf %243, %242 : vector<8x128xf32>
    %245 = arith.divf %243, %244 : vector<8x128xf32>
    %246 = vector.extract_strided_slice %226 {offsets = [0, 256], sizes = [8, 128], strides = [1, 1]} : vector<8x384xf32> to vector<8x128xf32>
    %247 = vector.extract_strided_slice %229 {offsets = [0, 256], sizes = [8, 128], strides = [1, 1]} : vector<8x384xf32> to vector<8x128xf32>
    %c0_73 = arith.constant 0 : index
    %c0_74 = arith.constant 0 : index
    %248 = vector.load %arg8[%c0_73, %c0_74] : memref<1x128xf32, #tpu.memory_space<vmem>>, vector<1x128xf32>
    %249 = vector.broadcast %248 : vector<1x128xf32> to vector<8x128xf32>
    %250 = arith.addf %247, %249 : vector<8x128xf32>
    %251 = arith.mulf %237, %250 : vector<8x128xf32>
    %252 = arith.addf %246, %251 : vector<8x128xf32>
    %253 = math.tanh %252 : vector<8x128xf32>
    %cst_75 = arith.constant 1.000000e+00 : f32
    %254 = vector.broadcast %cst_75 : f32 to vector<8x128xf32>
    %255 = arith.subf %254, %245 : vector<8x128xf32>
    %256 = arith.mulf %255, %253 : vector<8x128xf32>
    %257 = arith.mulf %245, %177 : vector<8x128xf32>
    %258 = arith.addf %256, %257 : vector<8x128xf32>
    %c5_i32 = arith.constant 5 : i32
    %259 = vector.broadcast %c5_i32 : i32 to vector<8x1xi32>
    %260 = arith.cmpi sgt, %8, %259 : vector<8x1xi32>
    %261 = vector.shape_cast %260 : vector<8x1xi1> to vector<8x1xi1>
    %262 = vector.broadcast %261 : vector<8x1xi1> to vector<8x128xi1>
    %263 = arith.select %262, %258, %177 : vector<8x128xi1>, vector<8x128xf32>
    %264 = vector.shape_cast %260 : vector<8x1xi1> to vector<8x1xi1>
    %265 = vector.broadcast %264 : vector<8x1xi1> to vector<8x128xi1>
    %266 = arith.select %265, %258, %9 : vector<8x128xi1>, vector<8x128xf32>
    %267 = vector.shape_cast %266 : vector<8x128xf32> to vector<8x1x128xf32>
    %c0_76 = arith.constant 0 : index
    %c5 = arith.constant 5 : index
    %c128_77 = arith.constant 128 : index
    %268 = vector.load %arg11[%c0_76, %c5, %c128_77] : memref<8x8x256xf32, #tpu.memory_space<vmem>>, vector<8x1x128xf32>
    tpu.vector_store %arg11[%c0_76, %c5, %c128_77], %267 {strides = array<i32>} : memref<8x8x256xf32, #tpu.memory_space<vmem>>, vector<8x1x128xf32>,
    %c24 = arith.constant 24 : index
    %c0_78 = arith.constant 0 : index
    %269 = vector.load %arg14[%c24, %c0_78] : memref<64x768xf32, #tpu.memory_space<vmem>>, vector<8x384xf32>
    %270 = arith.truncf %220 : vector<8x128xf32> to vector<8x128xbf16>
    %c0_79 = arith.constant 0 : index
    %c0_80 = arith.constant 0 : index
    %271 = vector.load %arg5[%c0_79, %c0_80] : memref<128x384xbf16, #tpu.memory_space<vmem>>, vector<128x384xbf16>
    %cst_81 = arith.constant dense<0.000000e+00> : vector<8x384xf32>
    %272 = tpu.matmul %270, %271, %cst_81 {dimension_numbers = #tpu.dot_dimension_numbers<[1], [0], [0], [1], [0, 0, 1, 1], [], []>} : vector<8x128xbf16>, vector<128x384xbf16>, vector<8x384xf32> -> vector<8x384xf32>
    %273 = vector.extract_strided_slice %269 {offsets = [0, 0], sizes = [8, 128], strides = [1, 1]} : vector<8x384xf32> to vector<8x128xf32>
    %274 = vector.extract_strided_slice %272 {offsets = [0, 0], sizes = [8, 128], strides = [1, 1]} : vector<8x384xf32> to vector<8x128xf32>
    %275 = arith.addf %273, %274 : vector<8x128xf32>
    %276 = arith.negf %275 : vector<8x128xf32>
    %277 = math.exp %276 : vector<8x128xf32>
    %cst_82 = arith.constant 1.000000e+00 : f32
    %278 = vector.broadcast %cst_82 : f32 to vector<8x128xf32>
    %279 = arith.addf %278, %277 : vector<8x128xf32>
    %280 = arith.divf %278, %279 : vector<8x128xf32>
    %281 = vector.extract_strided_slice %269 {offsets = [0, 128], sizes = [8, 128], strides = [1, 1]} : vector<8x384xf32> to vector<8x128xf32>
    %282 = vector.extract_strided_slice %272 {offsets = [0, 128], sizes = [8, 128], strides = [1, 1]} : vector<8x384xf32> to vector<8x128xf32>
    %283 = arith.addf %281, %282 : vector<8x128xf32>
    %284 = arith.negf %283 : vector<8x128xf32>
    %285 = math.exp %284 : vector<8x128xf32>
    %cst_83 = arith.constant 1.000000e+00 : f32
    %286 = vector.broadcast %cst_83 : f32 to vector<8x128xf32>
    %287 = arith.addf %286, %285 : vector<8x128xf32>
    %288 = arith.divf %286, %287 : vector<8x128xf32>
    %289 = vector.extract_strided_slice %269 {offsets = [0, 256], sizes = [8, 128], strides = [1, 1]} : vector<8x384xf32> to vector<8x128xf32>
    %290 = vector.extract_strided_slice %272 {offsets = [0, 256], sizes = [8, 128], strides = [1, 1]} : vector<8x384xf32> to vector<8x128xf32>
    %c0_84 = arith.constant 0 : index
    %c0_85 = arith.constant 0 : index
    %291 = vector.load %arg6[%c0_84, %c0_85] : memref<1x128xf32, #tpu.memory_space<vmem>>, vector<1x128xf32>
    %292 = vector.broadcast %291 : vector<1x128xf32> to vector<8x128xf32>
    %293 = arith.addf %290, %292 : vector<8x128xf32>
    %294 = arith.mulf %280, %293 : vector<8x128xf32>
    %295 = arith.addf %289, %294 : vector<8x128xf32>
    %296 = math.tanh %295 : vector<8x128xf32>
    %cst_86 = arith.constant 1.000000e+00 : f32
    %297 = vector.broadcast %cst_86 : f32 to vector<8x128xf32>
    %298 = arith.subf %297, %288 : vector<8x128xf32>
    %299 = arith.mulf %298, %296 : vector<8x128xf32>
    %300 = arith.mulf %288, %220 : vector<8x128xf32>
    %301 = arith.addf %299, %300 : vector<8x128xf32>
    %c3_i32 = arith.constant 3 : i32
    %302 = vector.broadcast %c3_i32 : i32 to vector<8x1xi32>
    %303 = arith.cmpi sgt, %8, %302 : vector<8x1xi32>
    %304 = vector.shape_cast %303 : vector<8x1xi1> to vector<8x1xi1>
    %305 = vector.broadcast %304 : vector<8x1xi1> to vector<8x128xi1>
    %306 = arith.select %305, %301, %220 : vector<8x128xi1>, vector<8x128xf32>
    %307 = vector.shape_cast %303 : vector<8x1xi1> to vector<8x1xi1>
    %308 = vector.broadcast %307 : vector<8x1xi1> to vector<8x128xi1>
    %309 = arith.select %308, %301, %9 : vector<8x128xi1>, vector<8x128xf32>
    %310 = vector.shape_cast %309 : vector<8x128xf32> to vector<8x1x128xf32>
    %c0_87 = arith.constant 0 : index
    %c3 = arith.constant 3 : index
    %c0_88 = arith.constant 0 : index
    %311 = vector.load %arg11[%c0_87, %c3, %c0_88] : memref<8x8x256xf32, #tpu.memory_space<vmem>>, vector<8x1x128xf32>
    tpu.vector_store %arg11[%c0_87, %c3, %c0_88], %310 {strides = array<i32>} : memref<8x8x256xf32, #tpu.memory_space<vmem>>, vector<8x1x128xf32>,
    %c32 = arith.constant 32 : index
    %c384_89 = arith.constant 384 : index
    %312 = vector.load %arg14[%c32, %c384_89] : memref<64x768xf32, #tpu.memory_space<vmem>>, vector<8x384xf32>
    %313 = arith.truncf %263 : vector<8x128xf32> to vector<8x128xbf16>
    %c0_90 = arith.constant 0 : index
    %c0_91 = arith.constant 0 : index
    %314 = vector.load %arg7[%c0_90, %c0_91] : memref<128x384xbf16, #tpu.memory_space<vmem>>, vector<128x384xbf16>
    %cst_92 = arith.constant dense<0.000000e+00> : vector<8x384xf32>
    %315 = tpu.matmul %313, %314, %cst_92 {dimension_numbers = #tpu.dot_dimension_numbers<[1], [0], [0], [1], [0, 0, 1, 1], [], []>} : vector<8x128xbf16>, vector<128x384xbf16>, vector<8x384xf32> -> vector<8x384xf32>
    %316 = vector.extract_strided_slice %312 {offsets = [0, 0], sizes = [8, 128], strides = [1, 1]} : vector<8x384xf32> to vector<8x128xf32>
    %317 = vector.extract_strided_slice %315 {offsets = [0, 0], sizes = [8, 128], strides = [1, 1]} : vector<8x384xf32> to vector<8x128xf32>
    %318 = arith.addf %316, %317 : vector<8x128xf32>
    %319 = arith.negf %318 : vector<8x128xf32>
    %320 = math.exp %319 : vector<8x128xf32>
    %cst_93 = arith.constant 1.000000e+00 : f32
    %321 = vector.broadcast %cst_93 : f32 to vector<8x128xf32>
    %322 = arith.addf %321, %320 : vector<8x128xf32>
    %323 = arith.divf %321, %322 : vector<8x128xf32>
    %324 = vector.extract_strided_slice %312 {offsets = [0, 128], sizes = [8, 128], strides = [1, 1]} : vector<8x384xf32> to vector<8x128xf32>
    %325 = vector.extract_strided_slice %315 {offsets = [0, 128], sizes = [8, 128], strides = [1, 1]} : vector<8x384xf32> to vector<8x128xf32>
    %326 = arith.addf %324, %325 : vector<8x128xf32>
    %327 = arith.negf %326 : vector<8x128xf32>
    %328 = math.exp %327 : vector<8x128xf32>
    %cst_94 = arith.constant 1.000000e+00 : f32
    %329 = vector.broadcast %cst_94 : f32 to vector<8x128xf32>
    %330 = arith.addf %329, %328 : vector<8x128xf32>
    %331 = arith.divf %329, %330 : vector<8x128xf32>
    %332 = vector.extract_strided_slice %312 {offsets = [0, 256], sizes = [8, 128], strides = [1, 1]} : vector<8x384xf32> to vector<8x128xf32>
    %333 = vector.extract_strided_slice %315 {offsets = [0, 256], sizes = [8, 128], strides = [1, 1]} : vector<8x384xf32> to vector<8x128xf32>
    %c0_95 = arith.constant 0 : index
    %c0_96 = arith.constant 0 : index
    %334 = vector.load %arg8[%c0_95, %c0_96] : memref<1x128xf32, #tpu.memory_space<vmem>>, vector<1x128xf32>
    %335 = vector.broadcast %334 : vector<1x128xf32> to vector<8x128xf32>
    %336 = arith.addf %333, %335 : vector<8x128xf32>
    %337 = arith.mulf %323, %336 : vector<8x128xf32>
    %338 = arith.addf %332, %337 : vector<8x128xf32>
    %339 = math.tanh %338 : vector<8x128xf32>
    %cst_97 = arith.constant 1.000000e+00 : f32
    %340 = vector.broadcast %cst_97 : f32 to vector<8x128xf32>
    %341 = arith.subf %340, %331 : vector<8x128xf32>
    %342 = arith.mulf %341, %339 : vector<8x128xf32>
    %343 = arith.mulf %331, %263 : vector<8x128xf32>
    %344 = arith.addf %342, %343 : vector<8x128xf32>
    %c4_i32 = arith.constant 4 : i32
    %345 = vector.broadcast %c4_i32 : i32 to vector<8x1xi32>
    %346 = arith.cmpi sgt, %8, %345 : vector<8x1xi32>
    %347 = vector.shape_cast %346 : vector<8x1xi1> to vector<8x1xi1>
    %348 = vector.broadcast %347 : vector<8x1xi1> to vector<8x128xi1>
    %349 = arith.select %348, %344, %263 : vector<8x128xi1>, vector<8x128xf32>
    %350 = vector.shape_cast %346 : vector<8x1xi1> to vector<8x1xi1>
    %351 = vector.broadcast %350 : vector<8x1xi1> to vector<8x128xi1>
    %352 = arith.select %351, %344, %9 : vector<8x128xi1>, vector<8x128xf32>
    %353 = vector.shape_cast %352 : vector<8x128xf32> to vector<8x1x128xf32>
    %c0_98 = arith.constant 0 : index
    %c4 = arith.constant 4 : index
    %c128_99 = arith.constant 128 : index
    %354 = vector.load %arg11[%c0_98, %c4, %c128_99] : memref<8x8x256xf32, #tpu.memory_space<vmem>>, vector<8x1x128xf32>
    tpu.vector_store %arg11[%c0_98, %c4, %c128_99], %353 {strides = array<i32>} : memref<8x8x256xf32, #tpu.memory_space<vmem>>, vector<8x1x128xf32>,
    %c32_100 = arith.constant 32 : index
    %c0_101 = arith.constant 0 : index
    %355 = vector.load %arg14[%c32_100, %c0_101] : memref<64x768xf32, #tpu.memory_space<vmem>>, vector<8x384xf32>
    %356 = arith.truncf %306 : vector<8x128xf32> to vector<8x128xbf16>
    %c0_102 = arith.constant 0 : index
    %c0_103 = arith.constant 0 : index
    %357 = vector.load %arg5[%c0_102, %c0_103] : memref<128x384xbf16, #tpu.memory_space<vmem>>, vector<128x384xbf16>
    %cst_104 = arith.constant dense<0.000000e+00> : vector<8x384xf32>
    %358 = tpu.matmul %356, %357, %cst_104 {dimension_numbers = #tpu.dot_dimension_numbers<[1], [0], [0], [1], [0, 0, 1, 1], [], []>} : vector<8x128xbf16>, vector<128x384xbf16>, vector<8x384xf32> -> vector<8x384xf32>
    %359 = vector.extract_strided_slice %355 {offsets = [0, 0], sizes = [8, 128], strides = [1, 1]} : vector<8x384xf32> to vector<8x128xf32>
    %360 = vector.extract_strided_slice %358 {offsets = [0, 0], sizes = [8, 128], strides = [1, 1]} : vector<8x384xf32> to vector<8x128xf32>
    %361 = arith.addf %359, %360 : vector<8x128xf32>
    %362 = arith.negf %361 : vector<8x128xf32>
    %363 = math.exp %362 : vector<8x128xf32>
    %cst_105 = arith.constant 1.000000e+00 : f32
    %364 = vector.broadcast %cst_105 : f32 to vector<8x128xf32>
    %365 = arith.addf %364, %363 : vector<8x128xf32>
    %366 = arith.divf %364, %365 : vector<8x128xf32>
    %367 = vector.extract_strided_slice %355 {offsets = [0, 128], sizes = [8, 128], strides = [1, 1]} : vector<8x384xf32> to vector<8x128xf32>
    %368 = vector.extract_strided_slice %358 {offsets = [0, 128], sizes = [8, 128], strides = [1, 1]} : vector<8x384xf32> to vector<8x128xf32>
    %369 = arith.addf %367, %368 : vector<8x128xf32>
    %370 = arith.negf %369 : vector<8x128xf32>
    %371 = math.exp %370 : vector<8x128xf32>
    %cst_106 = arith.constant 1.000000e+00 : f32
    %372 = vector.broadcast %cst_106 : f32 to vector<8x128xf32>
    %373 = arith.addf %372, %371 : vector<8x128xf32>
    %374 = arith.divf %372, %373 : vector<8x128xf32>
    %375 = vector.extract_strided_slice %355 {offsets = [0, 256], sizes = [8, 128], strides = [1, 1]} : vector<8x384xf32> to vector<8x128xf32>
    %376 = vector.extract_strided_slice %358 {offsets = [0, 256], sizes = [8, 128], strides = [1, 1]} : vector<8x384xf32> to vector<8x128xf32>
    %c0_107 = arith.constant 0 : index
    %c0_108 = arith.constant 0 : index
    %377 = vector.load %arg6[%c0_107, %c0_108] : memref<1x128xf32, #tpu.memory_space<vmem>>, vector<1x128xf32>
    %378 = vector.broadcast %377 : vector<1x128xf32> to vector<8x128xf32>
    %379 = arith.addf %376, %378 : vector<8x128xf32>
    %380 = arith.mulf %366, %379 : vector<8x128xf32>
    %381 = arith.addf %375, %380 : vector<8x128xf32>
    %382 = math.tanh %381 : vector<8x128xf32>
    %cst_109 = arith.constant 1.000000e+00 : f32
    %383 = vector.broadcast %cst_109 : f32 to vector<8x128xf32>
    %384 = arith.subf %383, %374 : vector<8x128xf32>
    %385 = arith.mulf %384, %382 : vector<8x128xf32>
    %386 = arith.mulf %374, %306 : vector<8x128xf32>
    %387 = arith.addf %385, %386 : vector<8x128xf32>
    %c4_i32_110 = arith.constant 4 : i32
    %388 = vector.broadcast %c4_i32_110 : i32 to vector<8x1xi32>
    %389 = arith.cmpi sgt, %8, %388 : vector<8x1xi32>
    %390 = vector.shape_cast %389 : vector<8x1xi1> to vector<8x1xi1>
    %391 = vector.broadcast %390 : vector<8x1xi1> to vector<8x128xi1>
    %392 = arith.select %391, %387, %306 : vector<8x128xi1>, vector<8x128xf32>
    %393 = vector.shape_cast %389 : vector<8x1xi1> to vector<8x1xi1>
    %394 = vector.broadcast %393 : vector<8x1xi1> to vector<8x128xi1>
    %395 = arith.select %394, %387, %9 : vector<8x128xi1>, vector<8x128xf32>
    %396 = vector.shape_cast %395 : vector<8x128xf32> to vector<8x1x128xf32>
    %c0_111 = arith.constant 0 : index
    %c4_112 = arith.constant 4 : index
    %c0_113 = arith.constant 0 : index
    %397 = vector.load %arg11[%c0_111, %c4_112, %c0_113] : memref<8x8x256xf32, #tpu.memory_space<vmem>>, vector<8x1x128xf32>
    tpu.vector_store %arg11[%c0_111, %c4_112, %c0_113], %396 {strides = array<i32>} : memref<8x8x256xf32, #tpu.memory_space<vmem>>, vector<8x1x128xf32>,
    %c24_114 = arith.constant 24 : index
    %c384_115 = arith.constant 384 : index
    %398 = vector.load %arg14[%c24_114, %c384_115] : memref<64x768xf32, #tpu.memory_space<vmem>>, vector<8x384xf32>
    %399 = arith.truncf %349 : vector<8x128xf32> to vector<8x128xbf16>
    %c0_116 = arith.constant 0 : index
    %c0_117 = arith.constant 0 : index
    %400 = vector.load %arg7[%c0_116, %c0_117] : memref<128x384xbf16, #tpu.memory_space<vmem>>, vector<128x384xbf16>
    %cst_118 = arith.constant dense<0.000000e+00> : vector<8x384xf32>
    %401 = tpu.matmul %399, %400, %cst_118 {dimension_numbers = #tpu.dot_dimension_numbers<[1], [0], [0], [1], [0, 0, 1, 1], [], []>} : vector<8x128xbf16>, vector<128x384xbf16>, vector<8x384xf32> -> vector<8x384xf32>
    %402 = vector.extract_strided_slice %398 {offsets = [0, 0], sizes = [8, 128], strides = [1, 1]} : vector<8x384xf32> to vector<8x128xf32>
    %403 = vector.extract_strided_slice %401 {offsets = [0, 0], sizes = [8, 128], strides = [1, 1]} : vector<8x384xf32> to vector<8x128xf32>
    %404 = arith.addf %402, %403 : vector<8x128xf32>
    %405 = arith.negf %404 : vector<8x128xf32>
    %406 = math.exp %405 : vector<8x128xf32>
    %cst_119 = arith.constant 1.000000e+00 : f32
    %407 = vector.broadcast %cst_119 : f32 to vector<8x128xf32>
    %408 = arith.addf %407, %406 : vector<8x128xf32>
    %409 = arith.divf %407, %408 : vector<8x128xf32>
    %410 = vector.extract_strided_slice %398 {offsets = [0, 128], sizes = [8, 128], strides = [1, 1]} : vector<8x384xf32> to vector<8x128xf32>
    %411 = vector.extract_strided_slice %401 {offsets = [0, 128], sizes = [8, 128], strides = [1, 1]} : vector<8x384xf32> to vector<8x128xf32>
    %412 = arith.addf %410, %411 : vector<8x128xf32>
    %413 = arith.negf %412 : vector<8x128xf32>
    %414 = math.exp %413 : vector<8x128xf32>
    %cst_120 = arith.constant 1.000000e+00 : f32
    %415 = vector.broadcast %cst_120 : f32 to vector<8x128xf32>
    %416 = arith.addf %415, %414 : vector<8x128xf32>
    %417 = arith.divf %415, %416 : vector<8x128xf32>
    %418 = vector.extract_strided_slice %398 {offsets = [0, 256], sizes = [8, 128], strides = [1, 1]} : vector<8x384xf32> to vector<8x128xf32>
    %419 = vector.extract_strided_slice %401 {offsets = [0, 256], sizes = [8, 128], strides = [1, 1]} : vector<8x384xf32> to vector<8x128xf32>
    %c0_121 = arith.constant 0 : index
    %c0_122 = arith.constant 0 : index
    %420 = vector.load %arg8[%c0_121, %c0_122] : memref<1x128xf32, #tpu.memory_space<vmem>>, vector<1x128xf32>
    %421 = vector.broadcast %420 : vector<1x128xf32> to vector<8x128xf32>
    %422 = arith.addf %419, %421 : vector<8x128xf32>
    %423 = arith.mulf %409, %422 : vector<8x128xf32>
    %424 = arith.addf %418, %423 : vector<8x128xf32>
    %425 = math.tanh %424 : vector<8x128xf32>
    %cst_123 = arith.constant 1.000000e+00 : f32
    %426 = vector.broadcast %cst_123 : f32 to vector<8x128xf32>
    %427 = arith.subf %426, %417 : vector<8x128xf32>
    %428 = arith.mulf %427, %425 : vector<8x128xf32>
    %429 = arith.mulf %417, %349 : vector<8x128xf32>
    %430 = arith.addf %428, %429 : vector<8x128xf32>
    %c3_i32_124 = arith.constant 3 : i32
    %431 = vector.broadcast %c3_i32_124 : i32 to vector<8x1xi32>
    %432 = arith.cmpi sgt, %8, %431 : vector<8x1xi32>
    %433 = vector.shape_cast %432 : vector<8x1xi1> to vector<8x1xi1>
    %434 = vector.broadcast %433 : vector<8x1xi1> to vector<8x128xi1>
    %435 = arith.select %434, %430, %349 : vector<8x128xi1>, vector<8x128xf32>
    %436 = vector.shape_cast %432 : vector<8x1xi1> to vector<8x1xi1>
    %437 = vector.broadcast %436 : vector<8x1xi1> to vector<8x128xi1>
    %438 = arith.select %437, %430, %9 : vector<8x128xi1>, vector<8x128xf32>
    %439 = vector.shape_cast %438 : vector<8x128xf32> to vector<8x1x128xf32>
    %c0_125 = arith.constant 0 : index
    %c3_126 = arith.constant 3 : index
    %c128_127 = arith.constant 128 : index
    %440 = vector.load %arg11[%c0_125, %c3_126, %c128_127] : memref<8x8x256xf32, #tpu.memory_space<vmem>>, vector<8x1x128xf32>
    tpu.vector_store %arg11[%c0_125, %c3_126, %c128_127], %439 {strides = array<i32>} : memref<8x8x256xf32, #tpu.memory_space<vmem>>, vector<8x1x128xf32>,
    %c40_128 = arith.constant 40 : index
    %c0_129 = arith.constant 0 : index
    %441 = vector.load %arg14[%c40_128, %c0_129] : memref<64x768xf32, #tpu.memory_space<vmem>>, vector<8x384xf32>
    %442 = arith.truncf %392 : vector<8x128xf32> to vector<8x128xbf16>
    %c0_130 = arith.constant 0 : index
    %c0_131 = arith.constant 0 : index
    %443 = vector.load %arg5[%c0_130, %c0_131] : memref<128x384xbf16, #tpu.memory_space<vmem>>, vector<128x384xbf16>
    %cst_132 = arith.constant dense<0.000000e+00> : vector<8x384xf32>
    %444 = tpu.matmul %442, %443, %cst_132 {dimension_numbers = #tpu.dot_dimension_numbers<[1], [0], [0], [1], [0, 0, 1, 1], [], []>} : vector<8x128xbf16>, vector<128x384xbf16>, vector<8x384xf32> -> vector<8x384xf32>
    %445 = vector.extract_strided_slice %441 {offsets = [0, 0], sizes = [8, 128], strides = [1, 1]} : vector<8x384xf32> to vector<8x128xf32>
    %446 = vector.extract_strided_slice %444 {offsets = [0, 0], sizes = [8, 128], strides = [1, 1]} : vector<8x384xf32> to vector<8x128xf32>
    %447 = arith.addf %445, %446 : vector<8x128xf32>
    %448 = arith.negf %447 : vector<8x128xf32>
    %449 = math.exp %448 : vector<8x128xf32>
    %cst_133 = arith.constant 1.000000e+00 : f32
    %450 = vector.broadcast %cst_133 : f32 to vector<8x128xf32>
    %451 = arith.addf %450, %449 : vector<8x128xf32>
    %452 = arith.divf %450, %451 : vector<8x128xf32>
    %453 = vector.extract_strided_slice %441 {offsets = [0, 128], sizes = [8, 128], strides = [1, 1]} : vector<8x384xf32> to vector<8x128xf32>
    %454 = vector.extract_strided_slice %444 {offsets = [0, 128], sizes = [8, 128], strides = [1, 1]} : vector<8x384xf32> to vector<8x128xf32>
    %455 = arith.addf %453, %454 : vector<8x128xf32>
    %456 = arith.negf %455 : vector<8x128xf32>
    %457 = math.exp %456 : vector<8x128xf32>
    %cst_134 = arith.constant 1.000000e+00 : f32
    %458 = vector.broadcast %cst_134 : f32 to vector<8x128xf32>
    %459 = arith.addf %458, %457 : vector<8x128xf32>
    %460 = arith.divf %458, %459 : vector<8x128xf32>
    %461 = vector.extract_strided_slice %441 {offsets = [0, 256], sizes = [8, 128], strides = [1, 1]} : vector<8x384xf32> to vector<8x128xf32>
    %462 = vector.extract_strided_slice %444 {offsets = [0, 256], sizes = [8, 128], strides = [1, 1]} : vector<8x384xf32> to vector<8x128xf32>
    %c0_135 = arith.constant 0 : index
    %c0_136 = arith.constant 0 : index
    %463 = vector.load %arg6[%c0_135, %c0_136] : memref<1x128xf32, #tpu.memory_space<vmem>>, vector<1x128xf32>
    %464 = vector.broadcast %463 : vector<1x128xf32> to vector<8x128xf32>
    %465 = arith.addf %462, %464 : vector<8x128xf32>
    %466 = arith.mulf %452, %465 : vector<8x128xf32>
    %467 = arith.addf %461, %466 : vector<8x128xf32>
    %468 = math.tanh %467 : vector<8x128xf32>
    %cst_137 = arith.constant 1.000000e+00 : f32
    %469 = vector.broadcast %cst_137 : f32 to vector<8x128xf32>
    %470 = arith.subf %469, %460 : vector<8x128xf32>
    %471 = arith.mulf %470, %468 : vector<8x128xf32>
    %472 = arith.mulf %460, %392 : vector<8x128xf32>
    %473 = arith.addf %471, %472 : vector<8x128xf32>
    %c5_i32_138 = arith.constant 5 : i32
    %474 = vector.broadcast %c5_i32_138 : i32 to vector<8x1xi32>
    %475 = arith.cmpi sgt, %8, %474 : vector<8x1xi32>
    %476 = vector.shape_cast %475 : vector<8x1xi1> to vector<8x1xi1>
    %477 = vector.broadcast %476 : vector<8x1xi1> to vector<8x128xi1>
    %478 = arith.select %477, %473, %392 : vector<8x128xi1>, vector<8x128xf32>
    %479 = vector.shape_cast %475 : vector<8x1xi1> to vector<8x1xi1>
    %480 = vector.broadcast %479 : vector<8x1xi1> to vector<8x128xi1>
    %481 = arith.select %480, %473, %9 : vector<8x128xi1>, vector<8x128xf32>
    %482 = vector.shape_cast %481 : vector<8x128xf32> to vector<8x1x128xf32>
    %c0_139 = arith.constant 0 : index
    %c5_140 = arith.constant 5 : index
    %c0_141 = arith.constant 0 : index
    %483 = vector.load %arg11[%c0_139, %c5_140, %c0_141] : memref<8x8x256xf32, #tpu.memory_space<vmem>>, vector<8x1x128xf32>
    tpu.vector_store %arg11[%c0_139, %c5_140, %c0_141], %482 {strides = array<i32>} : memref<8x8x256xf32, #tpu.memory_space<vmem>>, vector<8x1x128xf32>,
    %c16_142 = arith.constant 16 : index
    %c384_143 = arith.constant 384 : index
    %484 = vector.load %arg14[%c16_142, %c384_143] : memref<64x768xf32, #tpu.memory_space<vmem>>, vector<8x384xf32>
    %485 = arith.truncf %435 : vector<8x128xf32> to vector<8x128xbf16>
    %c0_144 = arith.constant 0 : index
    %c0_145 = arith.constant 0 : index
    %486 = vector.load %arg7[%c0_144, %c0_145] : memref<128x384xbf16, #tpu.memory_space<vmem>>, vector<128x384xbf16>
    %cst_146 = arith.constant dense<0.000000e+00> : vector<8x384xf32>
    %487 = tpu.matmul %485, %486, %cst_146 {dimension_numbers = #tpu.dot_dimension_numbers<[1], [0], [0], [1], [0, 0, 1, 1], [], []>} : vector<8x128xbf16>, vector<128x384xbf16>, vector<8x384xf32> -> vector<8x384xf32>
    %488 = vector.extract_strided_slice %484 {offsets = [0, 0], sizes = [8, 128], strides = [1, 1]} : vector<8x384xf32> to vector<8x128xf32>
    %489 = vector.extract_strided_slice %487 {offsets = [0, 0], sizes = [8, 128], strides = [1, 1]} : vector<8x384xf32> to vector<8x128xf32>
    %490 = arith.addf %488, %489 : vector<8x128xf32>
    %491 = arith.negf %490 : vector<8x128xf32>
    %492 = math.exp %491 : vector<8x128xf32>
    %cst_147 = arith.constant 1.000000e+00 : f32
    %493 = vector.broadcast %cst_147 : f32 to vector<8x128xf32>
    %494 = arith.addf %493, %492 : vector<8x128xf32>
    %495 = arith.divf %493, %494 : vector<8x128xf32>
    %496 = vector.extract_strided_slice %484 {offsets = [0, 128], sizes = [8, 128], strides = [1, 1]} : vector<8x384xf32> to vector<8x128xf32>
    %497 = vector.extract_strided_slice %487 {offsets = [0, 128], sizes = [8, 128], strides = [1, 1]} : vector<8x384xf32> to vector<8x128xf32>
    %498 = arith.addf %496, %497 : vector<8x128xf32>
    %499 = arith.negf %498 : vector<8x128xf32>
    %500 = math.exp %499 : vector<8x128xf32>
    %cst_148 = arith.constant 1.000000e+00 : f32
    %501 = vector.broadcast %cst_148 : f32 to vector<8x128xf32>
    %502 = arith.addf %501, %500 : vector<8x128xf32>
    %503 = arith.divf %501, %502 : vector<8x128xf32>
    %504 = vector.extract_strided_slice %484 {offsets = [0, 256], sizes = [8, 128], strides = [1, 1]} : vector<8x384xf32> to vector<8x128xf32>
    %505 = vector.extract_strided_slice %487 {offsets = [0, 256], sizes = [8, 128], strides = [1, 1]} : vector<8x384xf32> to vector<8x128xf32>
    %c0_149 = arith.constant 0 : index
    %c0_150 = arith.constant 0 : index
    %506 = vector.load %arg8[%c0_149, %c0_150] : memref<1x128xf32, #tpu.memory_space<vmem>>, vector<1x128xf32>
    %507 = vector.broadcast %506 : vector<1x128xf32> to vector<8x128xf32>
    %508 = arith.addf %505, %507 : vector<8x128xf32>
    %509 = arith.mulf %495, %508 : vector<8x128xf32>
    %510 = arith.addf %504, %509 : vector<8x128xf32>
    %511 = math.tanh %510 : vector<8x128xf32>
    %cst_151 = arith.constant 1.000000e+00 : f32
    %512 = vector.broadcast %cst_151 : f32 to vector<8x128xf32>
    %513 = arith.subf %512, %503 : vector<8x128xf32>
    %514 = arith.mulf %513, %511 : vector<8x128xf32>
    %515 = arith.mulf %503, %435 : vector<8x128xf32>
    %516 = arith.addf %514, %515 : vector<8x128xf32>
    %c2_i32_152 = arith.constant 2 : i32
    %517 = vector.broadcast %c2_i32_152 : i32 to vector<8x1xi32>
    %518 = arith.cmpi sgt, %8, %517 : vector<8x1xi32>
    %519 = vector.shape_cast %518 : vector<8x1xi1> to vector<8x1xi1>
    %520 = vector.broadcast %519 : vector<8x1xi1> to vector<8x128xi1>
    %521 = arith.select %520, %516, %435 : vector<8x128xi1>, vector<8x128xf32>
    %522 = vector.shape_cast %518 : vector<8x1xi1> to vector<8x1xi1>
    %523 = vector.broadcast %522 : vector<8x1xi1> to vector<8x128xi1>
    %524 = arith.select %523, %516, %9 : vector<8x128xi1>, vector<8x128xf32>
    %525 = vector.shape_cast %524 : vector<8x128xf32> to vector<8x1x128xf32>
    %c0_153 = arith.constant 0 : index
    %c2_154 = arith.constant 2 : index
    %c128_155 = arith.constant 128 : index
    %526 = vector.load %arg11[%c0_153, %c2_154, %c128_155] : memref<8x8x256xf32, #tpu.memory_space<vmem>>, vector<8x1x128xf32>
    tpu.vector_store %arg11[%c0_153, %c2_154, %c128_155], %525 {strides = array<i32>} : memref<8x8x256xf32, #tpu.memory_space<vmem>>, vector<8x1x128xf32>,
    %c48_156 = arith.constant 48 : index
    %c0_157 = arith.constant 0 : index
    %527 = vector.load %arg14[%c48_156, %c0_157] : memref<64x768xf32, #tpu.memory_space<vmem>>, vector<8x384xf32>
    %528 = arith.truncf %478 : vector<8x128xf32> to vector<8x128xbf16>
    %c0_158 = arith.constant 0 : index
    %c0_159 = arith.constant 0 : index
    %529 = vector.load %arg5[%c0_158, %c0_159] : memref<128x384xbf16, #tpu.memory_space<vmem>>, vector<128x384xbf16>
    %cst_160 = arith.constant dense<0.000000e+00> : vector<8x384xf32>
    %530 = tpu.matmul %528, %529, %cst_160 {dimension_numbers = #tpu.dot_dimension_numbers<[1], [0], [0], [1], [0, 0, 1, 1], [], []>} : vector<8x128xbf16>, vector<128x384xbf16>, vector<8x384xf32> -> vector<8x384xf32>
    %531 = vector.extract_strided_slice %527 {offsets = [0, 0], sizes = [8, 128], strides = [1, 1]} : vector<8x384xf32> to vector<8x128xf32>
    %532 = vector.extract_strided_slice %530 {offsets = [0, 0], sizes = [8, 128], strides = [1, 1]} : vector<8x384xf32> to vector<8x128xf32>
    %533 = arith.addf %531, %532 : vector<8x128xf32>
    %534 = arith.negf %533 : vector<8x128xf32>
    %535 = math.exp %534 : vector<8x128xf32>
    %cst_161 = arith.constant 1.000000e+00 : f32
    %536 = vector.broadcast %cst_161 : f32 to vector<8x128xf32>
    %537 = arith.addf %536, %535 : vector<8x128xf32>
    %538 = arith.divf %536, %537 : vector<8x128xf32>
    %539 = vector.extract_strided_slice %527 {offsets = [0, 128], sizes = [8, 128], strides = [1, 1]} : vector<8x384xf32> to vector<8x128xf32>
    %540 = vector.extract_strided_slice %530 {offsets = [0, 128], sizes = [8, 128], strides = [1, 1]} : vector<8x384xf32> to vector<8x128xf32>
    %541 = arith.addf %539, %540 : vector<8x128xf32>
    %542 = arith.negf %541 : vector<8x128xf32>
    %543 = math.exp %542 : vector<8x128xf32>
    %cst_162 = arith.constant 1.000000e+00 : f32
    %544 = vector.broadcast %cst_162 : f32 to vector<8x128xf32>
    %545 = arith.addf %544, %543 : vector<8x128xf32>
    %546 = arith.divf %544, %545 : vector<8x128xf32>
    %547 = vector.extract_strided_slice %527 {offsets = [0, 256], sizes = [8, 128], strides = [1, 1]} : vector<8x384xf32> to vector<8x128xf32>
    %548 = vector.extract_strided_slice %530 {offsets = [0, 256], sizes = [8, 128], strides = [1, 1]} : vector<8x384xf32> to vector<8x128xf32>
    %c0_163 = arith.constant 0 : index
    %c0_164 = arith.constant 0 : index
    %549 = vector.load %arg6[%c0_163, %c0_164] : memref<1x128xf32, #tpu.memory_space<vmem>>, vector<1x128xf32>
    %550 = vector.broadcast %549 : vector<1x128xf32> to vector<8x128xf32>
    %551 = arith.addf %548, %550 : vector<8x128xf32>
    %552 = arith.mulf %538, %551 : vector<8x128xf32>
    %553 = arith.addf %547, %552 : vector<8x128xf32>
    %554 = math.tanh %553 : vector<8x128xf32>
    %cst_165 = arith.constant 1.000000e+00 : f32
    %555 = vector.broadcast %cst_165 : f32 to vector<8x128xf32>
    %556 = arith.subf %555, %546 : vector<8x128xf32>
    %557 = arith.mulf %556, %554 : vector<8x128xf32>
    %558 = arith.mulf %546, %478 : vector<8x128xf32>
    %559 = arith.addf %557, %558 : vector<8x128xf32>
    %c6_i32_166 = arith.constant 6 : i32
    %560 = vector.broadcast %c6_i32_166 : i32 to vector<8x1xi32>
    %561 = arith.cmpi sgt, %8, %560 : vector<8x1xi32>
    %562 = vector.shape_cast %561 : vector<8x1xi1> to vector<8x1xi1>
    %563 = vector.broadcast %562 : vector<8x1xi1> to vector<8x128xi1>
    %564 = arith.select %563, %559, %478 : vector<8x128xi1>, vector<8x128xf32>
    %565 = vector.shape_cast %561 : vector<8x1xi1> to vector<8x1xi1>
    %566 = vector.broadcast %565 : vector<8x1xi1> to vector<8x128xi1>
    %567 = arith.select %566, %559, %9 : vector<8x128xi1>, vector<8x128xf32>
    %568 = vector.shape_cast %567 : vector<8x128xf32> to vector<8x1x128xf32>
    %c0_167 = arith.constant 0 : index
    %c6_168 = arith.constant 6 : index
    %c0_169 = arith.constant 0 : index
    %569 = vector.load %arg11[%c0_167, %c6_168, %c0_169] : memref<8x8x256xf32, #tpu.memory_space<vmem>>, vector<8x1x128xf32>
    tpu.vector_store %arg11[%c0_167, %c6_168, %c0_169], %568 {strides = array<i32>} : memref<8x8x256xf32, #tpu.memory_space<vmem>>, vector<8x1x128xf32>,
    %c8_170 = arith.constant 8 : index
    %c384_171 = arith.constant 384 : index
    %570 = vector.load %arg14[%c8_170, %c384_171] : memref<64x768xf32, #tpu.memory_space<vmem>>, vector<8x384xf32>
    %571 = arith.truncf %521 : vector<8x128xf32> to vector<8x128xbf16>
    %c0_172 = arith.constant 0 : index
    %c0_173 = arith.constant 0 : index
    %572 = vector.load %arg7[%c0_172, %c0_173] : memref<128x384xbf16, #tpu.memory_space<vmem>>, vector<128x384xbf16>
    %cst_174 = arith.constant dense<0.000000e+00> : vector<8x384xf32>
    %573 = tpu.matmul %571, %572, %cst_174 {dimension_numbers = #tpu.dot_dimension_numbers<[1], [0], [0], [1], [0, 0, 1, 1], [], []>} : vector<8x128xbf16>, vector<128x384xbf16>, vector<8x384xf32> -> vector<8x384xf32>
    %574 = vector.extract_strided_slice %570 {offsets = [0, 0], sizes = [8, 128], strides = [1, 1]} : vector<8x384xf32> to vector<8x128xf32>
    %575 = vector.extract_strided_slice %573 {offsets = [0, 0], sizes = [8, 128], strides = [1, 1]} : vector<8x384xf32> to vector<8x128xf32>
    %576 = arith.addf %574, %575 : vector<8x128xf32>
    %577 = arith.negf %576 : vector<8x128xf32>
    %578 = math.exp %577 : vector<8x128xf32>
    %cst_175 = arith.constant 1.000000e+00 : f32
    %579 = vector.broadcast %cst_175 : f32 to vector<8x128xf32>
    %580 = arith.addf %579, %578 : vector<8x128xf32>
    %581 = arith.divf %579, %580 : vector<8x128xf32>
    %582 = vector.extract_strided_slice %570 {offsets = [0, 128], sizes = [8, 128], strides = [1, 1]} : vector<8x384xf32> to vector<8x128xf32>
    %583 = vector.extract_strided_slice %573 {offsets = [0, 128], sizes = [8, 128], strides = [1, 1]} : vector<8x384xf32> to vector<8x128xf32>
    %584 = arith.addf %582, %583 : vector<8x128xf32>
    %585 = arith.negf %584 : vector<8x128xf32>
    %586 = math.exp %585 : vector<8x128xf32>
    %cst_176 = arith.constant 1.000000e+00 : f32
    %587 = vector.broadcast %cst_176 : f32 to vector<8x128xf32>
    %588 = arith.addf %587, %586 : vector<8x128xf32>
    %589 = arith.divf %587, %588 : vector<8x128xf32>
    %590 = vector.extract_strided_slice %570 {offsets = [0, 256], sizes = [8, 128], strides = [1, 1]} : vector<8x384xf32> to vector<8x128xf32>
    %591 = vector.extract_strided_slice %573 {offsets = [0, 256], sizes = [8, 128], strides = [1, 1]} : vector<8x384xf32> to vector<8x128xf32>
    %c0_177 = arith.constant 0 : index
    %c0_178 = arith.constant 0 : index
    %592 = vector.load %arg8[%c0_177, %c0_178] : memref<1x128xf32, #tpu.memory_space<vmem>>, vector<1x128xf32>
    %593 = vector.broadcast %592 : vector<1x128xf32> to vector<8x128xf32>
    %594 = arith.addf %591, %593 : vector<8x128xf32>
    %595 = arith.mulf %581, %594 : vector<8x128xf32>
    %596 = arith.addf %590, %595 : vector<8x128xf32>
    %597 = math.tanh %596 : vector<8x128xf32>
    %cst_179 = arith.constant 1.000000e+00 : f32
    %598 = vector.broadcast %cst_179 : f32 to vector<8x128xf32>
    %599 = arith.subf %598, %589 : vector<8x128xf32>
    %600 = arith.mulf %599, %597 : vector<8x128xf32>
    %601 = arith.mulf %589, %521 : vector<8x128xf32>
    %602 = arith.addf %600, %601 : vector<8x128xf32>
    %c1_i32_180 = arith.constant 1 : i32
    %603 = vector.broadcast %c1_i32_180 : i32 to vector<8x1xi32>
    %604 = arith.cmpi sgt, %8, %603 : vector<8x1xi32>
    %605 = vector.shape_cast %604 : vector<8x1xi1> to vector<8x1xi1>
    %606 = vector.broadcast %605 : vector<8x1xi1> to vector<8x128xi1>
    %607 = arith.select %606, %602, %521 : vector<8x128xi1>, vector<8x128xf32>
    %608 = vector.shape_cast %604 : vector<8x1xi1> to vector<8x1xi1>
    %609 = vector.broadcast %608 : vector<8x1xi1> to vector<8x128xi1>
    %610 = arith.select %609, %602, %9 : vector<8x128xi1>, vector<8x128xf32>
    %611 = vector.shape_cast %610 : vector<8x128xf32> to vector<8x1x128xf32>
    %c0_181 = arith.constant 0 : index
    %c1_182 = arith.constant 1 : index
    %c128_183 = arith.constant 128 : index
    %612 = vector.load %arg11[%c0_181, %c1_182, %c128_183] : memref<8x8x256xf32, #tpu.memory_space<vmem>>, vector<8x1x128xf32>
    tpu.vector_store %arg11[%c0_181, %c1_182, %c128_183], %611 {strides = array<i32>} : memref<8x8x256xf32, #tpu.memory_space<vmem>>, vector<8x1x128xf32>,
    %c56_184 = arith.constant 56 : index
    %c0_185 = arith.constant 0 : index
    %613 = vector.load %arg14[%c56_184, %c0_185] : memref<64x768xf32, #tpu.memory_space<vmem>>, vector<8x384xf32>
    %614 = arith.truncf %564 : vector<8x128xf32> to vector<8x128xbf16>
    %c0_186 = arith.constant 0 : index
    %c0_187 = arith.constant 0 : index
    %615 = vector.load %arg5[%c0_186, %c0_187] : memref<128x384xbf16, #tpu.memory_space<vmem>>, vector<128x384xbf16>
    %cst_188 = arith.constant dense<0.000000e+00> : vector<8x384xf32>
    %616 = tpu.matmul %614, %615, %cst_188 {dimension_numbers = #tpu.dot_dimension_numbers<[1], [0], [0], [1], [0, 0, 1, 1], [], []>} : vector<8x128xbf16>, vector<128x384xbf16>, vector<8x384xf32> -> vector<8x384xf32>
    %617 = vector.extract_strided_slice %613 {offsets = [0, 0], sizes = [8, 128], strides = [1, 1]} : vector<8x384xf32> to vector<8x128xf32>
    %618 = vector.extract_strided_slice %616 {offsets = [0, 0], sizes = [8, 128], strides = [1, 1]} : vector<8x384xf32> to vector<8x128xf32>
    %619 = arith.addf %617, %618 : vector<8x128xf32>
    %620 = arith.negf %619 : vector<8x128xf32>
    %621 = math.exp %620 : vector<8x128xf32>
    %cst_189 = arith.constant 1.000000e+00 : f32
    %622 = vector.broadcast %cst_189 : f32 to vector<8x128xf32>
    %623 = arith.addf %622, %621 : vector<8x128xf32>
    %624 = arith.divf %622, %623 : vector<8x128xf32>
    %625 = vector.extract_strided_slice %613 {offsets = [0, 128], sizes = [8, 128], strides = [1, 1]} : vector<8x384xf32> to vector<8x128xf32>
    %626 = vector.extract_strided_slice %616 {offsets = [0, 128], sizes = [8, 128], strides = [1, 1]} : vector<8x384xf32> to vector<8x128xf32>
    %627 = arith.addf %625, %626 : vector<8x128xf32>
    %628 = arith.negf %627 : vector<8x128xf32>
    %629 = math.exp %628 : vector<8x128xf32>
    %cst_190 = arith.constant 1.000000e+00 : f32
    %630 = vector.broadcast %cst_190 : f32 to vector<8x128xf32>
    %631 = arith.addf %630, %629 : vector<8x128xf32>
    %632 = arith.divf %630, %631 : vector<8x128xf32>
    %633 = vector.extract_strided_slice %613 {offsets = [0, 256], sizes = [8, 128], strides = [1, 1]} : vector<8x384xf32> to vector<8x128xf32>
    %634 = vector.extract_strided_slice %616 {offsets = [0, 256], sizes = [8, 128], strides = [1, 1]} : vector<8x384xf32> to vector<8x128xf32>
    %c0_191 = arith.constant 0 : index
    %c0_192 = arith.constant 0 : index
    %635 = vector.load %arg6[%c0_191, %c0_192] : memref<1x128xf32, #tpu.memory_space<vmem>>, vector<1x128xf32>
    %636 = vector.broadcast %635 : vector<1x128xf32> to vector<8x128xf32>
    %637 = arith.addf %634, %636 : vector<8x128xf32>
    %638 = arith.mulf %624, %637 : vector<8x128xf32>
    %639 = arith.addf %633, %638 : vector<8x128xf32>
    %640 = math.tanh %639 : vector<8x128xf32>
    %cst_193 = arith.constant 1.000000e+00 : f32
    %641 = vector.broadcast %cst_193 : f32 to vector<8x128xf32>
    %642 = arith.subf %641, %632 : vector<8x128xf32>
    %643 = arith.mulf %642, %640 : vector<8x128xf32>
    %644 = arith.mulf %632, %564 : vector<8x128xf32>
    %645 = arith.addf %643, %644 : vector<8x128xf32>
    %c7_i32_194 = arith.constant 7 : i32
    %646 = vector.broadcast %c7_i32_194 : i32 to vector<8x1xi32>
    %647 = arith.cmpi sgt, %8, %646 : vector<8x1xi32>
    %648 = vector.shape_cast %647 : vector<8x1xi1> to vector<8x1xi1>
    %649 = vector.broadcast %648 : vector<8x1xi1> to vector<8x128xi1>
    %650 = arith.select %649, %645, %9 : vector<8x128xi1>, vector<8x128xf32>
    %651 = vector.shape_cast %650 : vector<8x128xf32> to vector<8x1x128xf32>
    %c0_195 = arith.constant 0 : index
    %c7_196 = arith.constant 7 : index
    %c0_197 = arith.constant 0 : index
    %652 = vector.load %arg11[%c0_195, %c7_196, %c0_197] : memref<8x8x256xf32, #tpu.memory_space<vmem>>, vector<8x1x128xf32>
    tpu.vector_store %arg11[%c0_195, %c7_196, %c0_197], %651 {strides = array<i32>} : memref<8x8x256xf32, #tpu.memory_space<vmem>>, vector<8x1x128xf32>,
    %c0_198 = arith.constant 0 : index
    %c384_199 = arith.constant 384 : index
    %653 = vector.load %arg14[%c0_198, %c384_199] : memref<64x768xf32, #tpu.memory_space<vmem>>, vector<8x384xf32>
    %654 = arith.truncf %607 : vector<8x128xf32> to vector<8x128xbf16>
    %c0_200 = arith.constant 0 : index
    %c0_201 = arith.constant 0 : index
    %655 = vector.load %arg7[%c0_200, %c0_201] : memref<128x384xbf16, #tpu.memory_space<vmem>>, vector<128x384xbf16>
    %cst_202 = arith.constant dense<0.000000e+00> : vector<8x384xf32>
    %656 = tpu.matmul %654, %655, %cst_202 {dimension_numbers = #tpu.dot_dimension_numbers<[1], [0], [0], [1], [0, 0, 1, 1], [], []>} : vector<8x128xbf16>, vector<128x384xbf16>, vector<8x384xf32> -> vector<8x384xf32>
    %657 = vector.extract_strided_slice %653 {offsets = [0, 0], sizes = [8, 128], strides = [1, 1]} : vector<8x384xf32> to vector<8x128xf32>
    %658 = vector.extract_strided_slice %656 {offsets = [0, 0], sizes = [8, 128], strides = [1, 1]} : vector<8x384xf32> to vector<8x128xf32>
    %659 = arith.addf %657, %658 : vector<8x128xf32>
    %660 = arith.negf %659 : vector<8x128xf32>
    %661 = math.exp %660 : vector<8x128xf32>
    %cst_203 = arith.constant 1.000000e+00 : f32
    %662 = vector.broadcast %cst_203 : f32 to vector<8x128xf32>
    %663 = arith.addf %662, %661 : vector<8x128xf32>
    %664 = arith.divf %662, %663 : vector<8x128xf32>
    %665 = vector.extract_strided_slice %653 {offsets = [0, 128], sizes = [8, 128], strides = [1, 1]} : vector<8x384xf32> to vector<8x128xf32>
    %666 = vector.extract_strided_slice %656 {offsets = [0, 128], sizes = [8, 128], strides = [1, 1]} : vector<8x384xf32> to vector<8x128xf32>
    %667 = arith.addf %665, %666 : vector<8x128xf32>
    %668 = arith.negf %667 : vector<8x128xf32>
    %669 = math.exp %668 : vector<8x128xf32>
    %cst_204 = arith.constant 1.000000e+00 : f32
    %670 = vector.broadcast %cst_204 : f32 to vector<8x128xf32>
    %671 = arith.addf %670, %669 : vector<8x128xf32>
    %672 = arith.divf %670, %671 : vector<8x128xf32>
    %673 = vector.extract_strided_slice %653 {offsets = [0, 256], sizes = [8, 128], strides = [1, 1]} : vector<8x384xf32> to vector<8x128xf32>
    %674 = vector.extract_strided_slice %656 {offsets = [0, 256], sizes = [8, 128], strides = [1, 1]} : vector<8x384xf32> to vector<8x128xf32>
    %c0_205 = arith.constant 0 : index
    %c0_206 = arith.constant 0 : index
    %675 = vector.load %arg8[%c0_205, %c0_206] : memref<1x128xf32, #tpu.memory_space<vmem>>, vector<1x128xf32>
    %676 = vector.broadcast %675 : vector<1x128xf32> to vector<8x128xf32>
    %677 = arith.addf %674, %676 : vector<8x128xf32>
    %678 = arith.mulf %664, %677 : vector<8x128xf32>
    %679 = arith.addf %673, %678 : vector<8x128xf32>
    %680 = math.tanh %679 : vector<8x128xf32>
    %cst_207 = arith.constant 1.000000e+00 : f32
    %681 = vector.broadcast %cst_207 : f32 to vector<8x128xf32>
    %682 = arith.subf %681, %672 : vector<8x128xf32>
    %683 = arith.mulf %682, %680 : vector<8x128xf32>
    %684 = arith.mulf %672, %607 : vector<8x128xf32>
    %685 = arith.addf %683, %684 : vector<8x128xf32>
    %c0_i32_208 = arith.constant 0 : i32
    %686 = vector.broadcast %c0_i32_208 : i32 to vector<8x1xi32>
    %687 = arith.cmpi sgt, %8, %686 : vector<8x1xi32>
    %688 = vector.shape_cast %687 : vector<8x1xi1> to vector<8x1xi1>
    %689 = vector.broadcast %688 : vector<8x1xi1> to vector<8x128xi1>
    %690 = arith.select %689, %685, %9 : vector<8x128xi1>, vector<8x128xf32>
    %691 = vector.shape_cast %690 : vector<8x128xf32> to vector<8x1x128xf32>
    %c0_209 = arith.constant 0 : index
    %c0_210 = arith.constant 0 : index
    %c128_211 = arith.constant 128 : index
    %692 = vector.load %arg11[%c0_209, %c0_210, %c128_211] : memref<8x8x256xf32, #tpu.memory_space<vmem>>, vector<8x1x128xf32>
    tpu.vector_store %arg11[%c0_209, %c0_210, %c128_211], %691 {strides = array<i32>} : memref<8x8x256xf32, #tpu.memory_space<vmem>>, vector<8x1x128xf32>,
    %c0_212 = arith.constant 0 : index
    %c0_213 = arith.constant 0 : index
    %c0_214 = arith.constant 0 : index
    %693 = vector.load %arg11[%c0_212, %c0_213, %c0_214] : memref<8x8x256xf32, #tpu.memory_space<vmem>>, vector<8x8x256xf32>
    %694 = vector.shape_cast %693 : vector<8x8x256xf32> to vector<64x256xf32>
    %695 = arith.truncf %694 : vector<64x256xf32> to vector<64x256xbf16>
    %c0_215 = arith.constant 0 : index
    %c0_216 = arith.constant 0 : index
    %696 = vector.load %arg10[%c0_215, %c0_216] : memref<256x128xbf16, #tpu.memory_space<vmem>>, vector<256x128xbf16>
    %cst_217 = arith.constant dense<0.000000e+00> : vector<64x128xf32>
    %697 = tpu.matmul %695, %696, %cst_217 {dimension_numbers = #tpu.dot_dimension_numbers<[1], [0], [0], [1], [0, 0, 1, 1], [], []>} : vector<64x256xbf16>, vector<256x128xbf16>, vector<64x128xf32> -> vector<64x128xf32>
    %698 = vector.shape_cast %697 : vector<64x128xf32> to vector<8x8x128xf32>
    %c0_218 = arith.constant 0 : index
    %c0_219 = arith.constant 0 : index
    %c0_220 = arith.constant 0 : index
    %699 = vector.load %arg9[%c0_218, %c0_219, %c0_220] : memref<8x4x128xf32, #tpu.memory_space<vmem>>, vector<8x4x128xf32>
    "tpu.trace_start"() <{level = 10 : i32, message = "bse,bke->bsk"}> : () -> ()
    %cst_221 = arith.constant dense<0.000000e+00> : vector<8x8x4xf32>
    %700 = tpu.matmul %698, %699, %cst_221 {dimension_numbers = #tpu.dot_dimension_numbers<[2], [2], [1], [1], [0, 0, 0, 1, 1, 1], [0], [0]>} : vector<8x8x128xf32>, vector<8x4x128xf32>, vector<8x8x4xf32> -> vector<8x8x4xf32>
    "tpu.trace_stop"() : () -> ()
    %cst_222 = arith.constant dense<0xFF800000> : vector<8x8xf32>
    %701 = vector.multi_reduction <maximumf>, %700, %cst_222 [2] : vector<8x8x4xf32> to vector<8x8xf32>
    %702 = vector.shape_cast %701 : vector<8x8xf32> to vector<8x8x1xf32>
    %703 = vector.broadcast %702 : vector<8x8x1xf32> to vector<8x8x4xf32>
    %704 = arith.subf %700, %703 : vector<8x8x4xf32>
    %705 = math.exp %704 : vector<8x8x4xf32>
    %cst_223 = arith.constant dense<0.000000e+00> : vector<8x8xf32>
    %706 = vector.multi_reduction <add>, %705, %cst_223 [2] : vector<8x8x4xf32> to vector<8x8xf32>
    %707 = vector.shape_cast %706 : vector<8x8xf32> to vector<8x8x1xf32>
    %708 = vector.broadcast %707 : vector<8x8x1xf32> to vector<8x8x4xf32>
    %709 = arith.divf %705, %708 : vector<8x8x4xf32>
    %c0_224 = arith.constant 0 : index
    %c0_225 = arith.constant 0 : index
    %c0_226 = arith.constant 0 : index
    %710 = vector.load %arg13[%c0_224, %c0_225, %c0_226] : memref<8x8x4xf32, #tpu.memory_space<vmem>>, vector<8x8x4xf32>
    tpu.vector_store %arg13[%c0_224, %c0_225, %c0_226], %709 {strides = array<i32>} : memref<8x8x4xf32, #tpu.memory_space<vmem>>, vector<8x8x4xf32>,
    "tpu.trace_start"() <{level = 10 : i32, message = "bsk,bke->bse"}> : () -> ()
    %cst_227 = arith.constant dense<0.000000e+00> : vector<8x8x128xf32>
    %711 = tpu.matmul %709, %699, %cst_227 {dimension_numbers = #tpu.dot_dimension_numbers<[2], [1], [1], [2], [0, 0, 0, 1, 1, 2], [0], [0]>} : vector<8x8x4xf32>, vector<8x4x128xf32>, vector<8x8x128xf32> -> vector<8x8x128xf32>
    "tpu.trace_stop"() : () -> ()
    %c0_228 = arith.constant 0 : index
    %c0_229 = arith.constant 0 : index
    %c0_230 = arith.constant 0 : index
    %712 = vector.load %arg12[%c0_228, %c0_229, %c0_230] : memref<8x8x128xf32, #tpu.memory_space<vmem>>, vector<8x8x128xf32>
    tpu.vector_store %arg12[%c0_228, %c0_229, %c0_230], %711 {strides = array<i32>} : memref<8x8x128xf32, #tpu.memory_space<vmem>>, vector<8x8x128xf32>,
    return
  }
  func.func @transform_0(%arg0: i32) -> (i32, i32, i32) {
    %c0_i32 = arith.constant 0 : i32
    %c0_i32_0 = arith.constant 0 : i32
    %c0_i32_1 = arith.constant 0 : i32
    return %c0_i32, %arg0, %c0_i32_0 : i32, i32, i32
  }
  func.func @transform_1(%arg0: i32) -> (i32, i32) {
    %c0_i32 = arith.constant 0 : i32
    %c0_i32_0 = arith.constant 0 : i32
    return %arg0, %c0_i32 : i32, i32
  }
  func.func @transform_2(%arg0: i32) -> (i32, i32) {
    %c0_i32 = arith.constant 0 : i32
    %c0_i32_0 = arith.constant 0 : i32
    %c0_i32_1 = arith.constant 0 : i32
    return %c0_i32, %c0_i32_0 : i32, i32
  }
  func.func @transform_3(%arg0: i32) -> (i32, i32) {
    %c0_i32 = arith.constant 0 : i32
    %c0_i32_0 = arith.constant 0 : i32
    %c0_i32_1 = arith.constant 0 : i32
    return %c0_i32, %c0_i32_0 : i32, i32
  }
  func.func @transform_4(%arg0: i32) -> (i32, i32) {
    %c0_i32 = arith.constant 0 : i32
    %c0_i32_0 = arith.constant 0 : i32
    %c0_i32_1 = arith.constant 0 : i32
    return %c0_i32, %c0_i32_0 : i32, i32
  }
  func.func @transform_5(%arg0: i32) -> (i32, i32) {
    %c0_i32 = arith.constant 0 : i32
    %c0_i32_0 = arith.constant 0 : i32
    %c0_i32_1 = arith.constant 0 : i32
    return %c0_i32, %c0_i32_0 : i32, i32
  }
  func.func @transform_6(%arg0: i32) -> (i32, i32) {
    %c0_i32 = arith.constant 0 : i32
    %c0_i32_0 = arith.constant 0 : i32
    %c0_i32_1 = arith.constant 0 : i32
    return %c0_i32, %c0_i32_0 : i32, i32
  }
  func.func @transform_7(%arg0: i32) -> (i32, i32) {
    %c0_i32 = arith.constant 0 : i32
    %c0_i32_0 = arith.constant 0 : i32
    %c0_i32_1 = arith.constant 0 : i32
    return %c0_i32, %c0_i32_0 : i32, i32
  }
  func.func @transform_8(%arg0: i32) -> (i32, i32, i32) {
    %c0_i32 = arith.constant 0 : i32
    %c0_i32_0 = arith.constant 0 : i32
    %c0_i32_1 = arith.constant 0 : i32
    return %arg0, %c0_i32, %c0_i32_0 : i32, i32, i32
  }
  func.func @transform_9(%arg0: i32) -> (i32, i32) {
    %c0_i32 = arith.constant 0 : i32
    %c0_i32_0 = arith.constant 0 : i32
    %c0_i32_1 = arith.constant 0 : i32
    return %c0_i32, %c0_i32_0 : i32, i32
  }
  func.func @transform_10(%arg0: i32) -> (i32, i32, i32) {
    %c0_i32 = arith.constant 0 : i32
    %c0_i32_0 = arith.constant 0 : i32
    %c0_i32_1 = arith.constant 0 : i32
    return %arg0, %c0_i32, %c0_i32_0 : i32, i32, i32
  }
  func.func @transform_11(%arg0: i32) -> (i32, i32, i32) {
    %c0_i32 = arith.constant 0 : i32
    %c0_i32_0 = arith.constant 0 : i32
    %c0_i32_1 = arith.constant 0 : i32
    return %arg0, %c0_i32, %c0_i32_0 : i32, i32, i32
  }
  func.func @transform_12(%arg0: i32) -> (i32, i32, i32) {
    %c0_i32 = arith.constant 0 : i32
    %c0_i32_0 = arith.constant 0 : i32
    %c0_i32_1 = arith.constant 0 : i32
    return %arg0, %c0_i32, %c0_i32_0 : i32, i32, i32
  }
}

</mosaic_0001>

<llo_original>
// kernel: tpu_custom_call.1
$region0: #{tpu_custom_call.1}
  #allocation0 [shape = 'u32[]', space=smem, size = 0x4, offset = 0x4, fixed_abs, tag = 'smem constant byte address 0x4 - core index']
  #allocation1 [shape = 'u32[144,128]{1,0:T(1,128)}', space=vmem, size = 0x12000, scoped, tag = 'internal scratch']
  #allocation2 [shape = 'f32[64,768]{1,0:T(8,128)}', space=vmem, size = 0x30000, scoped, tag = 'scratch operand']
  %s0 = inlined_call_operand.hbm [shape: bf16[8,8,32], index: 0, kind: input, shape index: {}]
  %s1 = inlined_call_operand.vmem [shape: s32[8,1], index: 1, kind: input, shape index: {}]
  %s2 = inlined_call_operand.hbm [shape: bf16[32,768], index: 2, kind: input, shape index: {}]
  %s3 = inlined_call_operand.vmem [shape: f32[1,768], index: 3, kind: input, shape index: {}]
  %s4 = inlined_call_operand.hbm [shape: bf16[128,384], index: 4, kind: input, shape index: {}]
  %s5 = inlined_call_operand.vmem [shape: f32[1,128], index: 5, kind: input, shape index: {}]
  %s6 = inlined_call_operand.hbm [shape: bf16[128,384], index: 6, kind: input, shape index: {}]
  %s7 = inlined_call_operand.hbm [shape: f32[1,128], index: 7, kind: input, shape index: {}]
  %s8 = inlined_call_operand.vmem [shape: f32[8,4,128], index: 8, kind: input, shape index: {}]
  %s9 = inlined_call_operand.hbm [shape: bf16[256,128], index: 9, kind: input, shape index: {}]
  %s10 = inlined_call_operand.hbm [shape: f32[8,8,256], index: 10, kind: output, shape index: {0}]
  %s11 = inlined_call_operand.hbm [shape: f32[8,8,128], index: 11, kind: output, shape index: {1}]
  %s12 = inlined_call_operand.vmem [shape: f32[8,8,4], index: 12, kind: output, shape index: {2}]
  %13 = xla_tuple %s10, %s11, %s12
  %s14 = sld [smem:[#allocation0]]
  $region90: #{tpu_custom_call.1} parent=0
    _
  %s16 = ssub.s32 1, %s14
  %s17 = scalar_select 0, %s16, %s14
  $region1: #{tpu_custom_call.1} parent=0
    #allocation3 [shape = 'u8[16384]{0}', space=vmem, size = 0x4000, scoped, tag = 'input window, operand 0, single buffered']
    #allocation4 [shape = 's32[1]{0}', space=sflag, size = 0x4, scoped, tag = 'scoped memory for tpu_custom_call.1']
    #allocation5 [shape = 's32[1]{0}', space=sflag, size = 0x4, scoped, tag = 'scoped memory for tpu_custom_call.1']
    #allocation6 [shape = 'u8[49152]{0}', space=vmem, size = 0xc000, scoped, tag = 'input window, operand 2, single buffered']
    #allocation7 [shape = 's32[1]{0}', space=sflag, size = 0x4, scoped, tag = 'scoped memory for tpu_custom_call.1']
    #allocation8 [shape = 'u8[98304]{0}', space=vmem, size = 0x18000, scoped, tag = 'input window, operand 4, single buffered']
    #allocation9 [shape = 'u8[98304]{0}', space=vmem, size = 0x18000, scoped, tag = 'input window, operand 6, single buffered']
    #allocation10 [shape = 's32[1]{0}', space=sflag, size = 0x4, scoped, tag = 'scoped memory for tpu_custom_call.1']
    #allocation11 [shape = 'u8[512]{0}', space=vmem, size = 0x400, scoped, tag = 'input window, operand 7, single buffered']
    #allocation12 [shape = 'u8[65536]{0}', space=vmem, size = 0x10000, scoped, tag = 'input window, operand 9, single buffered']
    #allocation13 [shape = 's32[1]{0}', space=sflag, size = 0x4, scoped, tag = 'scoped memory for tpu_custom_call.1']
    #allocation14 [shape = 'u8[65536]{0}', space=vmem, size = 0x10000, scoped, tag = 'output window, operand 0, single buffered']
    #allocation15 [shape = 'u8[32768]{0}', space=vmem, size = 0x8000, scoped, tag = 'output window, operand 1, single buffered']
    #allocation16 [shape = 's32[1]{0}', space=sflag, size = 0x4, scoped, tag = 'scoped memory for tpu_custom_call.1']
    %18 = vsyncpa [#allocation4], 0
    %19 = vsyncpa [#allocation7], 0
    %20 = vsyncpa [#allocation10], 0
    %21 = vsyncpa [#allocation13], 0
    %22 = vsyncpa [#allocation5], 0
    %23 = vsyncpa [#allocation16], 0
    // Predicated region
    $region2: #{tpu_custom_call.1} parent=1 // pred_check
      _
    $region3: #{tpu_custom_call.1} parent=1 // pred_check_branch
      %25 = sbr.rel (0) target = $region5
    $region4: #{tpu_custom_call.1} parent=1 // pred_region
      %s27 = ssub.s32 512, 512
      %28 = vsyncadd [#allocation4], %s27
      %s29 = sshll.u32 [#allocation3], 4
      %s30 = int_to_ptr.vmem [resolvable:$true] %s29
      %35 = dma.hbm_to_vmem [thread:$0]  %s0, 512, %s30, [#allocation4], 64, 64, 4
    $region5: #{tpu_custom_call.1} parent=1 // pred_fallthru
      _
    // Predicated region
    $region6: #{tpu_custom_call.1} parent=1 // pred_check
      _
    $region7: #{tpu_custom_call.1} parent=1 // pred_check_branch
      %37 = sbr.rel (0) target = $region9
    $region8: #{tpu_custom_call.1} parent=1 // pred_region
      _
    $region9: #{tpu_custom_call.1} parent=1 // pred_fallthru
      _
    // Predicated region
    $region10: #{tpu_custom_call.1} parent=1 // pred_check
      _
    $region11: #{tpu_custom_call.1} parent=1 // pred_check_branch
      %39 = sbr.rel (0) target = $region13
    $region12: #{tpu_custom_call.1} parent=1 // pred_region
      %s41 = ssub.s32 1536, 1536
      %42 = vsyncadd [#allocation7], %s41
      %s43 = sshll.u32 [#allocation6], 4
      %s44 = int_to_ptr.vmem [resolvable:$true] %s43
      %49 = dma.hbm_to_vmem [thread:$0]  %s2, 1536, %s44, [#allocation7], 384, 384, 24
    $region13: #{tpu_custom_call.1} parent=1 // pred_fallthru
      _
    // Predicated region
    $region14: #{tpu_custom_call.1} parent=1 // pred_check
      _
    $region15: #{tpu_custom_call.1} parent=1 // pred_check_branch
      %51 = sbr.rel (0) target = $region17
    $region16: #{tpu_custom_call.1} parent=1 // pred_region
      _
    $region17: #{tpu_custom_call.1} parent=1 // pred_fallthru
      _
    // Predicated region
    $region18: #{tpu_custom_call.1} parent=1 // pred_check
      _
    $region19: #{tpu_custom_call.1} parent=1 // pred_check_branch
      %53 = sbr.rel (0) target = $region21
    $region20: #{tpu_custom_call.1} parent=1 // pred_region
      %s55 = ssub.s32 3072, 3072
      %56 = vsyncadd [#allocation7], %s55
      %s57 = sshll.u32 [#allocation8], 4
      %s58 = int_to_ptr.vmem [resolvable:$true] %s57
      %63 = dma.hbm_to_vmem [thread:$0]  %s4, 3072, %s58, [#allocation7], 192, 192, 12
    $region21: #{tpu_custom_call.1} parent=1 // pred_fallthru
      _
    // Predicated region
    $region22: #{tpu_custom_call.1} parent=1 // pred_check
      _
    $region23: #{tpu_custom_call.1} parent=1 // pred_check_branch
      %65 = sbr.rel (0) target = $region25
    $region24: #{tpu_custom_call.1} parent=1 // pred_region
      _
    $region25: #{tpu_custom_call.1} parent=1 // pred_fallthru
      _
    // Predicated region
    $region26: #{tpu_custom_call.1} parent=1 // pred_check
      _
    $region27: #{tpu_custom_call.1} parent=1 // pred_check_branch
      %67 = sbr.rel (0) target = $region29
    $region28: #{tpu_custom_call.1} parent=1 // pred_region
      %s69 = ssub.s32 3072, 3072
      %70 = vsyncadd [#allocation10], %s69
      %s71 = sshll.u32 [#allocation9], 4
      %s72 = int_to_ptr.vmem [resolvable:$true] %s71
      %77 = dma.hbm_to_vmem [thread:$0]  %s6, 3072, %s72, [#allocation10], 192, 192, 12
    $region29: #{tpu_custom_call.1} parent=1 // pred_fallthru
      _
    // Predicated region
    $region30: #{tpu_custom_call.1} parent=1 // pred_check
      _
    $region31: #{tpu_custom_call.1} parent=1 // pred_check_branch
      %79 = sbr.rel (0) target = $region33
    $region32: #{tpu_custom_call.1} parent=1 // pred_region
      %s81 = ssub.s32 16, 16
      %82 = vsyncadd [#allocation10], %s81
      %s84 = sshll.u32 [#allocation11], 4
      %s85 = int_to_ptr.vmem [resolvable:$true] %s84
      %87 = dma.hbm_to_vmem [thread:$0]  %s7, 16, %s85, [#allocation10]
    $region33: #{tpu_custom_call.1} parent=1 // pred_fallthru
      _
    // Predicated region
    $region34: #{tpu_custom_call.1} parent=1 // pred_check
      _
    $region35: #{tpu_custom_call.1} parent=1 // pred_check_branch
      %89 = sbr.rel (0) target = $region37
    $region36: #{tpu_custom_call.1} parent=1 // pred_region
      _
    $region37: #{tpu_custom_call.1} parent=1 // pred_fallthru
      _
    // Predicated region
    $region38: #{tpu_custom_call.1} parent=1 // pred_check
      _
    $region39: #{tpu_custom_call.1} parent=1 // pred_check_branch
      %91 = sbr.rel (0) target = $region41
    $region40: #{tpu_custom_call.1} parent=1 // pred_region
      %s93 = ssub.s32 2048, 2048
      %94 = vsyncadd [#allocation13], %s93
      %s95 = sshll.u32 [#allocation12], 4
      %s96 = int_to_ptr.vmem [resolvable:$true] %s95
      %101 = dma.hbm_to_vmem [thread:$0]  %s9, 2048, %s96, [#allocation13], 64, 64, 4
    $region41: #{tpu_custom_call.1} parent=1 // pred_fallthru
      _
    // Predicated region
    $region42: #{tpu_custom_call.1} parent=1 // pred_check
      _
    $region43: #{tpu_custom_call.1} parent=1 // pred_check_branch
      %103 = sbr.rel (0) target = $region45
    $region44: #{tpu_custom_call.1} parent=1 // pred_region
      %104 = dma.done [#allocation4], 512
    $region45: #{tpu_custom_call.1} parent=1 // pred_fallthru
      _
    // Predicated region
    $region46: #{tpu_custom_call.1} parent=1 // pred_check
      _
    $region47: #{tpu_custom_call.1} parent=1 // pred_check_branch
      %106 = sbr.rel (0) target = $region49
    $region48: #{tpu_custom_call.1} parent=1 // pred_region
      %107 = dma.done [#allocation7], 1536
    $region49: #{tpu_custom_call.1} parent=1 // pred_fallthru
      _
    // Predicated region
    $region50: #{tpu_custom_call.1} parent=1 // pred_check
      _
    $region51: #{tpu_custom_call.1} parent=1 // pred_check_branch
      %109 = sbr.rel (0) target = $region53
    $region52: #{tpu_custom_call.1} parent=1 // pred_region
      %110 = dma.done [#allocation7], 3072
    $region53: #{tpu_custom_call.1} parent=1 // pred_fallthru
      _
    // Predicated region
    $region54: #{tpu_custom_call.1} parent=1 // pred_check
      _
    $region55: #{tpu_custom_call.1} parent=1 // pred_check_branch
      %112 = sbr.rel (0) target = $region57
    $region56: #{tpu_custom_call.1} parent=1 // pred_region
      %113 = dma.done [#allocation10], 3072
    $region57: #{tpu_custom_call.1} parent=1 // pred_fallthru
      _
    // Predicated region
    $region58: #{tpu_custom_call.1} parent=1 // pred_check
      _
    $region59: #{tpu_custom_call.1} parent=1 // pred_check_branch
      %115 = sbr.rel (0) target = $region61
    $region60: #{tpu_custom_call.1} parent=1 // pred_region
      %116 = dma.done [#allocation10], 16
    $region61: #{tpu_custom_call.1} parent=1 // pred_fallthru
      _
    // Predicated region
    $region62: #{tpu_custom_call.1} parent=1 // pred_check
      _
    $region63: #{tpu_custom_call.1} parent=1 // pred_check_branch
      %118 = sbr.rel (0) target = $region65
    $region64: #{tpu_custom_call.1} parent=1 // pred_region
      %119 = dma.done [#allocation13], 2048
    $region65: #{tpu_custom_call.1} parent=1 // pred_fallthru
      _
    %v121 = vld [vmem:[#allocation3] sm:$0xf]
    %v122 = vld [vmem:[#allocation3 + $0x4] sm:$0xf]
    %v123 = vld [vmem:[#allocation3 + $0x8] sm:$0xf]
    %v124 = vld [vmem:[#allocation3 + $0xc] sm:$0xf]
    %v125 = vld [vmem:[#allocation3 + $0x10] sm:$0xf]
    %v126 = vld [vmem:[#allocation3 + $0x14] sm:$0xf]
    %v127 = vld [vmem:[#allocation3 + $0x18] sm:$0xf]
    %v128 = vld [vmem:[#allocation3 + $0x1c] sm:$0xf]
    %v129 = vld [vmem:[#allocation6] sm:$0xff]
    %v130 = vld [vmem:[#allocation6 + $0x8] sm:$0xff]
    %v131 = vld [vmem:[#allocation6 + $0x10] sm:$0xff]
    %v132 = vld [vmem:[#allocation6 + $0x18] sm:$0xff]
    %v133 = vld [vmem:[#allocation6 + $0x20] sm:$0xff]
    %v134 = vld [vmem:[#allocation6 + $0x28] sm:$0xff]
    %v135 = vld [vmem:[#allocation6 + $0x30] sm:$0xff]
    %v136 = vld [vmem:[#allocation6 + $0x38] sm:$0xff]
    %v137 = vld [vmem:[#allocation6 + $0x40] sm:$0xff]
    %v138 = vld [vmem:[#allocation6 + $0x48] sm:$0xff]
    %v139 = vld [vmem:[#allocation6 + $0x50] sm:$0xff]
    %v140 = vld [vmem:[#allocation6 + $0x58] sm:$0xff]
    %v141 = vld [vmem:[%s3] sm:$0x3f]
    %v143 = vlaneseq
    %v144 = vshrl.u32 %v143, 7
    %v145 = vsub.s32 0, %v144
    %v146 = vrot.slane %v141, %v145
    %v147 = vlaneseq
    %v148 = vshrl.u32 %v147, 7
    %v149 = vsub.s32 1, %v148
    %v150 = vrot.slane %v141, %v149
    %v151 = vlaneseq
    %v152 = vshrl.u32 %v151, 7
    %v153 = vsub.s32 2, %v152
    %v154 = vrot.slane %v141, %v153
    %v155 = vlaneseq
    %v156 = vshrl.u32 %v155, 7
    %v157 = vsub.s32 3, %v156
    %v158 = vrot.slane %v141, %v157
    %v159 = vlaneseq
    %v160 = vshrl.u32 %v159, 7
    %v161 = vsub.s32 4, %v160
    %v162 = vrot.slane %v141, %v161
    %v163 = vlaneseq
    %v164 = vshrl.u32 %v163, 7
    %v165 = vsub.s32 5, %v164
    %v166 = vrot.slane %v141, %v165
    %v181 = vunpack.c.l.b16 %v121
    %v182 = vunpack.c.l.b16 %v122
    %v183 = vunpack.c.l.b16 %v123
    %v184 = vunpack.c.l.b16 %v124
    %v185 = vunpack.c.l.b16 %v125
    %v186 = vunpack.c.l.b16 %v126
    %v187 = vunpack.c.l.b16 %v127
    %v188 = vunpack.c.l.b16 %v128
    %v189 = vpack.c.b16 %v182, %v181
    %v190 = vpack.c.b16 %v184, %v183
    %v191 = vpack.c.b16 %v186, %v185
    %v192 = vpack.c.b16 %v188, %v187
    %v205 = vunpack.c.l.b16 %v129
    %v206 = vunpack.c.h.b16 %v129
    %v207 = vunpack.c.l.b16 %v130
    %v208 = vunpack.c.h.b16 %v130
    %v209 = vunpack.c.l.b16 %v131
    %v210 = vunpack.c.h.b16 %v131
    %v211 = vunpack.c.l.b16 %v132
    %v212 = vunpack.c.h.b16 %v132
    %v213 = vunpack.c.l.b16 %v133
    %v214 = vunpack.c.h.b16 %v133
    %v215 = vunpack.c.l.b16 %v134
    %v216 = vunpack.c.h.b16 %v134
    %v217 = vunpack.c.l.b16 %v135
    %v218 = vunpack.c.h.b16 %v135
    %v219 = vunpack.c.l.b16 %v136
    %v220 = vunpack.c.h.b16 %v136
    %v221 = vunpack.c.l.b16 %v137
    %v222 = vunpack.c.h.b16 %v137
    %v223 = vunpack.c.l.b16 %v138
    %v224 = vunpack.c.h.b16 %v138
    %v225 = vunpack.c.l.b16 %v139
    %v226 = vunpack.c.h.b16 %v139
    %v227 = vunpack.c.l.b16 %v140
    %v228 = vunpack.c.h.b16 %v140
    %v229 = vpack.c.b16 %v211, %v205
    %v230 = vpack.c.b16 %v212, %v206
    %v231 = vpack.c.b16 %v213, %v207
    %v232 = vpack.c.b16 %v214, %v208
    %v233 = vpack.c.b16 %v215, %v209
    %v234 = vpack.c.b16 %v216, %v210
    %v235 = vpack.c.b16 %v223, %v217
    %v236 = vpack.c.b16 %v224, %v218
    %v237 = vpack.c.b16 %v225, %v219
    %v238 = vpack.c.b16 %v226, %v220
    %v239 = vpack.c.b16 %v227, %v221
    %v240 = vpack.c.b16 %v228, %v222
    %vm253 = vcmask 261120
    %v255 = vsel %vm253, %v189, 0
    %v258 = vsel %vm253, %v190, 0
    %v261 = vsel %vm253, %v191, 0
    %v264 = vsel %vm253, %v192, 0
    %266 = vmatprep.subr.bf16.mxu0 %v230
    %267 = vmatpush1.bf16.msra.mxu0 %v229
    %268 = vmatprep.subr.bf16.mxu0 %v236
    %269 = vmatpush1.bf16.msra.mxu0 %v235
    %270 = vmatprep.subr.bf16.mxu0 0
    %271 = vmatpush1.bf16.msra.mxu0 0
    %272 = vmatprep.subr.bf16.mxu0 0
    %273 = vmatpush1.bf16.msra.mxu0 0
    %274 = vmatprep.subr.bf16.mxu0 0
    %275 = vmatpush1.bf16.msra.mxu0 0
    %276 = vmatprep.subr.bf16.mxu0 0
    %277 = vmatpush1.bf16.msra.mxu0 0
    %278 = vmatprep.subr.bf16.mxu0 0
    %279 = vmatpush1.bf16.msra.mxu0 0
    %280 = vmatprep.subr.bf16.mxu0 0
    %281 = vmatpush1.bf16.msra.mxu0 0
    %282 = vmatprep.subr.bf16.mxu0 0
    %283 = vmatpush1.bf16.msra.mxu0 0
    %284 = vmatprep.subr.bf16.mxu0 0
    %285 = vmatpush1.bf16.msra.mxu0 0
    %286 = vmatprep.subr.bf16.mxu0 0
    %287 = vmatpush1.bf16.msra.mxu0 0
    %288 = vmatprep.subr.bf16.mxu0 0
    %289 = vmatpush1.bf16.msra.mxu0 0
    %290 = vmatprep.subr.bf16.mxu0 0
    %291 = vmatpush1.bf16.msra.mxu0 0
    %292 = vmatprep.subr.bf16.mxu0 0
    %293 = vmatpush1.bf16.msra.mxu0 0
    %294 = vmatprep.subr.bf16.mxu0 0
    %295 = vmatpush1.bf16.msra.mxu0 0
    %296 = vmatprep.subr.bf16.mxu0 0
    %297 = vmatpush1.bf16.msra.mxu0 0
    %298 = vmatprep.mubr.bf16.mxu0 0
    %299 = vmatmul.mubr.bf16.gmra.mrb[0].mxu0 %v255
    %v300 = vpop.f32.mrb[0].mxu0
    %v301 = vadd.f32 %v146, %v300
    %v302 = vpop.f32.mrb[0].mxu0
    %v303 = vadd.f32 %v150, %v302
    %v304 = vpop.f32.mrb[0].mxu0
    %v305 = vadd.f32 %v146, %v304
    %v306 = vpop.f32.mrb[0].mxu0
    %v307 = vadd.f32 %v150, %v306
    %308 = vmatprep.mubr.bf16.mxu0 0
    %309 = vmatmul.mubr.bf16.gmra.mrb[0].mxu0 %v258
    %v310 = vpop.f32.mrb[0].mxu0
    %v311 = vadd.f32 %v146, %v310
    %v312 = vpop.f32.mrb[0].mxu0
    %v313 = vadd.f32 %v150, %v312
    %v314 = vpop.f32.mrb[0].mxu0
    %v315 = vadd.f32 %v146, %v314
    %v316 = vpop.f32.mrb[0].mxu0
    %v317 = vadd.f32 %v150, %v316
    %318 = vmatprep.mubr.bf16.mxu0 0
    %319 = vmatmul.mubr.bf16.gmra.mrb[0].mxu0 %v261
    %v320 = vpop.f32.mrb[0].mxu0
    %v321 = vadd.f32 %v146, %v320
    %v322 = vpop.f32.mrb[0].mxu0
    %v323 = vadd.f32 %v150, %v322
    %v324 = vpop.f32.mrb[0].mxu0
    %v325 = vadd.f32 %v146, %v324
    %v326 = vpop.f32.mrb[0].mxu0
    %v327 = vadd.f32 %v150, %v326
    %328 = vmatprep.mubr.bf16.mxu0 0
    %329 = vmatmul.mubr.bf16.gmra.mrb[0].mxu0 %v264
    %v330 = vpop.f32.mrb[0].mxu0
    %v331 = vadd.f32 %v146, %v330
    %v332 = vpop.f32.mrb[0].mxu0
    %v333 = vadd.f32 %v150, %v332
    %v334 = vpop.f32.mrb[0].mxu0
    %v335 = vadd.f32 %v146, %v334
    %v336 = vpop.f32.mrb[0].mxu0
    %v337 = vadd.f32 %v150, %v336
    %338 = vdwg.mxu0
    %339 = vmatprep.subr.bf16.mxu0 %v232
    %340 = vmatpush1.bf16.msra.mxu0 %v231
    %341 = vmatprep.subr.bf16.mxu0 %v238
    %342 = vmatpush1.bf16.msra.mxu0 %v237
    %343 = vmatprep.subr.bf16.mxu0 0
    %344 = vmatpush1.bf16.msra.mxu0 0
    %345 = vmatprep.subr.bf16.mxu0 0
    %346 = vmatpush1.bf16.msra.mxu0 0
    %347 = vmatprep.subr.bf16.mxu0 0
    %348 = vmatpush1.bf16.msra.mxu0 0
    %349 = vmatprep.subr.bf16.mxu0 0
    %350 = vmatpush1.bf16.msra.mxu0 0
    %351 = vmatprep.subr.bf16.mxu0 0
    %352 = vmatpush1.bf16.msra.mxu0 0
    %353 = vmatprep.subr.bf16.mxu0 0
    %354 = vmatpush1.bf16.msra.mxu0 0
    %355 = vmatprep.subr.bf16.mxu0 0
    %356 = vmatpush1.bf16.msra.mxu0 0
    %357 = vmatprep.subr.bf16.mxu0 0
    %358 = vmatpush1.bf16.msra.mxu0 0
    %359 = vmatprep.subr.bf16.mxu0 0
    %360 = vmatpush1.bf16.msra.mxu0 0
    %361 = vmatprep.subr.bf16.mxu0 0
    %362 = vmatpush1.bf16.msra.mxu0 0
    %363 = vmatprep.subr.bf16.mxu0 0
    %364 = vmatpush1.bf16.msra.mxu0 0
    %365 = vmatprep.subr.bf16.mxu0 0
    %366 = vmatpush1.bf16.msra.mxu0 0
    %367 = vmatprep.subr.bf16.mxu0 0
    %368 = vmatpush1.bf16.msra.mxu0 0
    %369 = vmatprep.subr.bf16.mxu0 0
    %370 = vmatpush1.bf16.msra.mxu0 0
    %371 = vmatprep.mubr.bf16.mxu0 0
    %372 = vmatmul.mubr.bf16.gmra.mrb[0].mxu0 %v255
    %v373 = vpop.f32.mrb[0].mxu0
    %v374 = vadd.f32 %v154, %v373
    %v375 = vpop.f32.mrb[0].mxu0
    %v376 = vadd.f32 %v158, %v375
    %v377 = vpop.f32.mrb[0].mxu0
    %v378 = vadd.f32 %v154, %v377
    %v379 = vpop.f32.mrb[0].mxu0
    %v380 = vadd.f32 %v158, %v379
    %381 = vmatprep.mubr.bf16.mxu0 0
    %382 = vmatmul.mubr.bf16.gmra.mrb[0].mxu0 %v258
    %v383 = vpop.f32.mrb[0].mxu0
    %v384 = vadd.f32 %v154, %v383
    %v385 = vpop.f32.mrb[0].mxu0
    %v386 = vadd.f32 %v158, %v385
    %v387 = vpop.f32.mrb[0].mxu0
    %v388 = vadd.f32 %v154, %v387
    %v389 = vpop.f32.mrb[0].mxu0
    %v390 = vadd.f32 %v158, %v389
    %391 = vmatprep.mubr.bf16.mxu0 0
    %392 = vmatmul.mubr.bf16.gmra.mrb[0].mxu0 %v261
    %v393 = vpop.f32.mrb[0].mxu0
    %v394 = vadd.f32 %v154, %v393
    %v395 = vpop.f32.mrb[0].mxu0
    %v396 = vadd.f32 %v158, %v395
    %v397 = vpop.f32.mrb[0].mxu0
    %v398 = vadd.f32 %v154, %v397
    %v399 = vpop.f32.mrb[0].mxu0
    %v400 = vadd.f32 %v158, %v399
    %401 = vmatprep.mubr.bf16.mxu0 0
    %402 = vmatmul.mubr.bf16.gmra.mrb[0].mxu0 %v264
    %v403 = vpop.f32.mrb[0].mxu0
    %v404 = vadd.f32 %v154, %v403
    %v405 = vpop.f32.mrb[0].mxu0
    %v406 = vadd.f32 %v158, %v405
    %v407 = vpop.f32.mrb[0].mxu0
    %v408 = vadd.f32 %v154, %v407
    %v409 = vpop.f32.mrb[0].mxu0
    %v410 = vadd.f32 %v158, %v409
    %411 = vdwg.mxu0
    %412 = vmatprep.subr.bf16.mxu0 %v234
    %413 = vmatpush1.bf16.msra.mxu0 %v233
    %414 = vmatprep.subr.bf16.mxu0 %v240
    %415 = vmatpush1.bf16.msra.mxu0 %v239
    %416 = vmatprep.subr.bf16.mxu0 0
    %417 = vmatpush1.bf16.msra.mxu0 0
    %418 = vmatprep.subr.bf16.mxu0 0
    %419 = vmatpush1.bf16.msra.mxu0 0
    %420 = vmatprep.subr.bf16.mxu0 0
    %421 = vmatpush1.bf16.msra.mxu0 0
    %422 = vmatprep.subr.bf16.mxu0 0
    %423 = vmatpush1.bf16.msra.mxu0 0
    %424 = vmatprep.subr.bf16.mxu0 0
    %425 = vmatpush1.bf16.msra.mxu0 0
    %426 = vmatprep.subr.bf16.mxu0 0
    %427 = vmatpush1.bf16.msra.mxu0 0
    %428 = vmatprep.subr.bf16.mxu0 0
    %429 = vmatpush1.bf16.msra.mxu0 0
    %430 = vmatprep.subr.bf16.mxu0 0
    %431 = vmatpush1.bf16.msra.mxu0 0
    %432 = vmatprep.subr.bf16.mxu0 0
    %433 = vmatpush1.bf16.msra.mxu0 0
    %434 = vmatprep.subr.bf16.mxu0 0
    %435 = vmatpush1.bf16.msra.mxu0 0
    %436 = vmatprep.subr.bf16.mxu0 0
    %437 = vmatpush1.bf16.msra.mxu0 0
    %438 = vmatprep.subr.bf16.mxu0 0
    %439 = vmatpush1.bf16.msra.mxu0 0
    %440 = vmatprep.subr.bf16.mxu0 0
    %441 = vmatpush1.bf16.msra.mxu0 0
    %442 = vmatprep.subr.bf16.mxu0 0
    %443 = vmatpush1.bf16.msra.mxu0 0
    %444 = vmatprep.mubr.bf16.mxu0 0
    %445 = vmatmul.mubr.bf16.gmra.mrb[0].mxu0 %v255
    %v446 = vpop.f32.mrb[0].mxu0
    %v447 = vadd.f32 %v162, %v446
    %v448 = vpop.f32.mrb[0].mxu0
    %v449 = vadd.f32 %v166, %v448
    %v450 = vpop.f32.mrb[0].mxu0
    %v451 = vadd.f32 %v162, %v450
    %v452 = vpop.f32.mrb[0].mxu0
    %v453 = vadd.f32 %v166, %v452
    %454 = vmatprep.mubr.bf16.mxu0 0
    %455 = vmatmul.mubr.bf16.gmra.mrb[0].mxu0 %v258
    %v456 = vpop.f32.mrb[0].mxu0
    %v457 = vadd.f32 %v162, %v456
    %v458 = vpop.f32.mrb[0].mxu0
    %v459 = vadd.f32 %v166, %v458
    %v460 = vpop.f32.mrb[0].mxu0
    %v461 = vadd.f32 %v162, %v460
    %v462 = vpop.f32.mrb[0].mxu0
    %v463 = vadd.f32 %v166, %v462
    %464 = vmatprep.mubr.bf16.mxu0 0
    %465 = vmatmul.mubr.bf16.gmra.mrb[0].mxu0 %v261
    %v466 = vpop.f32.mrb[0].mxu0
    %v467 = vadd.f32 %v162, %v466
    %v468 = vpop.f32.mrb[0].mxu0
    %v469 = vadd.f32 %v166, %v468
    %v470 = vpop.f32.mrb[0].mxu0
    %v471 = vadd.f32 %v162, %v470
    %v472 = vpop.f32.mrb[0].mxu0
    %v473 = vadd.f32 %v166, %v472
    %474 = vmatprep.mubr.bf16.mxu0 0
    %475 = vmatmul.mubr.bf16.gmra.mrb[0].mxu0 %v264
    %v476 = vpop.f32.mrb[0].mxu0
    %v477 = vadd.f32 %v162, %v476
    %v478 = vpop.f32.mrb[0].mxu0
    %v479 = vadd.f32 %v166, %v478
    %v480 = vpop.f32.mrb[0].mxu0
    %v481 = vadd.f32 %v162, %v480
    %v482 = vpop.f32.mrb[0].mxu0
    %v483 = vadd.f32 %v166, %v482
    %484 = vdwg.mxu0
    %485 = vst [vmem:[#allocation2] sm:$0xff] %v301
    %486 = vst [vmem:[#allocation2 + $0x8] sm:$0xff] %v303
    %487 = vst [vmem:[#allocation2 + $0x10] sm:$0xff] %v374
    %488 = vst [vmem:[#allocation2 + $0x18] sm:$0xff] %v376
    %489 = vst [vmem:[#allocation2 + $0x20] sm:$0xff] %v447
    %490 = vst [vmem:[#allocation2 + $0x28] sm:$0xff] %v449
    %491 = vst [vmem:[#allocation2 + $0x30] sm:$0xff] %v305
    %492 = vst [vmem:[#allocation2 + $0x38] sm:$0xff] %v307
    %493 = vst [vmem:[#allocation2 + $0x40] sm:$0xff] %v378
    %494 = vst [vmem:[#allocation2 + $0x48] sm:$0xff] %v380
    %495 = vst [vmem:[#allocation2 + $0x50] sm:$0xff] %v451
    %496 = vst [vmem:[#allocation2 + $0x58] sm:$0xff] %v453
    %497 = vst [vmem:[#allocation2 + $0x60] sm:$0xff] %v311
    %498 = vst [vmem:[#allocation2 + $0x68] sm:$0xff] %v313
    %499 = vst [vmem:[#allocation2 + $0x70] sm:$0xff] %v384
    %500 = vst [vmem:[#allocation2 + $0x78] sm:$0xff] %v386
    %501 = vst [vmem:[#allocation2 + $0x80] sm:$0xff] %v457
    %502 = vst [vmem:[#allocation2 + $0x88] sm:$0xff] %v459
    %503 = vst [vmem:[#allocation2 + $0x90] sm:$0xff] %v315
    %504 = vst [vmem:[#allocation2 + $0x98] sm:$0xff] %v317
    %505 = vst [vmem:[#allocation2 + $0xa0] sm:$0xff] %v388
    %506 = vst [vmem:[#allocation2 + $0xa8] sm:$0xff] %v390
    %507 = vst [vmem:[#allocation2 + $0xb0] sm:$0xff] %v461
    %508 = vst [vmem:[#allocation2 + $0xb8] sm:$0xff] %v463
    %509 = vst [vmem:[#allocation2 + $0xc0] sm:$0xff] %v321
    %510 = vst [vmem:[#allocation2 + $0xc8] sm:$0xff] %v323
    %511 = vst [vmem:[#allocation2 + $0xd0] sm:$0xff] %v394
    %512 = vst [vmem:[#allocation2 + $0xd8] sm:$0xff] %v396
    %513 = vst [vmem:[#allocation2 + $0xe0] sm:$0xff] %v467
    %514 = vst [vmem:[#allocation2 + $0xe8] sm:$0xff] %v469
    %515 = vst [vmem:[#allocation2 + $0xf0] sm:$0xff] %v325
    %516 = vst [vmem:[#allocation2 + $0xf8] sm:$0xff] %v327
    %517 = vst [vmem:[#allocation2 + $0x100] sm:$0xff] %v398
    %518 = vst [vmem:[#allocation2 + $0x108] sm:$0xff] %v400
    %519 = vst [vmem:[#allocation2 + $0x110] sm:$0xff] %v471
    %520 = vst [vmem:[#allocation2 + $0x118] sm:$0xff] %v473
    %521 = vst [vmem:[#allocation2 + $0x120] sm:$0xff] %v331
    %522 = vst [vmem:[#allocation2 + $0x128] sm:$0xff] %v333
    %523 = vst [vmem:[#allocation2 + $0x130] sm:$0xff] %v404
    %524 = vst [vmem:[#allocation2 + $0x138] sm:$0xff] %v406
    %525 = vst [vmem:[#allocation2 + $0x140] sm:$0xff] %v477
    %526 = vst [vmem:[#allocation2 + $0x148] sm:$0xff] %v479
    %527 = vst [vmem:[#allocation2 + $0x150] sm:$0xff] %v335
    %528 = vst [vmem:[#allocation2 + $0x158] sm:$0xff] %v337
    %529 = vst [vmem:[#allocation2 + $0x160] sm:$0xff] %v408
    %530 = vst [vmem:[#allocation2 + $0x168] sm:$0xff] %v410
    %531 = vst [vmem:[#allocation2 + $0x170] sm:$0xff] %v481
    %532 = vst [vmem:[#allocation2 + $0x178] sm:$0xff] %v483
    %v533 = vld [vmem:[%s1] sm:$0xff]
    %v534 = vld [vmem:[#allocation2] sm:$0xff]
    %v535 = vld [vmem:[#allocation2 + $0x8] sm:$0xff]
    %v536 = vld [vmem:[#allocation2 + $0x10] sm:$0xff]
    %v537 = vld [vmem:[#allocation8] sm:$0xff]
    %v538 = vld [vmem:[#allocation8 + $0x8] sm:$0xf]
    %v539 = vld [vmem:[#allocation8 + $0xc] sm:$0xff]
    %v540 = vld [vmem:[#allocation8 + $0x14] sm:$0xf]
    %v541 = vld [vmem:[#allocation8 + $0x18] sm:$0xff]
    %v542 = vld [vmem:[#allocation8 + $0x20] sm:$0xf]
    %v543 = vld [vmem:[#allocation8 + $0x24] sm:$0xff]
    %v544 = vld [vmem:[#allocation8 + $0x2c] sm:$0xf]
    %v545 = vld [vmem:[#allocation8 + $0x30] sm:$0xff]
    %v546 = vld [vmem:[#allocation8 + $0x38] sm:$0xf]
    %v547 = vld [vmem:[#allocation8 + $0x3c] sm:$0xff]
    %v548 = vld [vmem:[#allocation8 + $0x44] sm:$0xf]
    %v549 = vld [vmem:[#allocation8 + $0x48] sm:$0xff]
    %v550 = vld [vmem:[#allocation8 + $0x50] sm:$0xf]
    %v551 = vld [vmem:[#allocation8 + $0x54] sm:$0xff]
    %v552 = vld [vmem:[#allocation8 + $0x5c] sm:$0xf]
    %v553 = vld [vmem:[#allocation8 + $0x60] sm:$0xff]
    %v554 = vld [vmem:[#allocation8 + $0x68] sm:$0xf]
    %v555 = vld [vmem:[#allocation8 + $0x6c] sm:$0xff]
    %v556 = vld [vmem:[#allocation8 + $0x74] sm:$0xf]
    %v557 = vld [vmem:[#allocation8 + $0x78] sm:$0xff]
    %v558 = vld [vmem:[#allocation8 + $0x80] sm:$0xf]
    %v559 = vld [vmem:[#allocation8 + $0x84] sm:$0xff]
    %v560 = vld [vmem:[#allocation8 + $0x8c] sm:$0xf]
    %v561 = vld [vmem:[#allocation8 + $0x90] sm:$0xff]
    %v562 = vld [vmem:[#allocation8 + $0x98] sm:$0xf]
    %v563 = vld [vmem:[#allocation8 + $0x9c] sm:$0xff]
    %v564 = vld [vmem:[#allocation8 + $0xa4] sm:$0xf]
    %v565 = vld [vmem:[#allocation8 + $0xa8] sm:$0xff]
    %v566 = vld [vmem:[#allocation8 + $0xb0] sm:$0xf]
    %v567 = vld [vmem:[#allocation8 + $0xb4] sm:$0xff]
    %v568 = vld [vmem:[#allocation8 + $0xbc] sm:$0xf]
    %v601 = vunpack.c.l.b16 %v537
    %v602 = vunpack.c.h.b16 %v537
    %v603 = vunpack.c.l.b16 %v538
    %v604 = vunpack.c.l.b16 %v539
    %v605 = vunpack.c.h.b16 %v539
    %v606 = vunpack.c.l.b16 %v540
    %v607 = vunpack.c.l.b16 %v541
    %v608 = vunpack.c.h.b16 %v541
    %v609 = vunpack.c.l.b16 %v542
    %v610 = vunpack.c.l.b16 %v543
    %v611 = vunpack.c.h.b16 %v543
    %v612 = vunpack.c.l.b16 %v544
    %v613 = vunpack.c.l.b16 %v545
    %v614 = vunpack.c.h.b16 %v545
    %v615 = vunpack.c.l.b16 %v546
    %v616 = vunpack.c.l.b16 %v547
    %v617 = vunpack.c.h.b16 %v547
    %v618 = vunpack.c.l.b16 %v548
    %v619 = vunpack.c.l.b16 %v549
    %v620 = vunpack.c.h.b16 %v549
    %v621 = vunpack.c.l.b16 %v550
    %v622 = vunpack.c.l.b16 %v551
    %v623 = vunpack.c.h.b16 %v551
    %v624 = vunpack.c.l.b16 %v552
    %v625 = vunpack.c.l.b16 %v553
    %v626 = vunpack.c.h.b16 %v553
    %v627 = vunpack.c.l.b16 %v554
    %v628 = vunpack.c.l.b16 %v555
    %v629 = vunpack.c.h.b16 %v555
    %v630 = vunpack.c.l.b16 %v556
    %v631 = vunpack.c.l.b16 %v557
    %v632 = vunpack.c.h.b16 %v557
    %v633 = vunpack.c.l.b16 %v558
    %v634 = vunpack.c.l.b16 %v559
    %v635 = vunpack.c.h.b16 %v559
    %v636 = vunpack.c.l.b16 %v560
    %v637 = vunpack.c.l.b16 %v561
    %v638 = vunpack.c.h.b16 %v561
    %v639 = vunpack.c.l.b16 %v562
    %v640 = vunpack.c.l.b16 %v563
    %v641 = vunpack.c.h.b16 %v563
    %v642 = vunpack.c.l.b16 %v564
    %v643 = vunpack.c.l.b16 %v565
    %v644 = vunpack.c.h.b16 %v565
    %v645 = vunpack.c.l.b16 %v566
    %v646 = vunpack.c.l.b16 %v567
    %v647 = vunpack.c.h.b16 %v567
    %v648 = vunpack.c.l.b16 %v568
    %v649 = vpack.c.b16 %v604, %v601
    %v650 = vpack.c.b16 %v605, %v602
    %v651 = vpack.c.b16 %v606, %v603
    %v652 = vpack.c.b16 %v610, %v607
    %v653 = vpack.c.b16 %v611, %v608
    %v654 = vpack.c.b16 %v612, %v609
    %v655 = vpack.c.b16 %v616, %v613
    %v656 = vpack.c.b16 %v617, %v614
    %v657 = vpack.c.b16 %v618, %v615
    %v658 = vpack.c.b16 %v622, %v619
    %v659 = vpack.c.b16 %v623, %v620
    %v660 = vpack.c.b16 %v624, %v621
    %v661 = vpack.c.b16 %v628, %v625
    %v662 = vpack.c.b16 %v629, %v626
    %v663 = vpack.c.b16 %v630, %v627
    %v664 = vpack.c.b16 %v634, %v631
    %v665 = vpack.c.b16 %v635, %v632
    %v666 = vpack.c.b16 %v636, %v633
    %v667 = vpack.c.b16 %v640, %v637
    %v668 = vpack.c.b16 %v641, %v638
    %v669 = vpack.c.b16 %v642, %v639
    %v670 = vpack.c.b16 %v646, %v643
    %v671 = vpack.c.b16 %v647, %v644
    %v672 = vpack.c.b16 %v648, %v645
    %697 = vmatprep.subr.bf16.mxu0 %v650
    %698 = vmatpush1.bf16.msra.mxu0 %v649
    %699 = vmatprep.subr.bf16.mxu0 %v653
    %700 = vmatpush1.bf16.msra.mxu0 %v652
    %701 = vmatprep.subr.bf16.mxu0 %v656
    %702 = vmatpush1.bf16.msra.mxu0 %v655
    %703 = vmatprep.subr.bf16.mxu0 %v659
    %704 = vmatpush1.bf16.msra.mxu0 %v658
    %705 = vmatprep.subr.bf16.mxu0 %v662
    %706 = vmatpush1.bf16.msra.mxu0 %v661
    %707 = vmatprep.subr.bf16.mxu0 %v665
    %708 = vmatpush1.bf16.msra.mxu0 %v664
    %709 = vmatprep.subr.bf16.mxu0 %v668
    %710 = vmatpush1.bf16.msra.mxu0 %v667
    %711 = vmatprep.subr.bf16.mxu0 %v671
    %712 = vmatpush1.bf16.msra.mxu0 %v670
    %713 = vmatprep.subr.bf16.mxu0 0
    %714 = vmatpush1.bf16.msra.mxu0 0
    %715 = vmatprep.subr.bf16.mxu0 0
    %716 = vmatpush1.bf16.msra.mxu0 0
    %717 = vmatprep.subr.bf16.mxu0 0
    %718 = vmatpush1.bf16.msra.mxu0 0
    %719 = vmatprep.subr.bf16.mxu0 0
    %720 = vmatpush1.bf16.msra.mxu0 0
    %721 = vmatprep.subr.bf16.mxu0 0
    %722 = vmatpush1.bf16.msra.mxu0 0
    %723 = vmatprep.subr.bf16.mxu0 0
    %724 = vmatpush1.bf16.msra.mxu0 0
    %725 = vmatprep.subr.bf16.mxu0 0
    %726 = vmatpush1.bf16.msra.mxu0 0
    %727 = vmatprep.subr.bf16.mxu0 0
    %728 = vmatpush1.bf16.msra.mxu0 0
    %729 = vmatprep.mubr.bf16.mxu0 0
    %730 = vmatmul.mubr.bf16.gmra.mrb[0].mxu0 0
    %v731 = vpop.f32.mrb[0].mxu0
    %v732 = vadd.f32 0.0, %v731
    %v733 = vpop.f32.mrb[0].mxu0
    %v734 = vadd.f32 0.0, %v733
    %v735 = vpop.f32.mrb[0].mxu0
    %v736 = vpop.f32.mrb[0].mxu0
    %737 = vdwg.mxu0
    %738 = vmatprep.subr.bf16.mxu0 0
    %739 = vmatpush1.bf16.msra.mxu0 %v651
    %740 = vmatprep.subr.bf16.mxu0 0
    %741 = vmatpush1.bf16.msra.mxu0 %v654
    %742 = vmatprep.subr.bf16.mxu0 0
    %743 = vmatpush1.bf16.msra.mxu0 %v657
    %744 = vmatprep.subr.bf16.mxu0 0
    %745 = vmatpush1.bf16.msra.mxu0 %v660
    %746 = vmatprep.subr.bf16.mxu0 0
    %747 = vmatpush1.bf16.msra.mxu0 %v663
    %748 = vmatprep.subr.bf16.mxu0 0
    %749 = vmatpush1.bf16.msra.mxu0 %v666
    %750 = vmatprep.subr.bf16.mxu0 0
    %751 = vmatpush1.bf16.msra.mxu0 %v669
    %752 = vmatprep.subr.bf16.mxu0 0
    %753 = vmatpush1.bf16.msra.mxu0 %v672
    %754 = vmatprep.subr.bf16.mxu0 0
    %755 = vmatpush1.bf16.msra.mxu0 0
    %756 = vmatprep.subr.bf16.mxu0 0
    %757 = vmatpush1.bf16.msra.mxu0 0
    %758 = vmatprep.subr.bf16.mxu0 0
    %759 = vmatpush1.bf16.msra.mxu0 0
    %760 = vmatprep.subr.bf16.mxu0 0
    %761 = vmatpush1.bf16.msra.mxu0 0
    %762 = vmatprep.subr.bf16.mxu0 0
    %763 = vmatpush1.bf16.msra.mxu0 0
    %764 = vmatprep.subr.bf16.mxu0 0
    %765 = vmatpush1.bf16.msra.mxu0 0
    %766 = vmatprep.subr.bf16.mxu0 0
    %767 = vmatpush1.bf16.msra.mxu0 0
    %768 = vmatprep.subr.bf16.mxu0 0
    %769 = vmatpush1.bf16.msra.mxu0 0
    %770 = vmatprep.mubr.bf16.mxu0 0
    %771 = vmatmul.mubr.bf16.gmra.mrb[0].mxu0 0
    %v772 = vpop.f32.mrb[0].mxu0
    %v773 = vadd.f32 0.0, %v772
    %v774 = vpop.f32.mrb[0].mxu0
    %v775 = vpop.f32.mrb[0].mxu0
    %v776 = vpop.f32.mrb[0].mxu0
    %777 = vdwg.mxu0
    %v778 = vadd.f32 %v534, %v732
    %v779 = vxor.u32 %v778, 2147483648
    %v780 = vmul.f32 %v779, 1.442695
    %v781 = vpow.pop %v780
    %v782 = vadd.f32 %v781, 1.0
    %v783 = vrcp.pop %v782
    %v784 = vmul.f32 1.0, %v783
    %v785 = vadd.f32 %v535, %v734
    %v786 = vxor.u32 %v785, 2147483648
    %v787 = vmul.f32 %v786, 1.442695
    %v788 = vpow.pop %v787
    %v789 = vadd.f32 %v788, 1.0
    %v790 = vrcp.pop %v789
    %v791 = vmul.f32 1.0, %v790
    %v792 = vld [vmem:[%s5] sm:$0x1]
    %v794 = vlaneseq
    %v795 = vshrl.u32 %v794, 7
    %v796 = vsub.s32 0, %v795
    %v797 = vrot.slane %v792, %v796
    %v799 = vadd.f32 %v773, %v797
    %v800 = vmul.f32 %v784, %v799
    %v801 = vadd.f32 %v536, %v800
    %v802 = vtanh.pop %v801
    %v803 = vsub.f32 1.0, %v791
    %v804 = vmul.f32 %v803, %v802
    %v805 = vmul.f32 %v791, 0.0
    %v806 = vadd.f32 %v804, %v805
    %vm807 = vcmp.gt.s32.totalorder %v533, 0
    %v808 = vsel %vm807, 1, 0
    %809 = vset.pattern.permute.xlu0 0
    %810 = vperm.xlu0 %809, %v808
    %v811 = vpop.permute.xlu0 %810
    %vm812 = vcmp.eq.s32.totalorder %v811, 1
    %v813 = vsel %vm812, %v806, 0.0
    %v815 = vcombine.high %v813, %v813
    %v817 = vunpack.c.l.s4 1966171168
    %v818 = vunpack.c.0.s8 %v817
    %v819 = vlaneseq
    %v820 = vshrl.u32 %v819, 7
    %v821 = vsub.s32 %v818, %v820
    %v822 = vrot.slane %v813, %v821
    %v824 = vunpack.c.l.s4 1966171168
    %v825 = vunpack.c.0.s8 %v824
    %v826 = vlaneseq
    %v827 = vshrl.u32 %v826, 7
    %v828 = vsub.s32 %v825, %v827
    %v829 = vrot.slane %v815, %v828
    %v830 = vcombine.high %v822, %v822
    %v831 = vcombine.high %v829, %v829
    %v833 = vunpack.c.l.s4 1966171168
    %v834 = vunpack.c.0.s8 %v833
    %v835 = vlaneseq
    %v836 = vshrl.u32 %v835, 7
    %v837 = vsub.s32 %v834, %v836
    %v838 = vrot.slane %v822, %v837
    %v840 = vunpack.c.l.s4 1966171168
    %v841 = vunpack.c.0.s8 %v840
    %v842 = vlaneseq
    %v843 = vshrl.u32 %v842, 7
    %v844 = vsub.s32 %v841, %v843
    %v845 = vrot.slane %v829, %v844
    %v847 = vunpack.c.l.s4 1966171168
    %v848 = vunpack.c.0.s8 %v847
    %v849 = vlaneseq
    %v850 = vshrl.u32 %v849, 7
    %v851 = vsub.s32 %v848, %v850
    %v852 = vrot.slane %v830, %v851
    %v854 = vunpack.c.l.s4 1966171168
    %v855 = vunpack.c.0.s8 %v854
    %v856 = vlaneseq
    %v857 = vshrl.u32 %v856, 7
    %v858 = vsub.s32 %v855, %v857
    %v859 = vrot.slane %v831, %v858
    %v860 = vcombine.high %v838, %v838
    %v861 = vcombine.high %v845, %v845
    %v862 = vcombine.high %v852, %v852
    %v863 = vcombine.high %v859, %v859
    %872 = vst [vmem:[#allocation14] sm:$0x1] %v838
    %873 = vst [vmem:[#allocation14 + $0x10] sm:$0x1] %v852
    %874 = vst [vmem:[#allocation14 + $0x20] sm:$0x1] %v860
    %875 = vst [vmem:[#allocation14 + $0x30] sm:$0x1] %v862
    %876 = vst [vmem:[#allocation14 + $0x40] sm:$0x1] %v845
    %877 = vst [vmem:[#allocation14 + $0x50] sm:$0x1] %v859
    %878 = vst [vmem:[#allocation14 + $0x60] sm:$0x1] %v861
    %879 = vst [vmem:[#allocation14 + $0x70] sm:$0x1] %v863
    %v880 = vld [vmem:[#allocation2 + $0x168] sm:$0xff]
    %v881 = vld [vmem:[#allocation2 + $0x170] sm:$0xff]
    %v882 = vld [vmem:[#allocation2 + $0x178] sm:$0xff]
    %v883 = vld [vmem:[#allocation9] sm:$0xff]
    %v884 = vld [vmem:[#allocation9 + $0x8] sm:$0xf]
    %v885 = vld [vmem:[#allocation9 + $0xc] sm:$0xff]
    %v886 = vld [vmem:[#allocation9 + $0x14] sm:$0xf]
    %v887 = vld [vmem:[#allocation9 + $0x18] sm:$0xff]
    %v888 = vld [vmem:[#allocation9 + $0x20] sm:$0xf]
    %v889 = vld [vmem:[#allocation9 + $0x24] sm:$0xff]
    %v890 = vld [vmem:[#allocation9 + $0x2c] sm:$0xf]
    %v891 = vld [vmem:[#allocation9 + $0x30] sm:$0xff]
    %v892 = vld [vmem:[#allocation9 + $0x38] sm:$0xf]
    %v893 = vld [vmem:[#allocation9 + $0x3c] sm:$0xff]
    %v894 = vld [vmem:[#allocation9 + $0x44] sm:$0xf]
    %v895 = vld [vmem:[#allocation9 + $0x48] sm:$0xff]
    %v896 = vld [vmem:[#allocation9 + $0x50] sm:$0xf]
    %v897 = vld [vmem:[#allocation9 + $0x54] sm:$0xff]
    %v898 = vld [vmem:[#allocation9 + $0x5c] sm:$0xf]
    %v899 = vld [vmem:[#allocation9 + $0x60] sm:$0xff]
    %v900 = vld [vmem:[#allocation9 + $0x68] sm:$0xf]
    %v901 = vld [vmem:[#allocation9 + $0x6c] sm:$0xff]
    %v902 = vld [vmem:[#allocation9 + $0x74] sm:$0xf]
    %v903 = vld [vmem:[#allocation9 + $0x78] sm:$0xff]
    %v904 = vld [vmem:[#allocation9 + $0x80] sm:$0xf]
    %v905 = vld [vmem:[#allocation9 + $0x84] sm:$0xff]
    %v906 = vld [vmem:[#allocation9 + $0x8c] sm:$0xf]
    %v907 = vld [vmem:[#allocation9 + $0x90] sm:$0xff]
    %v908 = vld [vmem:[#allocation9 + $0x98] sm:$0xf]
    %v909 = vld [vmem:[#allocation9 + $0x9c] sm:$0xff]
    %v910 = vld [vmem:[#allocation9 + $0xa4] sm:$0xf]
    %v911 = vld [vmem:[#allocation9 + $0xa8] sm:$0xff]
    %v912 = vld [vmem:[#allocation9 + $0xb0] sm:$0xf]
    %v913 = vld [vmem:[#allocation9 + $0xb4] sm:$0xff]
    %v914 = vld [vmem:[#allocation9 + $0xbc] sm:$0xf]
    %v947 = vunpack.c.l.b16 %v883
    %v948 = vunpack.c.h.b16 %v883
    %v949 = vunpack.c.l.b16 %v884
    %v950 = vunpack.c.l.b16 %v885
    %v951 = vunpack.c.h.b16 %v885
    %v952 = vunpack.c.l.b16 %v886
    %v953 = vunpack.c.l.b16 %v887
    %v954 = vunpack.c.h.b16 %v887
    %v955 = vunpack.c.l.b16 %v888
    %v956 = vunpack.c.l.b16 %v889
    %v957 = vunpack.c.h.b16 %v889
    %v958 = vunpack.c.l.b16 %v890
    %v959 = vunpack.c.l.b16 %v891
    %v960 = vunpack.c.h.b16 %v891
    %v961 = vunpack.c.l.b16 %v892
    %v962 = vunpack.c.l.b16 %v893
    %v963 = vunpack.c.h.b16 %v893
    %v964 = vunpack.c.l.b16 %v894
    %v965 = vunpack.c.l.b16 %v895
    %v966 = vunpack.c.h.b16 %v895
    %v967 = vunpack.c.l.b16 %v896
    %v968 = vunpack.c.l.b16 %v897
    %v969 = vunpack.c.h.b16 %v897
    %v970 = vunpack.c.l.b16 %v898
    %v971 = vunpack.c.l.b16 %v899
    %v972 = vunpack.c.h.b16 %v899
    %v973 = vunpack.c.l.b16 %v900
    %v974 = vunpack.c.l.b16 %v901
    %v975 = vunpack.c.h.b16 %v901
    %v976 = vunpack.c.l.b16 %v902
    %v977 = vunpack.c.l.b16 %v903
    %v978 = vunpack.c.h.b16 %v903
    %v979 = vunpack.c.l.b16 %v904
    %v980 = vunpack.c.l.b16 %v905
    %v981 = vunpack.c.h.b16 %v905
    %v982 = vunpack.c.l.b16 %v906
    %v983 = vunpack.c.l.b16 %v907
    %v984 = vunpack.c.h.b16 %v907
    %v985 = vunpack.c.l.b16 %v908
    %v986 = vunpack.c.l.b16 %v909
    %v987 = vunpack.c.h.b16 %v909
    %v988 = vunpack.c.l.b16 %v910
    %v989 = vunpack.c.l.b16 %v911
    %v990 = vunpack.c.h.b16 %v911
    %v991 = vunpack.c.l.b16 %v912
    %v992 = vunpack.c.l.b16 %v913
    %v993 = vunpack.c.h.b16 %v913
    %v994 = vunpack.c.l.b16 %v914
    %v995 = vpack.c.b16 %v950, %v947
    %v996 = vpack.c.b16 %v951, %v948
    %v997 = vpack.c.b16 %v952, %v949
    %v998 = vpack.c.b16 %v956, %v953
    %v999 = vpack.c.b16 %v957, %v954
    %v1000 = vpack.c.b16 %v958, %v955
    %v1001 = vpack.c.b16 %v962, %v959
    %v1002 = vpack.c.b16 %v963, %v960
    %v1003 = vpack.c.b16 %v964, %v961
    %v1004 = vpack.c.b16 %v968, %v965
    %v1005 = vpack.c.b16 %v969, %v966
    %v1006 = vpack.c.b16 %v970, %v967
    %v1007 = vpack.c.b16 %v974, %v971
    %v1008 = vpack.c.b16 %v975, %v972
    %v1009 = vpack.c.b16 %v976, %v973
    %v1010 = vpack.c.b16 %v980, %v977
    %v1011 = vpack.c.b16 %v981, %v978
    %v1012 = vpack.c.b16 %v982, %v979
    %v1013 = vpack.c.b16 %v986, %v983
    %v1014 = vpack.c.b16 %v987, %v984
    %v1015 = vpack.c.b16 %v988, %v985
    %v1016 = vpack.c.b16 %v992, %v989
    %v1017 = vpack.c.b16 %v993, %v990
    %v1018 = vpack.c.b16 %v994, %v991
    %1043 = vmatprep.subr.bf16.mxu0 %v996
    %1044 = vmatpush1.bf16.msra.mxu0 %v995
    %1045 = vmatprep.subr.bf16.mxu0 %v999
    %1046 = vmatpush1.bf16.msra.mxu0 %v998
    %1047 = vmatprep.subr.bf16.mxu0 %v1002
    %1048 = vmatpush1.bf16.msra.mxu0 %v1001
    %1049 = vmatprep.subr.bf16.mxu0 %v1005
    %1050 = vmatpush1.bf16.msra.mxu0 %v1004
    %1051 = vmatprep.subr.bf16.mxu0 %v1008
    %1052 = vmatpush1.bf16.msra.mxu0 %v1007
    %1053 = vmatprep.subr.bf16.mxu0 %v1011
    %1054 = vmatpush1.bf16.msra.mxu0 %v1010
    %1055 = vmatprep.subr.bf16.mxu0 %v1014
    %1056 = vmatpush1.bf16.msra.mxu0 %v1013
    %1057 = vmatprep.subr.bf16.mxu0 %v1017
    %1058 = vmatpush1.bf16.msra.mxu0 %v1016
    %1059 = vmatprep.subr.bf16.mxu0 0
    %1060 = vmatpush1.bf16.msra.mxu0 0
    %1061 = vmatprep.subr.bf16.mxu0 0
    %1062 = vmatpush1.bf16.msra.mxu0 0
    %1063 = vmatprep.subr.bf16.mxu0 0
    %1064 = vmatpush1.bf16.msra.mxu0 0
    %1065 = vmatprep.subr.bf16.mxu0 0
    %1066 = vmatpush1.bf16.msra.mxu0 0
    %1067 = vmatprep.subr.bf16.mxu0 0
    %1068 = vmatpush1.bf16.msra.mxu0 0
    %1069 = vmatprep.subr.bf16.mxu0 0
    %1070 = vmatpush1.bf16.msra.mxu0 0
    %1071 = vmatprep.subr.bf16.mxu0 0
    %1072 = vmatpush1.bf16.msra.mxu0 0
    %1073 = vmatprep.subr.bf16.mxu0 0
    %1074 = vmatpush1.bf16.msra.mxu0 0
    %1075 = vmatprep.mubr.bf16.mxu0 0
    %1076 = vmatmul.mubr.bf16.gmra.mrb[0].mxu0 0
    %v1077 = vpop.f32.mrb[0].mxu0
    %v1078 = vadd.f32 0.0, %v1077
    %v1079 = vpop.f32.mrb[0].mxu0
    %v1080 = vadd.f32 0.0, %v1079
    %v1081 = vpop.f32.mrb[0].mxu0
    %v1082 = vpop.f32.mrb[0].mxu0
    %1083 = vdwg.mxu0
    %1084 = vmatprep.subr.bf16.mxu0 0
    %1085 = vmatpush1.bf16.msra.mxu0 %v997
    %1086 = vmatprep.subr.bf16.mxu0 0
    %1087 = vmatpush1.bf16.msra.mxu0 %v1000
    %1088 = vmatprep.subr.bf16.mxu0 0
    %1089 = vmatpush1.bf16.msra.mxu0 %v1003
    %1090 = vmatprep.subr.bf16.mxu0 0
    %1091 = vmatpush1.bf16.msra.mxu0 %v1006
    %1092 = vmatprep.subr.bf16.mxu0 0
    %1093 = vmatpush1.bf16.msra.mxu0 %v1009
    %1094 = vmatprep.subr.bf16.mxu0 0
    %1095 = vmatpush1.bf16.msra.mxu0 %v1012
    %1096 = vmatprep.subr.bf16.mxu0 0
    %1097 = vmatpush1.bf16.msra.mxu0 %v1015
    %1098 = vmatprep.subr.bf16.mxu0 0
    %1099 = vmatpush1.bf16.msra.mxu0 %v1018
    %1100 = vmatprep.subr.bf16.mxu0 0
    %1101 = vmatpush1.bf16.msra.mxu0 0
    %1102 = vmatprep.subr.bf16.mxu0 0
    %1103 = vmatpush1.bf16.msra.mxu0 0
    %1104 = vmatprep.subr.bf16.mxu0 0
    %1105 = vmatpush1.bf16.msra.mxu0 0
    %1106 = vmatprep.subr.bf16.mxu0 0
    %1107 = vmatpush1.bf16.msra.mxu0 0
    %1108 = vmatprep.subr.bf16.mxu0 0
    %1109 = vmatpush1.bf16.msra.mxu0 0
    %1110 = vmatprep.subr.bf16.mxu0 0
    %1111 = vmatpush1.bf16.msra.mxu0 0
    %1112 = vmatprep.subr.bf16.mxu0 0
    %1113 = vmatpush1.bf16.msra.mxu0 0
    %1114 = vmatprep.subr.bf16.mxu0 0
    %1115 = vmatpush1.bf16.msra.mxu0 0
    %1116 = vmatprep.mubr.bf16.mxu0 0
    %1117 = vmatmul.mubr.bf16.gmra.mrb[0].mxu0 0
    %v1118 = vpop.f32.mrb[0].mxu0
    %v1119 = vadd.f32 0.0, %v1118
    %v1120 = vpop.f32.mrb[0].mxu0
    %v1121 = vpop.f32.mrb[0].mxu0
    %v1122 = vpop.f32.mrb[0].mxu0
    %1123 = vdwg.mxu0
    %v1124 = vadd.f32 %v880, %v1078
    %v1125 = vxor.u32 %v1124, 2147483648
    %v1126 = vmul.f32 %v1125, 1.442695
    %v1127 = vpow.pop %v1126
    %v1128 = vadd.f32 %v1127, 1.0
    %v1129 = vrcp.pop %v1128
    %v1130 = vmul.f32 1.0, %v1129
    %v1131 = vadd.f32 %v881, %v1080
    %v1132 = vxor.u32 %v1131, 2147483648
    %v1133 = vmul.f32 %v1132, 1.442695
    %v1134 = vpow.pop %v1133
    %v1135 = vadd.f32 %v1134, 1.0
    %v1136 = vrcp.pop %v1135
    %v1137 = vmul.f32 1.0, %v1136
    %v1138 = vld [vmem:[#allocation11] sm:$0x1]
    %v1140 = vlaneseq
    %v1141 = vshrl.u32 %v1140, 7
    %v1142 = vsub.s32 0, %v1141
    %v1143 = vrot.slane %v1138, %v1142
    %v1145 = vadd.f32 %v1119, %v1143
    %v1146 = vmul.f32 %v1130, %v1145
    %v1147 = vadd.f32 %v882, %v1146
    %v1148 = vtanh.pop %v1147
    %v1149 = vsub.f32 1.0, %v1137
    %v1150 = vmul.f32 %v1149, %v1148
    %v1151 = vmul.f32 %v1137, 0.0
    %v1152 = vadd.f32 %v1150, %v1151
    %vm1153 = vcmp.gt.s32.totalorder %v533, 7
    %v1154 = vsel %vm1153, 1, 0
    %1155 = vset.pattern.permute.xlu0 0
    %1156 = vperm.xlu0 %1155, %v1154
    %v1157 = vpop.permute.xlu0 %1156
    %vm1158 = vcmp.eq.s32.totalorder %v1157, 1
    %v1159 = vsel %vm1158, %v1152, 0.0
    %v1161 = vcombine.high %v1159, %v1159
    %v1163 = vunpack.c.l.s4 1966171168
    %v1164 = vunpack.c.0.s8 %v1163
    %v1165 = vlaneseq
    %v1166 = vshrl.u32 %v1165, 7
    %v1167 = vsub.s32 %v1164, %v1166
    %v1168 = vrot.slane %v1159, %v1167
    %v1170 = vunpack.c.l.s4 1966171168
    %v1171 = vunpack.c.0.s8 %v1170
    %v1172 = vlaneseq
    %v1173 = vshrl.u32 %v1172, 7
    %v1174 = vsub.s32 %v1171, %v1173
    %v1175 = vrot.slane %v1161, %v1174
    %v1176 = vcombine.high %v1168, %v1168
    %v1177 = vcombine.high %v1175, %v1175
    %v1179 = vunpack.c.l.s4 1966171168
    %v1180 = vunpack.c.0.s8 %v1179
    %v1181 = vlaneseq
    %v1182 = vshrl.u32 %v1181, 7
    %v1183 = vsub.s32 %v1180, %v1182
    %v1184 = vrot.slane %v1168, %v1183
    %v1186 = vunpack.c.l.s4 1966171168
    %v1187 = vunpack.c.0.s8 %v1186
    %v1188 = vlaneseq
    %v1189 = vshrl.u32 %v1188, 7
    %v1190 = vsub.s32 %v1187, %v1189
    %v1191 = vrot.slane %v1175, %v1190
    %v1193 = vunpack.c.l.s4 1966171168
    %v1194 = vunpack.c.0.s8 %v1193
    %v1195 = vlaneseq
    %v1196 = vshrl.u32 %v1195, 7
    %v1197 = vsub.s32 %v1194, %v1196
    %v1198 = vrot.slane %v1176, %v1197
    %v1200 = vunpack.c.l.s4 1966171168
    %v1201 = vunpack.c.0.s8 %v1200
    %v1202 = vlaneseq
    %v1203 = vshrl.u32 %v1202, 7
    %v1204 = vsub.s32 %v1201, %v1203
    %v1205 = vrot.slane %v1177, %v1204
    %v1206 = vcombine.high %v1184, %v1184
    %v1207 = vcombine.high %v1191, %v1191
    %v1208 = vcombine.high %v1198, %v1198
    %v1209 = vcombine.high %v1205, %v1205
    %1218 = vst [vmem:[#allocation14 + $0xf] sm:$0x1] %v1184
    %1219 = vst [vmem:[#allocation14 + $0x1f] sm:$0x1] %v1198
    %1220 = vst [vmem:[#allocation14 + $0x2f] sm:$0x1] %v1206
    %1221 = vst [vmem:[#allocation14 + $0x3f] sm:$0x1] %v1208
    %1222 = vst [vmem:[#allocation14 + $0x4f] sm:$0x1] %v1191
    %1223 = vst [vmem:[#allocation14 + $0x5f] sm:$0x1] %v1205
    %1224 = vst [vmem:[#allocation14 + $0x6f] sm:$0x1] %v1207
    %1225 = vst [vmem:[#allocation14 + $0x7f] sm:$0x1] %v1209
    %v1226 = vld [vmem:[#allocation2 + $0x30] sm:$0xff]
    %v1227 = vld [vmem:[#allocation2 + $0x38] sm:$0xff]
    %v1228 = vld [vmem:[#allocation2 + $0x40] sm:$0xff]
    %v1229 = vpack.c.bf16 %v813, %v813
    %v1230 = vld [vmem:[#allocation8] sm:$0xff]
    %v1231 = vld [vmem:[#allocation8 + $0x8] sm:$0xf]
    %v1232 = vld [vmem:[#allocation8 + $0xc] sm:$0xff]
    %v1233 = vld [vmem:[#allocation8 + $0x14] sm:$0xf]
    %v1234 = vld [vmem:[#allocation8 + $0x18] sm:$0xff]
    %v1235 = vld [vmem:[#allocation8 + $0x20] sm:$0xf]
    %v1236 = vld [vmem:[#allocation8 + $0x24] sm:$0xff]
    %v1237 = vld [vmem:[#allocation8 + $0x2c] sm:$0xf]
    %v1238 = vld [vmem:[#allocation8 + $0x30] sm:$0xff]
    %v1239 = vld [vmem:[#allocation8 + $0x38] sm:$0xf]
    %v1240 = vld [vmem:[#allocation8 + $0x3c] sm:$0xff]
    %v1241 = vld [vmem:[#allocation8 + $0x44] sm:$0xf]
    %v1242 = vld [vmem:[#allocation8 + $0x48] sm:$0xff]
    %v1243 = vld [vmem:[#allocation8 + $0x50] sm:$0xf]
    %v1244 = vld [vmem:[#allocation8 + $0x54] sm:$0xff]
    %v1245 = vld [vmem:[#allocation8 + $0x5c] sm:$0xf]
    %v1246 = vld [vmem:[#allocation8 + $0x60] sm:$0xff]
    %v1247 = vld [vmem:[#allocation8 + $0x68] sm:$0xf]
    %v1248 = vld [vmem:[#allocation8 + $0x6c] sm:$0xff]
    %v1249 = vld [vmem:[#allocation8 + $0x74] sm:$0xf]
    %v1250 = vld [vmem:[#allocation8 + $0x78] sm:$0xff]
    %v1251 = vld [vmem:[#allocation8 + $0x80] sm:$0xf]
    %v1252 = vld [vmem:[#allocation8 + $0x84] sm:$0xff]
    %v1253 = vld [vmem:[#allocation8 + $0x8c] sm:$0xf]
    %v1254 = vld [vmem:[#allocation8 + $0x90] sm:$0xff]
    %v1255 = vld [vmem:[#allocation8 + $0x98] sm:$0xf]
    %v1256 = vld [vmem:[#allocation8 + $0x9c] sm:$0xff]
    %v1257 = vld [vmem:[#allocation8 + $0xa4] sm:$0xf]
    %v1258 = vld [vmem:[#allocation8 + $0xa8] sm:$0xff]
    %v1259 = vld [vmem:[#allocation8 + $0xb0] sm:$0xf]
    %v1260 = vld [vmem:[#allocation8 + $0xb4] sm:$0xff]
    %v1261 = vld [vmem:[#allocation8 + $0xbc] sm:$0xf]
    %v1294 = vunpack.c.l.b16 %v1230
    %v1295 = vunpack.c.h.b16 %v1230
    %v1296 = vunpack.c.l.b16 %v1231
    %v1297 = vunpack.c.l.b16 %v1232
    %v1298 = vunpack.c.h.b16 %v1232
    %v1299 = vunpack.c.l.b16 %v1233
    %v1300 = vunpack.c.l.b16 %v1234
    %v1301 = vunpack.c.h.b16 %v1234
    %v1302 = vunpack.c.l.b16 %v1235
    %v1303 = vunpack.c.l.b16 %v1236
    %v1304 = vunpack.c.h.b16 %v1236
    %v1305 = vunpack.c.l.b16 %v1237
    %v1306 = vunpack.c.l.b16 %v1238
    %v1307 = vunpack.c.h.b16 %v1238
    %v1308 = vunpack.c.l.b16 %v1239
    %v1309 = vunpack.c.l.b16 %v1240
    %v1310 = vunpack.c.h.b16 %v1240
    %v1311 = vunpack.c.l.b16 %v1241
    %v1312 = vunpack.c.l.b16 %v1242
    %v1313 = vunpack.c.h.b16 %v1242
    %v1314 = vunpack.c.l.b16 %v1243
    %v1315 = vunpack.c.l.b16 %v1244
    %v1316 = vunpack.c.h.b16 %v1244
    %v1317 = vunpack.c.l.b16 %v1245
    %v1318 = vunpack.c.l.b16 %v1246
    %v1319 = vunpack.c.h.b16 %v1246
    %v1320 = vunpack.c.l.b16 %v1247
    %v1321 = vunpack.c.l.b16 %v1248
    %v1322 = vunpack.c.h.b16 %v1248
    %v1323 = vunpack.c.l.b16 %v1249
    %v1324 = vunpack.c.l.b16 %v1250
    %v1325 = vunpack.c.h.b16 %v1250
    %v1326 = vunpack.c.l.b16 %v1251
    %v1327 = vunpack.c.l.b16 %v1252
    %v1328 = vunpack.c.h.b16 %v1252
    %v1329 = vunpack.c.l.b16 %v1253
    %v1330 = vunpack.c.l.b16 %v1254
    %v1331 = vunpack.c.h.b16 %v1254
    %v1332 = vunpack.c.l.b16 %v1255
    %v1333 = vunpack.c.l.b16 %v1256
    %v1334 = vunpack.c.h.b16 %v1256
    %v1335 = vunpack.c.l.b16 %v1257
    %v1336 = vunpack.c.l.b16 %v1258
    %v1337 = vunpack.c.h.b16 %v1258
    %v1338 = vunpack.c.l.b16 %v1259
    %v1339 = vunpack.c.l.b16 %v1260
    %v1340 = vunpack.c.h.b16 %v1260
    %v1341 = vunpack.c.l.b16 %v1261
    %v1342 = vpack.c.b16 %v1297, %v1294
    %v1343 = vpack.c.b16 %v1298, %v1295
    %v1344 = vpack.c.b16 %v1299, %v1296
    %v1345 = vpack.c.b16 %v1303, %v1300
    %v1346 = vpack.c.b16 %v1304, %v1301
    %v1347 = vpack.c.b16 %v1305, %v1302
    %v1348 = vpack.c.b16 %v1309, %v1306
    %v1349 = vpack.c.b16 %v1310, %v1307
    %v1350 = vpack.c.b16 %v1311, %v1308
    %v1351 = vpack.c.b16 %v1315, %v1312
    %v1352 = vpack.c.b16 %v1316, %v1313
    %v1353 = vpack.c.b16 %v1317, %v1314
    %v1354 = vpack.c.b16 %v1321, %v1318
    %v1355 = vpack.c.b16 %v1322, %v1319
    %v1356 = vpack.c.b16 %v1323, %v1320
    %v1357 = vpack.c.b16 %v1327, %v1324
    %v1358 = vpack.c.b16 %v1328, %v1325
    %v1359 = vpack.c.b16 %v1329, %v1326
    %v1360 = vpack.c.b16 %v1333, %v1330
    %v1361 = vpack.c.b16 %v1334, %v1331
    %v1362 = vpack.c.b16 %v1335, %v1332
    %v1363 = vpack.c.b16 %v1339, %v1336
    %v1364 = vpack.c.b16 %v1340, %v1337
    %v1365 = vpack.c.b16 %v1341, %v1338
    %1390 = vmatprep.subr.bf16.mxu0 %v1343
    %1391 = vmatpush1.bf16.msra.mxu0 %v1342
    %1392 = vmatprep.subr.bf16.mxu0 %v1346
    %1393 = vmatpush1.bf16.msra.mxu0 %v1345
    %1394 = vmatprep.subr.bf16.mxu0 %v1349
    %1395 = vmatpush1.bf16.msra.mxu0 %v1348
    %1396 = vmatprep.subr.bf16.mxu0 %v1352
    %1397 = vmatpush1.bf16.msra.mxu0 %v1351
    %1398 = vmatprep.subr.bf16.mxu0 %v1355
    %1399 = vmatpush1.bf16.msra.mxu0 %v1354
    %1400 = vmatprep.subr.bf16.mxu0 %v1358
    %1401 = vmatpush1.bf16.msra.mxu0 %v1357
    %1402 = vmatprep.subr.bf16.mxu0 %v1361
    %1403 = vmatpush1.bf16.msra.mxu0 %v1360
    %1404 = vmatprep.subr.bf16.mxu0 %v1364
    %1405 = vmatpush1.bf16.msra.mxu0 %v1363
    %1406 = vmatprep.subr.bf16.mxu0 0
    %1407 = vmatpush1.bf16.msra.mxu0 0
    %1408 = vmatprep.subr.bf16.mxu0 0
    %1409 = vmatpush1.bf16.msra.mxu0 0
    %1410 = vmatprep.subr.bf16.mxu0 0
    %1411 = vmatpush1.bf16.msra.mxu0 0
    %1412 = vmatprep.subr.bf16.mxu0 0
    %1413 = vmatpush1.bf16.msra.mxu0 0
    %1414 = vmatprep.subr.bf16.mxu0 0
    %1415 = vmatpush1.bf16.msra.mxu0 0
    %1416 = vmatprep.subr.bf16.mxu0 0
    %1417 = vmatpush1.bf16.msra.mxu0 0
    %1418 = vmatprep.subr.bf16.mxu0 0
    %1419 = vmatpush1.bf16.msra.mxu0 0
    %1420 = vmatprep.subr.bf16.mxu0 0
    %1421 = vmatpush1.bf16.msra.mxu0 0
    %1422 = vmatprep.mubr.bf16.mxu0 0
    %1423 = vmatmul.mubr.bf16.gmra.mrb[0].mxu0 %v1229
    %v1424 = vpop.f32.mrb[0].mxu0
    %v1425 = vadd.f32 0.0, %v1424
    %v1426 = vpop.f32.mrb[0].mxu0
    %v1427 = vadd.f32 0.0, %v1426
    %v1428 = vpop.f32.mrb[0].mxu0
    %v1429 = vpop.f32.mrb[0].mxu0
    %1430 = vdwg.mxu0
    %1431 = vmatprep.subr.bf16.mxu0 0
    %1432 = vmatpush1.bf16.msra.mxu0 %v1344
    %1433 = vmatprep.subr.bf16.mxu0 0
    %1434 = vmatpush1.bf16.msra.mxu0 %v1347
    %1435 = vmatprep.subr.bf16.mxu0 0
    %1436 = vmatpush1.bf16.msra.mxu0 %v1350
    %1437 = vmatprep.subr.bf16.mxu0 0
    %1438 = vmatpush1.bf16.msra.mxu0 %v1353
    %1439 = vmatprep.subr.bf16.mxu0 0
    %1440 = vmatpush1.bf16.msra.mxu0 %v1356
    %1441 = vmatprep.subr.bf16.mxu0 0
    %1442 = vmatpush1.bf16.msra.mxu0 %v1359
    %1443 = vmatprep.subr.bf16.mxu0 0
    %1444 = vmatpush1.bf16.msra.mxu0 %v1362
    %1445 = vmatprep.subr.bf16.mxu0 0
    %1446 = vmatpush1.bf16.msra.mxu0 %v1365
    %1447 = vmatprep.subr.bf16.mxu0 0
    %1448 = vmatpush1.bf16.msra.mxu0 0
    %1449 = vmatprep.subr.bf16.mxu0 0
    %1450 = vmatpush1.bf16.msra.mxu0 0
    %1451 = vmatprep.subr.bf16.mxu0 0
    %1452 = vmatpush1.bf16.msra.mxu0 0
    %1453 = vmatprep.subr.bf16.mxu0 0
    %1454 = vmatpush1.bf16.msra.mxu0 0
    %1455 = vmatprep.subr.bf16.mxu0 0
    %1456 = vmatpush1.bf16.msra.mxu0 0
    %1457 = vmatprep.subr.bf16.mxu0 0
    %1458 = vmatpush1.bf16.msra.mxu0 0
    %1459 = vmatprep.subr.bf16.mxu0 0
    %1460 = vmatpush1.bf16.msra.mxu0 0
    %1461 = vmatprep.subr.bf16.mxu0 0
    %1462 = vmatpush1.bf16.msra.mxu0 0
    %1463 = vmatprep.mubr.bf16.mxu0 0
    %1464 = vmatmul.mubr.bf16.gmra.mrb[0].mxu0 %v1229
    %v1465 = vpop.f32.mrb[0].mxu0
    %v1466 = vadd.f32 0.0, %v1465
    %v1467 = vpop.f32.mrb[0].mxu0
    %v1468 = vpop.f32.mrb[0].mxu0
    %v1469 = vpop.f32.mrb[0].mxu0
    %1470 = vdwg.mxu0
    %v1471 = vadd.f32 %v1226, %v1425
    %v1472 = vxor.u32 %v1471, 2147483648
    %v1473 = vmul.f32 %v1472, 1.442695
    %v1474 = vpow.pop %v1473
    %v1475 = vadd.f32 %v1474, 1.0
    %v1476 = vrcp.pop %v1475
    %v1477 = vmul.f32 1.0, %v1476
    %v1478 = vadd.f32 %v1227, %v1427
    %v1479 = vxor.u32 %v1478, 2147483648
    %v1480 = vmul.f32 %v1479, 1.442695
    %v1481 = vpow.pop %v1480
    %v1482 = vadd.f32 %v1481, 1.0
    %v1483 = vrcp.pop %v1482
    %v1484 = vmul.f32 1.0, %v1483
    %v1485 = vld [vmem:[%s5] sm:$0x1]
    %v1487 = vlaneseq
    %v1488 = vshrl.u32 %v1487, 7
    %v1489 = vsub.s32 0, %v1488
    %v1490 = vrot.slane %v1485, %v1489
    %v1492 = vadd.f32 %v1466, %v1490
    %v1493 = vmul.f32 %v1477, %v1492
    %v1494 = vadd.f32 %v1228, %v1493
    %v1495 = vtanh.pop %v1494
    %v1496 = vsub.f32 1.0, %v1484
    %v1497 = vmul.f32 %v1496, %v1495
    %v1498 = vmul.f32 %v1484, %v813
    %v1499 = vadd.f32 %v1497, %v1498
    %vm1500 = vcmp.gt.s32.totalorder %v533, 1
    %v1501 = vsel %vm1500, 1, 0
    %1502 = vset.pattern.permute.xlu0 0
    %1503 = vperm.xlu0 %1502, %v1501
    %v1504 = vpop.permute.xlu0 %1503
    %vm1505 = vcmp.eq.s32.totalorder %v1504, 1
    %v1506 = vsel %vm1505, %v1499, %v813
    %v1507 = vsel %vm1505, %v1499, 0.0
    %v1509 = vcombine.high %v1507, %v1507
    %v1511 = vunpack.c.l.s4 1966171168
    %v1512 = vunpack.c.0.s8 %v1511
    %v1513 = vlaneseq
    %v1514 = vshrl.u32 %v1513, 7
    %v1515 = vsub.s32 %v1512, %v1514
    %v1516 = vrot.slane %v1507, %v1515
    %v1518 = vunpack.c.l.s4 1966171168
    %v1519 = vunpack.c.0.s8 %v1518
    %v1520 = vlaneseq
    %v1521 = vshrl.u32 %v1520, 7
    %v1522 = vsub.s32 %v1519, %v1521
    %v1523 = vrot.slane %v1509, %v1522
    %v1524 = vcombine.high %v1516, %v1516
    %v1525 = vcombine.high %v1523, %v1523
    %v1527 = vunpack.c.l.s4 1966171168
    %v1528 = vunpack.c.0.s8 %v1527
    %v1529 = vlaneseq
    %v1530 = vshrl.u32 %v1529, 7
    %v1531 = vsub.s32 %v1528, %v1530
    %v1532 = vrot.slane %v1516, %v1531
    %v1534 = vunpack.c.l.s4 1966171168
    %v1535 = vunpack.c.0.s8 %v1534
    %v1536 = vlaneseq
    %v1537 = vshrl.u32 %v1536, 7
    %v1538 = vsub.s32 %v1535, %v1537
    %v1539 = vrot.slane %v1523, %v1538
    %v1541 = vunpack.c.l.s4 1966171168
    %v1542 = vunpack.c.0.s8 %v1541
    %v1543 = vlaneseq
    %v1544 = vshrl.u32 %v1543, 7
    %v1545 = vsub.s32 %v1542, %v1544
    %v1546 = vrot.slane %v1524, %v1545
    %v1548 = vunpack.c.l.s4 1966171168
    %v1549 = vunpack.c.0.s8 %v1548
    %v1550 = vlaneseq
    %v1551 = vshrl.u32 %v1550, 7
    %v1552 = vsub.s32 %v1549, %v1551
    %v1553 = vrot.slane %v1525, %v1552
    %v1554 = vcombine.high %v1532, %v1532
    %v1555 = vcombine.high %v1539, %v1539
    %v1556 = vcombine.high %v1546, %v1546
    %v1557 = vcombine.high %v1553, %v1553
    %1566 = vst [vmem:[#allocation14 + $0x1] sm:$0x1] %v1532
    %1567 = vst [vmem:[#allocation14 + $0x11] sm:$0x1] %v1546
    %1568 = vst [vmem:[#allocation14 + $0x21] sm:$0x1] %v1554
    %1569 = vst [vmem:[#allocation14 + $0x31] sm:$0x1] %v1556
    %1570 = vst [vmem:[#allocation14 + $0x41] sm:$0x1] %v1539
    %1571 = vst [vmem:[#allocation14 + $0x51] sm:$0x1] %v1553
    %1572 = vst [vmem:[#allocation14 + $0x61] sm:$0x1] %v1555
    %1573 = vst [vmem:[#allocation14 + $0x71] sm:$0x1] %v1557
    %v1574 = vld [vmem:[#allocation2 + $0x138] sm:$0xff]
    %v1575 = vld [vmem:[#allocation2 + $0x140] sm:$0xff]
    %v1576 = vld [vmem:[#allocation2 + $0x148] sm:$0xff]
    %v1577 = vpack.c.bf16 %v1159, %v1159
    %v1578 = vld [vmem:[#allocation9] sm:$0xff]
    %v1579 = vld [vmem:[#allocation9 + $0x8] sm:$0xf]
    %v1580 = vld [vmem:[#allocation9 + $0xc] sm:$0xff]
    %v1581 = vld [vmem:[#allocation9 + $0x14] sm:$0xf]
    %v1582 = vld [vmem:[#allocation9 + $0x18] sm:$0xff]
    %v1583 = vld [vmem:[#allocation9 + $0x20] sm:$0xf]
    %v1584 = vld [vmem:[#allocation9 + $0x24] sm:$0xff]
    %v1585 = vld [vmem:[#allocation9 + $0x2c] sm:$0xf]
    %v1586 = vld [vmem:[#allocation9 + $0x30] sm:$0xff]
    %v1587 = vld [vmem:[#allocation9 + $0x38] sm:$0xf]
    %v1588 = vld [vmem:[#allocation9 + $0x3c] sm:$0xff]
    %v1589 = vld [vmem:[#allocation9 + $0x44] sm:$0xf]
    %v1590 = vld [vmem:[#allocation9 + $0x48] sm:$0xff]
    %v1591 = vld [vmem:[#allocation9 + $0x50] sm:$0xf]
    %v1592 = vld [vmem:[#allocation9 + $0x54] sm:$0xff]
    %v1593 = vld [vmem:[#allocation9 + $0x5c] sm:$0xf]
    %v1594 = vld [vmem:[#allocation9 + $0x60] sm:$0xff]
    %v1595 = vld [vmem:[#allocation9 + $0x68] sm:$0xf]
    %v1596 = vld [vmem:[#allocation9 + $0x6c] sm:$0xff]
    %v1597 = vld [vmem:[#allocation9 + $0x74] sm:$0xf]
    %v1598 = vld [vmem:[#allocation9 + $0x78] sm:$0xff]
    %v1599 = vld [vmem:[#allocation9 + $0x80] sm:$0xf]
    %v1600 = vld [vmem:[#allocation9 + $0x84] sm:$0xff]
    %v1601 = vld [vmem:[#allocation9 + $0x8c] sm:$0xf]
    %v1602 = vld [vmem:[#allocation9 + $0x90] sm:$0xff]
    %v1603 = vld [vmem:[#allocation9 + $0x98] sm:$0xf]
    %v1604 = vld [vmem:[#allocation9 + $0x9c] sm:$0xff]
    %v1605 = vld [vmem:[#allocation9 + $0xa4] sm:$0xf]
    %v1606 = vld [vmem:[#allocation9 + $0xa8] sm:$0xff]
    %v1607 = vld [vmem:[#allocation9 + $0xb0] sm:$0xf]
    %v1608 = vld [vmem:[#allocation9 + $0xb4] sm:$0xff]
    %v1609 = vld [vmem:[#allocation9 + $0xbc] sm:$0xf]
    %v1642 = vunpack.c.l.b16 %v1578
    %v1643 = vunpack.c.h.b16 %v1578
    %v1644 = vunpack.c.l.b16 %v1579
    %v1645 = vunpack.c.l.b16 %v1580
    %v1646 = vunpack.c.h.b16 %v1580
    %v1647 = vunpack.c.l.b16 %v1581
    %v1648 = vunpack.c.l.b16 %v1582
    %v1649 = vunpack.c.h.b16 %v1582
    %v1650 = vunpack.c.l.b16 %v1583
    %v1651 = vunpack.c.l.b16 %v1584
    %v1652 = vunpack.c.h.b16 %v1584
    %v1653 = vunpack.c.l.b16 %v1585
    %v1654 = vunpack.c.l.b16 %v1586
    %v1655 = vunpack.c.h.b16 %v1586
    %v1656 = vunpack.c.l.b16 %v1587
    %v1657 = vunpack.c.l.b16 %v1588
    %v1658 = vunpack.c.h.b16 %v1588
    %v1659 = vunpack.c.l.b16 %v1589
    %v1660 = vunpack.c.l.b16 %v1590
    %v1661 = vunpack.c.h.b16 %v1590
    %v1662 = vunpack.c.l.b16 %v1591
    %v1663 = vunpack.c.l.b16 %v1592
    %v1664 = vunpack.c.h.b16 %v1592
    %v1665 = vunpack.c.l.b16 %v1593
    %v1666 = vunpack.c.l.b16 %v1594
    %v1667 = vunpack.c.h.b16 %v1594
    %v1668 = vunpack.c.l.b16 %v1595
    %v1669 = vunpack.c.l.b16 %v1596
    %v1670 = vunpack.c.h.b16 %v1596
    %v1671 = vunpack.c.l.b16 %v1597
    %v1672 = vunpack.c.l.b16 %v1598
    %v1673 = vunpack.c.h.b16 %v1598
    %v1674 = vunpack.c.l.b16 %v1599
    %v1675 = vunpack.c.l.b16 %v1600
    %v1676 = vunpack.c.h.b16 %v1600
    %v1677 = vunpack.c.l.b16 %v1601
    %v1678 = vunpack.c.l.b16 %v1602
    %v1679 = vunpack.c.h.b16 %v1602
    %v1680 = vunpack.c.l.b16 %v1603
    %v1681 = vunpack.c.l.b16 %v1604
    %v1682 = vunpack.c.h.b16 %v1604
    %v1683 = vunpack.c.l.b16 %v1605
    %v1684 = vunpack.c.l.b16 %v1606
    %v1685 = vunpack.c.h.b16 %v1606
    %v1686 = vunpack.c.l.b16 %v1607
    %v1687 = vunpack.c.l.b16 %v1608
    %v1688 = vunpack.c.h.b16 %v1608
    %v1689 = vunpack.c.l.b16 %v1609
    %v1690 = vpack.c.b16 %v1645, %v1642
    %v1691 = vpack.c.b16 %v1646, %v1643
    %v1692 = vpack.c.b16 %v1647, %v1644
    %v1693 = vpack.c.b16 %v1651, %v1648
    %v1694 = vpack.c.b16 %v1652, %v1649
    %v1695 = vpack.c.b16 %v1653, %v1650
    %v1696 = vpack.c.b16 %v1657, %v1654
    %v1697 = vpack.c.b16 %v1658, %v1655
    %v1698 = vpack.c.b16 %v1659, %v1656
    %v1699 = vpack.c.b16 %v1663, %v1660
    %v1700 = vpack.c.b16 %v1664, %v1661
    %v1701 = vpack.c.b16 %v1665, %v1662
    %v1702 = vpack.c.b16 %v1669, %v1666
    %v1703 = vpack.c.b16 %v1670, %v1667
    %v1704 = vpack.c.b16 %v1671, %v1668
    %v1705 = vpack.c.b16 %v1675, %v1672
    %v1706 = vpack.c.b16 %v1676, %v1673
    %v1707 = vpack.c.b16 %v1677, %v1674
    %v1708 = vpack.c.b16 %v1681, %v1678
    %v1709 = vpack.c.b16 %v1682, %v1679
    %v1710 = vpack.c.b16 %v1683, %v1680
    %v1711 = vpack.c.b16 %v1687, %v1684
    %v1712 = vpack.c.b16 %v1688, %v1685
    %v1713 = vpack.c.b16 %v1689, %v1686
    %1738 = vmatprep.subr.bf16.mxu0 %v1691
    %1739 = vmatpush1.bf16.msra.mxu0 %v1690
    %1740 = vmatprep.subr.bf16.mxu0 %v1694
    %1741 = vmatpush1.bf16.msra.mxu0 %v1693
    %1742 = vmatprep.subr.bf16.mxu0 %v1697
    %1743 = vmatpush1.bf16.msra.mxu0 %v1696
    %1744 = vmatprep.subr.bf16.mxu0 %v1700
    %1745 = vmatpush1.bf16.msra.mxu0 %v1699
    %1746 = vmatprep.subr.bf16.mxu0 %v1703
    %1747 = vmatpush1.bf16.msra.mxu0 %v1702
    %1748 = vmatprep.subr.bf16.mxu0 %v1706
    %1749 = vmatpush1.bf16.msra.mxu0 %v1705
    %1750 = vmatprep.subr.bf16.mxu0 %v1709
    %1751 = vmatpush1.bf16.msra.mxu0 %v1708
    %1752 = vmatprep.subr.bf16.mxu0 %v1712
    %1753 = vmatpush1.bf16.msra.mxu0 %v1711
    %1754 = vmatprep.subr.bf16.mxu0 0
    %1755 = vmatpush1.bf16.msra.mxu0 0
    %1756 = vmatprep.subr.bf16.mxu0 0
    %1757 = vmatpush1.bf16.msra.mxu0 0
    %1758 = vmatprep.subr.bf16.mxu0 0
    %1759 = vmatpush1.bf16.msra.mxu0 0
    %1760 = vmatprep.subr.bf16.mxu0 0
    %1761 = vmatpush1.bf16.msra.mxu0 0
    %1762 = vmatprep.subr.bf16.mxu0 0
    %1763 = vmatpush1.bf16.msra.mxu0 0
    %1764 = vmatprep.subr.bf16.mxu0 0
    %1765 = vmatpush1.bf16.msra.mxu0 0
    %1766 = vmatprep.subr.bf16.mxu0 0
    %1767 = vmatpush1.bf16.msra.mxu0 0
    %1768 = vmatprep.subr.bf16.mxu0 0
    %1769 = vmatpush1.bf16.msra.mxu0 0
    %1770 = vmatprep.mubr.bf16.mxu0 0
    %1771 = vmatmul.mubr.bf16.gmra.mrb[0].mxu0 %v1577
    %v1772 = vpop.f32.mrb[0].mxu0
    %v1773 = vadd.f32 0.0, %v1772
    %v1774 = vpop.f32.mrb[0].mxu0
    %v1775 = vadd.f32 0.0, %v1774
    %v1776 = vpop.f32.mrb[0].mxu0
    %v1777 = vpop.f32.mrb[0].mxu0
    %1778 = vdwg.mxu0
    %1779 = vmatprep.subr.bf16.mxu0 0
    %1780 = vmatpush1.bf16.msra.mxu0 %v1692
    %1781 = vmatprep.subr.bf16.mxu0 0
    %1782 = vmatpush1.bf16.msra.mxu0 %v1695
    %1783 = vmatprep.subr.bf16.mxu0 0
    %1784 = vmatpush1.bf16.msra.mxu0 %v1698
    %1785 = vmatprep.subr.bf16.mxu0 0
    %1786 = vmatpush1.bf16.msra.mxu0 %v1701
    %1787 = vmatprep.subr.bf16.mxu0 0
    %1788 = vmatpush1.bf16.msra.mxu0 %v1704
    %1789 = vmatprep.subr.bf16.mxu0 0
    %1790 = vmatpush1.bf16.msra.mxu0 %v1707
    %1791 = vmatprep.subr.bf16.mxu0 0
    %1792 = vmatpush1.bf16.msra.mxu0 %v1710
    %1793 = vmatprep.subr.bf16.mxu0 0
    %1794 = vmatpush1.bf16.msra.mxu0 %v1713
    %1795 = vmatprep.subr.bf16.mxu0 0
    %1796 = vmatpush1.bf16.msra.mxu0 0
    %1797 = vmatprep.subr.bf16.mxu0 0
    %1798 = vmatpush1.bf16.msra.mxu0 0
    %1799 = vmatprep.subr.bf16.mxu0 0
    %1800 = vmatpush1.bf16.msra.mxu0 0
    %1801 = vmatprep.subr.bf16.mxu0 0
    %1802 = vmatpush1.bf16.msra.mxu0 0
    %1803 = vmatprep.subr.bf16.mxu0 0
    %1804 = vmatpush1.bf16.msra.mxu0 0
    %1805 = vmatprep.subr.bf16.mxu0 0
    %1806 = vmatpush1.bf16.msra.mxu0 0
    %1807 = vmatprep.subr.bf16.mxu0 0
    %1808 = vmatpush1.bf16.msra.mxu0 0
    %1809 = vmatprep.subr.bf16.mxu0 0
    %1810 = vmatpush1.bf16.msra.mxu0 0
    %1811 = vmatprep.mubr.bf16.mxu0 0
    %1812 = vmatmul.mubr.bf16.gmra.mrb[0].mxu0 %v1577
    %v1813 = vpop.f32.mrb[0].mxu0
    %v1814 = vadd.f32 0.0, %v1813
    %v1815 = vpop.f32.mrb[0].mxu0
    %v1816 = vpop.f32.mrb[0].mxu0
    %v1817 = vpop.f32.mrb[0].mxu0
    %1818 = vdwg.mxu0
    %v1819 = vadd.f32 %v1574, %v1773
    %v1820 = vxor.u32 %v1819, 2147483648
    %v1821 = vmul.f32 %v1820, 1.442695
    %v1822 = vpow.pop %v1821
    %v1823 = vadd.f32 %v1822, 1.0
    %v1824 = vrcp.pop %v1823
    %v1825 = vmul.f32 1.0, %v1824
    %v1826 = vadd.f32 %v1575, %v1775
    %v1827 = vxor.u32 %v1826, 2147483648
    %v1828 = vmul.f32 %v1827, 1.442695
    %v1829 = vpow.pop %v1828
    %v1830 = vadd.f32 %v1829, 1.0
    %v1831 = vrcp.pop %v1830
    %v1832 = vmul.f32 1.0, %v1831
    %v1833 = vld [vmem:[#allocation11] sm:$0x1]
    %v1835 = vlaneseq
    %v1836 = vshrl.u32 %v1835, 7
    %v1837 = vsub.s32 0, %v1836
    %v1838 = vrot.slane %v1833, %v1837
    %v1840 = vadd.f32 %v1814, %v1838
    %v1841 = vmul.f32 %v1825, %v1840
    %v1842 = vadd.f32 %v1576, %v1841
    %v1843 = vtanh.pop %v1842
    %v1844 = vsub.f32 1.0, %v1832
    %v1845 = vmul.f32 %v1844, %v1843
    %v1846 = vmul.f32 %v1832, %v1159
    %v1847 = vadd.f32 %v1845, %v1846
    %vm1848 = vcmp.gt.s32.totalorder %v533, 6
    %v1849 = vsel %vm1848, 1, 0
    %1850 = vset.pattern.permute.xlu0 0
    %1851 = vperm.xlu0 %1850, %v1849
    %v1852 = vpop.permute.xlu0 %1851
    %vm1853 = vcmp.eq.s32.totalorder %v1852, 1
    %v1854 = vsel %vm1853, %v1847, %v1159
    %v1855 = vsel %vm1853, %v1847, 0.0
    %v1857 = vcombine.high %v1855, %v1855
    %v1859 = vunpack.c.l.s4 1966171168
    %v1860 = vunpack.c.0.s8 %v1859
    %v1861 = vlaneseq
    %v1862 = vshrl.u32 %v1861, 7
    %v1863 = vsub.s32 %v1860, %v1862
    %v1864 = vrot.slane %v1855, %v1863
    %v1866 = vunpack.c.l.s4 1966171168
    %v1867 = vunpack.c.0.s8 %v1866
    %v1868 = vlaneseq
    %v1869 = vshrl.u32 %v1868, 7
    %v1870 = vsub.s32 %v1867, %v1869
    %v1871 = vrot.slane %v1857, %v1870
    %v1872 = vcombine.high %v1864, %v1864
    %v1873 = vcombine.high %v1871, %v1871
    %v1875 = vunpack.c.l.s4 1966171168
    %v1876 = vunpack.c.0.s8 %v1875
    %v1877 = vlaneseq
    %v1878 = vshrl.u32 %v1877, 7
    %v1879 = vsub.s32 %v1876, %v1878
    %v1880 = vrot.slane %v1864, %v1879
    %v1882 = vunpack.c.l.s4 1966171168
    %v1883 = vunpack.c.0.s8 %v1882
    %v1884 = vlaneseq
    %v1885 = vshrl.u32 %v1884, 7
    %v1886 = vsub.s32 %v1883, %v1885
    %v1887 = vrot.slane %v1871, %v1886
    %v1889 = vunpack.c.l.s4 1966171168
    %v1890 = vunpack.c.0.s8 %v1889
    %v1891 = vlaneseq
    %v1892 = vshrl.u32 %v1891, 7
    %v1893 = vsub.s32 %v1890, %v1892
    %v1894 = vrot.slane %v1872, %v1893
    %v1896 = vunpack.c.l.s4 1966171168
    %v1897 = vunpack.c.0.s8 %v1896
    %v1898 = vlaneseq
    %v1899 = vshrl.u32 %v1898, 7
    %v1900 = vsub.s32 %v1897, %v1899
    %v1901 = vrot.slane %v1873, %v1900
    %v1902 = vcombine.high %v1880, %v1880
    %v1903 = vcombine.high %v1887, %v1887
    %v1904 = vcombine.high %v1894, %v1894
    %v1905 = vcombine.high %v1901, %v1901
    %1914 = vst [vmem:[#allocation14 + $0xe] sm:$0x1] %v1880
    %1915 = vst [vmem:[#allocation14 + $0x1e] sm:$0x1] %v1894
    %1916 = vst [vmem:[#allocation14 + $0x2e] sm:$0x1] %v1902
    %1917 = vst [vmem:[#allocation14 + $0x3e] sm:$0x1] %v1904
    %1918 = vst [vmem:[#allocation14 + $0x4e] sm:$0x1] %v1887
    %1919 = vst [vmem:[#allocation14 + $0x5e] sm:$0x1] %v1901
    %1920 = vst [vmem:[#allocation14 + $0x6e] sm:$0x1] %v1903
    %1921 = vst [vmem:[#allocation14 + $0x7e] sm:$0x1] %v1905
    %v1922 = vld [vmem:[#allocation2 + $0x60] sm:$0xff]
    %v1923 = vld [vmem:[#allocation2 + $0x68] sm:$0xff]
    %v1924 = vld [vmem:[#allocation2 + $0x70] sm:$0xff]
    %v1925 = vpack.c.bf16 %v1506, %v1506
    %v1926 = vld [vmem:[#allocation8] sm:$0xff]
    %v1927 = vld [vmem:[#allocation8 + $0x8] sm:$0xf]
    %v1928 = vld [vmem:[#allocation8 + $0xc] sm:$0xff]
    %v1929 = vld [vmem:[#allocation8 + $0x14] sm:$0xf]
    %v1930 = vld [vmem:[#allocation8 + $0x18] sm:$0xff]
    %v1931 = vld [vmem:[#allocation8 + $0x20] sm:$0xf]
    %v1932 = vld [vmem:[#allocation8 + $0x24] sm:$0xff]
    %v1933 = vld [vmem:[#allocation8 + $0x2c] sm:$0xf]
    %v1934 = vld [vmem:[#allocation8 + $0x30] sm:$0xff]
    %v1935 = vld [vmem:[#allocation8 + $0x38] sm:$0xf]
    %v1936 = vld [vmem:[#allocation8 + $0x3c] sm:$0xff]
    %v1937 = vld [vmem:[#allocation8 + $0x44] sm:$0xf]
    %v1938 = vld [vmem:[#allocation8 + $0x48] sm:$0xff]
    %v1939 = vld [vmem:[#allocation8 + $0x50] sm:$0xf]
    %v1940 = vld [vmem:[#allocation8 + $0x54] sm:$0xff]
    %v1941 = vld [vmem:[#allocation8 + $0x5c] sm:$0xf]
    %v1942 = vld [vmem:[#allocation8 + $0x60] sm:$0xff]
    %v1943 = vld [vmem:[#allocation8 + $0x68] sm:$0xf]
    %v1944 = vld [vmem:[#allocation8 + $0x6c] sm:$0xff]
    %v1945 = vld [vmem:[#allocation8 + $0x74] sm:$0xf]
    %v1946 = vld [vmem:[#allocation8 + $0x78] sm:$0xff]
    %v1947 = vld [vmem:[#allocation8 + $0x80] sm:$0xf]
    %v1948 = vld [vmem:[#allocation8 + $0x84] sm:$0xff]
    %v1949 = vld [vmem:[#allocation8 + $0x8c] sm:$0xf]
    %v1950 = vld [vmem:[#allocation8 + $0x90] sm:$0xff]
    %v1951 = vld [vmem:[#allocation8 + $0x98] sm:$0xf]
    %v1952 = vld [vmem:[#allocation8 + $0x9c] sm:$0xff]
    %v1953 = vld [vmem:[#allocation8 + $0xa4] sm:$0xf]
    %v1954 = vld [vmem:[#allocation8 + $0xa8] sm:$0xff]
    %v1955 = vld [vmem:[#allocation8 + $0xb0] sm:$0xf]
    %v1956 = vld [vmem:[#allocation8 + $0xb4] sm:$0xff]
    %v1957 = vld [vmem:[#allocation8 + $0xbc] sm:$0xf]
    %v1990 = vunpack.c.l.b16 %v1926
    %v1991 = vunpack.c.h.b16 %v1926
    %v1992 = vunpack.c.l.b16 %v1927
    %v1993 = vunpack.c.l.b16 %v1928
    %v1994 = vunpack.c.h.b16 %v1928
    %v1995 = vunpack.c.l.b16 %v1929
    %v1996 = vunpack.c.l.b16 %v1930
    %v1997 = vunpack.c.h.b16 %v1930
    %v1998 = vunpack.c.l.b16 %v1931
    %v1999 = vunpack.c.l.b16 %v1932
    %v2000 = vunpack.c.h.b16 %v1932
    %v2001 = vunpack.c.l.b16 %v1933
    %v2002 = vunpack.c.l.b16 %v1934
    %v2003 = vunpack.c.h.b16 %v1934
    %v2004 = vunpack.c.l.b16 %v1935
    %v2005 = vunpack.c.l.b16 %v1936
    %v2006 = vunpack.c.h.b16 %v1936
    %v2007 = vunpack.c.l.b16 %v1937
    %v2008 = vunpack.c.l.b16 %v1938
    %v2009 = vunpack.c.h.b16 %v1938
    %v2010 = vunpack.c.l.b16 %v1939
    %v2011 = vunpack.c.l.b16 %v1940
    %v2012 = vunpack.c.h.b16 %v1940
    %v2013 = vunpack.c.l.b16 %v1941
    %v2014 = vunpack.c.l.b16 %v1942
    %v2015 = vunpack.c.h.b16 %v1942
    %v2016 = vunpack.c.l.b16 %v1943
    %v2017 = vunpack.c.l.b16 %v1944
    %v2018 = vunpack.c.h.b16 %v1944
    %v2019 = vunpack.c.l.b16 %v1945
    %v2020 = vunpack.c.l.b16 %v1946
    %v2021 = vunpack.c.h.b16 %v1946
    %v2022 = vunpack.c.l.b16 %v1947
    %v2023 = vunpack.c.l.b16 %v1948
    %v2024 = vunpack.c.h.b16 %v1948
    %v2025 = vunpack.c.l.b16 %v1949
    %v2026 = vunpack.c.l.b16 %v1950
    %v2027 = vunpack.c.h.b16 %v1950
    %v2028 = vunpack.c.l.b16 %v1951
    %v2029 = vunpack.c.l.b16 %v1952
    %v2030 = vunpack.c.h.b16 %v1952
    %v2031 = vunpack.c.l.b16 %v1953
    %v2032 = vunpack.c.l.b16 %v1954
    %v2033 = vunpack.c.h.b16 %v1954
    %v2034 = vunpack.c.l.b16 %v1955
    %v2035 = vunpack.c.l.b16 %v1956
    %v2036 = vunpack.c.h.b16 %v1956
    %v2037 = vunpack.c.l.b16 %v1957
    %v2038 = vpack.c.b16 %v1993, %v1990
    %v2039 = vpack.c.b16 %v1994, %v1991
    %v2040 = vpack.c.b16 %v1995, %v1992
    %v2041 = vpack.c.b16 %v1999, %v1996
    %v2042 = vpack.c.b16 %v2000, %v1997
    %v2043 = vpack.c.b16 %v2001, %v1998
    %v2044 = vpack.c.b16 %v2005, %v2002
    %v2045 = vpack.c.b16 %v2006, %v2003
    %v2046 = vpack.c.b16 %v2007, %v2004
    %v2047 = vpack.c.b16 %v2011, %v2008
    %v2048 = vpack.c.b16 %v2012, %v2009
    %v2049 = vpack.c.b16 %v2013, %v2010
    %v2050 = vpack.c.b16 %v2017, %v2014
    %v2051 = vpack.c.b16 %v2018, %v2015
    %v2052 = vpack.c.b16 %v2019, %v2016
    %v2053 = vpack.c.b16 %v2023, %v2020
    %v2054 = vpack.c.b16 %v2024, %v2021
    %v2055 = vpack.c.b16 %v2025, %v2022
    %v2056 = vpack.c.b16 %v2029, %v2026
    %v2057 = vpack.c.b16 %v2030, %v2027
    %v2058 = vpack.c.b16 %v2031, %v2028
    %v2059 = vpack.c.b16 %v2035, %v2032
    %v2060 = vpack.c.b16 %v2036, %v2033
    %v2061 = vpack.c.b16 %v2037, %v2034
    %2086 = vmatprep.subr.bf16.mxu0 %v2039
    %2087 = vmatpush1.bf16.msra.mxu0 %v2038
    %2088 = vmatprep.subr.bf16.mxu0 %v2042
    %2089 = vmatpush1.bf16.msra.mxu0 %v2041
    %2090 = vmatprep.subr.bf16.mxu0 %v2045
    %2091 = vmatpush1.bf16.msra.mxu0 %v2044
    %2092 = vmatprep.subr.bf16.mxu0 %v2048
    %2093 = vmatpush1.bf16.msra.mxu0 %v2047
    %2094 = vmatprep.subr.bf16.mxu0 %v2051
    %2095 = vmatpush1.bf16.msra.mxu0 %v2050
    %2096 = vmatprep.subr.bf16.mxu0 %v2054
    %2097 = vmatpush1.bf16.msra.mxu0 %v2053
    %2098 = vmatprep.subr.bf16.mxu0 %v2057
    %2099 = vmatpush1.bf16.msra.mxu0 %v2056
    %2100 = vmatprep.subr.bf16.mxu0 %v2060
    %2101 = vmatpush1.bf16.msra.mxu0 %v2059
    %2102 = vmatprep.subr.bf16.mxu0 0
    %2103 = vmatpush1.bf16.msra.mxu0 0
    %2104 = vmatprep.subr.bf16.mxu0 0
    %2105 = vmatpush1.bf16.msra.mxu0 0
    %2106 = vmatprep.subr.bf16.mxu0 0
    %2107 = vmatpush1.bf16.msra.mxu0 0
    %2108 = vmatprep.subr.bf16.mxu0 0
    %2109 = vmatpush1.bf16.msra.mxu0 0
    %2110 = vmatprep.subr.bf16.mxu0 0
    %2111 = vmatpush1.bf16.msra.mxu0 0
    %2112 = vmatprep.subr.bf16.mxu0 0
    %2113 = vmatpush1.bf16.msra.mxu0 0
    %2114 = vmatprep.subr.bf16.mxu0 0
    %2115 = vmatpush1.bf16.msra.mxu0 0
    %2116 = vmatprep.subr.bf16.mxu0 0
    %2117 = vmatpush1.bf16.msra.mxu0 0
    %2118 = vmatprep.mubr.bf16.mxu0 0
    %2119 = vmatmul.mubr.bf16.gmra.mrb[0].mxu0 %v1925
    %v2120 = vpop.f32.mrb[0].mxu0
    %v2121 = vadd.f32 0.0, %v2120
    %v2122 = vpop.f32.mrb[0].mxu0
    %v2123 = vadd.f32 0.0, %v2122
    %v2124 = vpop.f32.mrb[0].mxu0
    %v2125 = vpop.f32.mrb[0].mxu0
    %2126 = vdwg.mxu0
    %2127 = vmatprep.subr.bf16.mxu0 0
    %2128 = vmatpush1.bf16.msra.mxu0 %v2040
    %2129 = vmatprep.subr.bf16.mxu0 0
    %2130 = vmatpush1.bf16.msra.mxu0 %v2043
    %2131 = vmatprep.subr.bf16.mxu0 0
    %2132 = vmatpush1.bf16.msra.mxu0 %v2046
    %2133 = vmatprep.subr.bf16.mxu0 0
    %2134 = vmatpush1.bf16.msra.mxu0 %v2049
    %2135 = vmatprep.subr.bf16.mxu0 0
    %2136 = vmatpush1.bf16.msra.mxu0 %v2052
    %2137 = vmatprep.subr.bf16.mxu0 0
    %2138 = vmatpush1.bf16.msra.mxu0 %v2055
    %2139 = vmatprep.subr.bf16.mxu0 0
    %2140 = vmatpush1.bf16.msra.mxu0 %v2058
    %2141 = vmatprep.subr.bf16.mxu0 0
    %2142 = vmatpush1.bf16.msra.mxu0 %v2061
    %2143 = vmatprep.subr.bf16.mxu0 0
    %2144 = vmatpush1.bf16.msra.mxu0 0
    %2145 = vmatprep.subr.bf16.mxu0 0
    %2146 = vmatpush1.bf16.msra.mxu0 0
    %2147 = vmatprep.subr.bf16.mxu0 0
    %2148 = vmatpush1.bf16.msra.mxu0 0
    %2149 = vmatprep.subr.bf16.mxu0 0
    %2150 = vmatpush1.bf16.msra.mxu0 0
    %2151 = vmatprep.subr.bf16.mxu0 0
    %2152 = vmatpush1.bf16.msra.mxu0 0
    %2153 = vmatprep.subr.bf16.mxu0 0
    %2154 = vmatpush1.bf16.msra.mxu0 0
    %2155 = vmatprep.subr.bf16.mxu0 0
    %2156 = vmatpush1.bf16.msra.mxu0 0
    %2157 = vmatprep.subr.bf16.mxu0 0
    %2158 = vmatpush1.bf16.msra.mxu0 0
    %2159 = vmatprep.mubr.bf16.mxu0 0
    %2160 = vmatmul.mubr.bf16.gmra.mrb[0].mxu0 %v1925
    %v2161 = vpop.f32.mrb[0].mxu0
    %v2162 = vadd.f32 0.0, %v2161
    %v2163 = vpop.f32.mrb[0].mxu0
    %v2164 = vpop.f32.mrb[0].mxu0
    %v2165 = vpop.f32.mrb[0].mxu0
    %2166 = vdwg.mxu0
    %v2167 = vadd.f32 %v1922, %v2121
    %v2168 = vxor.u32 %v2167, 2147483648
    %v2169 = vmul.f32 %v2168, 1.442695
    %v2170 = vpow.pop %v2169
    %v2171 = vadd.f32 %v2170, 1.0
    %v2172 = vrcp.pop %v2171
    %v2173 = vmul.f32 1.0, %v2172
    %v2174 = vadd.f32 %v1923, %v2123
    %v2175 = vxor.u32 %v2174, 2147483648
    %v2176 = vmul.f32 %v2175, 1.442695
    %v2177 = vpow.pop %v2176
    %v2178 = vadd.f32 %v2177, 1.0
    %v2179 = vrcp.pop %v2178
    %v2180 = vmul.f32 1.0, %v2179
    %v2181 = vld [vmem:[%s5] sm:$0x1]
    %v2183 = vlaneseq
    %v2184 = vshrl.u32 %v2183, 7
    %v2185 = vsub.s32 0, %v2184
    %v2186 = vrot.slane %v2181, %v2185
    %v2188 = vadd.f32 %v2162, %v2186
    %v2189 = vmul.f32 %v2173, %v2188
    %v2190 = vadd.f32 %v1924, %v2189
    %v2191 = vtanh.pop %v2190
    %v2192 = vsub.f32 1.0, %v2180
    %v2193 = vmul.f32 %v2192, %v2191
    %v2194 = vmul.f32 %v2180, %v1506
    %v2195 = vadd.f32 %v2193, %v2194
    %vm2196 = vcmp.gt.s32.totalorder %v533, 2
    %v2197 = vsel %vm2196, 1, 0
    %2198 = vset.pattern.permute.xlu0 0
    %2199 = vperm.xlu0 %2198, %v2197
    %v2200 = vpop.permute.xlu0 %2199
    %vm2201 = vcmp.eq.s32.totalorder %v2200, 1
    %v2202 = vsel %vm2201, %v2195, %v1506
    %v2203 = vsel %vm2201, %v2195, 0.0
    %v2205 = vcombine.high %v2203, %v2203
    %v2207 = vunpack.c.l.s4 1966171168
    %v2208 = vunpack.c.0.s8 %v2207
    %v2209 = vlaneseq
    %v2210 = vshrl.u32 %v2209, 7
    %v2211 = vsub.s32 %v2208, %v2210
    %v2212 = vrot.slane %v2203, %v2211
    %v2214 = vunpack.c.l.s4 1966171168
    %v2215 = vunpack.c.0.s8 %v2214
    %v2216 = vlaneseq
    %v2217 = vshrl.u32 %v2216, 7
    %v2218 = vsub.s32 %v2215, %v2217
    %v2219 = vrot.slane %v2205, %v2218
    %v2220 = vcombine.high %v2212, %v2212
    %v2221 = vcombine.high %v2219, %v2219
    %v2223 = vunpack.c.l.s4 1966171168
    %v2224 = vunpack.c.0.s8 %v2223
    %v2225 = vlaneseq
    %v2226 = vshrl.u32 %v2225, 7
    %v2227 = vsub.s32 %v2224, %v2226
    %v2228 = vrot.slane %v2212, %v2227
    %v2230 = vunpack.c.l.s4 1966171168
    %v2231 = vunpack.c.0.s8 %v2230
    %v2232 = vlaneseq
    %v2233 = vshrl.u32 %v2232, 7
    %v2234 = vsub.s32 %v2231, %v2233
    %v2235 = vrot.slane %v2219, %v2234
    %v2237 = vunpack.c.l.s4 1966171168
    %v2238 = vunpack.c.0.s8 %v2237
    %v2239 = vlaneseq
    %v2240 = vshrl.u32 %v2239, 7
    %v2241 = vsub.s32 %v2238, %v2240
    %v2242 = vrot.slane %v2220, %v2241
    %v2244 = vunpack.c.l.s4 1966171168
    %v2245 = vunpack.c.0.s8 %v2244
    %v2246 = vlaneseq
    %v2247 = vshrl.u32 %v2246, 7
    %v2248 = vsub.s32 %v2245, %v2247
    %v2249 = vrot.slane %v2221, %v2248
    %v2250 = vcombine.high %v2228, %v2228
    %v2251 = vcombine.high %v2235, %v2235
    %v2252 = vcombine.high %v2242, %v2242
    %v2253 = vcombine.high %v2249, %v2249
    %2262 = vst [vmem:[#allocation14 + $0x2] sm:$0x1] %v2228
    %2263 = vst [vmem:[#allocation14 + $0x12] sm:$0x1] %v2242
    %2264 = vst [vmem:[#allocation14 + $0x22] sm:$0x1] %v2250
    %2265 = vst [vmem:[#allocation14 + $0x32] sm:$0x1] %v2252
    %2266 = vst [vmem:[#allocation14 + $0x42] sm:$0x1] %v2235
    %2267 = vst [vmem:[#allocation14 + $0x52] sm:$0x1] %v2249
    %2268 = vst [vmem:[#allocation14 + $0x62] sm:$0x1] %v2251
    %2269 = vst [vmem:[#allocation14 + $0x72] sm:$0x1] %v2253
    %v2270 = vld [vmem:[#allocation2 + $0x108] sm:$0xff]
    %v2271 = vld [vmem:[#allocation2 + $0x110] sm:$0xff]
    %v2272 = vld [vmem:[#allocation2 + $0x118] sm:$0xff]
    %v2273 = vpack.c.bf16 %v1854, %v1854
    %v2274 = vld [vmem:[#allocation9] sm:$0xff]
    %v2275 = vld [vmem:[#allocation9 + $0x8] sm:$0xf]
    %v2276 = vld [vmem:[#allocation9 + $0xc] sm:$0xff]
    %v2277 = vld [vmem:[#allocation9 + $0x14] sm:$0xf]
    %v2278 = vld [vmem:[#allocation9 + $0x18] sm:$0xff]
    %v2279 = vld [vmem:[#allocation9 + $0x20] sm:$0xf]
    %v2280 = vld [vmem:[#allocation9 + $0x24] sm:$0xff]
    %v2281 = vld [vmem:[#allocation9 + $0x2c] sm:$0xf]
    %v2282 = vld [vmem:[#allocation9 + $0x30] sm:$0xff]
    %v2283 = vld [vmem:[#allocation9 + $0x38] sm:$0xf]
    %v2284 = vld [vmem:[#allocation9 + $0x3c] sm:$0xff]
    %v2285 = vld [vmem:[#allocation9 + $0x44] sm:$0xf]
    %v2286 = vld [vmem:[#allocation9 + $0x48] sm:$0xff]
    %v2287 = vld [vmem:[#allocation9 + $0x50] sm:$0xf]
    %v2288 = vld [vmem:[#allocation9 + $0x54] sm:$0xff]
    %v2289 = vld [vmem:[#allocation9 + $0x5c] sm:$0xf]
    %v2290 = vld [vmem:[#allocation9 + $0x60] sm:$0xff]
    %v2291 = vld [vmem:[#allocation9 + $0x68] sm:$0xf]
    %v2292 = vld [vmem:[#allocation9 + $0x6c] sm:$0xff]
    %v2293 = vld [vmem:[#allocation9 + $0x74] sm:$0xf]
    %v2294 = vld [vmem:[#allocation9 + $0x78] sm:$0xff]
    %v2295 = vld [vmem:[#allocation9 + $0x80] sm:$0xf]
    %v2296 = vld [vmem:[#allocation9 + $0x84] sm:$0xff]
    %v2297 = vld [vmem:[#allocation9 + $0x8c] sm:$0xf]
    %v2298 = vld [vmem:[#allocation9 + $0x90] sm:$0xff]
    %v2299 = vld [vmem:[#allocation9 + $0x98] sm:$0xf]
    %v2300 = vld [vmem:[#allocation9 + $0x9c] sm:$0xff]
    %v2301 = vld [vmem:[#allocation9 + $0xa4] sm:$0xf]
    %v2302 = vld [vmem:[#allocation9 + $0xa8] sm:$0xff]
    %v2303 = vld [vmem:[#allocation9 + $0xb0] sm:$0xf]
    %v2304 = vld [vmem:[#allocation9 + $0xb4] sm:$0xff]
    %v2305 = vld [vmem:[#allocation9 + $0xbc] sm:$0xf]
    %v2338 = vunpack.c.l.b16 %v2274
    %v2339 = vunpack.c.h.b16 %v2274
    %v2340 = vunpack.c.l.b16 %v2275
    %v2341 = vunpack.c.l.b16 %v2276
    %v2342 = vunpack.c.h.b16 %v2276
    %v2343 = vunpack.c.l.b16 %v2277
    %v2344 = vunpack.c.l.b16 %v2278
    %v2345 = vunpack.c.h.b16 %v2278
    %v2346 = vunpack.c.l.b16 %v2279
    %v2347 = vunpack.c.l.b16 %v2280
    %v2348 = vunpack.c.h.b16 %v2280
    %v2349 = vunpack.c.l.b16 %v2281
    %v2350 = vunpack.c.l.b16 %v2282
    %v2351 = vunpack.c.h.b16 %v2282
    %v2352 = vunpack.c.l.b16 %v2283
    %v2353 = vunpack.c.l.b16 %v2284
    %v2354 = vunpack.c.h.b16 %v2284
    %v2355 = vunpack.c.l.b16 %v2285
    %v2356 = vunpack.c.l.b16 %v2286
    %v2357 = vunpack.c.h.b16 %v2286
    %v2358 = vunpack.c.l.b16 %v2287
    %v2359 = vunpack.c.l.b16 %v2288
    %v2360 = vunpack.c.h.b16 %v2288
    %v2361 = vunpack.c.l.b16 %v2289
    %v2362 = vunpack.c.l.b16 %v2290
    %v2363 = vunpack.c.h.b16 %v2290
    %v2364 = vunpack.c.l.b16 %v2291
    %v2365 = vunpack.c.l.b16 %v2292
    %v2366 = vunpack.c.h.b16 %v2292
    %v2367 = vunpack.c.l.b16 %v2293
    %v2368 = vunpack.c.l.b16 %v2294
    %v2369 = vunpack.c.h.b16 %v2294
    %v2370 = vunpack.c.l.b16 %v2295
    %v2371 = vunpack.c.l.b16 %v2296
    %v2372 = vunpack.c.h.b16 %v2296
    %v2373 = vunpack.c.l.b16 %v2297
    %v2374 = vunpack.c.l.b16 %v2298
    %v2375 = vunpack.c.h.b16 %v2298
    %v2376 = vunpack.c.l.b16 %v2299
    %v2377 = vunpack.c.l.b16 %v2300
    %v2378 = vunpack.c.h.b16 %v2300
    %v2379 = vunpack.c.l.b16 %v2301
    %v2380 = vunpack.c.l.b16 %v2302
    %v2381 = vunpack.c.h.b16 %v2302
    %v2382 = vunpack.c.l.b16 %v2303
    %v2383 = vunpack.c.l.b16 %v2304
    %v2384 = vunpack.c.h.b16 %v2304
    %v2385 = vunpack.c.l.b16 %v2305
    %v2386 = vpack.c.b16 %v2341, %v2338
    %v2387 = vpack.c.b16 %v2342, %v2339
    %v2388 = vpack.c.b16 %v2343, %v2340
    %v2389 = vpack.c.b16 %v2347, %v2344
    %v2390 = vpack.c.b16 %v2348, %v2345
    %v2391 = vpack.c.b16 %v2349, %v2346
    %v2392 = vpack.c.b16 %v2353, %v2350
    %v2393 = vpack.c.b16 %v2354, %v2351
    %v2394 = vpack.c.b16 %v2355, %v2352
    %v2395 = vpack.c.b16 %v2359, %v2356
    %v2396 = vpack.c.b16 %v2360, %v2357
    %v2397 = vpack.c.b16 %v2361, %v2358
    %v2398 = vpack.c.b16 %v2365, %v2362
    %v2399 = vpack.c.b16 %v2366, %v2363
    %v2400 = vpack.c.b16 %v2367, %v2364
    %v2401 = vpack.c.b16 %v2371, %v2368
    %v2402 = vpack.c.b16 %v2372, %v2369
    %v2403 = vpack.c.b16 %v2373, %v2370
    %v2404 = vpack.c.b16 %v2377, %v2374
    %v2405 = vpack.c.b16 %v2378, %v2375
    %v2406 = vpack.c.b16 %v2379, %v2376
    %v2407 = vpack.c.b16 %v2383, %v2380
    %v2408 = vpack.c.b16 %v2384, %v2381
    %v2409 = vpack.c.b16 %v2385, %v2382
    %2434 = vmatprep.subr.bf16.mxu0 %v2387
    %2435 = vmatpush1.bf16.msra.mxu0 %v2386
    %2436 = vmatprep.subr.bf16.mxu0 %v2390
    %2437 = vmatpush1.bf16.msra.mxu0 %v2389
    %2438 = vmatprep.subr.bf16.mxu0 %v2393
    %2439 = vmatpush1.bf16.msra.mxu0 %v2392
    %2440 = vmatprep.subr.bf16.mxu0 %v2396
    %2441 = vmatpush1.bf16.msra.mxu0 %v2395
    %2442 = vmatprep.subr.bf16.mxu0 %v2399
    %2443 = vmatpush1.bf16.msra.mxu0 %v2398
    %2444 = vmatprep.subr.bf16.mxu0 %v2402
    %2445 = vmatpush1.bf16.msra.mxu0 %v2401
    %2446 = vmatprep.subr.bf16.mxu0 %v2405
    %2447 = vmatpush1.bf16.msra.mxu0 %v2404
    %2448 = vmatprep.subr.bf16.mxu0 %v2408
    %2449 = vmatpush1.bf16.msra.mxu0 %v2407
    %2450 = vmatprep.subr.bf16.mxu0 0
    %2451 = vmatpush1.bf16.msra.mxu0 0
    %2452 = vmatprep.subr.bf16.mxu0 0
    %2453 = vmatpush1.bf16.msra.mxu0 0
    %2454 = vmatprep.subr.bf16.mxu0 0
    %2455 = vmatpush1.bf16.msra.mxu0 0
    %2456 = vmatprep.subr.bf16.mxu0 0
    %2457 = vmatpush1.bf16.msra.mxu0 0
    %2458 = vmatprep.subr.bf16.mxu0 0
    %2459 = vmatpush1.bf16.msra.mxu0 0
    %2460 = vmatprep.subr.bf16.mxu0 0
    %2461 = vmatpush1.bf16.msra.mxu0 0
    %2462 = vmatprep.subr.bf16.mxu0 0
    %2463 = vmatpush1.bf16.msra.mxu0 0
    %2464 = vmatprep.subr.bf16.mxu0 0
    %2465 = vmatpush1.bf16.msra.mxu0 0
    %2466 = vmatprep.mubr.bf16.mxu0 0
    %2467 = vmatmul.mubr.bf16.gmra.mrb[0].mxu0 %v2273
    %v2468 = vpop.f32.mrb[0].mxu0
    %v2469 = vadd.f32 0.0, %v2468
    %v2470 = vpop.f32.mrb[0].mxu0
    %v2471 = vadd.f32 0.0, %v2470
    %v2472 = vpop.f32.mrb[0].mxu0
    %v2473 = vpop.f32.mrb[0].mxu0
    %2474 = vdwg.mxu0
    %2475 = vmatprep.subr.bf16.mxu0 0
    %2476 = vmatpush1.bf16.msra.mxu0 %v2388
    %2477 = vmatprep.subr.bf16.mxu0 0
    %2478 = vmatpush1.bf16.msra.mxu0 %v2391
    %2479 = vmatprep.subr.bf16.mxu0 0
    %2480 = vmatpush1.bf16.msra.mxu0 %v2394
    %2481 = vmatprep.subr.bf16.mxu0 0
    %2482 = vmatpush1.bf16.msra.mxu0 %v2397
    %2483 = vmatprep.subr.bf16.mxu0 0
    %2484 = vmatpush1.bf16.msra.mxu0 %v2400
    %2485 = vmatprep.subr.bf16.mxu0 0
    %2486 = vmatpush1.bf16.msra.mxu0 %v2403
    %2487 = vmatprep.subr.bf16.mxu0 0
    %2488 = vmatpush1.bf16.msra.mxu0 %v2406
    %2489 = vmatprep.subr.bf16.mxu0 0
    %2490 = vmatpush1.bf16.msra.mxu0 %v2409
    %2491 = vmatprep.subr.bf16.mxu0 0
    %2492 = vmatpush1.bf16.msra.mxu0 0
    %2493 = vmatprep.subr.bf16.mxu0 0
    %2494 = vmatpush1.bf16.msra.mxu0 0
    %2495 = vmatprep.subr.bf16.mxu0 0
    %2496 = vmatpush1.bf16.msra.mxu0 0
    %2497 = vmatprep.subr.bf16.mxu0 0
    %2498 = vmatpush1.bf16.msra.mxu0 0
    %2499 = vmatprep.subr.bf16.mxu0 0
    %2500 = vmatpush1.bf16.msra.mxu0 0
    %2501 = vmatprep.subr.bf16.mxu0 0
    %2502 = vmatpush1.bf16.msra.mxu0 0
    %2503 = vmatprep.subr.bf16.mxu0 0
    %2504 = vmatpush1.bf16.msra.mxu0 0
    %2505 = vmatprep.subr.bf16.mxu0 0
    %2506 = vmatpush1.bf16.msra.mxu0 0
    %2507 = vmatprep.mubr.bf16.mxu0 0
    %2508 = vmatmul.mubr.bf16.gmra.mrb[0].mxu0 %v2273
    %v2509 = vpop.f32.mrb[0].mxu0
    %v2510 = vadd.f32 0.0, %v2509
    %v2511 = vpop.f32.mrb[0].mxu0
    %v2512 = vpop.f32.mrb[0].mxu0
    %v2513 = vpop.f32.mrb[0].mxu0
    %2514 = vdwg.mxu0
    %v2515 = vadd.f32 %v2270, %v2469
    %v2516 = vxor.u32 %v2515, 2147483648
    %v2517 = vmul.f32 %v2516, 1.442695
    %v2518 = vpow.pop %v2517
    %v2519 = vadd.f32 %v2518, 1.0
    %v2520 = vrcp.pop %v2519
    %v2521 = vmul.f32 1.0, %v2520
    %v2522 = vadd.f32 %v2271, %v2471
    %v2523 = vxor.u32 %v2522, 2147483648
    %v2524 = vmul.f32 %v2523, 1.442695
    %v2525 = vpow.pop %v2524
    %v2526 = vadd.f32 %v2525, 1.0
    %v2527 = vrcp.pop %v2526
    %v2528 = vmul.f32 1.0, %v2527
    %v2529 = vld [vmem:[#allocation11] sm:$0x1]
    %v2531 = vlaneseq
    %v2532 = vshrl.u32 %v2531, 7
    %v2533 = vsub.s32 0, %v2532
    %v2534 = vrot.slane %v2529, %v2533
    %v2536 = vadd.f32 %v2510, %v2534
    %v2537 = vmul.f32 %v2521, %v2536
    %v2538 = vadd.f32 %v2272, %v2537
    %v2539 = vtanh.pop %v2538
    %v2540 = vsub.f32 1.0, %v2528
    %v2541 = vmul.f32 %v2540, %v2539
    %v2542 = vmul.f32 %v2528, %v1854
    %v2543 = vadd.f32 %v2541, %v2542
    %vm2544 = vcmp.gt.s32.totalorder %v533, 5
    %v2545 = vsel %vm2544, 1, 0
    %2546 = vset.pattern.permute.xlu0 0
    %2547 = vperm.xlu0 %2546, %v2545
    %v2548 = vpop.permute.xlu0 %2547
    %vm2549 = vcmp.eq.s32.totalorder %v2548, 1
    %v2550 = vsel %vm2549, %v2543, %v1854
    %v2551 = vsel %vm2549, %v2543, 0.0
    %v2553 = vcombine.high %v2551, %v2551
    %v2555 = vunpack.c.l.s4 1966171168
    %v2556 = vunpack.c.0.s8 %v2555
    %v2557 = vlaneseq
    %v2558 = vshrl.u32 %v2557, 7
    %v2559 = vsub.s32 %v2556, %v2558
    %v2560 = vrot.slane %v2551, %v2559
    %v2562 = vunpack.c.l.s4 1966171168
    %v2563 = vunpack.c.0.s8 %v2562
    %v2564 = vlaneseq
    %v2565 = vshrl.u32 %v2564, 7
    %v2566 = vsub.s32 %v2563, %v2565
    %v2567 = vrot.slane %v2553, %v2566
    %v2568 = vcombine.high %v2560, %v2560
    %v2569 = vcombine.high %v2567, %v2567
    %v2571 = vunpack.c.l.s4 1966171168
    %v2572 = vunpack.c.0.s8 %v2571
    %v2573 = vlaneseq
    %v2574 = vshrl.u32 %v2573, 7
    %v2575 = vsub.s32 %v2572, %v2574
    %v2576 = vrot.slane %v2560, %v2575
    %v2578 = vunpack.c.l.s4 1966171168
    %v2579 = vunpack.c.0.s8 %v2578
    %v2580 = vlaneseq
    %v2581 = vshrl.u32 %v2580, 7
    %v2582 = vsub.s32 %v2579, %v2581
    %v2583 = vrot.slane %v2567, %v2582
    %v2585 = vunpack.c.l.s4 1966171168
    %v2586 = vunpack.c.0.s8 %v2585
    %v2587 = vlaneseq
    %v2588 = vshrl.u32 %v2587, 7
    %v2589 = vsub.s32 %v2586, %v2588
    %v2590 = vrot.slane %v2568, %v2589
    %v2592 = vunpack.c.l.s4 1966171168
    %v2593 = vunpack.c.0.s8 %v2592
    %v2594 = vlaneseq
    %v2595 = vshrl.u32 %v2594, 7
    %v2596 = vsub.s32 %v2593, %v2595
    %v2597 = vrot.slane %v2569, %v2596
    %v2598 = vcombine.high %v2576, %v2576
    %v2599 = vcombine.high %v2583, %v2583
    %v2600 = vcombine.high %v2590, %v2590
    %v2601 = vcombine.high %v2597, %v2597
    %2610 = vst [vmem:[#allocation14 + $0xd] sm:$0x1] %v2576
    %2611 = vst [vmem:[#allocation14 + $0x1d] sm:$0x1] %v2590
    %2612 = vst [vmem:[#allocation14 + $0x2d] sm:$0x1] %v2598
    %2613 = vst [vmem:[#allocation14 + $0x3d] sm:$0x1] %v2600
    %2614 = vst [vmem:[#allocation14 + $0x4d] sm:$0x1] %v2583
    %2615 = vst [vmem:[#allocation14 + $0x5d] sm:$0x1] %v2597
    %2616 = vst [vmem:[#allocation14 + $0x6d] sm:$0x1] %v2599
    %2617 = vst [vmem:[#allocation14 + $0x7d] sm:$0x1] %v2601
    %v2618 = vld [vmem:[#allocation2 + $0x90] sm:$0xff]
    %v2619 = vld [vmem:[#allocation2 + $0x98] sm:$0xff]
    %v2620 = vld [vmem:[#allocation2 + $0xa0] sm:$0xff]
    %v2621 = vpack.c.bf16 %v2202, %v2202
    %v2622 = vld [vmem:[#allocation8] sm:$0xff]
    %v2623 = vld [vmem:[#allocation8 + $0x8] sm:$0xf]
    %v2624 = vld [vmem:[#allocation8 + $0xc] sm:$0xff]
    %v2625 = vld [vmem:[#allocation8 + $0x14] sm:$0xf]
    %v2626 = vld [vmem:[#allocation8 + $0x18] sm:$0xff]
    %v2627 = vld [vmem:[#allocation8 + $0x20] sm:$0xf]
    %v2628 = vld [vmem:[#allocation8 + $0x24] sm:$0xff]
    %v2629 = vld [vmem:[#allocation8 + $0x2c] sm:$0xf]
    %v2630 = vld [vmem:[#allocation8 + $0x30] sm:$0xff]
    %v2631 = vld [vmem:[#allocation8 + $0x38] sm:$0xf]
    %v2632 = vld [vmem:[#allocation8 + $0x3c] sm:$0xff]
    %v2633 = vld [vmem:[#allocation8 + $0x44] sm:$0xf]
    %v2634 = vld [vmem:[#allocation8 + $0x48] sm:$0xff]
    %v2635 = vld [vmem:[#allocation8 + $0x50] sm:$0xf]
    %v2636 = vld [vmem:[#allocation8 + $0x54] sm:$0xff]
    %v2637 = vld [vmem:[#allocation8 + $0x5c] sm:$0xf]
    %v2638 = vld [vmem:[#allocation8 + $0x60] sm:$0xff]
    %v2639 = vld [vmem:[#allocation8 + $0x68] sm:$0xf]
    %v2640 = vld [vmem:[#allocation8 + $0x6c] sm:$0xff]
    %v2641 = vld [vmem:[#allocation8 + $0x74] sm:$0xf]
    %v2642 = vld [vmem:[#allocation8 + $0x78] sm:$0xff]
    %v2643 = vld [vmem:[#allocation8 + $0x80] sm:$0xf]
    %v2644 = vld [vmem:[#allocation8 + $0x84] sm:$0xff]
    %v2645 = vld [vmem:[#allocation8 + $0x8c] sm:$0xf]
    %v2646 = vld [vmem:[#allocation8 + $0x90] sm:$0xff]
    %v2647 = vld [vmem:[#allocation8 + $0x98] sm:$0xf]
    %v2648 = vld [vmem:[#allocation8 + $0x9c] sm:$0xff]
    %v2649 = vld [vmem:[#allocation8 + $0xa4] sm:$0xf]
    %v2650 = vld [vmem:[#allocation8 + $0xa8] sm:$0xff]
    %v2651 = vld [vmem:[#allocation8 + $0xb0] sm:$0xf]
    %v2652 = vld [vmem:[#allocation8 + $0xb4] sm:$0xff]
    %v2653 = vld [vmem:[#allocation8 + $0xbc] sm:$0xf]
    %v2686 = vunpack.c.l.b16 %v2622
    %v2687 = vunpack.c.h.b16 %v2622
    %v2688 = vunpack.c.l.b16 %v2623
    %v2689 = vunpack.c.l.b16 %v2624
    %v2690 = vunpack.c.h.b16 %v2624
    %v2691 = vunpack.c.l.b16 %v2625
    %v2692 = vunpack.c.l.b16 %v2626
    %v2693 = vunpack.c.h.b16 %v2626
    %v2694 = vunpack.c.l.b16 %v2627
    %v2695 = vunpack.c.l.b16 %v2628
    %v2696 = vunpack.c.h.b16 %v2628
    %v2697 = vunpack.c.l.b16 %v2629
    %v2698 = vunpack.c.l.b16 %v2630
    %v2699 = vunpack.c.h.b16 %v2630
    %v2700 = vunpack.c.l.b16 %v2631
    %v2701 = vunpack.c.l.b16 %v2632
    %v2702 = vunpack.c.h.b16 %v2632
    %v2703 = vunpack.c.l.b16 %v2633
    %v2704 = vunpack.c.l.b16 %v2634
    %v2705 = vunpack.c.h.b16 %v2634
    %v2706 = vunpack.c.l.b16 %v2635
    %v2707 = vunpack.c.l.b16 %v2636
    %v2708 = vunpack.c.h.b16 %v2636
    %v2709 = vunpack.c.l.b16 %v2637
    %v2710 = vunpack.c.l.b16 %v2638
    %v2711 = vunpack.c.h.b16 %v2638
    %v2712 = vunpack.c.l.b16 %v2639
    %v2713 = vunpack.c.l.b16 %v2640
    %v2714 = vunpack.c.h.b16 %v2640
    %v2715 = vunpack.c.l.b16 %v2641
    %v2716 = vunpack.c.l.b16 %v2642
    %v2717 = vunpack.c.h.b16 %v2642
    %v2718 = vunpack.c.l.b16 %v2643
    %v2719 = vunpack.c.l.b16 %v2644
    %v2720 = vunpack.c.h.b16 %v2644
    %v2721 = vunpack.c.l.b16 %v2645
    %v2722 = vunpack.c.l.b16 %v2646
    %v2723 = vunpack.c.h.b16 %v2646
    %v2724 = vunpack.c.l.b16 %v2647
    %v2725 = vunpack.c.l.b16 %v2648
    %v2726 = vunpack.c.h.b16 %v2648
    %v2727 = vunpack.c.l.b16 %v2649
    %v2728 = vunpack.c.l.b16 %v2650
    %v2729 = vunpack.c.h.b16 %v2650
    %v2730 = vunpack.c.l.b16 %v2651
    %v2731 = vunpack.c.l.b16 %v2652
    %v2732 = vunpack.c.h.b16 %v2652
    %v2733 = vunpack.c.l.b16 %v2653
    %v2734 = vpack.c.b16 %v2689, %v2686
    %v2735 = vpack.c.b16 %v2690, %v2687
    %v2736 = vpack.c.b16 %v2691, %v2688
    %v2737 = vpack.c.b16 %v2695, %v2692
    %v2738 = vpack.c.b16 %v2696, %v2693
    %v2739 = vpack.c.b16 %v2697, %v2694
    %v2740 = vpack.c.b16 %v2701, %v2698
    %v2741 = vpack.c.b16 %v2702, %v2699
    %v2742 = vpack.c.b16 %v2703, %v2700
    %v2743 = vpack.c.b16 %v2707, %v2704
    %v2744 = vpack.c.b16 %v2708, %v2705
    %v2745 = vpack.c.b16 %v2709, %v2706
    %v2746 = vpack.c.b16 %v2713, %v2710
    %v2747 = vpack.c.b16 %v2714, %v2711
    %v2748 = vpack.c.b16 %v2715, %v2712
    %v2749 = vpack.c.b16 %v2719, %v2716
    %v2750 = vpack.c.b16 %v2720, %v2717
    %v2751 = vpack.c.b16 %v2721, %v2718
    %v2752 = vpack.c.b16 %v2725, %v2722
    %v2753 = vpack.c.b16 %v2726, %v2723
    %v2754 = vpack.c.b16 %v2727, %v2724
    %v2755 = vpack.c.b16 %v2731, %v2728
    %v2756 = vpack.c.b16 %v2732, %v2729
    %v2757 = vpack.c.b16 %v2733, %v2730
    %2782 = vmatprep.subr.bf16.mxu0 %v2735
    %2783 = vmatpush1.bf16.msra.mxu0 %v2734
    %2784 = vmatprep.subr.bf16.mxu0 %v2738
    %2785 = vmatpush1.bf16.msra.mxu0 %v2737
    %2786 = vmatprep.subr.bf16.mxu0 %v2741
    %2787 = vmatpush1.bf16.msra.mxu0 %v2740
    %2788 = vmatprep.subr.bf16.mxu0 %v2744
    %2789 = vmatpush1.bf16.msra.mxu0 %v2743
    %2790 = vmatprep.subr.bf16.mxu0 %v2747
    %2791 = vmatpush1.bf16.msra.mxu0 %v2746
    %2792 = vmatprep.subr.bf16.mxu0 %v2750
    %2793 = vmatpush1.bf16.msra.mxu0 %v2749
    %2794 = vmatprep.subr.bf16.mxu0 %v2753
    %2795 = vmatpush1.bf16.msra.mxu0 %v2752
    %2796 = vmatprep.subr.bf16.mxu0 %v2756
    %2797 = vmatpush1.bf16.msra.mxu0 %v2755
    %2798 = vmatprep.subr.bf16.mxu0 0
    %2799 = vmatpush1.bf16.msra.mxu0 0
    %2800 = vmatprep.subr.bf16.mxu0 0
    %2801 = vmatpush1.bf16.msra.mxu0 0
    %2802 = vmatprep.subr.bf16.mxu0 0
    %2803 = vmatpush1.bf16.msra.mxu0 0
    %2804 = vmatprep.subr.bf16.mxu0 0
    %2805 = vmatpush1.bf16.msra.mxu0 0
    %2806 = vmatprep.subr.bf16.mxu0 0
    %2807 = vmatpush1.bf16.msra.mxu0 0
    %2808 = vmatprep.subr.bf16.mxu0 0
    %2809 = vmatpush1.bf16.msra.mxu0 0
    %2810 = vmatprep.subr.bf16.mxu0 0
    %2811 = vmatpush1.bf16.msra.mxu0 0
    %2812 = vmatprep.subr.bf16.mxu0 0
    %2813 = vmatpush1.bf16.msra.mxu0 0
    %2814 = vmatprep.mubr.bf16.mxu0 0
    %2815 = vmatmul.mubr.bf16.gmra.mrb[0].mxu0 %v2621
    %v2816 = vpop.f32.mrb[0].mxu0
    %v2817 = vadd.f32 0.0, %v2816
    %v2818 = vpop.f32.mrb[0].mxu0
    %v2819 = vadd.f32 0.0, %v2818
    %v2820 = vpop.f32.mrb[0].mxu0
    %v2821 = vpop.f32.mrb[0].mxu0
    %2822 = vdwg.mxu0
    %2823 = vmatprep.subr.bf16.mxu0 0
    %2824 = vmatpush1.bf16.msra.mxu0 %v2736
    %2825 = vmatprep.subr.bf16.mxu0 0
    %2826 = vmatpush1.bf16.msra.mxu0 %v2739
    %2827 = vmatprep.subr.bf16.mxu0 0
    %2828 = vmatpush1.bf16.msra.mxu0 %v2742
    %2829 = vmatprep.subr.bf16.mxu0 0
    %2830 = vmatpush1.bf16.msra.mxu0 %v2745
    %2831 = vmatprep.subr.bf16.mxu0 0
    %2832 = vmatpush1.bf16.msra.mxu0 %v2748
    %2833 = vmatprep.subr.bf16.mxu0 0
    %2834 = vmatpush1.bf16.msra.mxu0 %v2751
    %2835 = vmatprep.subr.bf16.mxu0 0
    %2836 = vmatpush1.bf16.msra.mxu0 %v2754
    %2837 = vmatprep.subr.bf16.mxu0 0
    %2838 = vmatpush1.bf16.msra.mxu0 %v2757
    %2839 = vmatprep.subr.bf16.mxu0 0
    %2840 = vmatpush1.bf16.msra.mxu0 0
    %2841 = vmatprep.subr.bf16.mxu0 0
    %2842 = vmatpush1.bf16.msra.mxu0 0
    %2843 = vmatprep.subr.bf16.mxu0 0
    %2844 = vmatpush1.bf16.msra.mxu0 0
    %2845 = vmatprep.subr.bf16.mxu0 0
    %2846 = vmatpush1.bf16.msra.mxu0 0
    %2847 = vmatprep.subr.bf16.mxu0 0
    %2848 = vmatpush1.bf16.msra.mxu0 0
    %2849 = vmatprep.subr.bf16.mxu0 0
    %2850 = vmatpush1.bf16.msra.mxu0 0
    %2851 = vmatprep.subr.bf16.mxu0 0
    %2852 = vmatpush1.bf16.msra.mxu0 0
    %2853 = vmatprep.subr.bf16.mxu0 0
    %2854 = vmatpush1.bf16.msra.mxu0 0
    %2855 = vmatprep.mubr.bf16.mxu0 0
    %2856 = vmatmul.mubr.bf16.gmra.mrb[0].mxu0 %v2621
    %v2857 = vpop.f32.mrb[0].mxu0
    %v2858 = vadd.f32 0.0, %v2857
    %v2859 = vpop.f32.mrb[0].mxu0
    %v2860 = vpop.f32.mrb[0].mxu0
    %v2861 = vpop.f32.mrb[0].mxu0
    %2862 = vdwg.mxu0
    %v2863 = vadd.f32 %v2618, %v2817
    %v2864 = vxor.u32 %v2863, 2147483648
    %v2865 = vmul.f32 %v2864, 1.442695
    %v2866 = vpow.pop %v2865
    %v2867 = vadd.f32 %v2866, 1.0
    %v2868 = vrcp.pop %v2867
    %v2869 = vmul.f32 1.0, %v2868
    %v2870 = vadd.f32 %v2619, %v2819
    %v2871 = vxor.u32 %v2870, 2147483648
    %v2872 = vmul.f32 %v2871, 1.442695
    %v2873 = vpow.pop %v2872
    %v2874 = vadd.f32 %v2873, 1.0
    %v2875 = vrcp.pop %v2874
    %v2876 = vmul.f32 1.0, %v2875
    %v2877 = vld [vmem:[%s5] sm:$0x1]
    %v2879 = vlaneseq
    %v2880 = vshrl.u32 %v2879, 7
    %v2881 = vsub.s32 0, %v2880
    %v2882 = vrot.slane %v2877, %v2881
    %v2884 = vadd.f32 %v2858, %v2882
    %v2885 = vmul.f32 %v2869, %v2884
    %v2886 = vadd.f32 %v2620, %v2885
    %v2887 = vtanh.pop %v2886
    %v2888 = vsub.f32 1.0, %v2876
    %v2889 = vmul.f32 %v2888, %v2887
    %v2890 = vmul.f32 %v2876, %v2202
    %v2891 = vadd.f32 %v2889, %v2890
    %vm2892 = vcmp.gt.s32.totalorder %v533, 3
    %v2893 = vsel %vm2892, 1, 0
    %2894 = vset.pattern.permute.xlu0 0
    %2895 = vperm.xlu0 %2894, %v2893
    %v2896 = vpop.permute.xlu0 %2895
    %vm2897 = vcmp.eq.s32.totalorder %v2896, 1
    %v2898 = vsel %vm2897, %v2891, %v2202
    %v2899 = vsel %vm2897, %v2891, 0.0
    %v2901 = vcombine.high %v2899, %v2899
    %v2903 = vunpack.c.l.s4 1966171168
    %v2904 = vunpack.c.0.s8 %v2903
    %v2905 = vlaneseq
    %v2906 = vshrl.u32 %v2905, 7
    %v2907 = vsub.s32 %v2904, %v2906
    %v2908 = vrot.slane %v2899, %v2907
    %v2910 = vunpack.c.l.s4 1966171168
    %v2911 = vunpack.c.0.s8 %v2910
    %v2912 = vlaneseq
    %v2913 = vshrl.u32 %v2912, 7
    %v2914 = vsub.s32 %v2911, %v2913
    %v2915 = vrot.slane %v2901, %v2914
    %v2916 = vcombine.high %v2908, %v2908
    %v2917 = vcombine.high %v2915, %v2915
    %v2919 = vunpack.c.l.s4 1966171168
    %v2920 = vunpack.c.0.s8 %v2919
    %v2921 = vlaneseq
    %v2922 = vshrl.u32 %v2921, 7
    %v2923 = vsub.s32 %v2920, %v2922
    %v2924 = vrot.slane %v2908, %v2923
    %v2926 = vunpack.c.l.s4 1966171168
    %v2927 = vunpack.c.0.s8 %v2926
    %v2928 = vlaneseq
    %v2929 = vshrl.u32 %v2928, 7
    %v2930 = vsub.s32 %v2927, %v2929
    %v2931 = vrot.slane %v2915, %v2930
    %v2933 = vunpack.c.l.s4 1966171168
    %v2934 = vunpack.c.0.s8 %v2933
    %v2935 = vlaneseq
    %v2936 = vshrl.u32 %v2935, 7
    %v2937 = vsub.s32 %v2934, %v2936
    %v2938 = vrot.slane %v2916, %v2937
    %v2940 = vunpack.c.l.s4 1966171168
    %v2941 = vunpack.c.0.s8 %v2940
    %v2942 = vlaneseq
    %v2943 = vshrl.u32 %v2942, 7
    %v2944 = vsub.s32 %v2941, %v2943
    %v2945 = vrot.slane %v2917, %v2944
    %v2946 = vcombine.high %v2924, %v2924
    %v2947 = vcombine.high %v2931, %v2931
    %v2948 = vcombine.high %v2938, %v2938
    %v2949 = vcombine.high %v2945, %v2945
    %2958 = vst [vmem:[#allocation14 + $0x3] sm:$0x1] %v2924
    %2959 = vst [vmem:[#allocation14 + $0x13] sm:$0x1] %v2938
    %2960 = vst [vmem:[#allocation14 + $0x23] sm:$0x1] %v2946
    %2961 = vst [vmem:[#allocation14 + $0x33] sm:$0x1] %v2948
    %2962 = vst [vmem:[#allocation14 + $0x43] sm:$0x1] %v2931
    %2963 = vst [vmem:[#allocation14 + $0x53] sm:$0x1] %v2945
    %2964 = vst [vmem:[#allocation14 + $0x63] sm:$0x1] %v2947
    %2965 = vst [vmem:[#allocation14 + $0x73] sm:$0x1] %v2949
    %v2966 = vld [vmem:[#allocation2 + $0xd8] sm:$0xff]
    %v2967 = vld [vmem:[#allocation2 + $0xe0] sm:$0xff]
    %v2968 = vld [vmem:[#allocation2 + $0xe8] sm:$0xff]
    %v2969 = vpack.c.bf16 %v2550, %v2550
    %v2970 = vld [vmem:[#allocation9] sm:$0xff]
    %v2971 = vld [vmem:[#allocation9 + $0x8] sm:$0xf]
    %v2972 = vld [vmem:[#allocation9 + $0xc] sm:$0xff]
    %v2973 = vld [vmem:[#allocation9 + $0x14] sm:$0xf]
    %v2974 = vld [vmem:[#allocation9 + $0x18] sm:$0xff]
    %v2975 = vld [vmem:[#allocation9 + $0x20] sm:$0xf]
    %v2976 = vld [vmem:[#allocation9 + $0x24] sm:$0xff]
    %v2977 = vld [vmem:[#allocation9 + $0x2c] sm:$0xf]
    %v2978 = vld [vmem:[#allocation9 + $0x30] sm:$0xff]
    %v2979 = vld [vmem:[#allocation9 + $0x38] sm:$0xf]
    %v2980 = vld [vmem:[#allocation9 + $0x3c] sm:$0xff]
    %v2981 = vld [vmem:[#allocation9 + $0x44] sm:$0xf]
    %v2982 = vld [vmem:[#allocation9 + $0x48] sm:$0xff]
    %v2983 = vld [vmem:[#allocation9 + $0x50] sm:$0xf]
    %v2984 = vld [vmem:[#allocation9 + $0x54] sm:$0xff]
    %v2985 = vld [vmem:[#allocation9 + $0x5c] sm:$0xf]
    %v2986 = vld [vmem:[#allocation9 + $0x60] sm:$0xff]
    %v2987 = vld [vmem:[#allocation9 + $0x68] sm:$0xf]
    %v2988 = vld [vmem:[#allocation9 + $0x6c] sm:$0xff]
    %v2989 = vld [vmem:[#allocation9 + $0x74] sm:$0xf]
    %v2990 = vld [vmem:[#allocation9 + $0x78] sm:$0xff]
    %v2991 = vld [vmem:[#allocation9 + $0x80] sm:$0xf]
    %v2992 = vld [vmem:[#allocation9 + $0x84] sm:$0xff]
    %v2993 = vld [vmem:[#allocation9 + $0x8c] sm:$0xf]
    %v2994 = vld [vmem:[#allocation9 + $0x90] sm:$0xff]
    %v2995 = vld [vmem:[#allocation9 + $0x98] sm:$0xf]
    %v2996 = vld [vmem:[#allocation9 + $0x9c] sm:$0xff]
    %v2997 = vld [vmem:[#allocation9 + $0xa4] sm:$0xf]
    %v2998 = vld [vmem:[#allocation9 + $0xa8] sm:$0xff]
    %v2999 = vld [vmem:[#allocation9 + $0xb0] sm:$0xf]
    %v3000 = vld [vmem:[#allocation9 + $0xb4] sm:$0xff]
    %v3001 = vld [vmem:[#allocation9 + $0xbc] sm:$0xf]
    %v3034 = vunpack.c.l.b16 %v2970
    %v3035 = vunpack.c.h.b16 %v2970
    %v3036 = vunpack.c.l.b16 %v2971
    %v3037 = vunpack.c.l.b16 %v2972
    %v3038 = vunpack.c.h.b16 %v2972
    %v3039 = vunpack.c.l.b16 %v2973
    %v3040 = vunpack.c.l.b16 %v2974
    %v3041 = vunpack.c.h.b16 %v2974
    %v3042 = vunpack.c.l.b16 %v2975
    %v3043 = vunpack.c.l.b16 %v2976
    %v3044 = vunpack.c.h.b16 %v2976
    %v3045 = vunpack.c.l.b16 %v2977
    %v3046 = vunpack.c.l.b16 %v2978
    %v3047 = vunpack.c.h.b16 %v2978
    %v3048 = vunpack.c.l.b16 %v2979
    %v3049 = vunpack.c.l.b16 %v2980
    %v3050 = vunpack.c.h.b16 %v2980
    %v3051 = vunpack.c.l.b16 %v2981
    %v3052 = vunpack.c.l.b16 %v2982
    %v3053 = vunpack.c.h.b16 %v2982
    %v3054 = vunpack.c.l.b16 %v2983
    %v3055 = vunpack.c.l.b16 %v2984
    %v3056 = vunpack.c.h.b16 %v2984
    %v3057 = vunpack.c.l.b16 %v2985
    %v3058 = vunpack.c.l.b16 %v2986
    %v3059 = vunpack.c.h.b16 %v2986
    %v3060 = vunpack.c.l.b16 %v2987
    %v3061 = vunpack.c.l.b16 %v2988
    %v3062 = vunpack.c.h.b16 %v2988
    %v3063 = vunpack.c.l.b16 %v2989
    %v3064 = vunpack.c.l.b16 %v2990
    %v3065 = vunpack.c.h.b16 %v2990
    %v3066 = vunpack.c.l.b16 %v2991
    %v3067 = vunpack.c.l.b16 %v2992
    %v3068 = vunpack.c.h.b16 %v2992
    %v3069 = vunpack.c.l.b16 %v2993
    %v3070 = vunpack.c.l.b16 %v2994
    %v3071 = vunpack.c.h.b16 %v2994
    %v3072 = vunpack.c.l.b16 %v2995
    %v3073 = vunpack.c.l.b16 %v2996
    %v3074 = vunpack.c.h.b16 %v2996
    %v3075 = vunpack.c.l.b16 %v2997
    %v3076 = vunpack.c.l.b16 %v2998
    %v3077 = vunpack.c.h.b16 %v2998
    %v3078 = vunpack.c.l.b16 %v2999
    %v3079 = vunpack.c.l.b16 %v3000
    %v3080 = vunpack.c.h.b16 %v3000
    %v3081 = vunpack.c.l.b16 %v3001
    %v3082 = vpack.c.b16 %v3037, %v3034
    %v3083 = vpack.c.b16 %v3038, %v3035
    %v3084 = vpack.c.b16 %v3039, %v3036
    %v3085 = vpack.c.b16 %v3043, %v3040
    %v3086 = vpack.c.b16 %v3044, %v3041
    %v3087 = vpack.c.b16 %v3045, %v3042
    %v3088 = vpack.c.b16 %v3049, %v3046
    %v3089 = vpack.c.b16 %v3050, %v3047
    %v3090 = vpack.c.b16 %v3051, %v3048
    %v3091 = vpack.c.b16 %v3055, %v3052
    %v3092 = vpack.c.b16 %v3056, %v3053
    %v3093 = vpack.c.b16 %v3057, %v3054
    %v3094 = vpack.c.b16 %v3061, %v3058
    %v3095 = vpack.c.b16 %v3062, %v3059
    %v3096 = vpack.c.b16 %v3063, %v3060
    %v3097 = vpack.c.b16 %v3067, %v3064
    %v3098 = vpack.c.b16 %v3068, %v3065
    %v3099 = vpack.c.b16 %v3069, %v3066
    %v3100 = vpack.c.b16 %v3073, %v3070
    %v3101 = vpack.c.b16 %v3074, %v3071
    %v3102 = vpack.c.b16 %v3075, %v3072
    %v3103 = vpack.c.b16 %v3079, %v3076
    %v3104 = vpack.c.b16 %v3080, %v3077
    %v3105 = vpack.c.b16 %v3081, %v3078
    %3130 = vmatprep.subr.bf16.mxu0 %v3083
    %3131 = vmatpush1.bf16.msra.mxu0 %v3082
    %3132 = vmatprep.subr.bf16.mxu0 %v3086
    %3133 = vmatpush1.bf16.msra.mxu0 %v3085
    %3134 = vmatprep.subr.bf16.mxu0 %v3089
    %3135 = vmatpush1.bf16.msra.mxu0 %v3088
    %3136 = vmatprep.subr.bf16.mxu0 %v3092
    %3137 = vmatpush1.bf16.msra.mxu0 %v3091
    %3138 = vmatprep.subr.bf16.mxu0 %v3095
    %3139 = vmatpush1.bf16.msra.mxu0 %v3094
    %3140 = vmatprep.subr.bf16.mxu0 %v3098
    %3141 = vmatpush1.bf16.msra.mxu0 %v3097
    %3142 = vmatprep.subr.bf16.mxu0 %v3101
    %3143 = vmatpush1.bf16.msra.mxu0 %v3100
    %3144 = vmatprep.subr.bf16.mxu0 %v3104
    %3145 = vmatpush1.bf16.msra.mxu0 %v3103
    %3146 = vmatprep.subr.bf16.mxu0 0
    %3147 = vmatpush1.bf16.msra.mxu0 0
    %3148 = vmatprep.subr.bf16.mxu0 0
    %3149 = vmatpush1.bf16.msra.mxu0 0
    %3150 = vmatprep.subr.bf16.mxu0 0
    %3151 = vmatpush1.bf16.msra.mxu0 0
    %3152 = vmatprep.subr.bf16.mxu0 0
    %3153 = vmatpush1.bf16.msra.mxu0 0
    %3154 = vmatprep.subr.bf16.mxu0 0
    %3155 = vmatpush1.bf16.msra.mxu0 0
    %3156 = vmatprep.subr.bf16.mxu0 0
    %3157 = vmatpush1.bf16.msra.mxu0 0
    %3158 = vmatprep.subr.bf16.mxu0 0
    %3159 = vmatpush1.bf16.msra.mxu0 0
    %3160 = vmatprep.subr.bf16.mxu0 0
    %3161 = vmatpush1.bf16.msra.mxu0 0
    %3162 = vmatprep.mubr.bf16.mxu0 0
    %3163 = vmatmul.mubr.bf16.gmra.mrb[0].mxu0 %v2969
    %v3164 = vpop.f32.mrb[0].mxu0
    %v3165 = vadd.f32 0.0, %v3164
    %v3166 = vpop.f32.mrb[0].mxu0
    %v3167 = vadd.f32 0.0, %v3166
    %v3168 = vpop.f32.mrb[0].mxu0
    %v3169 = vpop.f32.mrb[0].mxu0
    %3170 = vdwg.mxu0
    %3171 = vmatprep.subr.bf16.mxu0 0
    %3172 = vmatpush1.bf16.msra.mxu0 %v3084
    %3173 = vmatprep.subr.bf16.mxu0 0
    %3174 = vmatpush1.bf16.msra.mxu0 %v3087
    %3175 = vmatprep.subr.bf16.mxu0 0
    %3176 = vmatpush1.bf16.msra.mxu0 %v3090
    %3177 = vmatprep.subr.bf16.mxu0 0
    %3178 = vmatpush1.bf16.msra.mxu0 %v3093
    %3179 = vmatprep.subr.bf16.mxu0 0
    %3180 = vmatpush1.bf16.msra.mxu0 %v3096
    %3181 = vmatprep.subr.bf16.mxu0 0
    %3182 = vmatpush1.bf16.msra.mxu0 %v3099
    %3183 = vmatprep.subr.bf16.mxu0 0
    %3184 = vmatpush1.bf16.msra.mxu0 %v3102
    %3185 = vmatprep.subr.bf16.mxu0 0
    %3186 = vmatpush1.bf16.msra.mxu0 %v3105
    %3187 = vmatprep.subr.bf16.mxu0 0
    %3188 = vmatpush1.bf16.msra.mxu0 0
    %3189 = vmatprep.subr.bf16.mxu0 0
    %3190 = vmatpush1.bf16.msra.mxu0 0
    %3191 = vmatprep.subr.bf16.mxu0 0
    %3192 = vmatpush1.bf16.msra.mxu0 0
    %3193 = vmatprep.subr.bf16.mxu0 0
    %3194 = vmatpush1.bf16.msra.mxu0 0
    %3195 = vmatprep.subr.bf16.mxu0 0
    %3196 = vmatpush1.bf16.msra.mxu0 0
    %3197 = vmatprep.subr.bf16.mxu0 0
    %3198 = vmatpush1.bf16.msra.mxu0 0
    %3199 = vmatprep.subr.bf16.mxu0 0
    %3200 = vmatpush1.bf16.msra.mxu0 0
    %3201 = vmatprep.subr.bf16.mxu0 0
    %3202 = vmatpush1.bf16.msra.mxu0 0
    %3203 = vmatprep.mubr.bf16.mxu0 0
    %3204 = vmatmul.mubr.bf16.gmra.mrb[0].mxu0 %v2969
    %v3205 = vpop.f32.mrb[0].mxu0
    %v3206 = vadd.f32 0.0, %v3205
    %v3207 = vpop.f32.mrb[0].mxu0
    %v3208 = vpop.f32.mrb[0].mxu0
    %v3209 = vpop.f32.mrb[0].mxu0
    %3210 = vdwg.mxu0
    %v3211 = vadd.f32 %v2966, %v3165
    %v3212 = vxor.u32 %v3211, 2147483648
    %v3213 = vmul.f32 %v3212, 1.442695
    %v3214 = vpow.pop %v3213
    %v3215 = vadd.f32 %v3214, 1.0
    %v3216 = vrcp.pop %v3215
    %v3217 = vmul.f32 1.0, %v3216
    %v3218 = vadd.f32 %v2967, %v3167
    %v3219 = vxor.u32 %v3218, 2147483648
    %v3220 = vmul.f32 %v3219, 1.442695
    %v3221 = vpow.pop %v3220
    %v3222 = vadd.f32 %v3221, 1.0
    %v3223 = vrcp.pop %v3222
    %v3224 = vmul.f32 1.0, %v3223
    %v3225 = vld [vmem:[#allocation11] sm:$0x1]
    %v3227 = vlaneseq
    %v3228 = vshrl.u32 %v3227, 7
    %v3229 = vsub.s32 0, %v3228
    %v3230 = vrot.slane %v3225, %v3229
    %v3232 = vadd.f32 %v3206, %v3230
    %v3233 = vmul.f32 %v3217, %v3232
    %v3234 = vadd.f32 %v2968, %v3233
    %v3235 = vtanh.pop %v3234
    %v3236 = vsub.f32 1.0, %v3224
    %v3237 = vmul.f32 %v3236, %v3235
    %v3238 = vmul.f32 %v3224, %v2550
    %v3239 = vadd.f32 %v3237, %v3238
    %vm3240 = vcmp.gt.s32.totalorder %v533, 4
    %v3241 = vsel %vm3240, 1, 0
    %3242 = vset.pattern.permute.xlu0 0
    %3243 = vperm.xlu0 %3242, %v3241
    %v3244 = vpop.permute.xlu0 %3243
    %vm3245 = vcmp.eq.s32.totalorder %v3244, 1
    %v3246 = vsel %vm3245, %v3239, %v2550
    %v3247 = vsel %vm3245, %v3239, 0.0
    %v3249 = vcombine.high %v3247, %v3247
    %v3251 = vunpack.c.l.s4 1966171168
    %v3252 = vunpack.c.0.s8 %v3251
    %v3253 = vlaneseq
    %v3254 = vshrl.u32 %v3253, 7
    %v3255 = vsub.s32 %v3252, %v3254
    %v3256 = vrot.slane %v3247, %v3255
    %v3258 = vunpack.c.l.s4 1966171168
    %v3259 = vunpack.c.0.s8 %v3258
    %v3260 = vlaneseq
    %v3261 = vshrl.u32 %v3260, 7
    %v3262 = vsub.s32 %v3259, %v3261
    %v3263 = vrot.slane %v3249, %v3262
    %v3264 = vcombine.high %v3256, %v3256
    %v3265 = vcombine.high %v3263, %v3263
    %v3267 = vunpack.c.l.s4 1966171168
    %v3268 = vunpack.c.0.s8 %v3267
    %v3269 = vlaneseq
    %v3270 = vshrl.u32 %v3269, 7
    %v3271 = vsub.s32 %v3268, %v3270
    %v3272 = vrot.slane %v3256, %v3271
    %v3274 = vunpack.c.l.s4 1966171168
    %v3275 = vunpack.c.0.s8 %v3274
    %v3276 = vlaneseq
    %v3277 = vshrl.u32 %v3276, 7
    %v3278 = vsub.s32 %v3275, %v3277
    %v3279 = vrot.slane %v3263, %v3278
    %v3281 = vunpack.c.l.s4 1966171168
    %v3282 = vunpack.c.0.s8 %v3281
    %v3283 = vlaneseq
    %v3284 = vshrl.u32 %v3283, 7
    %v3285 = vsub.s32 %v3282, %v3284
    %v3286 = vrot.slane %v3264, %v3285
    %v3288 = vunpack.c.l.s4 1966171168
    %v3289 = vunpack.c.0.s8 %v3288
    %v3290 = vlaneseq
    %v3291 = vshrl.u32 %v3290, 7
    %v3292 = vsub.s32 %v3289, %v3291
    %v3293 = vrot.slane %v3265, %v3292
    %v3294 = vcombine.high %v3272, %v3272
    %v3295 = vcombine.high %v3279, %v3279
    %v3296 = vcombine.high %v3286, %v3286
    %v3297 = vcombine.high %v3293, %v3293
    %3306 = vst [vmem:[#allocation14 + $0xc] sm:$0x1] %v3272
    %3307 = vst [vmem:[#allocation14 + $0x1c] sm:$0x1] %v3286
    %3308 = vst [vmem:[#allocation14 + $0x2c] sm:$0x1] %v3294
    %3309 = vst [vmem:[#allocation14 + $0x3c] sm:$0x1] %v3296
    %3310 = vst [vmem:[#allocation14 + $0x4c] sm:$0x1] %v3279
    %3311 = vst [vmem:[#allocation14 + $0x5c] sm:$0x1] %v3293
    %3312 = vst [vmem:[#allocation14 + $0x6c] sm:$0x1] %v3295
    %3313 = vst [vmem:[#allocation14 + $0x7c] sm:$0x1] %v3297
    %v3314 = vld [vmem:[#allocation2 + $0xc0] sm:$0xff]
    %v3315 = vld [vmem:[#allocation2 + $0xc8] sm:$0xff]
    %v3316 = vld [vmem:[#allocation2 + $0xd0] sm:$0xff]
    %v3317 = vpack.c.bf16 %v2898, %v2898
    %v3318 = vld [vmem:[#allocation8] sm:$0xff]
    %v3319 = vld [vmem:[#allocation8 + $0x8] sm:$0xf]
    %v3320 = vld [vmem:[#allocation8 + $0xc] sm:$0xff]
    %v3321 = vld [vmem:[#allocation8 + $0x14] sm:$0xf]
    %v3322 = vld [vmem:[#allocation8 + $0x18] sm:$0xff]
    %v3323 = vld [vmem:[#allocation8 + $0x20] sm:$0xf]
    %v3324 = vld [vmem:[#allocation8 + $0x24] sm:$0xff]
    %v3325 = vld [vmem:[#allocation8 + $0x2c] sm:$0xf]
    %v3326 = vld [vmem:[#allocation8 + $0x30] sm:$0xff]
    %v3327 = vld [vmem:[#allocation8 + $0x38] sm:$0xf]
    %v3328 = vld [vmem:[#allocation8 + $0x3c] sm:$0xff]
    %v3329 = vld [vmem:[#allocation8 + $0x44] sm:$0xf]
    %v3330 = vld [vmem:[#allocation8 + $0x48] sm:$0xff]
    %v3331 = vld [vmem:[#allocation8 + $0x50] sm:$0xf]
    %v3332 = vld [vmem:[#allocation8 + $0x54] sm:$0xff]
    %v3333 = vld [vmem:[#allocation8 + $0x5c] sm:$0xf]
    %v3334 = vld [vmem:[#allocation8 + $0x60] sm:$0xff]
    %v3335 = vld [vmem:[#allocation8 + $0x68] sm:$0xf]
    %v3336 = vld [vmem:[#allocation8 + $0x6c] sm:$0xff]
    %v3337 = vld [vmem:[#allocation8 + $0x74] sm:$0xf]
    %v3338 = vld [vmem:[#allocation8 + $0x78] sm:$0xff]
    %v3339 = vld [vmem:[#allocation8 + $0x80] sm:$0xf]
    %v3340 = vld [vmem:[#allocation8 + $0x84] sm:$0xff]
    %v3341 = vld [vmem:[#allocation8 + $0x8c] sm:$0xf]
    %v3342 = vld [vmem:[#allocation8 + $0x90] sm:$0xff]
    %v3343 = vld [vmem:[#allocation8 + $0x98] sm:$0xf]
    %v3344 = vld [vmem:[#allocation8 + $0x9c] sm:$0xff]
    %v3345 = vld [vmem:[#allocation8 + $0xa4] sm:$0xf]
    %v3346 = vld [vmem:[#allocation8 + $0xa8] sm:$0xff]
    %v3347 = vld [vmem:[#allocation8 + $0xb0] sm:$0xf]
    %v3348 = vld [vmem:[#allocation8 + $0xb4] sm:$0xff]
    %v3349 = vld [vmem:[#allocation8 + $0xbc] sm:$0xf]
    %v3382 = vunpack.c.l.b16 %v3318
    %v3383 = vunpack.c.h.b16 %v3318
    %v3384 = vunpack.c.l.b16 %v3319
    %v3385 = vunpack.c.l.b16 %v3320
    %v3386 = vunpack.c.h.b16 %v3320
    %v3387 = vunpack.c.l.b16 %v3321
    %v3388 = vunpack.c.l.b16 %v3322
    %v3389 = vunpack.c.h.b16 %v3322
    %v3390 = vunpack.c.l.b16 %v3323
    %v3391 = vunpack.c.l.b16 %v3324
    %v3392 = vunpack.c.h.b16 %v3324
    %v3393 = vunpack.c.l.b16 %v3325
    %v3394 = vunpack.c.l.b16 %v3326
    %v3395 = vunpack.c.h.b16 %v3326
    %v3396 = vunpack.c.l.b16 %v3327
    %v3397 = vunpack.c.l.b16 %v3328
    %v3398 = vunpack.c.h.b16 %v3328
    %v3399 = vunpack.c.l.b16 %v3329
    %v3400 = vunpack.c.l.b16 %v3330
    %v3401 = vunpack.c.h.b16 %v3330
    %v3402 = vunpack.c.l.b16 %v3331
    %v3403 = vunpack.c.l.b16 %v3332
    %v3404 = vunpack.c.h.b16 %v3332
    %v3405 = vunpack.c.l.b16 %v3333
    %v3406 = vunpack.c.l.b16 %v3334
    %v3407 = vunpack.c.h.b16 %v3334
    %v3408 = vunpack.c.l.b16 %v3335
    %v3409 = vunpack.c.l.b16 %v3336
    %v3410 = vunpack.c.h.b16 %v3336
    %v3411 = vunpack.c.l.b16 %v3337
    %v3412 = vunpack.c.l.b16 %v3338
    %v3413 = vunpack.c.h.b16 %v3338
    %v3414 = vunpack.c.l.b16 %v3339
    %v3415 = vunpack.c.l.b16 %v3340
    %v3416 = vunpack.c.h.b16 %v3340
    %v3417 = vunpack.c.l.b16 %v3341
    %v3418 = vunpack.c.l.b16 %v3342
    %v3419 = vunpack.c.h.b16 %v3342
    %v3420 = vunpack.c.l.b16 %v3343
    %v3421 = vunpack.c.l.b16 %v3344
    %v3422 = vunpack.c.h.b16 %v3344
    %v3423 = vunpack.c.l.b16 %v3345
    %v3424 = vunpack.c.l.b16 %v3346
    %v3425 = vunpack.c.h.b16 %v3346
    %v3426 = vunpack.c.l.b16 %v3347
    %v3427 = vunpack.c.l.b16 %v3348
    %v3428 = vunpack.c.h.b16 %v3348
    %v3429 = vunpack.c.l.b16 %v3349
    %v3430 = vpack.c.b16 %v3385, %v3382
    %v3431 = vpack.c.b16 %v3386, %v3383
    %v3432 = vpack.c.b16 %v3387, %v3384
    %v3433 = vpack.c.b16 %v3391, %v3388
    %v3434 = vpack.c.b16 %v3392, %v3389
    %v3435 = vpack.c.b16 %v3393, %v3390
    %v3436 = vpack.c.b16 %v3397, %v3394
    %v3437 = vpack.c.b16 %v3398, %v3395
    %v3438 = vpack.c.b16 %v3399, %v3396
    %v3439 = vpack.c.b16 %v3403, %v3400
    %v3440 = vpack.c.b16 %v3404, %v3401
    %v3441 = vpack.c.b16 %v3405, %v3402
    %v3442 = vpack.c.b16 %v3409, %v3406
    %v3443 = vpack.c.b16 %v3410, %v3407
    %v3444 = vpack.c.b16 %v3411, %v3408
    %v3445 = vpack.c.b16 %v3415, %v3412
    %v3446 = vpack.c.b16 %v3416, %v3413
    %v3447 = vpack.c.b16 %v3417, %v3414
    %v3448 = vpack.c.b16 %v3421, %v3418
    %v3449 = vpack.c.b16 %v3422, %v3419
    %v3450 = vpack.c.b16 %v3423, %v3420
    %v3451 = vpack.c.b16 %v3427, %v3424
    %v3452 = vpack.c.b16 %v3428, %v3425
    %v3453 = vpack.c.b16 %v3429, %v3426
    %3478 = vmatprep.subr.bf16.mxu0 %v3431
    %3479 = vmatpush1.bf16.msra.mxu0 %v3430
    %3480 = vmatprep.subr.bf16.mxu0 %v3434
    %3481 = vmatpush1.bf16.msra.mxu0 %v3433
    %3482 = vmatprep.subr.bf16.mxu0 %v3437
    %3483 = vmatpush1.bf16.msra.mxu0 %v3436
    %3484 = vmatprep.subr.bf16.mxu0 %v3440
    %3485 = vmatpush1.bf16.msra.mxu0 %v3439
    %3486 = vmatprep.subr.bf16.mxu0 %v3443
    %3487 = vmatpush1.bf16.msra.mxu0 %v3442
    %3488 = vmatprep.subr.bf16.mxu0 %v3446
    %3489 = vmatpush1.bf16.msra.mxu0 %v3445
    %3490 = vmatprep.subr.bf16.mxu0 %v3449
    %3491 = vmatpush1.bf16.msra.mxu0 %v3448
    %3492 = vmatprep.subr.bf16.mxu0 %v3452
    %3493 = vmatpush1.bf16.msra.mxu0 %v3451
    %3494 = vmatprep.subr.bf16.mxu0 0
    %3495 = vmatpush1.bf16.msra.mxu0 0
    %3496 = vmatprep.subr.bf16.mxu0 0
    %3497 = vmatpush1.bf16.msra.mxu0 0
    %3498 = vmatprep.subr.bf16.mxu0 0
    %3499 = vmatpush1.bf16.msra.mxu0 0
    %3500 = vmatprep.subr.bf16.mxu0 0
    %3501 = vmatpush1.bf16.msra.mxu0 0
    %3502 = vmatprep.subr.bf16.mxu0 0
    %3503 = vmatpush1.bf16.msra.mxu0 0
    %3504 = vmatprep.subr.bf16.mxu0 0
    %3505 = vmatpush1.bf16.msra.mxu0 0
    %3506 = vmatprep.subr.bf16.mxu0 0
    %3507 = vmatpush1.bf16.msra.mxu0 0
    %3508 = vmatprep.subr.bf16.mxu0 0
    %3509 = vmatpush1.bf16.msra.mxu0 0
    %3510 = vmatprep.mubr.bf16.mxu0 0
    %3511 = vmatmul.mubr.bf16.gmra.mrb[0].mxu0 %v3317
    %v3512 = vpop.f32.mrb[0].mxu0
    %v3513 = vadd.f32 0.0, %v3512
    %v3514 = vpop.f32.mrb[0].mxu0
    %v3515 = vadd.f32 0.0, %v3514
    %v3516 = vpop.f32.mrb[0].mxu0
    %v3517 = vpop.f32.mrb[0].mxu0
    %3518 = vdwg.mxu0
    %3519 = vmatprep.subr.bf16.mxu0 0
    %3520 = vmatpush1.bf16.msra.mxu0 %v3432
    %3521 = vmatprep.subr.bf16.mxu0 0
    %3522 = vmatpush1.bf16.msra.mxu0 %v3435
    %3523 = vmatprep.subr.bf16.mxu0 0
    %3524 = vmatpush1.bf16.msra.mxu0 %v3438
    %3525 = vmatprep.subr.bf16.mxu0 0
    %3526 = vmatpush1.bf16.msra.mxu0 %v3441
    %3527 = vmatprep.subr.bf16.mxu0 0
    %3528 = vmatpush1.bf16.msra.mxu0 %v3444
    %3529 = vmatprep.subr.bf16.mxu0 0
    %3530 = vmatpush1.bf16.msra.mxu0 %v3447
    %3531 = vmatprep.subr.bf16.mxu0 0
    %3532 = vmatpush1.bf16.msra.mxu0 %v3450
    %3533 = vmatprep.subr.bf16.mxu0 0
    %3534 = vmatpush1.bf16.msra.mxu0 %v3453
    %3535 = vmatprep.subr.bf16.mxu0 0
    %3536 = vmatpush1.bf16.msra.mxu0 0
    %3537 = vmatprep.subr.bf16.mxu0 0
    %3538 = vmatpush1.bf16.msra.mxu0 0
    %3539 = vmatprep.subr.bf16.mxu0 0
    %3540 = vmatpush1.bf16.msra.mxu0 0
    %3541 = vmatprep.subr.bf16.mxu0 0
    %3542 = vmatpush1.bf16.msra.mxu0 0
    %3543 = vmatprep.subr.bf16.mxu0 0
    %3544 = vmatpush1.bf16.msra.mxu0 0
    %3545 = vmatprep.subr.bf16.mxu0 0
    %3546 = vmatpush1.bf16.msra.mxu0 0
    %3547 = vmatprep.subr.bf16.mxu0 0
    %3548 = vmatpush1.bf16.msra.mxu0 0
    %3549 = vmatprep.subr.bf16.mxu0 0
    %3550 = vmatpush1.bf16.msra.mxu0 0
    %3551 = vmatprep.mubr.bf16.mxu0 0
    %3552 = vmatmul.mubr.bf16.gmra.mrb[0].mxu0 %v3317
    %v3553 = vpop.f32.mrb[0].mxu0
    %v3554 = vadd.f32 0.0, %v3553
    %v3555 = vpop.f32.mrb[0].mxu0
    %v3556 = vpop.f32.mrb[0].mxu0
    %v3557 = vpop.f32.mrb[0].mxu0
    %3558 = vdwg.mxu0
    %v3559 = vadd.f32 %v3314, %v3513
    %v3560 = vxor.u32 %v3559, 2147483648
    %v3561 = vmul.f32 %v3560, 1.442695
    %v3562 = vpow.pop %v3561
    %v3563 = vadd.f32 %v3562, 1.0
    %v3564 = vrcp.pop %v3563
    %v3565 = vmul.f32 1.0, %v3564
    %v3566 = vadd.f32 %v3315, %v3515
    %v3567 = vxor.u32 %v3566, 2147483648
    %v3568 = vmul.f32 %v3567, 1.442695
    %v3569 = vpow.pop %v3568
    %v3570 = vadd.f32 %v3569, 1.0
    %v3571 = vrcp.pop %v3570
    %v3572 = vmul.f32 1.0, %v3571
    %v3573 = vld [vmem:[%s5] sm:$0x1]
    %v3575 = vlaneseq
    %v3576 = vshrl.u32 %v3575, 7
    %v3577 = vsub.s32 0, %v3576
    %v3578 = vrot.slane %v3573, %v3577
    %v3580 = vadd.f32 %v3554, %v3578
    %v3581 = vmul.f32 %v3565, %v3580
    %v3582 = vadd.f32 %v3316, %v3581
    %v3583 = vtanh.pop %v3582
    %v3584 = vsub.f32 1.0, %v3572
    %v3585 = vmul.f32 %v3584, %v3583
    %v3586 = vmul.f32 %v3572, %v2898
    %v3587 = vadd.f32 %v3585, %v3586
    %v3588 = vsel %vm3245, %v3587, %v2898
    %v3589 = vsel %vm3245, %v3587, 0.0
    %v3591 = vcombine.high %v3589, %v3589
    %v3593 = vunpack.c.l.s4 1966171168
    %v3594 = vunpack.c.0.s8 %v3593
    %v3595 = vlaneseq
    %v3596 = vshrl.u32 %v3595, 7
    %v3597 = vsub.s32 %v3594, %v3596
    %v3598 = vrot.slane %v3589, %v3597
    %v3600 = vunpack.c.l.s4 1966171168
    %v3601 = vunpack.c.0.s8 %v3600
    %v3602 = vlaneseq
    %v3603 = vshrl.u32 %v3602, 7
    %v3604 = vsub.s32 %v3601, %v3603
    %v3605 = vrot.slane %v3591, %v3604
    %v3606 = vcombine.high %v3598, %v3598
    %v3607 = vcombine.high %v3605, %v3605
    %v3609 = vunpack.c.l.s4 1966171168
    %v3610 = vunpack.c.0.s8 %v3609
    %v3611 = vlaneseq
    %v3612 = vshrl.u32 %v3611, 7
    %v3613 = vsub.s32 %v3610, %v3612
    %v3614 = vrot.slane %v3598, %v3613
    %v3616 = vunpack.c.l.s4 1966171168
    %v3617 = vunpack.c.0.s8 %v3616
    %v3618 = vlaneseq
    %v3619 = vshrl.u32 %v3618, 7
    %v3620 = vsub.s32 %v3617, %v3619
    %v3621 = vrot.slane %v3605, %v3620
    %v3623 = vunpack.c.l.s4 1966171168
    %v3624 = vunpack.c.0.s8 %v3623
    %v3625 = vlaneseq
    %v3626 = vshrl.u32 %v3625, 7
    %v3627 = vsub.s32 %v3624, %v3626
    %v3628 = vrot.slane %v3606, %v3627
    %v3630 = vunpack.c.l.s4 1966171168
    %v3631 = vunpack.c.0.s8 %v3630
    %v3632 = vlaneseq
    %v3633 = vshrl.u32 %v3632, 7
    %v3634 = vsub.s32 %v3631, %v3633
    %v3635 = vrot.slane %v3607, %v3634
    %v3636 = vcombine.high %v3614, %v3614
    %v3637 = vcombine.high %v3621, %v3621
    %v3638 = vcombine.high %v3628, %v3628
    %v3639 = vcombine.high %v3635, %v3635
    %3648 = vst [vmem:[#allocation14 + $0x4] sm:$0x1] %v3614
    %3649 = vst [vmem:[#allocation14 + $0x14] sm:$0x1] %v3628
    %3650 = vst [vmem:[#allocation14 + $0x24] sm:$0x1] %v3636
    %3651 = vst [vmem:[#allocation14 + $0x34] sm:$0x1] %v3638
    %3652 = vst [vmem:[#allocation14 + $0x44] sm:$0x1] %v3621
    %3653 = vst [vmem:[#allocation14 + $0x54] sm:$0x1] %v3635
    %3654 = vst [vmem:[#allocation14 + $0x64] sm:$0x1] %v3637
    %3655 = vst [vmem:[#allocation14 + $0x74] sm:$0x1] %v3639
    %v3656 = vld [vmem:[#allocation2 + $0xa8] sm:$0xff]
    %v3657 = vld [vmem:[#allocation2 + $0xb0] sm:$0xff]
    %v3658 = vld [vmem:[#allocation2 + $0xb8] sm:$0xff]
    %v3659 = vpack.c.bf16 %v3246, %v3246
    %v3660 = vld [vmem:[#allocation9] sm:$0xff]
    %v3661 = vld [vmem:[#allocation9 + $0x8] sm:$0xf]
    %v3662 = vld [vmem:[#allocation9 + $0xc] sm:$0xff]
    %v3663 = vld [vmem:[#allocation9 + $0x14] sm:$0xf]
    %v3664 = vld [vmem:[#allocation9 + $0x18] sm:$0xff]
    %v3665 = vld [vmem:[#allocation9 + $0x20] sm:$0xf]
    %v3666 = vld [vmem:[#allocation9 + $0x24] sm:$0xff]
    %v3667 = vld [vmem:[#allocation9 + $0x2c] sm:$0xf]
    %v3668 = vld [vmem:[#allocation9 + $0x30] sm:$0xff]
    %v3669 = vld [vmem:[#allocation9 + $0x38] sm:$0xf]
    %v3670 = vld [vmem:[#allocation9 + $0x3c] sm:$0xff]
    %v3671 = vld [vmem:[#allocation9 + $0x44] sm:$0xf]
    %v3672 = vld [vmem:[#allocation9 + $0x48] sm:$0xff]
    %v3673 = vld [vmem:[#allocation9 + $0x50] sm:$0xf]
    %v3674 = vld [vmem:[#allocation9 + $0x54] sm:$0xff]
    %v3675 = vld [vmem:[#allocation9 + $0x5c] sm:$0xf]
    %v3676 = vld [vmem:[#allocation9 + $0x60] sm:$0xff]
    %v3677 = vld [vmem:[#allocation9 + $0x68] sm:$0xf]
    %v3678 = vld [vmem:[#allocation9 + $0x6c] sm:$0xff]
    %v3679 = vld [vmem:[#allocation9 + $0x74] sm:$0xf]
    %v3680 = vld [vmem:[#allocation9 + $0x78] sm:$0xff]
    %v3681 = vld [vmem:[#allocation9 + $0x80] sm:$0xf]
    %v3682 = vld [vmem:[#allocation9 + $0x84] sm:$0xff]
    %v3683 = vld [vmem:[#allocation9 + $0x8c] sm:$0xf]
    %v3684 = vld [vmem:[#allocation9 + $0x90] sm:$0xff]
    %v3685 = vld [vmem:[#allocation9 + $0x98] sm:$0xf]
    %v3686 = vld [vmem:[#allocation9 + $0x9c] sm:$0xff]
    %v3687 = vld [vmem:[#allocation9 + $0xa4] sm:$0xf]
    %v3688 = vld [vmem:[#allocation9 + $0xa8] sm:$0xff]
    %v3689 = vld [vmem:[#allocation9 + $0xb0] sm:$0xf]
    %v3690 = vld [vmem:[#allocation9 + $0xb4] sm:$0xff]
    %v3691 = vld [vmem:[#allocation9 + $0xbc] sm:$0xf]
    %v3724 = vunpack.c.l.b16 %v3660
    %v3725 = vunpack.c.h.b16 %v3660
    %v3726 = vunpack.c.l.b16 %v3661
    %v3727 = vunpack.c.l.b16 %v3662
    %v3728 = vunpack.c.h.b16 %v3662
    %v3729 = vunpack.c.l.b16 %v3663
    %v3730 = vunpack.c.l.b16 %v3664
    %v3731 = vunpack.c.h.b16 %v3664
    %v3732 = vunpack.c.l.b16 %v3665
    %v3733 = vunpack.c.l.b16 %v3666
    %v3734 = vunpack.c.h.b16 %v3666
    %v3735 = vunpack.c.l.b16 %v3667
    %v3736 = vunpack.c.l.b16 %v3668
    %v3737 = vunpack.c.h.b16 %v3668
    %v3738 = vunpack.c.l.b16 %v3669
    %v3739 = vunpack.c.l.b16 %v3670
    %v3740 = vunpack.c.h.b16 %v3670
    %v3741 = vunpack.c.l.b16 %v3671
    %v3742 = vunpack.c.l.b16 %v3672
    %v3743 = vunpack.c.h.b16 %v3672
    %v3744 = vunpack.c.l.b16 %v3673
    %v3745 = vunpack.c.l.b16 %v3674
    %v3746 = vunpack.c.h.b16 %v3674
    %v3747 = vunpack.c.l.b16 %v3675
    %v3748 = vunpack.c.l.b16 %v3676
    %v3749 = vunpack.c.h.b16 %v3676
    %v3750 = vunpack.c.l.b16 %v3677
    %v3751 = vunpack.c.l.b16 %v3678
    %v3752 = vunpack.c.h.b16 %v3678
    %v3753 = vunpack.c.l.b16 %v3679
    %v3754 = vunpack.c.l.b16 %v3680
    %v3755 = vunpack.c.h.b16 %v3680
    %v3756 = vunpack.c.l.b16 %v3681
    %v3757 = vunpack.c.l.b16 %v3682
    %v3758 = vunpack.c.h.b16 %v3682
    %v3759 = vunpack.c.l.b16 %v3683
    %v3760 = vunpack.c.l.b16 %v3684
    %v3761 = vunpack.c.h.b16 %v3684
    %v3762 = vunpack.c.l.b16 %v3685
    %v3763 = vunpack.c.l.b16 %v3686
    %v3764 = vunpack.c.h.b16 %v3686
    %v3765 = vunpack.c.l.b16 %v3687
    %v3766 = vunpack.c.l.b16 %v3688
    %v3767 = vunpack.c.h.b16 %v3688
    %v3768 = vunpack.c.l.b16 %v3689
    %v3769 = vunpack.c.l.b16 %v3690
    %v3770 = vunpack.c.h.b16 %v3690
    %v3771 = vunpack.c.l.b16 %v3691
    %v3772 = vpack.c.b16 %v3727, %v3724
    %v3773 = vpack.c.b16 %v3728, %v3725
    %v3774 = vpack.c.b16 %v3729, %v3726
    %v3775 = vpack.c.b16 %v3733, %v3730
    %v3776 = vpack.c.b16 %v3734, %v3731
    %v3777 = vpack.c.b16 %v3735, %v3732
    %v3778 = vpack.c.b16 %v3739, %v3736
    %v3779 = vpack.c.b16 %v3740, %v3737
    %v3780 = vpack.c.b16 %v3741, %v3738
    %v3781 = vpack.c.b16 %v3745, %v3742
    %v3782 = vpack.c.b16 %v3746, %v3743
    %v3783 = vpack.c.b16 %v3747, %v3744
    %v3784 = vpack.c.b16 %v3751, %v3748
    %v3785 = vpack.c.b16 %v3752, %v3749
    %v3786 = vpack.c.b16 %v3753, %v3750
    %v3787 = vpack.c.b16 %v3757, %v3754
    %v3788 = vpack.c.b16 %v3758, %v3755
    %v3789 = vpack.c.b16 %v3759, %v3756
    %v3790 = vpack.c.b16 %v3763, %v3760
    %v3791 = vpack.c.b16 %v3764, %v3761
    %v3792 = vpack.c.b16 %v3765, %v3762
    %v3793 = vpack.c.b16 %v3769, %v3766
    %v3794 = vpack.c.b16 %v3770, %v3767
    %v3795 = vpack.c.b16 %v3771, %v3768
    %3820 = vmatprep.subr.bf16.mxu0 %v3773
    %3821 = vmatpush1.bf16.msra.mxu0 %v3772
    %3822 = vmatprep.subr.bf16.mxu0 %v3776
    %3823 = vmatpush1.bf16.msra.mxu0 %v3775
    %3824 = vmatprep.subr.bf16.mxu0 %v3779
    %3825 = vmatpush1.bf16.msra.mxu0 %v3778
    %3826 = vmatprep.subr.bf16.mxu0 %v3782
    %3827 = vmatpush1.bf16.msra.mxu0 %v3781
    %3828 = vmatprep.subr.bf16.mxu0 %v3785
    %3829 = vmatpush1.bf16.msra.mxu0 %v3784
    %3830 = vmatprep.subr.bf16.mxu0 %v3788
    %3831 = vmatpush1.bf16.msra.mxu0 %v3787
    %3832 = vmatprep.subr.bf16.mxu0 %v3791
    %3833 = vmatpush1.bf16.msra.mxu0 %v3790
    %3834 = vmatprep.subr.bf16.mxu0 %v3794
    %3835 = vmatpush1.bf16.msra.mxu0 %v3793
    %3836 = vmatprep.subr.bf16.mxu0 0
    %3837 = vmatpush1.bf16.msra.mxu0 0
    %3838 = vmatprep.subr.bf16.mxu0 0
    %3839 = vmatpush1.bf16.msra.mxu0 0
    %3840 = vmatprep.subr.bf16.mxu0 0
    %3841 = vmatpush1.bf16.msra.mxu0 0
    %3842 = vmatprep.subr.bf16.mxu0 0
    %3843 = vmatpush1.bf16.msra.mxu0 0
    %3844 = vmatprep.subr.bf16.mxu0 0
    %3845 = vmatpush1.bf16.msra.mxu0 0
    %3846 = vmatprep.subr.bf16.mxu0 0
    %3847 = vmatpush1.bf16.msra.mxu0 0
    %3848 = vmatprep.subr.bf16.mxu0 0
    %3849 = vmatpush1.bf16.msra.mxu0 0
    %3850 = vmatprep.subr.bf16.mxu0 0
    %3851 = vmatpush1.bf16.msra.mxu0 0
    %3852 = vmatprep.mubr.bf16.mxu0 0
    %3853 = vmatmul.mubr.bf16.gmra.mrb[0].mxu0 %v3659
    %v3854 = vpop.f32.mrb[0].mxu0
    %v3855 = vadd.f32 0.0, %v3854
    %v3856 = vpop.f32.mrb[0].mxu0
    %v3857 = vadd.f32 0.0, %v3856
    %v3858 = vpop.f32.mrb[0].mxu0
    %v3859 = vpop.f32.mrb[0].mxu0
    %3860 = vdwg.mxu0
    %3861 = vmatprep.subr.bf16.mxu0 0
    %3862 = vmatpush1.bf16.msra.mxu0 %v3774
    %3863 = vmatprep.subr.bf16.mxu0 0
    %3864 = vmatpush1.bf16.msra.mxu0 %v3777
    %3865 = vmatprep.subr.bf16.mxu0 0
    %3866 = vmatpush1.bf16.msra.mxu0 %v3780
    %3867 = vmatprep.subr.bf16.mxu0 0
    %3868 = vmatpush1.bf16.msra.mxu0 %v3783
    %3869 = vmatprep.subr.bf16.mxu0 0
    %3870 = vmatpush1.bf16.msra.mxu0 %v3786
    %3871 = vmatprep.subr.bf16.mxu0 0
    %3872 = vmatpush1.bf16.msra.mxu0 %v3789
    %3873 = vmatprep.subr.bf16.mxu0 0
    %3874 = vmatpush1.bf16.msra.mxu0 %v3792
    %3875 = vmatprep.subr.bf16.mxu0 0
    %3876 = vmatpush1.bf16.msra.mxu0 %v3795
    %3877 = vmatprep.subr.bf16.mxu0 0
    %3878 = vmatpush1.bf16.msra.mxu0 0
    %3879 = vmatprep.subr.bf16.mxu0 0
    %3880 = vmatpush1.bf16.msra.mxu0 0
    %3881 = vmatprep.subr.bf16.mxu0 0
    %3882 = vmatpush1.bf16.msra.mxu0 0
    %3883 = vmatprep.subr.bf16.mxu0 0
    %3884 = vmatpush1.bf16.msra.mxu0 0
    %3885 = vmatprep.subr.bf16.mxu0 0
    %3886 = vmatpush1.bf16.msra.mxu0 0
    %3887 = vmatprep.subr.bf16.mxu0 0
    %3888 = vmatpush1.bf16.msra.mxu0 0
    %3889 = vmatprep.subr.bf16.mxu0 0
    %3890 = vmatpush1.bf16.msra.mxu0 0
    %3891 = vmatprep.subr.bf16.mxu0 0
    %3892 = vmatpush1.bf16.msra.mxu0 0
    %3893 = vmatprep.mubr.bf16.mxu0 0
    %3894 = vmatmul.mubr.bf16.gmra.mrb[0].mxu0 %v3659
    %v3895 = vpop.f32.mrb[0].mxu0
    %v3896 = vadd.f32 0.0, %v3895
    %v3897 = vpop.f32.mrb[0].mxu0
    %v3898 = vpop.f32.mrb[0].mxu0
    %v3899 = vpop.f32.mrb[0].mxu0
    %3900 = vdwg.mxu0
    %v3901 = vadd.f32 %v3656, %v3855
    %v3902 = vxor.u32 %v3901, 2147483648
    %v3903 = vmul.f32 %v3902, 1.442695
    %v3904 = vpow.pop %v3903
    %v3905 = vadd.f32 %v3904, 1.0
    %v3906 = vrcp.pop %v3905
    %v3907 = vmul.f32 1.0, %v3906
    %v3908 = vadd.f32 %v3657, %v3857
    %v3909 = vxor.u32 %v3908, 2147483648
    %v3910 = vmul.f32 %v3909, 1.442695
    %v3911 = vpow.pop %v3910
    %v3912 = vadd.f32 %v3911, 1.0
    %v3913 = vrcp.pop %v3912
    %v3914 = vmul.f32 1.0, %v3913
    %v3915 = vld [vmem:[#allocation11] sm:$0x1]
    %v3917 = vlaneseq
    %v3918 = vshrl.u32 %v3917, 7
    %v3919 = vsub.s32 0, %v3918
    %v3920 = vrot.slane %v3915, %v3919
    %v3922 = vadd.f32 %v3896, %v3920
    %v3923 = vmul.f32 %v3907, %v3922
    %v3924 = vadd.f32 %v3658, %v3923
    %v3925 = vtanh.pop %v3924
    %v3926 = vsub.f32 1.0, %v3914
    %v3927 = vmul.f32 %v3926, %v3925
    %v3928 = vmul.f32 %v3914, %v3246
    %v3929 = vadd.f32 %v3927, %v3928
    %v3930 = vsel %vm2897, %v3929, %v3246
    %v3931 = vsel %vm2897, %v3929, 0.0
    %v3933 = vcombine.high %v3931, %v3931
    %v3935 = vunpack.c.l.s4 1966171168
    %v3936 = vunpack.c.0.s8 %v3935
    %v3937 = vlaneseq
    %v3938 = vshrl.u32 %v3937, 7
    %v3939 = vsub.s32 %v3936, %v3938
    %v3940 = vrot.slane %v3931, %v3939
    %v3942 = vunpack.c.l.s4 1966171168
    %v3943 = vunpack.c.0.s8 %v3942
    %v3944 = vlaneseq
    %v3945 = vshrl.u32 %v3944, 7
    %v3946 = vsub.s32 %v3943, %v3945
    %v3947 = vrot.slane %v3933, %v3946
    %v3948 = vcombine.high %v3940, %v3940
    %v3949 = vcombine.high %v3947, %v3947
    %v3951 = vunpack.c.l.s4 1966171168
    %v3952 = vunpack.c.0.s8 %v3951
    %v3953 = vlaneseq
    %v3954 = vshrl.u32 %v3953, 7
    %v3955 = vsub.s32 %v3952, %v3954
    %v3956 = vrot.slane %v3940, %v3955
    %v3958 = vunpack.c.l.s4 1966171168
    %v3959 = vunpack.c.0.s8 %v3958
    %v3960 = vlaneseq
    %v3961 = vshrl.u32 %v3960, 7
    %v3962 = vsub.s32 %v3959, %v3961
    %v3963 = vrot.slane %v3947, %v3962
    %v3965 = vunpack.c.l.s4 1966171168
    %v3966 = vunpack.c.0.s8 %v3965
    %v3967 = vlaneseq
    %v3968 = vshrl.u32 %v3967, 7
    %v3969 = vsub.s32 %v3966, %v3968
    %v3970 = vrot.slane %v3948, %v3969
    %v3972 = vunpack.c.l.s4 1966171168
    %v3973 = vunpack.c.0.s8 %v3972
    %v3974 = vlaneseq
    %v3975 = vshrl.u32 %v3974, 7
    %v3976 = vsub.s32 %v3973, %v3975
    %v3977 = vrot.slane %v3949, %v3976
    %v3978 = vcombine.high %v3956, %v3956
    %v3979 = vcombine.high %v3963, %v3963
    %v3980 = vcombine.high %v3970, %v3970
    %v3981 = vcombine.high %v3977, %v3977
    %3990 = vst [vmem:[#allocation14 + $0xb] sm:$0x1] %v3956
    %3991 = vst [vmem:[#allocation14 + $0x1b] sm:$0x1] %v3970
    %3992 = vst [vmem:[#allocation14 + $0x2b] sm:$0x1] %v3978
    %3993 = vst [vmem:[#allocation14 + $0x3b] sm:$0x1] %v3980
    %3994 = vst [vmem:[#allocation14 + $0x4b] sm:$0x1] %v3963
    %3995 = vst [vmem:[#allocation14 + $0x5b] sm:$0x1] %v3977
    %3996 = vst [vmem:[#allocation14 + $0x6b] sm:$0x1] %v3979
    %3997 = vst [vmem:[#allocation14 + $0x7b] sm:$0x1] %v3981
    %v3998 = vld [vmem:[#allocation2 + $0xf0] sm:$0xff]
    %v3999 = vld [vmem:[#allocation2 + $0xf8] sm:$0xff]
    %v4000 = vld [vmem:[#allocation2 + $0x100] sm:$0xff]
    %v4001 = vpack.c.bf16 %v3588, %v3588
    %v4002 = vld [vmem:[#allocation8] sm:$0xff]
    %v4003 = vld [vmem:[#allocation8 + $0x8] sm:$0xf]
    %v4004 = vld [vmem:[#allocation8 + $0xc] sm:$0xff]
    %v4005 = vld [vmem:[#allocation8 + $0x14] sm:$0xf]
    %v4006 = vld [vmem:[#allocation8 + $0x18] sm:$0xff]
    %v4007 = vld [vmem:[#allocation8 + $0x20] sm:$0xf]
    %v4008 = vld [vmem:[#allocation8 + $0x24] sm:$0xff]
    %v4009 = vld [vmem:[#allocation8 + $0x2c] sm:$0xf]
    %v4010 = vld [vmem:[#allocation8 + $0x30] sm:$0xff]
    %v4011 = vld [vmem:[#allocation8 + $0x38] sm:$0xf]
    %v4012 = vld [vmem:[#allocation8 + $0x3c] sm:$0xff]
    %v4013 = vld [vmem:[#allocation8 + $0x44] sm:$0xf]
    %v4014 = vld [vmem:[#allocation8 + $0x48] sm:$0xff]
    %v4015 = vld [vmem:[#allocation8 + $0x50] sm:$0xf]
    %v4016 = vld [vmem:[#allocation8 + $0x54] sm:$0xff]
    %v4017 = vld [vmem:[#allocation8 + $0x5c] sm:$0xf]
    %v4018 = vld [vmem:[#allocation8 + $0x60] sm:$0xff]
    %v4019 = vld [vmem:[#allocation8 + $0x68] sm:$0xf]
    %v4020 = vld [vmem:[#allocation8 + $0x6c] sm:$0xff]
    %v4021 = vld [vmem:[#allocation8 + $0x74] sm:$0xf]
    %v4022 = vld [vmem:[#allocation8 + $0x78] sm:$0xff]
    %v4023 = vld [vmem:[#allocation8 + $0x80] sm:$0xf]
    %v4024 = vld [vmem:[#allocation8 + $0x84] sm:$0xff]
    %v4025 = vld [vmem:[#allocation8 + $0x8c] sm:$0xf]
    %v4026 = vld [vmem:[#allocation8 + $0x90] sm:$0xff]
    %v4027 = vld [vmem:[#allocation8 + $0x98] sm:$0xf]
    %v4028 = vld [vmem:[#allocation8 + $0x9c] sm:$0xff]
    %v4029 = vld [vmem:[#allocation8 + $0xa4] sm:$0xf]
    %v4030 = vld [vmem:[#allocation8 + $0xa8] sm:$0xff]
    %v4031 = vld [vmem:[#allocation8 + $0xb0] sm:$0xf]
    %v4032 = vld [vmem:[#allocation8 + $0xb4] sm:$0xff]
    %v4033 = vld [vmem:[#allocation8 + $0xbc] sm:$0xf]
    %v4066 = vunpack.c.l.b16 %v4002
    %v4067 = vunpack.c.h.b16 %v4002
    %v4068 = vunpack.c.l.b16 %v4003
    %v4069 = vunpack.c.l.b16 %v4004
    %v4070 = vunpack.c.h.b16 %v4004
    %v4071 = vunpack.c.l.b16 %v4005
    %v4072 = vunpack.c.l.b16 %v4006
    %v4073 = vunpack.c.h.b16 %v4006
    %v4074 = vunpack.c.l.b16 %v4007
    %v4075 = vunpack.c.l.b16 %v4008
    %v4076 = vunpack.c.h.b16 %v4008
    %v4077 = vunpack.c.l.b16 %v4009
    %v4078 = vunpack.c.l.b16 %v4010
    %v4079 = vunpack.c.h.b16 %v4010
    %v4080 = vunpack.c.l.b16 %v4011
    %v4081 = vunpack.c.l.b16 %v4012
    %v4082 = vunpack.c.h.b16 %v4012
    %v4083 = vunpack.c.l.b16 %v4013
    %v4084 = vunpack.c.l.b16 %v4014
    %v4085 = vunpack.c.h.b16 %v4014
    %v4086 = vunpack.c.l.b16 %v4015
    %v4087 = vunpack.c.l.b16 %v4016
    %v4088 = vunpack.c.h.b16 %v4016
    %v4089 = vunpack.c.l.b16 %v4017
    %v4090 = vunpack.c.l.b16 %v4018
    %v4091 = vunpack.c.h.b16 %v4018
    %v4092 = vunpack.c.l.b16 %v4019
    %v4093 = vunpack.c.l.b16 %v4020
    %v4094 = vunpack.c.h.b16 %v4020
    %v4095 = vunpack.c.l.b16 %v4021
    %v4096 = vunpack.c.l.b16 %v4022
    %v4097 = vunpack.c.h.b16 %v4022
    %v4098 = vunpack.c.l.b16 %v4023
    %v4099 = vunpack.c.l.b16 %v4024
    %v4100 = vunpack.c.h.b16 %v4024
    %v4101 = vunpack.c.l.b16 %v4025
    %v4102 = vunpack.c.l.b16 %v4026
    %v4103 = vunpack.c.h.b16 %v4026
    %v4104 = vunpack.c.l.b16 %v4027
    %v4105 = vunpack.c.l.b16 %v4028
    %v4106 = vunpack.c.h.b16 %v4028
    %v4107 = vunpack.c.l.b16 %v4029
    %v4108 = vunpack.c.l.b16 %v4030
    %v4109 = vunpack.c.h.b16 %v4030
    %v4110 = vunpack.c.l.b16 %v4031
    %v4111 = vunpack.c.l.b16 %v4032
    %v4112 = vunpack.c.h.b16 %v4032
    %v4113 = vunpack.c.l.b16 %v4033
    %v4114 = vpack.c.b16 %v4069, %v4066
    %v4115 = vpack.c.b16 %v4070, %v4067
    %v4116 = vpack.c.b16 %v4071, %v4068
    %v4117 = vpack.c.b16 %v4075, %v4072
    %v4118 = vpack.c.b16 %v4076, %v4073
    %v4119 = vpack.c.b16 %v4077, %v4074
    %v4120 = vpack.c.b16 %v4081, %v4078
    %v4121 = vpack.c.b16 %v4082, %v4079
    %v4122 = vpack.c.b16 %v4083, %v4080
    %v4123 = vpack.c.b16 %v4087, %v4084
    %v4124 = vpack.c.b16 %v4088, %v4085
    %v4125 = vpack.c.b16 %v4089, %v4086
    %v4126 = vpack.c.b16 %v4093, %v4090
    %v4127 = vpack.c.b16 %v4094, %v4091
    %v4128 = vpack.c.b16 %v4095, %v4092
    %v4129 = vpack.c.b16 %v4099, %v4096
    %v4130 = vpack.c.b16 %v4100, %v4097
    %v4131 = vpack.c.b16 %v4101, %v4098
    %v4132 = vpack.c.b16 %v4105, %v4102
    %v4133 = vpack.c.b16 %v4106, %v4103
    %v4134 = vpack.c.b16 %v4107, %v4104
    %v4135 = vpack.c.b16 %v4111, %v4108
    %v4136 = vpack.c.b16 %v4112, %v4109
    %v4137 = vpack.c.b16 %v4113, %v4110
    %4162 = vmatprep.subr.bf16.mxu0 %v4115
    %4163 = vmatpush1.bf16.msra.mxu0 %v4114
    %4164 = vmatprep.subr.bf16.mxu0 %v4118
    %4165 = vmatpush1.bf16.msra.mxu0 %v4117
    %4166 = vmatprep.subr.bf16.mxu0 %v4121
    %4167 = vmatpush1.bf16.msra.mxu0 %v4120
    %4168 = vmatprep.subr.bf16.mxu0 %v4124
    %4169 = vmatpush1.bf16.msra.mxu0 %v4123
    %4170 = vmatprep.subr.bf16.mxu0 %v4127
    %4171 = vmatpush1.bf16.msra.mxu0 %v4126
    %4172 = vmatprep.subr.bf16.mxu0 %v4130
    %4173 = vmatpush1.bf16.msra.mxu0 %v4129
    %4174 = vmatprep.subr.bf16.mxu0 %v4133
    %4175 = vmatpush1.bf16.msra.mxu0 %v4132
    %4176 = vmatprep.subr.bf16.mxu0 %v4136
    %4177 = vmatpush1.bf16.msra.mxu0 %v4135
    %4178 = vmatprep.subr.bf16.mxu0 0
    %4179 = vmatpush1.bf16.msra.mxu0 0
    %4180 = vmatprep.subr.bf16.mxu0 0
    %4181 = vmatpush1.bf16.msra.mxu0 0
    %4182 = vmatprep.subr.bf16.mxu0 0
    %4183 = vmatpush1.bf16.msra.mxu0 0
    %4184 = vmatprep.subr.bf16.mxu0 0
    %4185 = vmatpush1.bf16.msra.mxu0 0
    %4186 = vmatprep.subr.bf16.mxu0 0
    %4187 = vmatpush1.bf16.msra.mxu0 0
    %4188 = vmatprep.subr.bf16.mxu0 0
    %4189 = vmatpush1.bf16.msra.mxu0 0
    %4190 = vmatprep.subr.bf16.mxu0 0
    %4191 = vmatpush1.bf16.msra.mxu0 0
    %4192 = vmatprep.subr.bf16.mxu0 0
    %4193 = vmatpush1.bf16.msra.mxu0 0
    %4194 = vmatprep.mubr.bf16.mxu0 0
    %4195 = vmatmul.mubr.bf16.gmra.mrb[0].mxu0 %v4001
    %v4196 = vpop.f32.mrb[0].mxu0
    %v4197 = vadd.f32 0.0, %v4196
    %v4198 = vpop.f32.mrb[0].mxu0
    %v4199 = vadd.f32 0.0, %v4198
    %v4200 = vpop.f32.mrb[0].mxu0
    %v4201 = vpop.f32.mrb[0].mxu0
    %4202 = vdwg.mxu0
    %4203 = vmatprep.subr.bf16.mxu0 0
    %4204 = vmatpush1.bf16.msra.mxu0 %v4116
    %4205 = vmatprep.subr.bf16.mxu0 0
    %4206 = vmatpush1.bf16.msra.mxu0 %v4119
    %4207 = vmatprep.subr.bf16.mxu0 0
    %4208 = vmatpush1.bf16.msra.mxu0 %v4122
    %4209 = vmatprep.subr.bf16.mxu0 0
    %4210 = vmatpush1.bf16.msra.mxu0 %v4125
    %4211 = vmatprep.subr.bf16.mxu0 0
    %4212 = vmatpush1.bf16.msra.mxu0 %v4128
    %4213 = vmatprep.subr.bf16.mxu0 0
    %4214 = vmatpush1.bf16.msra.mxu0 %v4131
    %4215 = vmatprep.subr.bf16.mxu0 0
    %4216 = vmatpush1.bf16.msra.mxu0 %v4134
    %4217 = vmatprep.subr.bf16.mxu0 0
    %4218 = vmatpush1.bf16.msra.mxu0 %v4137
    %4219 = vmatprep.subr.bf16.mxu0 0
    %4220 = vmatpush1.bf16.msra.mxu0 0
    %4221 = vmatprep.subr.bf16.mxu0 0
    %4222 = vmatpush1.bf16.msra.mxu0 0
    %4223 = vmatprep.subr.bf16.mxu0 0
    %4224 = vmatpush1.bf16.msra.mxu0 0
    %4225 = vmatprep.subr.bf16.mxu0 0
    %4226 = vmatpush1.bf16.msra.mxu0 0
    %4227 = vmatprep.subr.bf16.mxu0 0
    %4228 = vmatpush1.bf16.msra.mxu0 0
    %4229 = vmatprep.subr.bf16.mxu0 0
    %4230 = vmatpush1.bf16.msra.mxu0 0
    %4231 = vmatprep.subr.bf16.mxu0 0
    %4232 = vmatpush1.bf16.msra.mxu0 0
    %4233 = vmatprep.subr.bf16.mxu0 0
    %4234 = vmatpush1.bf16.msra.mxu0 0
    %4235 = vmatprep.mubr.bf16.mxu0 0
    %4236 = vmatmul.mubr.bf16.gmra.mrb[0].mxu0 %v4001
    %v4237 = vpop.f32.mrb[0].mxu0
    %v4238 = vadd.f32 0.0, %v4237
    %v4239 = vpop.f32.mrb[0].mxu0
    %v4240 = vpop.f32.mrb[0].mxu0
    %v4241 = vpop.f32.mrb[0].mxu0
    %4242 = vdwg.mxu0
    %v4243 = vadd.f32 %v3998, %v4197
    %v4244 = vxor.u32 %v4243, 2147483648
    %v4245 = vmul.f32 %v4244, 1.442695
    %v4246 = vpow.pop %v4245
    %v4247 = vadd.f32 %v4246, 1.0
    %v4248 = vrcp.pop %v4247
    %v4249 = vmul.f32 1.0, %v4248
    %v4250 = vadd.f32 %v3999, %v4199
    %v4251 = vxor.u32 %v4250, 2147483648
    %v4252 = vmul.f32 %v4251, 1.442695
    %v4253 = vpow.pop %v4252
    %v4254 = vadd.f32 %v4253, 1.0
    %v4255 = vrcp.pop %v4254
    %v4256 = vmul.f32 1.0, %v4255
    %v4257 = vld [vmem:[%s5] sm:$0x1]
    %v4259 = vlaneseq
    %v4260 = vshrl.u32 %v4259, 7
    %v4261 = vsub.s32 0, %v4260
    %v4262 = vrot.slane %v4257, %v4261
    %v4264 = vadd.f32 %v4238, %v4262
    %v4265 = vmul.f32 %v4249, %v4264
    %v4266 = vadd.f32 %v4000, %v4265
    %v4267 = vtanh.pop %v4266
    %v4268 = vsub.f32 1.0, %v4256
    %v4269 = vmul.f32 %v4268, %v4267
    %v4270 = vmul.f32 %v4256, %v3588
    %v4271 = vadd.f32 %v4269, %v4270
    %v4272 = vsel %vm2549, %v4271, %v3588
    %v4273 = vsel %vm2549, %v4271, 0.0
    %v4275 = vcombine.high %v4273, %v4273
    %v4277 = vunpack.c.l.s4 1966171168
    %v4278 = vunpack.c.0.s8 %v4277
    %v4279 = vlaneseq
    %v4280 = vshrl.u32 %v4279, 7
    %v4281 = vsub.s32 %v4278, %v4280
    %v4282 = vrot.slane %v4273, %v4281
    %v4284 = vunpack.c.l.s4 1966171168
    %v4285 = vunpack.c.0.s8 %v4284
    %v4286 = vlaneseq
    %v4287 = vshrl.u32 %v4286, 7
    %v4288 = vsub.s32 %v4285, %v4287
    %v4289 = vrot.slane %v4275, %v4288
    %v4290 = vcombine.high %v4282, %v4282
    %v4291 = vcombine.high %v4289, %v4289
    %v4293 = vunpack.c.l.s4 1966171168
    %v4294 = vunpack.c.0.s8 %v4293
    %v4295 = vlaneseq
    %v4296 = vshrl.u32 %v4295, 7
    %v4297 = vsub.s32 %v4294, %v4296
    %v4298 = vrot.slane %v4282, %v4297
    %v4300 = vunpack.c.l.s4 1966171168
    %v4301 = vunpack.c.0.s8 %v4300
    %v4302 = vlaneseq
    %v4303 = vshrl.u32 %v4302, 7
    %v4304 = vsub.s32 %v4301, %v4303
    %v4305 = vrot.slane %v4289, %v4304
    %v4307 = vunpack.c.l.s4 1966171168
    %v4308 = vunpack.c.0.s8 %v4307
    %v4309 = vlaneseq
    %v4310 = vshrl.u32 %v4309, 7
    %v4311 = vsub.s32 %v4308, %v4310
    %v4312 = vrot.slane %v4290, %v4311
    %v4314 = vunpack.c.l.s4 1966171168
    %v4315 = vunpack.c.0.s8 %v4314
    %v4316 = vlaneseq
    %v4317 = vshrl.u32 %v4316, 7
    %v4318 = vsub.s32 %v4315, %v4317
    %v4319 = vrot.slane %v4291, %v4318
    %v4320 = vcombine.high %v4298, %v4298
    %v4321 = vcombine.high %v4305, %v4305
    %v4322 = vcombine.high %v4312, %v4312
    %v4323 = vcombine.high %v4319, %v4319
    %4332 = vst [vmem:[#allocation14 + $0x5] sm:$0x1] %v4298
    %4333 = vst [vmem:[#allocation14 + $0x15] sm:$0x1] %v4312
    %4334 = vst [vmem:[#allocation14 + $0x25] sm:$0x1] %v4320
    %4335 = vst [vmem:[#allocation14 + $0x35] sm:$0x1] %v4322
    %4336 = vst [vmem:[#allocation14 + $0x45] sm:$0x1] %v4305
    %4337 = vst [vmem:[#allocation14 + $0x55] sm:$0x1] %v4319
    %4338 = vst [vmem:[#allocation14 + $0x65] sm:$0x1] %v4321
    %4339 = vst [vmem:[#allocation14 + $0x75] sm:$0x1] %v4323
    %v4340 = vld [vmem:[#allocation2 + $0x78] sm:$0xff]
    %v4341 = vld [vmem:[#allocation2 + $0x80] sm:$0xff]
    %v4342 = vld [vmem:[#allocation2 + $0x88] sm:$0xff]
    %v4343 = vpack.c.bf16 %v3930, %v3930
    %v4344 = vld [vmem:[#allocation9] sm:$0xff]
    %v4345 = vld [vmem:[#allocation9 + $0x8] sm:$0xf]
    %v4346 = vld [vmem:[#allocation9 + $0xc] sm:$0xff]
    %v4347 = vld [vmem:[#allocation9 + $0x14] sm:$0xf]
    %v4348 = vld [vmem:[#allocation9 + $0x18] sm:$0xff]
    %v4349 = vld [vmem:[#allocation9 + $0x20] sm:$0xf]
    %v4350 = vld [vmem:[#allocation9 + $0x24] sm:$0xff]
    %v4351 = vld [vmem:[#allocation9 + $0x2c] sm:$0xf]
    %v4352 = vld [vmem:[#allocation9 + $0x30] sm:$0xff]
    %v4353 = vld [vmem:[#allocation9 + $0x38] sm:$0xf]
    %v4354 = vld [vmem:[#allocation9 + $0x3c] sm:$0xff]
    %v4355 = vld [vmem:[#allocation9 + $0x44] sm:$0xf]
    %v4356 = vld [vmem:[#allocation9 + $0x48] sm:$0xff]
    %v4357 = vld [vmem:[#allocation9 + $0x50] sm:$0xf]
    %v4358 = vld [vmem:[#allocation9 + $0x54] sm:$0xff]
    %v4359 = vld [vmem:[#allocation9 + $0x5c] sm:$0xf]
    %v4360 = vld [vmem:[#allocation9 + $0x60] sm:$0xff]
    %v4361 = vld [vmem:[#allocation9 + $0x68] sm:$0xf]
    %v4362 = vld [vmem:[#allocation9 + $0x6c] sm:$0xff]
    %v4363 = vld [vmem:[#allocation9 + $0x74] sm:$0xf]
    %v4364 = vld [vmem:[#allocation9 + $0x78] sm:$0xff]
    %v4365 = vld [vmem:[#allocation9 + $0x80] sm:$0xf]
    %v4366 = vld [vmem:[#allocation9 + $0x84] sm:$0xff]
    %v4367 = vld [vmem:[#allocation9 + $0x8c] sm:$0xf]
    %v4368 = vld [vmem:[#allocation9 + $0x90] sm:$0xff]
    %v4369 = vld [vmem:[#allocation9 + $0x98] sm:$0xf]
    %v4370 = vld [vmem:[#allocation9 + $0x9c] sm:$0xff]
    %v4371 = vld [vmem:[#allocation9 + $0xa4] sm:$0xf]
    %v4372 = vld [vmem:[#allocation9 + $0xa8] sm:$0xff]
    %v4373 = vld [vmem:[#allocation9 + $0xb0] sm:$0xf]
    %v4374 = vld [vmem:[#allocation9 + $0xb4] sm:$0xff]
    %v4375 = vld [vmem:[#allocation9 + $0xbc] sm:$0xf]
    %v4408 = vunpack.c.l.b16 %v4344
    %v4409 = vunpack.c.h.b16 %v4344
    %v4410 = vunpack.c.l.b16 %v4345
    %v4411 = vunpack.c.l.b16 %v4346
    %v4412 = vunpack.c.h.b16 %v4346
    %v4413 = vunpack.c.l.b16 %v4347
    %v4414 = vunpack.c.l.b16 %v4348
    %v4415 = vunpack.c.h.b16 %v4348
    %v4416 = vunpack.c.l.b16 %v4349
    %v4417 = vunpack.c.l.b16 %v4350
    %v4418 = vunpack.c.h.b16 %v4350
    %v4419 = vunpack.c.l.b16 %v4351
    %v4420 = vunpack.c.l.b16 %v4352
    %v4421 = vunpack.c.h.b16 %v4352
    %v4422 = vunpack.c.l.b16 %v4353
    %v4423 = vunpack.c.l.b16 %v4354
    %v4424 = vunpack.c.h.b16 %v4354
    %v4425 = vunpack.c.l.b16 %v4355
    %v4426 = vunpack.c.l.b16 %v4356
    %v4427 = vunpack.c.h.b16 %v4356
    %v4428 = vunpack.c.l.b16 %v4357
    %v4429 = vunpack.c.l.b16 %v4358
    %v4430 = vunpack.c.h.b16 %v4358
    %v4431 = vunpack.c.l.b16 %v4359
    %v4432 = vunpack.c.l.b16 %v4360
    %v4433 = vunpack.c.h.b16 %v4360
    %v4434 = vunpack.c.l.b16 %v4361
    %v4435 = vunpack.c.l.b16 %v4362
    %v4436 = vunpack.c.h.b16 %v4362
    %v4437 = vunpack.c.l.b16 %v4363
    %v4438 = vunpack.c.l.b16 %v4364
    %v4439 = vunpack.c.h.b16 %v4364
    %v4440 = vunpack.c.l.b16 %v4365
    %v4441 = vunpack.c.l.b16 %v4366
    %v4442 = vunpack.c.h.b16 %v4366
    %v4443 = vunpack.c.l.b16 %v4367
    %v4444 = vunpack.c.l.b16 %v4368
    %v4445 = vunpack.c.h.b16 %v4368
    %v4446 = vunpack.c.l.b16 %v4369
    %v4447 = vunpack.c.l.b16 %v4370
    %v4448 = vunpack.c.h.b16 %v4370
    %v4449 = vunpack.c.l.b16 %v4371
    %v4450 = vunpack.c.l.b16 %v4372
    %v4451 = vunpack.c.h.b16 %v4372
    %v4452 = vunpack.c.l.b16 %v4373
    %v4453 = vunpack.c.l.b16 %v4374
    %v4454 = vunpack.c.h.b16 %v4374
    %v4455 = vunpack.c.l.b16 %v4375
    %v4456 = vpack.c.b16 %v4411, %v4408
    %v4457 = vpack.c.b16 %v4412, %v4409
    %v4458 = vpack.c.b16 %v4413, %v4410
    %v4459 = vpack.c.b16 %v4417, %v4414
    %v4460 = vpack.c.b16 %v4418, %v4415
    %v4461 = vpack.c.b16 %v4419, %v4416
    %v4462 = vpack.c.b16 %v4423, %v4420
    %v4463 = vpack.c.b16 %v4424, %v4421
    %v4464 = vpack.c.b16 %v4425, %v4422
    %v4465 = vpack.c.b16 %v4429, %v4426
    %v4466 = vpack.c.b16 %v4430, %v4427
    %v4467 = vpack.c.b16 %v4431, %v4428
    %v4468 = vpack.c.b16 %v4435, %v4432
    %v4469 = vpack.c.b16 %v4436, %v4433
    %v4470 = vpack.c.b16 %v4437, %v4434
    %v4471 = vpack.c.b16 %v4441, %v4438
    %v4472 = vpack.c.b16 %v4442, %v4439
    %v4473 = vpack.c.b16 %v4443, %v4440
    %v4474 = vpack.c.b16 %v4447, %v4444
    %v4475 = vpack.c.b16 %v4448, %v4445
    %v4476 = vpack.c.b16 %v4449, %v4446
    %v4477 = vpack.c.b16 %v4453, %v4450
    %v4478 = vpack.c.b16 %v4454, %v4451
    %v4479 = vpack.c.b16 %v4455, %v4452
    %4504 = vmatprep.subr.bf16.mxu0 %v4457
    %4505 = vmatpush1.bf16.msra.mxu0 %v4456
    %4506 = vmatprep.subr.bf16.mxu0 %v4460
    %4507 = vmatpush1.bf16.msra.mxu0 %v4459
    %4508 = vmatprep.subr.bf16.mxu0 %v4463
    %4509 = vmatpush1.bf16.msra.mxu0 %v4462
    %4510 = vmatprep.subr.bf16.mxu0 %v4466
    %4511 = vmatpush1.bf16.msra.mxu0 %v4465
    %4512 = vmatprep.subr.bf16.mxu0 %v4469
    %4513 = vmatpush1.bf16.msra.mxu0 %v4468
    %4514 = vmatprep.subr.bf16.mxu0 %v4472
    %4515 = vmatpush1.bf16.msra.mxu0 %v4471
    %4516 = vmatprep.subr.bf16.mxu0 %v4475
    %4517 = vmatpush1.bf16.msra.mxu0 %v4474
    %4518 = vmatprep.subr.bf16.mxu0 %v4478
    %4519 = vmatpush1.bf16.msra.mxu0 %v4477
    %4520 = vmatprep.subr.bf16.mxu0 0
    %4521 = vmatpush1.bf16.msra.mxu0 0
    %4522 = vmatprep.subr.bf16.mxu0 0
    %4523 = vmatpush1.bf16.msra.mxu0 0
    %4524 = vmatprep.subr.bf16.mxu0 0
    %4525 = vmatpush1.bf16.msra.mxu0 0
    %4526 = vmatprep.subr.bf16.mxu0 0
    %4527 = vmatpush1.bf16.msra.mxu0 0
    %4528 = vmatprep.subr.bf16.mxu0 0
    %4529 = vmatpush1.bf16.msra.mxu0 0
    %4530 = vmatprep.subr.bf16.mxu0 0
    %4531 = vmatpush1.bf16.msra.mxu0 0
    %4532 = vmatprep.subr.bf16.mxu0 0
    %4533 = vmatpush1.bf16.msra.mxu0 0
    %4534 = vmatprep.subr.bf16.mxu0 0
    %4535 = vmatpush1.bf16.msra.mxu0 0
    %4536 = vmatprep.mubr.bf16.mxu0 0
    %4537 = vmatmul.mubr.bf16.gmra.mrb[0].mxu0 %v4343
    %v4538 = vpop.f32.mrb[0].mxu0
    %v4539 = vadd.f32 0.0, %v4538
    %v4540 = vpop.f32.mrb[0].mxu0
    %v4541 = vadd.f32 0.0, %v4540
    %v4542 = vpop.f32.mrb[0].mxu0
    %v4543 = vpop.f32.mrb[0].mxu0
    %4544 = vdwg.mxu0
    %4545 = vmatprep.subr.bf16.mxu0 0
    %4546 = vmatpush1.bf16.msra.mxu0 %v4458
    %4547 = vmatprep.subr.bf16.mxu0 0
    %4548 = vmatpush1.bf16.msra.mxu0 %v4461
    %4549 = vmatprep.subr.bf16.mxu0 0
    %4550 = vmatpush1.bf16.msra.mxu0 %v4464
    %4551 = vmatprep.subr.bf16.mxu0 0
    %4552 = vmatpush1.bf16.msra.mxu0 %v4467
    %4553 = vmatprep.subr.bf16.mxu0 0
    %4554 = vmatpush1.bf16.msra.mxu0 %v4470
    %4555 = vmatprep.subr.bf16.mxu0 0
    %4556 = vmatpush1.bf16.msra.mxu0 %v4473
    %4557 = vmatprep.subr.bf16.mxu0 0
    %4558 = vmatpush1.bf16.msra.mxu0 %v4476
    %4559 = vmatprep.subr.bf16.mxu0 0
    %4560 = vmatpush1.bf16.msra.mxu0 %v4479
    %4561 = vmatprep.subr.bf16.mxu0 0
    %4562 = vmatpush1.bf16.msra.mxu0 0
    %4563 = vmatprep.subr.bf16.mxu0 0
    %4564 = vmatpush1.bf16.msra.mxu0 0
    %4565 = vmatprep.subr.bf16.mxu0 0
    %4566 = vmatpush1.bf16.msra.mxu0 0
    %4567 = vmatprep.subr.bf16.mxu0 0
    %4568 = vmatpush1.bf16.msra.mxu0 0
    %4569 = vmatprep.subr.bf16.mxu0 0
    %4570 = vmatpush1.bf16.msra.mxu0 0
    %4571 = vmatprep.subr.bf16.mxu0 0
    %4572 = vmatpush1.bf16.msra.mxu0 0
    %4573 = vmatprep.subr.bf16.mxu0 0
    %4574 = vmatpush1.bf16.msra.mxu0 0
    %4575 = vmatprep.subr.bf16.mxu0 0
    %4576 = vmatpush1.bf16.msra.mxu0 0
    %4577 = vmatprep.mubr.bf16.mxu0 0
    %4578 = vmatmul.mubr.bf16.gmra.mrb[0].mxu0 %v4343
    %v4579 = vpop.f32.mrb[0].mxu0
    %v4580 = vadd.f32 0.0, %v4579
    %v4581 = vpop.f32.mrb[0].mxu0
    %v4582 = vpop.f32.mrb[0].mxu0
    %v4583 = vpop.f32.mrb[0].mxu0
    %4584 = vdwg.mxu0
    %v4585 = vadd.f32 %v4340, %v4539
    %v4586 = vxor.u32 %v4585, 2147483648
    %v4587 = vmul.f32 %v4586, 1.442695
    %v4588 = vpow.pop %v4587
    %v4589 = vadd.f32 %v4588, 1.0
    %v4590 = vrcp.pop %v4589
    %v4591 = vmul.f32 1.0, %v4590
    %v4592 = vadd.f32 %v4341, %v4541
    %v4593 = vxor.u32 %v4592, 2147483648
    %v4594 = vmul.f32 %v4593, 1.442695
    %v4595 = vpow.pop %v4594
    %v4596 = vadd.f32 %v4595, 1.0
    %v4597 = vrcp.pop %v4596
    %v4598 = vmul.f32 1.0, %v4597
    %v4599 = vld [vmem:[#allocation11] sm:$0x1]
    %v4601 = vlaneseq
    %v4602 = vshrl.u32 %v4601, 7
    %v4603 = vsub.s32 0, %v4602
    %v4604 = vrot.slane %v4599, %v4603
    %v4606 = vadd.f32 %v4580, %v4604
    %v4607 = vmul.f32 %v4591, %v4606
    %v4608 = vadd.f32 %v4342, %v4607
    %v4609 = vtanh.pop %v4608
    %v4610 = vsub.f32 1.0, %v4598
    %v4611 = vmul.f32 %v4610, %v4609
    %v4612 = vmul.f32 %v4598, %v3930
    %v4613 = vadd.f32 %v4611, %v4612
    %v4614 = vsel %vm2201, %v4613, %v3930
    %v4615 = vsel %vm2201, %v4613, 0.0
    %v4617 = vcombine.high %v4615, %v4615
    %v4619 = vunpack.c.l.s4 1966171168
    %v4620 = vunpack.c.0.s8 %v4619
    %v4621 = vlaneseq
    %v4622 = vshrl.u32 %v4621, 7
    %v4623 = vsub.s32 %v4620, %v4622
    %v4624 = vrot.slane %v4615, %v4623
    %v4626 = vunpack.c.l.s4 1966171168
    %v4627 = vunpack.c.0.s8 %v4626
    %v4628 = vlaneseq
    %v4629 = vshrl.u32 %v4628, 7
    %v4630 = vsub.s32 %v4627, %v4629
    %v4631 = vrot.slane %v4617, %v4630
    %v4632 = vcombine.high %v4624, %v4624
    %v4633 = vcombine.high %v4631, %v4631
    %v4635 = vunpack.c.l.s4 1966171168
    %v4636 = vunpack.c.0.s8 %v4635
    %v4637 = vlaneseq
    %v4638 = vshrl.u32 %v4637, 7
    %v4639 = vsub.s32 %v4636, %v4638
    %v4640 = vrot.slane %v4624, %v4639
    %v4642 = vunpack.c.l.s4 1966171168
    %v4643 = vunpack.c.0.s8 %v4642
    %v4644 = vlaneseq
    %v4645 = vshrl.u32 %v4644, 7
    %v4646 = vsub.s32 %v4643, %v4645
    %v4647 = vrot.slane %v4631, %v4646
    %v4649 = vunpack.c.l.s4 1966171168
    %v4650 = vunpack.c.0.s8 %v4649
    %v4651 = vlaneseq
    %v4652 = vshrl.u32 %v4651, 7
    %v4653 = vsub.s32 %v4650, %v4652
    %v4654 = vrot.slane %v4632, %v4653
    %v4656 = vunpack.c.l.s4 1966171168
    %v4657 = vunpack.c.0.s8 %v4656
    %v4658 = vlaneseq
    %v4659 = vshrl.u32 %v4658, 7
    %v4660 = vsub.s32 %v4657, %v4659
    %v4661 = vrot.slane %v4633, %v4660
    %v4662 = vcombine.high %v4640, %v4640
    %v4663 = vcombine.high %v4647, %v4647
    %v4664 = vcombine.high %v4654, %v4654
    %v4665 = vcombine.high %v4661, %v4661
    %4674 = vst [vmem:[#allocation14 + $0xa] sm:$0x1] %v4640
    %4675 = vst [vmem:[#allocation14 + $0x1a] sm:$0x1] %v4654
    %4676 = vst [vmem:[#allocation14 + $0x2a] sm:$0x1] %v4662
    %4677 = vst [vmem:[#allocation14 + $0x3a] sm:$0x1] %v4664
    %4678 = vst [vmem:[#allocation14 + $0x4a] sm:$0x1] %v4647
    %4679 = vst [vmem:[#allocation14 + $0x5a] sm:$0x1] %v4661
    %4680 = vst [vmem:[#allocation14 + $0x6a] sm:$0x1] %v4663
    %4681 = vst [vmem:[#allocation14 + $0x7a] sm:$0x1] %v4665
    %v4682 = vld [vmem:[#allocation2 + $0x120] sm:$0xff]
    %v4683 = vld [vmem:[#allocation2 + $0x128] sm:$0xff]
    %v4684 = vld [vmem:[#allocation2 + $0x130] sm:$0xff]
    %v4685 = vpack.c.bf16 %v4272, %v4272
    %v4686 = vld [vmem:[#allocation8] sm:$0xff]
    %v4687 = vld [vmem:[#allocation8 + $0x8] sm:$0xf]
    %v4688 = vld [vmem:[#allocation8 + $0xc] sm:$0xff]
    %v4689 = vld [vmem:[#allocation8 + $0x14] sm:$0xf]
    %v4690 = vld [vmem:[#allocation8 + $0x18] sm:$0xff]
    %v4691 = vld [vmem:[#allocation8 + $0x20] sm:$0xf]
    %v4692 = vld [vmem:[#allocation8 + $0x24] sm:$0xff]
    %v4693 = vld [vmem:[#allocation8 + $0x2c] sm:$0xf]
    %v4694 = vld [vmem:[#allocation8 + $0x30] sm:$0xff]
    %v4695 = vld [vmem:[#allocation8 + $0x38] sm:$0xf]
    %v4696 = vld [vmem:[#allocation8 + $0x3c] sm:$0xff]
    %v4697 = vld [vmem:[#allocation8 + $0x44] sm:$0xf]
    %v4698 = vld [vmem:[#allocation8 + $0x48] sm:$0xff]
    %v4699 = vld [vmem:[#allocation8 + $0x50] sm:$0xf]
    %v4700 = vld [vmem:[#allocation8 + $0x54] sm:$0xff]
    %v4701 = vld [vmem:[#allocation8 + $0x5c] sm:$0xf]
    %v4702 = vld [vmem:[#allocation8 + $0x60] sm:$0xff]
    %v4703 = vld [vmem:[#allocation8 + $0x68] sm:$0xf]
    %v4704 = vld [vmem:[#allocation8 + $0x6c] sm:$0xff]
    %v4705 = vld [vmem:[#allocation8 + $0x74] sm:$0xf]
    %v4706 = vld [vmem:[#allocation8 + $0x78] sm:$0xff]
    %v4707 = vld [vmem:[#allocation8 + $0x80] sm:$0xf]
    %v4708 = vld [vmem:[#allocation8 + $0x84] sm:$0xff]
    %v4709 = vld [vmem:[#allocation8 + $0x8c] sm:$0xf]
    %v4710 = vld [vmem:[#allocation8 + $0x90] sm:$0xff]
    %v4711 = vld [vmem:[#allocation8 + $0x98] sm:$0xf]
    %v4712 = vld [vmem:[#allocation8 + $0x9c] sm:$0xff]
    %v4713 = vld [vmem:[#allocation8 + $0xa4] sm:$0xf]
    %v4714 = vld [vmem:[#allocation8 + $0xa8] sm:$0xff]
    %v4715 = vld [vmem:[#allocation8 + $0xb0] sm:$0xf]
    %v4716 = vld [vmem:[#allocation8 + $0xb4] sm:$0xff]
    %v4717 = vld [vmem:[#allocation8 + $0xbc] sm:$0xf]
    %v4750 = vunpack.c.l.b16 %v4686
    %v4751 = vunpack.c.h.b16 %v4686
    %v4752 = vunpack.c.l.b16 %v4687
    %v4753 = vunpack.c.l.b16 %v4688
    %v4754 = vunpack.c.h.b16 %v4688
    %v4755 = vunpack.c.l.b16 %v4689
    %v4756 = vunpack.c.l.b16 %v4690
    %v4757 = vunpack.c.h.b16 %v4690
    %v4758 = vunpack.c.l.b16 %v4691
    %v4759 = vunpack.c.l.b16 %v4692
    %v4760 = vunpack.c.h.b16 %v4692
    %v4761 = vunpack.c.l.b16 %v4693
    %v4762 = vunpack.c.l.b16 %v4694
    %v4763 = vunpack.c.h.b16 %v4694
    %v4764 = vunpack.c.l.b16 %v4695
    %v4765 = vunpack.c.l.b16 %v4696
    %v4766 = vunpack.c.h.b16 %v4696
    %v4767 = vunpack.c.l.b16 %v4697
    %v4768 = vunpack.c.l.b16 %v4698
    %v4769 = vunpack.c.h.b16 %v4698
    %v4770 = vunpack.c.l.b16 %v4699
    %v4771 = vunpack.c.l.b16 %v4700
    %v4772 = vunpack.c.h.b16 %v4700
    %v4773 = vunpack.c.l.b16 %v4701
    %v4774 = vunpack.c.l.b16 %v4702
    %v4775 = vunpack.c.h.b16 %v4702
    %v4776 = vunpack.c.l.b16 %v4703
    %v4777 = vunpack.c.l.b16 %v4704
    %v4778 = vunpack.c.h.b16 %v4704
    %v4779 = vunpack.c.l.b16 %v4705
    %v4780 = vunpack.c.l.b16 %v4706
    %v4781 = vunpack.c.h.b16 %v4706
    %v4782 = vunpack.c.l.b16 %v4707
    %v4783 = vunpack.c.l.b16 %v4708
    %v4784 = vunpack.c.h.b16 %v4708
    %v4785 = vunpack.c.l.b16 %v4709
    %v4786 = vunpack.c.l.b16 %v4710
    %v4787 = vunpack.c.h.b16 %v4710
    %v4788 = vunpack.c.l.b16 %v4711
    %v4789 = vunpack.c.l.b16 %v4712
    %v4790 = vunpack.c.h.b16 %v4712
    %v4791 = vunpack.c.l.b16 %v4713
    %v4792 = vunpack.c.l.b16 %v4714
    %v4793 = vunpack.c.h.b16 %v4714
    %v4794 = vunpack.c.l.b16 %v4715
    %v4795 = vunpack.c.l.b16 %v4716
    %v4796 = vunpack.c.h.b16 %v4716
    %v4797 = vunpack.c.l.b16 %v4717
    %v4798 = vpack.c.b16 %v4753, %v4750
    %v4799 = vpack.c.b16 %v4754, %v4751
    %v4800 = vpack.c.b16 %v4755, %v4752
    %v4801 = vpack.c.b16 %v4759, %v4756
    %v4802 = vpack.c.b16 %v4760, %v4757
    %v4803 = vpack.c.b16 %v4761, %v4758
    %v4804 = vpack.c.b16 %v4765, %v4762
    %v4805 = vpack.c.b16 %v4766, %v4763
    %v4806 = vpack.c.b16 %v4767, %v4764
    %v4807 = vpack.c.b16 %v4771, %v4768
    %v4808 = vpack.c.b16 %v4772, %v4769
    %v4809 = vpack.c.b16 %v4773, %v4770
    %v4810 = vpack.c.b16 %v4777, %v4774
    %v4811 = vpack.c.b16 %v4778, %v4775
    %v4812 = vpack.c.b16 %v4779, %v4776
    %v4813 = vpack.c.b16 %v4783, %v4780
    %v4814 = vpack.c.b16 %v4784, %v4781
    %v4815 = vpack.c.b16 %v4785, %v4782
    %v4816 = vpack.c.b16 %v4789, %v4786
    %v4817 = vpack.c.b16 %v4790, %v4787
    %v4818 = vpack.c.b16 %v4791, %v4788
    %v4819 = vpack.c.b16 %v4795, %v4792
    %v4820 = vpack.c.b16 %v4796, %v4793
    %v4821 = vpack.c.b16 %v4797, %v4794
    %4846 = vmatprep.subr.bf16.mxu0 %v4799
    %4847 = vmatpush1.bf16.msra.mxu0 %v4798
    %4848 = vmatprep.subr.bf16.mxu0 %v4802
    %4849 = vmatpush1.bf16.msra.mxu0 %v4801
    %4850 = vmatprep.subr.bf16.mxu0 %v4805
    %4851 = vmatpush1.bf16.msra.mxu0 %v4804
    %4852 = vmatprep.subr.bf16.mxu0 %v4808
    %4853 = vmatpush1.bf16.msra.mxu0 %v4807
    %4854 = vmatprep.subr.bf16.mxu0 %v4811
    %4855 = vmatpush1.bf16.msra.mxu0 %v4810
    %4856 = vmatprep.subr.bf16.mxu0 %v4814
    %4857 = vmatpush1.bf16.msra.mxu0 %v4813
    %4858 = vmatprep.subr.bf16.mxu0 %v4817
    %4859 = vmatpush1.bf16.msra.mxu0 %v4816
    %4860 = vmatprep.subr.bf16.mxu0 %v4820
    %4861 = vmatpush1.bf16.msra.mxu0 %v4819
    %4862 = vmatprep.subr.bf16.mxu0 0
    %4863 = vmatpush1.bf16.msra.mxu0 0
    %4864 = vmatprep.subr.bf16.mxu0 0
    %4865 = vmatpush1.bf16.msra.mxu0 0
    %4866 = vmatprep.subr.bf16.mxu0 0
    %4867 = vmatpush1.bf16.msra.mxu0 0
    %4868 = vmatprep.subr.bf16.mxu0 0
    %4869 = vmatpush1.bf16.msra.mxu0 0
    %4870 = vmatprep.subr.bf16.mxu0 0
    %4871 = vmatpush1.bf16.msra.mxu0 0
    %4872 = vmatprep.subr.bf16.mxu0 0
    %4873 = vmatpush1.bf16.msra.mxu0 0
    %4874 = vmatprep.subr.bf16.mxu0 0
    %4875 = vmatpush1.bf16.msra.mxu0 0
    %4876 = vmatprep.subr.bf16.mxu0 0
    %4877 = vmatpush1.bf16.msra.mxu0 0
    %4878 = vmatprep.mubr.bf16.mxu0 0
    %4879 = vmatmul.mubr.bf16.gmra.mrb[0].mxu0 %v4685
    %v4880 = vpop.f32.mrb[0].mxu0
    %v4881 = vadd.f32 0.0, %v4880
    %v4882 = vpop.f32.mrb[0].mxu0
    %v4883 = vadd.f32 0.0, %v4882
    %v4884 = vpop.f32.mrb[0].mxu0
    %v4885 = vpop.f32.mrb[0].mxu0
    %4886 = vdwg.mxu0
    %4887 = vmatprep.subr.bf16.mxu0 0
    %4888 = vmatpush1.bf16.msra.mxu0 %v4800
    %4889 = vmatprep.subr.bf16.mxu0 0
    %4890 = vmatpush1.bf16.msra.mxu0 %v4803
    %4891 = vmatprep.subr.bf16.mxu0 0
    %4892 = vmatpush1.bf16.msra.mxu0 %v4806
    %4893 = vmatprep.subr.bf16.mxu0 0
    %4894 = vmatpush1.bf16.msra.mxu0 %v4809
    %4895 = vmatprep.subr.bf16.mxu0 0
    %4896 = vmatpush1.bf16.msra.mxu0 %v4812
    %4897 = vmatprep.subr.bf16.mxu0 0
    %4898 = vmatpush1.bf16.msra.mxu0 %v4815
    %4899 = vmatprep.subr.bf16.mxu0 0
    %4900 = vmatpush1.bf16.msra.mxu0 %v4818
    %4901 = vmatprep.subr.bf16.mxu0 0
    %4902 = vmatpush1.bf16.msra.mxu0 %v4821
    %4903 = vmatprep.subr.bf16.mxu0 0
    %4904 = vmatpush1.bf16.msra.mxu0 0
    %4905 = vmatprep.subr.bf16.mxu0 0
    %4906 = vmatpush1.bf16.msra.mxu0 0
    %4907 = vmatprep.subr.bf16.mxu0 0
    %4908 = vmatpush1.bf16.msra.mxu0 0
    %4909 = vmatprep.subr.bf16.mxu0 0
    %4910 = vmatpush1.bf16.msra.mxu0 0
    %4911 = vmatprep.subr.bf16.mxu0 0
    %4912 = vmatpush1.bf16.msra.mxu0 0
    %4913 = vmatprep.subr.bf16.mxu0 0
    %4914 = vmatpush1.bf16.msra.mxu0 0
    %4915 = vmatprep.subr.bf16.mxu0 0
    %4916 = vmatpush1.bf16.msra.mxu0 0
    %4917 = vmatprep.subr.bf16.mxu0 0
    %4918 = vmatpush1.bf16.msra.mxu0 0
    %4919 = vmatprep.mubr.bf16.mxu0 0
    %4920 = vmatmul.mubr.bf16.gmra.mrb[0].mxu0 %v4685
    %v4921 = vpop.f32.mrb[0].mxu0
    %v4922 = vadd.f32 0.0, %v4921
    %v4923 = vpop.f32.mrb[0].mxu0
    %v4924 = vpop.f32.mrb[0].mxu0
    %v4925 = vpop.f32.mrb[0].mxu0
    %4926 = vdwg.mxu0
    %v4927 = vadd.f32 %v4682, %v4881
    %v4928 = vxor.u32 %v4927, 2147483648
    %v4929 = vmul.f32 %v4928, 1.442695
    %v4930 = vpow.pop %v4929
    %v4931 = vadd.f32 %v4930, 1.0
    %v4932 = vrcp.pop %v4931
    %v4933 = vmul.f32 1.0, %v4932
    %v4934 = vadd.f32 %v4683, %v4883
    %v4935 = vxor.u32 %v4934, 2147483648
    %v4936 = vmul.f32 %v4935, 1.442695
    %v4937 = vpow.pop %v4936
    %v4938 = vadd.f32 %v4937, 1.0
    %v4939 = vrcp.pop %v4938
    %v4940 = vmul.f32 1.0, %v4939
    %v4941 = vld [vmem:[%s5] sm:$0x1]
    %v4943 = vlaneseq
    %v4944 = vshrl.u32 %v4943, 7
    %v4945 = vsub.s32 0, %v4944
    %v4946 = vrot.slane %v4941, %v4945
    %v4948 = vadd.f32 %v4922, %v4946
    %v4949 = vmul.f32 %v4933, %v4948
    %v4950 = vadd.f32 %v4684, %v4949
    %v4951 = vtanh.pop %v4950
    %v4952 = vsub.f32 1.0, %v4940
    %v4953 = vmul.f32 %v4952, %v4951
    %v4954 = vmul.f32 %v4940, %v4272
    %v4955 = vadd.f32 %v4953, %v4954
    %v4956 = vsel %vm1853, %v4955, %v4272
    %v4957 = vsel %vm1853, %v4955, 0.0
    %v4959 = vcombine.high %v4957, %v4957
    %v4961 = vunpack.c.l.s4 1966171168
    %v4962 = vunpack.c.0.s8 %v4961
    %v4963 = vlaneseq
    %v4964 = vshrl.u32 %v4963, 7
    %v4965 = vsub.s32 %v4962, %v4964
    %v4966 = vrot.slane %v4957, %v4965
    %v4968 = vunpack.c.l.s4 1966171168
    %v4969 = vunpack.c.0.s8 %v4968
    %v4970 = vlaneseq
    %v4971 = vshrl.u32 %v4970, 7
    %v4972 = vsub.s32 %v4969, %v4971
    %v4973 = vrot.slane %v4959, %v4972
    %v4974 = vcombine.high %v4966, %v4966
    %v4975 = vcombine.high %v4973, %v4973
    %v4977 = vunpack.c.l.s4 1966171168
    %v4978 = vunpack.c.0.s8 %v4977
    %v4979 = vlaneseq
    %v4980 = vshrl.u32 %v4979, 7
    %v4981 = vsub.s32 %v4978, %v4980
    %v4982 = vrot.slane %v4966, %v4981
    %v4984 = vunpack.c.l.s4 1966171168
    %v4985 = vunpack.c.0.s8 %v4984
    %v4986 = vlaneseq
    %v4987 = vshrl.u32 %v4986, 7
    %v4988 = vsub.s32 %v4985, %v4987
    %v4989 = vrot.slane %v4973, %v4988
    %v4991 = vunpack.c.l.s4 1966171168
    %v4992 = vunpack.c.0.s8 %v4991
    %v4993 = vlaneseq
    %v4994 = vshrl.u32 %v4993, 7
    %v4995 = vsub.s32 %v4992, %v4994
    %v4996 = vrot.slane %v4974, %v4995
    %v4998 = vunpack.c.l.s4 1966171168
    %v4999 = vunpack.c.0.s8 %v4998
    %v5000 = vlaneseq
    %v5001 = vshrl.u32 %v5000, 7
    %v5002 = vsub.s32 %v4999, %v5001
    %v5003 = vrot.slane %v4975, %v5002
    %v5004 = vcombine.high %v4982, %v4982
    %v5005 = vcombine.high %v4989, %v4989
    %v5006 = vcombine.high %v4996, %v4996
    %v5007 = vcombine.high %v5003, %v5003
    %5016 = vst [vmem:[#allocation14 + $0x6] sm:$0x1] %v4982
    %5017 = vst [vmem:[#allocation14 + $0x16] sm:$0x1] %v4996
    %5018 = vst [vmem:[#allocation14 + $0x26] sm:$0x1] %v5004
    %5019 = vst [vmem:[#allocation14 + $0x36] sm:$0x1] %v5006
    %5020 = vst [vmem:[#allocation14 + $0x46] sm:$0x1] %v4989
    %5021 = vst [vmem:[#allocation14 + $0x56] sm:$0x1] %v5003
    %5022 = vst [vmem:[#allocation14 + $0x66] sm:$0x1] %v5005
    %5023 = vst [vmem:[#allocation14 + $0x76] sm:$0x1] %v5007
    %v5024 = vld [vmem:[#allocation2 + $0x48] sm:$0xff]
    %v5025 = vld [vmem:[#allocation2 + $0x50] sm:$0xff]
    %v5026 = vld [vmem:[#allocation2 + $0x58] sm:$0xff]
    %v5027 = vpack.c.bf16 %v4614, %v4614
    %v5028 = vld [vmem:[#allocation9] sm:$0xff]
    %v5029 = vld [vmem:[#allocation9 + $0x8] sm:$0xf]
    %v5030 = vld [vmem:[#allocation9 + $0xc] sm:$0xff]
    %v5031 = vld [vmem:[#allocation9 + $0x14] sm:$0xf]
    %v5032 = vld [vmem:[#allocation9 + $0x18] sm:$0xff]
    %v5033 = vld [vmem:[#allocation9 + $0x20] sm:$0xf]
    %v5034 = vld [vmem:[#allocation9 + $0x24] sm:$0xff]
    %v5035 = vld [vmem:[#allocation9 + $0x2c] sm:$0xf]
    %v5036 = vld [vmem:[#allocation9 + $0x30] sm:$0xff]
    %v5037 = vld [vmem:[#allocation9 + $0x38] sm:$0xf]
    %v5038 = vld [vmem:[#allocation9 + $0x3c] sm:$0xff]
    %v5039 = vld [vmem:[#allocation9 + $0x44] sm:$0xf]
    %v5040 = vld [vmem:[#allocation9 + $0x48] sm:$0xff]
    %v5041 = vld [vmem:[#allocation9 + $0x50] sm:$0xf]
    %v5042 = vld [vmem:[#allocation9 + $0x54] sm:$0xff]
    %v5043 = vld [vmem:[#allocation9 + $0x5c] sm:$0xf]
    %v5044 = vld [vmem:[#allocation9 + $0x60] sm:$0xff]
    %v5045 = vld [vmem:[#allocation9 + $0x68] sm:$0xf]
    %v5046 = vld [vmem:[#allocation9 + $0x6c] sm:$0xff]
    %v5047 = vld [vmem:[#allocation9 + $0x74] sm:$0xf]
    %v5048 = vld [vmem:[#allocation9 + $0x78] sm:$0xff]
    %v5049 = vld [vmem:[#allocation9 + $0x80] sm:$0xf]
    %v5050 = vld [vmem:[#allocation9 + $0x84] sm:$0xff]
    %v5051 = vld [vmem:[#allocation9 + $0x8c] sm:$0xf]
    %v5052 = vld [vmem:[#allocation9 + $0x90] sm:$0xff]
    %v5053 = vld [vmem:[#allocation9 + $0x98] sm:$0xf]
    %v5054 = vld [vmem:[#allocation9 + $0x9c] sm:$0xff]
    %v5055 = vld [vmem:[#allocation9 + $0xa4] sm:$0xf]
    %v5056 = vld [vmem:[#allocation9 + $0xa8] sm:$0xff]
    %v5057 = vld [vmem:[#allocation9 + $0xb0] sm:$0xf]
    %v5058 = vld [vmem:[#allocation9 + $0xb4] sm:$0xff]
    %v5059 = vld [vmem:[#allocation9 + $0xbc] sm:$0xf]
    %v5092 = vunpack.c.l.b16 %v5028
    %v5093 = vunpack.c.h.b16 %v5028
    %v5094 = vunpack.c.l.b16 %v5029
    %v5095 = vunpack.c.l.b16 %v5030
    %v5096 = vunpack.c.h.b16 %v5030
    %v5097 = vunpack.c.l.b16 %v5031
    %v5098 = vunpack.c.l.b16 %v5032
    %v5099 = vunpack.c.h.b16 %v5032
    %v5100 = vunpack.c.l.b16 %v5033
    %v5101 = vunpack.c.l.b16 %v5034
    %v5102 = vunpack.c.h.b16 %v5034
    %v5103 = vunpack.c.l.b16 %v5035
    %v5104 = vunpack.c.l.b16 %v5036
    %v5105 = vunpack.c.h.b16 %v5036
    %v5106 = vunpack.c.l.b16 %v5037
    %v5107 = vunpack.c.l.b16 %v5038
    %v5108 = vunpack.c.h.b16 %v5038
    %v5109 = vunpack.c.l.b16 %v5039
    %v5110 = vunpack.c.l.b16 %v5040
    %v5111 = vunpack.c.h.b16 %v5040
    %v5112 = vunpack.c.l.b16 %v5041
    %v5113 = vunpack.c.l.b16 %v5042
    %v5114 = vunpack.c.h.b16 %v5042
    %v5115 = vunpack.c.l.b16 %v5043
    %v5116 = vunpack.c.l.b16 %v5044
    %v5117 = vunpack.c.h.b16 %v5044
    %v5118 = vunpack.c.l.b16 %v5045
    %v5119 = vunpack.c.l.b16 %v5046
    %v5120 = vunpack.c.h.b16 %v5046
    %v5121 = vunpack.c.l.b16 %v5047
    %v5122 = vunpack.c.l.b16 %v5048
    %v5123 = vunpack.c.h.b16 %v5048
    %v5124 = vunpack.c.l.b16 %v5049
    %v5125 = vunpack.c.l.b16 %v5050
    %v5126 = vunpack.c.h.b16 %v5050
    %v5127 = vunpack.c.l.b16 %v5051
    %v5128 = vunpack.c.l.b16 %v5052
    %v5129 = vunpack.c.h.b16 %v5052
    %v5130 = vunpack.c.l.b16 %v5053
    %v5131 = vunpack.c.l.b16 %v5054
    %v5132 = vunpack.c.h.b16 %v5054
    %v5133 = vunpack.c.l.b16 %v5055
    %v5134 = vunpack.c.l.b16 %v5056
    %v5135 = vunpack.c.h.b16 %v5056
    %v5136 = vunpack.c.l.b16 %v5057
    %v5137 = vunpack.c.l.b16 %v5058
    %v5138 = vunpack.c.h.b16 %v5058
    %v5139 = vunpack.c.l.b16 %v5059
    %v5140 = vpack.c.b16 %v5095, %v5092
    %v5141 = vpack.c.b16 %v5096, %v5093
    %v5142 = vpack.c.b16 %v5097, %v5094
    %v5143 = vpack.c.b16 %v5101, %v5098
    %v5144 = vpack.c.b16 %v5102, %v5099
    %v5145 = vpack.c.b16 %v5103, %v5100
    %v5146 = vpack.c.b16 %v5107, %v5104
    %v5147 = vpack.c.b16 %v5108, %v5105
    %v5148 = vpack.c.b16 %v5109, %v5106
    %v5149 = vpack.c.b16 %v5113, %v5110
    %v5150 = vpack.c.b16 %v5114, %v5111
    %v5151 = vpack.c.b16 %v5115, %v5112
    %v5152 = vpack.c.b16 %v5119, %v5116
    %v5153 = vpack.c.b16 %v5120, %v5117
    %v5154 = vpack.c.b16 %v5121, %v5118
    %v5155 = vpack.c.b16 %v5125, %v5122
    %v5156 = vpack.c.b16 %v5126, %v5123
    %v5157 = vpack.c.b16 %v5127, %v5124
    %v5158 = vpack.c.b16 %v5131, %v5128
    %v5159 = vpack.c.b16 %v5132, %v5129
    %v5160 = vpack.c.b16 %v5133, %v5130
    %v5161 = vpack.c.b16 %v5137, %v5134
    %v5162 = vpack.c.b16 %v5138, %v5135
    %v5163 = vpack.c.b16 %v5139, %v5136
    %5188 = vmatprep.subr.bf16.mxu0 %v5141
    %5189 = vmatpush1.bf16.msra.mxu0 %v5140
    %5190 = vmatprep.subr.bf16.mxu0 %v5144
    %5191 = vmatpush1.bf16.msra.mxu0 %v5143
    %5192 = vmatprep.subr.bf16.mxu0 %v5147
    %5193 = vmatpush1.bf16.msra.mxu0 %v5146
    %5194 = vmatprep.subr.bf16.mxu0 %v5150
    %5195 = vmatpush1.bf16.msra.mxu0 %v5149
    %5196 = vmatprep.subr.bf16.mxu0 %v5153
    %5197 = vmatpush1.bf16.msra.mxu0 %v5152
    %5198 = vmatprep.subr.bf16.mxu0 %v5156
    %5199 = vmatpush1.bf16.msra.mxu0 %v5155
    %5200 = vmatprep.subr.bf16.mxu0 %v5159
    %5201 = vmatpush1.bf16.msra.mxu0 %v5158
    %5202 = vmatprep.subr.bf16.mxu0 %v5162
    %5203 = vmatpush1.bf16.msra.mxu0 %v5161
    %5204 = vmatprep.subr.bf16.mxu0 0
    %5205 = vmatpush1.bf16.msra.mxu0 0
    %5206 = vmatprep.subr.bf16.mxu0 0
    %5207 = vmatpush1.bf16.msra.mxu0 0
    %5208 = vmatprep.subr.bf16.mxu0 0
    %5209 = vmatpush1.bf16.msra.mxu0 0
    %5210 = vmatprep.subr.bf16.mxu0 0
    %5211 = vmatpush1.bf16.msra.mxu0 0
    %5212 = vmatprep.subr.bf16.mxu0 0
    %5213 = vmatpush1.bf16.msra.mxu0 0
    %5214 = vmatprep.subr.bf16.mxu0 0
    %5215 = vmatpush1.bf16.msra.mxu0 0
    %5216 = vmatprep.subr.bf16.mxu0 0
    %5217 = vmatpush1.bf16.msra.mxu0 0
    %5218 = vmatprep.subr.bf16.mxu0 0
    %5219 = vmatpush1.bf16.msra.mxu0 0
    %5220 = vmatprep.mubr.bf16.mxu0 0
    %5221 = vmatmul.mubr.bf16.gmra.mrb[0].mxu0 %v5027
    %v5222 = vpop.f32.mrb[0].mxu0
    %v5223 = vadd.f32 0.0, %v5222
    %v5224 = vpop.f32.mrb[0].mxu0
    %v5225 = vadd.f32 0.0, %v5224
    %v5226 = vpop.f32.mrb[0].mxu0
    %v5227 = vpop.f32.mrb[0].mxu0
    %5228 = vdwg.mxu0
    %5229 = vmatprep.subr.bf16.mxu0 0
    %5230 = vmatpush1.bf16.msra.mxu0 %v5142
    %5231 = vmatprep.subr.bf16.mxu0 0
    %5232 = vmatpush1.bf16.msra.mxu0 %v5145
    %5233 = vmatprep.subr.bf16.mxu0 0
    %5234 = vmatpush1.bf16.msra.mxu0 %v5148
    %5235 = vmatprep.subr.bf16.mxu0 0
    %5236 = vmatpush1.bf16.msra.mxu0 %v5151
    %5237 = vmatprep.subr.bf16.mxu0 0
    %5238 = vmatpush1.bf16.msra.mxu0 %v5154
    %5239 = vmatprep.subr.bf16.mxu0 0
    %5240 = vmatpush1.bf16.msra.mxu0 %v5157
    %5241 = vmatprep.subr.bf16.mxu0 0
    %5242 = vmatpush1.bf16.msra.mxu0 %v5160
    %5243 = vmatprep.subr.bf16.mxu0 0
    %5244 = vmatpush1.bf16.msra.mxu0 %v5163
    %5245 = vmatprep.subr.bf16.mxu0 0
    %5246 = vmatpush1.bf16.msra.mxu0 0
    %5247 = vmatprep.subr.bf16.mxu0 0
    %5248 = vmatpush1.bf16.msra.mxu0 0
    %5249 = vmatprep.subr.bf16.mxu0 0
    %5250 = vmatpush1.bf16.msra.mxu0 0
    %5251 = vmatprep.subr.bf16.mxu0 0
    %5252 = vmatpush1.bf16.msra.mxu0 0
    %5253 = vmatprep.subr.bf16.mxu0 0
    %5254 = vmatpush1.bf16.msra.mxu0 0
    %5255 = vmatprep.subr.bf16.mxu0 0
    %5256 = vmatpush1.bf16.msra.mxu0 0
    %5257 = vmatprep.subr.bf16.mxu0 0
    %5258 = vmatpush1.bf16.msra.mxu0 0
    %5259 = vmatprep.subr.bf16.mxu0 0
    %5260 = vmatpush1.bf16.msra.mxu0 0
    %5261 = vmatprep.mubr.bf16.mxu0 0
    %5262 = vmatmul.mubr.bf16.gmra.mrb[0].mxu0 %v5027
    %v5263 = vpop.f32.mrb[0].mxu0
    %v5264 = vadd.f32 0.0, %v5263
    %v5265 = vpop.f32.mrb[0].mxu0
    %v5266 = vpop.f32.mrb[0].mxu0
    %v5267 = vpop.f32.mrb[0].mxu0
    %5268 = vdwg.mxu0
    %v5269 = vadd.f32 %v5024, %v5223
    %v5270 = vxor.u32 %v5269, 2147483648
    %v5271 = vmul.f32 %v5270, 1.442695
    %v5272 = vpow.pop %v5271
    %v5273 = vadd.f32 %v5272, 1.0
    %v5274 = vrcp.pop %v5273
    %v5275 = vmul.f32 1.0, %v5274
    %v5276 = vadd.f32 %v5025, %v5225
    %v5277 = vxor.u32 %v5276, 2147483648
    %v5278 = vmul.f32 %v5277, 1.442695
    %v5279 = vpow.pop %v5278
    %v5280 = vadd.f32 %v5279, 1.0
    %v5281 = vrcp.pop %v5280
    %v5282 = vmul.f32 1.0, %v5281
    %v5283 = vld [vmem:[#allocation11] sm:$0x1]
    %v5285 = vlaneseq
    %v5286 = vshrl.u32 %v5285, 7
    %v5287 = vsub.s32 0, %v5286
    %v5288 = vrot.slane %v5283, %v5287
    %v5290 = vadd.f32 %v5264, %v5288
    %v5291 = vmul.f32 %v5275, %v5290
    %v5292 = vadd.f32 %v5026, %v5291
    %v5293 = vtanh.pop %v5292
    %v5294 = vsub.f32 1.0, %v5282
    %v5295 = vmul.f32 %v5294, %v5293
    %v5296 = vmul.f32 %v5282, %v4614
    %v5297 = vadd.f32 %v5295, %v5296
    %v5298 = vsel %vm1505, %v5297, %v4614
    %v5299 = vsel %vm1505, %v5297, 0.0
    %v5301 = vcombine.high %v5299, %v5299
    %v5303 = vunpack.c.l.s4 1966171168
    %v5304 = vunpack.c.0.s8 %v5303
    %v5305 = vlaneseq
    %v5306 = vshrl.u32 %v5305, 7
    %v5307 = vsub.s32 %v5304, %v5306
    %v5308 = vrot.slane %v5299, %v5307
    %v5310 = vunpack.c.l.s4 1966171168
    %v5311 = vunpack.c.0.s8 %v5310
    %v5312 = vlaneseq
    %v5313 = vshrl.u32 %v5312, 7
    %v5314 = vsub.s32 %v5311, %v5313
    %v5315 = vrot.slane %v5301, %v5314
    %v5316 = vcombine.high %v5308, %v5308
    %v5317 = vcombine.high %v5315, %v5315
    %v5319 = vunpack.c.l.s4 1966171168
    %v5320 = vunpack.c.0.s8 %v5319
    %v5321 = vlaneseq
    %v5322 = vshrl.u32 %v5321, 7
    %v5323 = vsub.s32 %v5320, %v5322
    %v5324 = vrot.slane %v5308, %v5323
    %v5326 = vunpack.c.l.s4 1966171168
    %v5327 = vunpack.c.0.s8 %v5326
    %v5328 = vlaneseq
    %v5329 = vshrl.u32 %v5328, 7
    %v5330 = vsub.s32 %v5327, %v5329
    %v5331 = vrot.slane %v5315, %v5330
    %v5333 = vunpack.c.l.s4 1966171168
    %v5334 = vunpack.c.0.s8 %v5333
    %v5335 = vlaneseq
    %v5336 = vshrl.u32 %v5335, 7
    %v5337 = vsub.s32 %v5334, %v5336
    %v5338 = vrot.slane %v5316, %v5337
    %v5340 = vunpack.c.l.s4 1966171168
    %v5341 = vunpack.c.0.s8 %v5340
    %v5342 = vlaneseq
    %v5343 = vshrl.u32 %v5342, 7
    %v5344 = vsub.s32 %v5341, %v5343
    %v5345 = vrot.slane %v5317, %v5344
    %v5346 = vcombine.high %v5324, %v5324
    %v5347 = vcombine.high %v5331, %v5331
    %v5348 = vcombine.high %v5338, %v5338
    %v5349 = vcombine.high %v5345, %v5345
    %5358 = vst [vmem:[#allocation14 + $0x9] sm:$0x1] %v5324
    %5359 = vst [vmem:[#allocation14 + $0x19] sm:$0x1] %v5338
    %5360 = vst [vmem:[#allocation14 + $0x29] sm:$0x1] %v5346
    %5361 = vst [vmem:[#allocation14 + $0x39] sm:$0x1] %v5348
    %5362 = vst [vmem:[#allocation14 + $0x49] sm:$0x1] %v5331
    %5363 = vst [vmem:[#allocation14 + $0x59] sm:$0x1] %v5345
    %5364 = vst [vmem:[#allocation14 + $0x69] sm:$0x1] %v5347
    %5365 = vst [vmem:[#allocation14 + $0x79] sm:$0x1] %v5349
    %v5366 = vld [vmem:[#allocation2 + $0x150] sm:$0xff]
    %v5367 = vld [vmem:[#allocation2 + $0x158] sm:$0xff]
    %v5368 = vld [vmem:[#allocation2 + $0x160] sm:$0xff]
    %v5369 = vpack.c.bf16 %v4956, %v4956
    %v5370 = vld [vmem:[#allocation8] sm:$0xff]
    %v5371 = vld [vmem:[#allocation8 + $0x8] sm:$0xf]
    %v5372 = vld [vmem:[#allocation8 + $0xc] sm:$0xff]
    %v5373 = vld [vmem:[#allocation8 + $0x14] sm:$0xf]
    %v5374 = vld [vmem:[#allocation8 + $0x18] sm:$0xff]
    %v5375 = vld [vmem:[#allocation8 + $0x20] sm:$0xf]
    %v5376 = vld [vmem:[#allocation8 + $0x24] sm:$0xff]
    %v5377 = vld [vmem:[#allocation8 + $0x2c] sm:$0xf]
    %v5378 = vld [vmem:[#allocation8 + $0x30] sm:$0xff]
    %v5379 = vld [vmem:[#allocation8 + $0x38] sm:$0xf]
    %v5380 = vld [vmem:[#allocation8 + $0x3c] sm:$0xff]
    %v5381 = vld [vmem:[#allocation8 + $0x44] sm:$0xf]
    %v5382 = vld [vmem:[#allocation8 + $0x48] sm:$0xff]
    %v5383 = vld [vmem:[#allocation8 + $0x50] sm:$0xf]
    %v5384 = vld [vmem:[#allocation8 + $0x54] sm:$0xff]
    %v5385 = vld [vmem:[#allocation8 + $0x5c] sm:$0xf]
    %v5386 = vld [vmem:[#allocation8 + $0x60] sm:$0xff]
    %v5387 = vld [vmem:[#allocation8 + $0x68] sm:$0xf]
    %v5388 = vld [vmem:[#allocation8 + $0x6c] sm:$0xff]
    %v5389 = vld [vmem:[#allocation8 + $0x74] sm:$0xf]
    %v5390 = vld [vmem:[#allocation8 + $0x78] sm:$0xff]
    %v5391 = vld [vmem:[#allocation8 + $0x80] sm:$0xf]
    %v5392 = vld [vmem:[#allocation8 + $0x84] sm:$0xff]
    %v5393 = vld [vmem:[#allocation8 + $0x8c] sm:$0xf]
    %v5394 = vld [vmem:[#allocation8 + $0x90] sm:$0xff]
    %v5395 = vld [vmem:[#allocation8 + $0x98] sm:$0xf]
    %v5396 = vld [vmem:[#allocation8 + $0x9c] sm:$0xff]
    %v5397 = vld [vmem:[#allocation8 + $0xa4] sm:$0xf]
    %v5398 = vld [vmem:[#allocation8 + $0xa8] sm:$0xff]
    %v5399 = vld [vmem:[#allocation8 + $0xb0] sm:$0xf]
    %v5400 = vld [vmem:[#allocation8 + $0xb4] sm:$0xff]
    %v5401 = vld [vmem:[#allocation8 + $0xbc] sm:$0xf]
    %v5434 = vunpack.c.l.b16 %v5370
    %v5435 = vunpack.c.h.b16 %v5370
    %v5436 = vunpack.c.l.b16 %v5371
    %v5437 = vunpack.c.l.b16 %v5372
    %v5438 = vunpack.c.h.b16 %v5372
    %v5439 = vunpack.c.l.b16 %v5373
    %v5440 = vunpack.c.l.b16 %v5374
    %v5441 = vunpack.c.h.b16 %v5374
    %v5442 = vunpack.c.l.b16 %v5375
    %v5443 = vunpack.c.l.b16 %v5376
    %v5444 = vunpack.c.h.b16 %v5376
    %v5445 = vunpack.c.l.b16 %v5377
    %v5446 = vunpack.c.l.b16 %v5378
    %v5447 = vunpack.c.h.b16 %v5378
    %v5448 = vunpack.c.l.b16 %v5379
    %v5449 = vunpack.c.l.b16 %v5380
    %v5450 = vunpack.c.h.b16 %v5380
    %v5451 = vunpack.c.l.b16 %v5381
    %v5452 = vunpack.c.l.b16 %v5382
    %v5453 = vunpack.c.h.b16 %v5382
    %v5454 = vunpack.c.l.b16 %v5383
    %v5455 = vunpack.c.l.b16 %v5384
    %v5456 = vunpack.c.h.b16 %v5384
    %v5457 = vunpack.c.l.b16 %v5385
    %v5458 = vunpack.c.l.b16 %v5386
    %v5459 = vunpack.c.h.b16 %v5386
    %v5460 = vunpack.c.l.b16 %v5387
    %v5461 = vunpack.c.l.b16 %v5388
    %v5462 = vunpack.c.h.b16 %v5388
    %v5463 = vunpack.c.l.b16 %v5389
    %v5464 = vunpack.c.l.b16 %v5390
    %v5465 = vunpack.c.h.b16 %v5390
    %v5466 = vunpack.c.l.b16 %v5391
    %v5467 = vunpack.c.l.b16 %v5392
    %v5468 = vunpack.c.h.b16 %v5392
    %v5469 = vunpack.c.l.b16 %v5393
    %v5470 = vunpack.c.l.b16 %v5394
    %v5471 = vunpack.c.h.b16 %v5394
    %v5472 = vunpack.c.l.b16 %v5395
    %v5473 = vunpack.c.l.b16 %v5396
    %v5474 = vunpack.c.h.b16 %v5396
    %v5475 = vunpack.c.l.b16 %v5397
    %v5476 = vunpack.c.l.b16 %v5398
    %v5477 = vunpack.c.h.b16 %v5398
    %v5478 = vunpack.c.l.b16 %v5399
    %v5479 = vunpack.c.l.b16 %v5400
    %v5480 = vunpack.c.h.b16 %v5400
    %v5481 = vunpack.c.l.b16 %v5401
    %v5482 = vpack.c.b16 %v5437, %v5434
    %v5483 = vpack.c.b16 %v5438, %v5435
    %v5484 = vpack.c.b16 %v5439, %v5436
    %v5485 = vpack.c.b16 %v5443, %v5440
    %v5486 = vpack.c.b16 %v5444, %v5441
    %v5487 = vpack.c.b16 %v5445, %v5442
    %v5488 = vpack.c.b16 %v5449, %v5446
    %v5489 = vpack.c.b16 %v5450, %v5447
    %v5490 = vpack.c.b16 %v5451, %v5448
    %v5491 = vpack.c.b16 %v5455, %v5452
    %v5492 = vpack.c.b16 %v5456, %v5453
    %v5493 = vpack.c.b16 %v5457, %v5454
    %v5494 = vpack.c.b16 %v5461, %v5458
    %v5495 = vpack.c.b16 %v5462, %v5459
    %v5496 = vpack.c.b16 %v5463, %v5460
    %v5497 = vpack.c.b16 %v5467, %v5464
    %v5498 = vpack.c.b16 %v5468, %v5465
    %v5499 = vpack.c.b16 %v5469, %v5466
    %v5500 = vpack.c.b16 %v5473, %v5470
    %v5501 = vpack.c.b16 %v5474, %v5471
    %v5502 = vpack.c.b16 %v5475, %v5472
    %v5503 = vpack.c.b16 %v5479, %v5476
    %v5504 = vpack.c.b16 %v5480, %v5477
    %v5505 = vpack.c.b16 %v5481, %v5478
    %5530 = vmatprep.subr.bf16.mxu0 %v5483
    %5531 = vmatpush1.bf16.msra.mxu0 %v5482
    %5532 = vmatprep.subr.bf16.mxu0 %v5486
    %5533 = vmatpush1.bf16.msra.mxu0 %v5485
    %5534 = vmatprep.subr.bf16.mxu0 %v5489
    %5535 = vmatpush1.bf16.msra.mxu0 %v5488
    %5536 = vmatprep.subr.bf16.mxu0 %v5492
    %5537 = vmatpush1.bf16.msra.mxu0 %v5491
    %5538 = vmatprep.subr.bf16.mxu0 %v5495
    %5539 = vmatpush1.bf16.msra.mxu0 %v5494
    %5540 = vmatprep.subr.bf16.mxu0 %v5498
    %5541 = vmatpush1.bf16.msra.mxu0 %v5497
    %5542 = vmatprep.subr.bf16.mxu0 %v5501
    %5543 = vmatpush1.bf16.msra.mxu0 %v5500
    %5544 = vmatprep.subr.bf16.mxu0 %v5504
    %5545 = vmatpush1.bf16.msra.mxu0 %v5503
    %5546 = vmatprep.subr.bf16.mxu0 0
    %5547 = vmatpush1.bf16.msra.mxu0 0
    %5548 = vmatprep.subr.bf16.mxu0 0
    %5549 = vmatpush1.bf16.msra.mxu0 0
    %5550 = vmatprep.subr.bf16.mxu0 0
    %5551 = vmatpush1.bf16.msra.mxu0 0
    %5552 = vmatprep.subr.bf16.mxu0 0
    %5553 = vmatpush1.bf16.msra.mxu0 0
    %5554 = vmatprep.subr.bf16.mxu0 0
    %5555 = vmatpush1.bf16.msra.mxu0 0
    %5556 = vmatprep.subr.bf16.mxu0 0
    %5557 = vmatpush1.bf16.msra.mxu0 0
    %5558 = vmatprep.subr.bf16.mxu0 0
    %5559 = vmatpush1.bf16.msra.mxu0 0
    %5560 = vmatprep.subr.bf16.mxu0 0
    %5561 = vmatpush1.bf16.msra.mxu0 0
    %5562 = vmatprep.mubr.bf16.mxu0 0
    %5563 = vmatmul.mubr.bf16.gmra.mrb[0].mxu0 %v5369
    %v5564 = vpop.f32.mrb[0].mxu0
    %v5565 = vadd.f32 0.0, %v5564
    %v5566 = vpop.f32.mrb[0].mxu0
    %v5567 = vadd.f32 0.0, %v5566
    %v5568 = vpop.f32.mrb[0].mxu0
    %v5569 = vpop.f32.mrb[0].mxu0
    %5570 = vdwg.mxu0
    %5571 = vmatprep.subr.bf16.mxu0 0
    %5572 = vmatpush1.bf16.msra.mxu0 %v5484
    %5573 = vmatprep.subr.bf16.mxu0 0
    %5574 = vmatpush1.bf16.msra.mxu0 %v5487
    %5575 = vmatprep.subr.bf16.mxu0 0
    %5576 = vmatpush1.bf16.msra.mxu0 %v5490
    %5577 = vmatprep.subr.bf16.mxu0 0
    %5578 = vmatpush1.bf16.msra.mxu0 %v5493
    %5579 = vmatprep.subr.bf16.mxu0 0
    %5580 = vmatpush1.bf16.msra.mxu0 %v5496
    %5581 = vmatprep.subr.bf16.mxu0 0
    %5582 = vmatpush1.bf16.msra.mxu0 %v5499
    %5583 = vmatprep.subr.bf16.mxu0 0
    %5584 = vmatpush1.bf16.msra.mxu0 %v5502
    %5585 = vmatprep.subr.bf16.mxu0 0
    %5586 = vmatpush1.bf16.msra.mxu0 %v5505
    %5587 = vmatprep.subr.bf16.mxu0 0
    %5588 = vmatpush1.bf16.msra.mxu0 0
    %5589 = vmatprep.subr.bf16.mxu0 0
    %5590 = vmatpush1.bf16.msra.mxu0 0
    %5591 = vmatprep.subr.bf16.mxu0 0
    %5592 = vmatpush1.bf16.msra.mxu0 0
    %5593 = vmatprep.subr.bf16.mxu0 0
    %5594 = vmatpush1.bf16.msra.mxu0 0
    %5595 = vmatprep.subr.bf16.mxu0 0
    %5596 = vmatpush1.bf16.msra.mxu0 0
    %5597 = vmatprep.subr.bf16.mxu0 0
    %5598 = vmatpush1.bf16.msra.mxu0 0
    %5599 = vmatprep.subr.bf16.mxu0 0
    %5600 = vmatpush1.bf16.msra.mxu0 0
    %5601 = vmatprep.subr.bf16.mxu0 0
    %5602 = vmatpush1.bf16.msra.mxu0 0
    %5603 = vmatprep.mubr.bf16.mxu0 0
    %5604 = vmatmul.mubr.bf16.gmra.mrb[0].mxu0 %v5369
    %v5605 = vpop.f32.mrb[0].mxu0
    %v5606 = vadd.f32 0.0, %v5605
    %v5607 = vpop.f32.mrb[0].mxu0
    %v5608 = vpop.f32.mrb[0].mxu0
    %v5609 = vpop.f32.mrb[0].mxu0
    %5610 = vdwg.mxu0
    %v5611 = vadd.f32 %v5366, %v5565
    %v5612 = vxor.u32 %v5611, 2147483648
    %v5613 = vmul.f32 %v5612, 1.442695
    %v5614 = vpow.pop %v5613
    %v5615 = vadd.f32 %v5614, 1.0
    %v5616 = vrcp.pop %v5615
    %v5617 = vmul.f32 1.0, %v5616
    %v5618 = vadd.f32 %v5367, %v5567
    %v5619 = vxor.u32 %v5618, 2147483648
    %v5620 = vmul.f32 %v5619, 1.442695
    %v5621 = vpow.pop %v5620
    %v5622 = vadd.f32 %v5621, 1.0
    %v5623 = vrcp.pop %v5622
    %v5624 = vmul.f32 1.0, %v5623
    %v5625 = vld [vmem:[%s5] sm:$0x1]
    %v5627 = vlaneseq
    %v5628 = vshrl.u32 %v5627, 7
    %v5629 = vsub.s32 0, %v5628
    %v5630 = vrot.slane %v5625, %v5629
    %v5632 = vadd.f32 %v5606, %v5630
    %v5633 = vmul.f32 %v5617, %v5632
    %v5634 = vadd.f32 %v5368, %v5633
    %v5635 = vtanh.pop %v5634
    %v5636 = vsub.f32 1.0, %v5624
    %v5637 = vmul.f32 %v5636, %v5635
    %v5638 = vmul.f32 %v5624, %v4956
    %v5639 = vadd.f32 %v5637, %v5638
    %v5640 = vsel %vm1158, %v5639, 0.0
    %v5642 = vcombine.high %v5640, %v5640
    %v5644 = vunpack.c.l.s4 1966171168
    %v5645 = vunpack.c.0.s8 %v5644
    %v5646 = vlaneseq
    %v5647 = vshrl.u32 %v5646, 7
    %v5648 = vsub.s32 %v5645, %v5647
    %v5649 = vrot.slane %v5640, %v5648
    %v5651 = vunpack.c.l.s4 1966171168
    %v5652 = vunpack.c.0.s8 %v5651
    %v5653 = vlaneseq
    %v5654 = vshrl.u32 %v5653, 7
    %v5655 = vsub.s32 %v5652, %v5654
    %v5656 = vrot.slane %v5642, %v5655
    %v5657 = vcombine.high %v5649, %v5649
    %v5658 = vcombine.high %v5656, %v5656
    %v5660 = vunpack.c.l.s4 1966171168
    %v5661 = vunpack.c.0.s8 %v5660
    %v5662 = vlaneseq
    %v5663 = vshrl.u32 %v5662, 7
    %v5664 = vsub.s32 %v5661, %v5663
    %v5665 = vrot.slane %v5649, %v5664
    %v5667 = vunpack.c.l.s4 1966171168
    %v5668 = vunpack.c.0.s8 %v5667
    %v5669 = vlaneseq
    %v5670 = vshrl.u32 %v5669, 7
    %v5671 = vsub.s32 %v5668, %v5670
    %v5672 = vrot.slane %v5656, %v5671
    %v5674 = vunpack.c.l.s4 1966171168
    %v5675 = vunpack.c.0.s8 %v5674
    %v5676 = vlaneseq
    %v5677 = vshrl.u32 %v5676, 7
    %v5678 = vsub.s32 %v5675, %v5677
    %v5679 = vrot.slane %v5657, %v5678
    %v5681 = vunpack.c.l.s4 1966171168
    %v5682 = vunpack.c.0.s8 %v5681
    %v5683 = vlaneseq
    %v5684 = vshrl.u32 %v5683, 7
    %v5685 = vsub.s32 %v5682, %v5684
    %v5686 = vrot.slane %v5658, %v5685
    %v5687 = vcombine.high %v5665, %v5665
    %v5688 = vcombine.high %v5672, %v5672
    %v5689 = vcombine.high %v5679, %v5679
    %v5690 = vcombine.high %v5686, %v5686
    %5699 = vst [vmem:[#allocation14 + $0x7] sm:$0x1] %v5665
    %5700 = vst [vmem:[#allocation14 + $0x17] sm:$0x1] %v5679
    %5701 = vst [vmem:[#allocation14 + $0x27] sm:$0x1] %v5687
    %5702 = vst [vmem:[#allocation14 + $0x37] sm:$0x1] %v5689
    %5703 = vst [vmem:[#allocation14 + $0x47] sm:$0x1] %v5672
    %5704 = vst [vmem:[#allocation14 + $0x57] sm:$0x1] %v5686
    %5705 = vst [vmem:[#allocation14 + $0x67] sm:$0x1] %v5688
    %5706 = vst [vmem:[#allocation14 + $0x77] sm:$0x1] %v5690
    %v5707 = vld [vmem:[#allocation2 + $0x18] sm:$0xff]
    %v5708 = vld [vmem:[#allocation2 + $0x20] sm:$0xff]
    %v5709 = vld [vmem:[#allocation2 + $0x28] sm:$0xff]
    %v5710 = vpack.c.bf16 %v5298, %v5298
    %v5711 = vld [vmem:[#allocation9] sm:$0xff]
    %v5712 = vld [vmem:[#allocation9 + $0x8] sm:$0xf]
    %v5713 = vld [vmem:[#allocation9 + $0xc] sm:$0xff]
    %v5714 = vld [vmem:[#allocation9 + $0x14] sm:$0xf]
    %v5715 = vld [vmem:[#allocation9 + $0x18] sm:$0xff]
    %v5716 = vld [vmem:[#allocation9 + $0x20] sm:$0xf]
    %v5717 = vld [vmem:[#allocation9 + $0x24] sm:$0xff]
    %v5718 = vld [vmem:[#allocation9 + $0x2c] sm:$0xf]
    %v5719 = vld [vmem:[#allocation9 + $0x30] sm:$0xff]
    %v5720 = vld [vmem:[#allocation9 + $0x38] sm:$0xf]
    %v5721 = vld [vmem:[#allocation9 + $0x3c] sm:$0xff]
    %v5722 = vld [vmem:[#allocation9 + $0x44] sm:$0xf]
    %v5723 = vld [vmem:[#allocation9 + $0x48] sm:$0xff]
    %v5724 = vld [vmem:[#allocation9 + $0x50] sm:$0xf]
    %v5725 = vld [vmem:[#allocation9 + $0x54] sm:$0xff]
    %v5726 = vld [vmem:[#allocation9 + $0x5c] sm:$0xf]
    %v5727 = vld [vmem:[#allocation9 + $0x60] sm:$0xff]
    %v5728 = vld [vmem:[#allocation9 + $0x68] sm:$0xf]
    %v5729 = vld [vmem:[#allocation9 + $0x6c] sm:$0xff]
    %v5730 = vld [vmem:[#allocation9 + $0x74] sm:$0xf]
    %v5731 = vld [vmem:[#allocation9 + $0x78] sm:$0xff]
    %v5732 = vld [vmem:[#allocation9 + $0x80] sm:$0xf]
    %v5733 = vld [vmem:[#allocation9 + $0x84] sm:$0xff]
    %v5734 = vld [vmem:[#allocation9 + $0x8c] sm:$0xf]
    %v5735 = vld [vmem:[#allocation9 + $0x90] sm:$0xff]
    %v5736 = vld [vmem:[#allocation9 + $0x98] sm:$0xf]
    %v5737 = vld [vmem:[#allocation9 + $0x9c] sm:$0xff]
    %v5738 = vld [vmem:[#allocation9 + $0xa4] sm:$0xf]
    %v5739 = vld [vmem:[#allocation9 + $0xa8] sm:$0xff]
    %v5740 = vld [vmem:[#allocation9 + $0xb0] sm:$0xf]
    %v5741 = vld [vmem:[#allocation9 + $0xb4] sm:$0xff]
    %v5742 = vld [vmem:[#allocation9 + $0xbc] sm:$0xf]
    %v5775 = vunpack.c.l.b16 %v5711
    %v5776 = vunpack.c.h.b16 %v5711
    %v5777 = vunpack.c.l.b16 %v5712
    %v5778 = vunpack.c.l.b16 %v5713
    %v5779 = vunpack.c.h.b16 %v5713
    %v5780 = vunpack.c.l.b16 %v5714
    %v5781 = vunpack.c.l.b16 %v5715
    %v5782 = vunpack.c.h.b16 %v5715
    %v5783 = vunpack.c.l.b16 %v5716
    %v5784 = vunpack.c.l.b16 %v5717
    %v5785 = vunpack.c.h.b16 %v5717
    %v5786 = vunpack.c.l.b16 %v5718
    %v5787 = vunpack.c.l.b16 %v5719
    %v5788 = vunpack.c.h.b16 %v5719
    %v5789 = vunpack.c.l.b16 %v5720
    %v5790 = vunpack.c.l.b16 %v5721
    %v5791 = vunpack.c.h.b16 %v5721
    %v5792 = vunpack.c.l.b16 %v5722
    %v5793 = vunpack.c.l.b16 %v5723
    %v5794 = vunpack.c.h.b16 %v5723
    %v5795 = vunpack.c.l.b16 %v5724
    %v5796 = vunpack.c.l.b16 %v5725
    %v5797 = vunpack.c.h.b16 %v5725
    %v5798 = vunpack.c.l.b16 %v5726
    %v5799 = vunpack.c.l.b16 %v5727
    %v5800 = vunpack.c.h.b16 %v5727
    %v5801 = vunpack.c.l.b16 %v5728
    %v5802 = vunpack.c.l.b16 %v5729
    %v5803 = vunpack.c.h.b16 %v5729
    %v5804 = vunpack.c.l.b16 %v5730
    %v5805 = vunpack.c.l.b16 %v5731
    %v5806 = vunpack.c.h.b16 %v5731
    %v5807 = vunpack.c.l.b16 %v5732
    %v5808 = vunpack.c.l.b16 %v5733
    %v5809 = vunpack.c.h.b16 %v5733
    %v5810 = vunpack.c.l.b16 %v5734
    %v5811 = vunpack.c.l.b16 %v5735
    %v5812 = vunpack.c.h.b16 %v5735
    %v5813 = vunpack.c.l.b16 %v5736
    %v5814 = vunpack.c.l.b16 %v5737
    %v5815 = vunpack.c.h.b16 %v5737
    %v5816 = vunpack.c.l.b16 %v5738
    %v5817 = vunpack.c.l.b16 %v5739
    %v5818 = vunpack.c.h.b16 %v5739
    %v5819 = vunpack.c.l.b16 %v5740
    %v5820 = vunpack.c.l.b16 %v5741
    %v5821 = vunpack.c.h.b16 %v5741
    %v5822 = vunpack.c.l.b16 %v5742
    %v5823 = vpack.c.b16 %v5778, %v5775
    %v5824 = vpack.c.b16 %v5779, %v5776
    %v5825 = vpack.c.b16 %v5780, %v5777
    %v5826 = vpack.c.b16 %v5784, %v5781
    %v5827 = vpack.c.b16 %v5785, %v5782
    %v5828 = vpack.c.b16 %v5786, %v5783
    %v5829 = vpack.c.b16 %v5790, %v5787
    %v5830 = vpack.c.b16 %v5791, %v5788
    %v5831 = vpack.c.b16 %v5792, %v5789
    %v5832 = vpack.c.b16 %v5796, %v5793
    %v5833 = vpack.c.b16 %v5797, %v5794
    %v5834 = vpack.c.b16 %v5798, %v5795
    %v5835 = vpack.c.b16 %v5802, %v5799
    %v5836 = vpack.c.b16 %v5803, %v5800
    %v5837 = vpack.c.b16 %v5804, %v5801
    %v5838 = vpack.c.b16 %v5808, %v5805
    %v5839 = vpack.c.b16 %v5809, %v5806
    %v5840 = vpack.c.b16 %v5810, %v5807
    %v5841 = vpack.c.b16 %v5814, %v5811
    %v5842 = vpack.c.b16 %v5815, %v5812
    %v5843 = vpack.c.b16 %v5816, %v5813
    %v5844 = vpack.c.b16 %v5820, %v5817
    %v5845 = vpack.c.b16 %v5821, %v5818
    %v5846 = vpack.c.b16 %v5822, %v5819
    %5871 = vmatprep.subr.bf16.mxu0 %v5824
    %5872 = vmatpush1.bf16.msra.mxu0 %v5823
    %5873 = vmatprep.subr.bf16.mxu0 %v5827
    %5874 = vmatpush1.bf16.msra.mxu0 %v5826
    %5875 = vmatprep.subr.bf16.mxu0 %v5830
    %5876 = vmatpush1.bf16.msra.mxu0 %v5829
    %5877 = vmatprep.subr.bf16.mxu0 %v5833
    %5878 = vmatpush1.bf16.msra.mxu0 %v5832
    %5879 = vmatprep.subr.bf16.mxu0 %v5836
    %5880 = vmatpush1.bf16.msra.mxu0 %v5835
    %5881 = vmatprep.subr.bf16.mxu0 %v5839
    %5882 = vmatpush1.bf16.msra.mxu0 %v5838
    %5883 = vmatprep.subr.bf16.mxu0 %v5842
    %5884 = vmatpush1.bf16.msra.mxu0 %v5841
    %5885 = vmatprep.subr.bf16.mxu0 %v5845
    %5886 = vmatpush1.bf16.msra.mxu0 %v5844
    %5887 = vmatprep.subr.bf16.mxu0 0
    %5888 = vmatpush1.bf16.msra.mxu0 0
    %5889 = vmatprep.subr.bf16.mxu0 0
    %5890 = vmatpush1.bf16.msra.mxu0 0
    %5891 = vmatprep.subr.bf16.mxu0 0
    %5892 = vmatpush1.bf16.msra.mxu0 0
    %5893 = vmatprep.subr.bf16.mxu0 0
    %5894 = vmatpush1.bf16.msra.mxu0 0
    %5895 = vmatprep.subr.bf16.mxu0 0
    %5896 = vmatpush1.bf16.msra.mxu0 0
    %5897 = vmatprep.subr.bf16.mxu0 0
    %5898 = vmatpush1.bf16.msra.mxu0 0
    %5899 = vmatprep.subr.bf16.mxu0 0
    %5900 = vmatpush1.bf16.msra.mxu0 0
    %5901 = vmatprep.subr.bf16.mxu0 0
    %5902 = vmatpush1.bf16.msra.mxu0 0
    %5903 = vmatprep.mubr.bf16.mxu0 0
    %5904 = vmatmul.mubr.bf16.gmra.mrb[0].mxu0 %v5710
    %v5905 = vpop.f32.mrb[0].mxu0
    %v5906 = vadd.f32 0.0, %v5905
    %v5907 = vpop.f32.mrb[0].mxu0
    %v5908 = vadd.f32 0.0, %v5907
    %v5909 = vpop.f32.mrb[0].mxu0
    %v5910 = vpop.f32.mrb[0].mxu0
    %5911 = vdwg.mxu0
    %5912 = vmatprep.subr.bf16.mxu0 0
    %5913 = vmatpush1.bf16.msra.mxu0 %v5825
    %5914 = vmatprep.subr.bf16.mxu0 0
    %5915 = vmatpush1.bf16.msra.mxu0 %v5828
    %5916 = vmatprep.subr.bf16.mxu0 0
    %5917 = vmatpush1.bf16.msra.mxu0 %v5831
    %5918 = vmatprep.subr.bf16.mxu0 0
    %5919 = vmatpush1.bf16.msra.mxu0 %v5834
    %5920 = vmatprep.subr.bf16.mxu0 0
    %5921 = vmatpush1.bf16.msra.mxu0 %v5837
    %5922 = vmatprep.subr.bf16.mxu0 0
    %5923 = vmatpush1.bf16.msra.mxu0 %v5840
    %5924 = vmatprep.subr.bf16.mxu0 0
    %5925 = vmatpush1.bf16.msra.mxu0 %v5843
    %5926 = vmatprep.subr.bf16.mxu0 0
    %5927 = vmatpush1.bf16.msra.mxu0 %v5846
    %5928 = vmatprep.subr.bf16.mxu0 0
    %5929 = vmatpush1.bf16.msra.mxu0 0
    %5930 = vmatprep.subr.bf16.mxu0 0
    %5931 = vmatpush1.bf16.msra.mxu0 0
    %5932 = vmatprep.subr.bf16.mxu0 0
    %5933 = vmatpush1.bf16.msra.mxu0 0
    %5934 = vmatprep.subr.bf16.mxu0 0
    %5935 = vmatpush1.bf16.msra.mxu0 0
    %5936 = vmatprep.subr.bf16.mxu0 0
    %5937 = vmatpush1.bf16.msra.mxu0 0
    %5938 = vmatprep.subr.bf16.mxu0 0
    %5939 = vmatpush1.bf16.msra.mxu0 0
    %5940 = vmatprep.subr.bf16.mxu0 0
    %5941 = vmatpush1.bf16.msra.mxu0 0
    %5942 = vmatprep.subr.bf16.mxu0 0
    %5943 = vmatpush1.bf16.msra.mxu0 0
    %5944 = vmatprep.mubr.bf16.mxu0 0
    %5945 = vmatmul.mubr.bf16.gmra.mrb[0].mxu0 %v5710
    %v5946 = vpop.f32.mrb[0].mxu0
    %v5947 = vadd.f32 0.0, %v5946
    %v5948 = vpop.f32.mrb[0].mxu0
    %v5949 = vpop.f32.mrb[0].mxu0
    %v5950 = vpop.f32.mrb[0].mxu0
    %5951 = vdwg.mxu0
    %v5952 = vadd.f32 %v5707, %v5906
    %v5953 = vxor.u32 %v5952, 2147483648
    %v5954 = vmul.f32 %v5953, 1.442695
    %v5955 = vpow.pop %v5954
    %v5956 = vadd.f32 %v5955, 1.0
    %v5957 = vrcp.pop %v5956
    %v5958 = vmul.f32 1.0, %v5957
    %v5959 = vadd.f32 %v5708, %v5908
    %v5960 = vxor.u32 %v5959, 2147483648
    %v5961 = vmul.f32 %v5960, 1.442695
    %v5962 = vpow.pop %v5961
    %v5963 = vadd.f32 %v5962, 1.0
    %v5964 = vrcp.pop %v5963
    %v5965 = vmul.f32 1.0, %v5964
    %v5966 = vld [vmem:[#allocation11] sm:$0x1]
    %v5968 = vlaneseq
    %v5969 = vshrl.u32 %v5968, 7
    %v5970 = vsub.s32 0, %v5969
    %v5971 = vrot.slane %v5966, %v5970
    %v5973 = vadd.f32 %v5947, %v5971
    %v5974 = vmul.f32 %v5958, %v5973
    %v5975 = vadd.f32 %v5709, %v5974
    %v5976 = vtanh.pop %v5975
    %v5977 = vsub.f32 1.0, %v5965
    %v5978 = vmul.f32 %v5977, %v5976
    %v5979 = vmul.f32 %v5965, %v5298
    %v5980 = vadd.f32 %v5978, %v5979
    %v5981 = vsel %vm812, %v5980, 0.0
    %v5983 = vcombine.high %v5981, %v5981
    %v5985 = vunpack.c.l.s4 1966171168
    %v5986 = vunpack.c.0.s8 %v5985
    %v5987 = vlaneseq
    %v5988 = vshrl.u32 %v5987, 7
    %v5989 = vsub.s32 %v5986, %v5988
    %v5990 = vrot.slane %v5981, %v5989
    %v5992 = vunpack.c.l.s4 1966171168
    %v5993 = vunpack.c.0.s8 %v5992
    %v5994 = vlaneseq
    %v5995 = vshrl.u32 %v5994, 7
    %v5996 = vsub.s32 %v5993, %v5995
    %v5997 = vrot.slane %v5983, %v5996
    %v5998 = vcombine.high %v5990, %v5990
    %v5999 = vcombine.high %v5997, %v5997
    %v6001 = vunpack.c.l.s4 1966171168
    %v6002 = vunpack.c.0.s8 %v6001
    %v6003 = vlaneseq
    %v6004 = vshrl.u32 %v6003, 7
    %v6005 = vsub.s32 %v6002, %v6004
    %v6006 = vrot.slane %v5990, %v6005
    %v6008 = vunpack.c.l.s4 1966171168
    %v6009 = vunpack.c.0.s8 %v6008
    %v6010 = vlaneseq
    %v6011 = vshrl.u32 %v6010, 7
    %v6012 = vsub.s32 %v6009, %v6011
    %v6013 = vrot.slane %v5997, %v6012
    %v6015 = vunpack.c.l.s4 1966171168
    %v6016 = vunpack.c.0.s8 %v6015
    %v6017 = vlaneseq
    %v6018 = vshrl.u32 %v6017, 7
    %v6019 = vsub.s32 %v6016, %v6018
    %v6020 = vrot.slane %v5998, %v6019
    %v6022 = vunpack.c.l.s4 1966171168
    %v6023 = vunpack.c.0.s8 %v6022
    %v6024 = vlaneseq
    %v6025 = vshrl.u32 %v6024, 7
    %v6026 = vsub.s32 %v6023, %v6025
    %v6027 = vrot.slane %v5999, %v6026
    %v6028 = vcombine.high %v6006, %v6006
    %v6029 = vcombine.high %v6013, %v6013
    %v6030 = vcombine.high %v6020, %v6020
    %v6031 = vcombine.high %v6027, %v6027
    %6040 = vst [vmem:[#allocation14 + $0x8] sm:$0x1] %v6006
    %6041 = vst [vmem:[#allocation14 + $0x18] sm:$0x1] %v6020
    %6042 = vst [vmem:[#allocation14 + $0x28] sm:$0x1] %v6028
    %6043 = vst [vmem:[#allocation14 + $0x38] sm:$0x1] %v6030
    %6044 = vst [vmem:[#allocation14 + $0x48] sm:$0x1] %v6013
    %6045 = vst [vmem:[#allocation14 + $0x58] sm:$0x1] %v6027
    %6046 = vst [vmem:[#allocation14 + $0x68] sm:$0x1] %v6029
    %6047 = vst [vmem:[#allocation14 + $0x78] sm:$0x1] %v6031
    %v6048 = vld [vmem:[#allocation14] sm:$0xff]
    %v6049 = vld [vmem:[#allocation14 + $0x8] sm:$0xff]
    %v6050 = vld [vmem:[#allocation14 + $0x10] sm:$0xff]
    %v6051 = vld [vmem:[#allocation14 + $0x18] sm:$0xff]
    %v6052 = vld [vmem:[#allocation14 + $0x20] sm:$0xff]
    %v6053 = vld [vmem:[#allocation14 + $0x28] sm:$0xff]
    %v6054 = vld [vmem:[#allocation14 + $0x30] sm:$0xff]
    %v6055 = vld [vmem:[#allocation14 + $0x38] sm:$0xff]
    %v6056 = vld [vmem:[#allocation14 + $0x40] sm:$0xff]
    %v6057 = vld [vmem:[#allocation14 + $0x48] sm:$0xff]
    %v6058 = vld [vmem:[#allocation14 + $0x50] sm:$0xff]
    %v6059 = vld [vmem:[#allocation14 + $0x58] sm:$0xff]
    %v6060 = vld [vmem:[#allocation14 + $0x60] sm:$0xff]
    %v6061 = vld [vmem:[#allocation14 + $0x68] sm:$0xff]
    %v6062 = vld [vmem:[#allocation14 + $0x70] sm:$0xff]
    %v6063 = vld [vmem:[#allocation14 + $0x78] sm:$0xff]
    %v6064 = vpack.c.bf16 %v6050, %v6048
    %v6065 = vpack.c.bf16 %v6051, %v6049
    %v6066 = vpack.c.bf16 %v6054, %v6052
    %v6067 = vpack.c.bf16 %v6055, %v6053
    %v6068 = vpack.c.bf16 %v6058, %v6056
    %v6069 = vpack.c.bf16 %v6059, %v6057
    %v6070 = vpack.c.bf16 %v6062, %v6060
    %v6071 = vpack.c.bf16 %v6063, %v6061
    %v6072 = vld [vmem:[#allocation12] sm:$0xf]
    %v6073 = vld [vmem:[#allocation12 + $0x4] sm:$0xf]
    %v6074 = vld [vmem:[#allocation12 + $0x8] sm:$0xf]
    %v6075 = vld [vmem:[#allocation12 + $0xc] sm:$0xf]
    %v6076 = vld [vmem:[#allocation12 + $0x10] sm:$0xf]
    %v6077 = vld [vmem:[#allocation12 + $0x14] sm:$0xf]
    %v6078 = vld [vmem:[#allocation12 + $0x18] sm:$0xf]
    %v6079 = vld [vmem:[#allocation12 + $0x1c] sm:$0xf]
    %v6080 = vld [vmem:[#allocation12 + $0x20] sm:$0xf]
    %v6081 = vld [vmem:[#allocation12 + $0x24] sm:$0xf]
    %v6082 = vld [vmem:[#allocation12 + $0x28] sm:$0xf]
    %v6083 = vld [vmem:[#allocation12 + $0x2c] sm:$0xf]
    %v6084 = vld [vmem:[#allocation12 + $0x30] sm:$0xf]
    %v6085 = vld [vmem:[#allocation12 + $0x34] sm:$0xf]
    %v6086 = vld [vmem:[#allocation12 + $0x38] sm:$0xf]
    %v6087 = vld [vmem:[#allocation12 + $0x3c] sm:$0xf]
    %v6088 = vld [vmem:[#allocation12 + $0x40] sm:$0xf]
    %v6089 = vld [vmem:[#allocation12 + $0x44] sm:$0xf]
    %v6090 = vld [vmem:[#allocation12 + $0x48] sm:$0xf]
    %v6091 = vld [vmem:[#allocation12 + $0x4c] sm:$0xf]
    %v6092 = vld [vmem:[#allocation12 + $0x50] sm:$0xf]
    %v6093 = vld [vmem:[#allocation12 + $0x54] sm:$0xf]
    %v6094 = vld [vmem:[#allocation12 + $0x58] sm:$0xf]
    %v6095 = vld [vmem:[#allocation12 + $0x5c] sm:$0xf]
    %v6096 = vld [vmem:[#allocation12 + $0x60] sm:$0xf]
    %v6097 = vld [vmem:[#allocation12 + $0x64] sm:$0xf]
    %v6098 = vld [vmem:[#allocation12 + $0x68] sm:$0xf]
    %v6099 = vld [vmem:[#allocation12 + $0x6c] sm:$0xf]
    %v6100 = vld [vmem:[#allocation12 + $0x70] sm:$0xf]
    %v6101 = vld [vmem:[#allocation12 + $0x74] sm:$0xf]
    %v6102 = vld [vmem:[#allocation12 + $0x78] sm:$0xf]
    %v6103 = vld [vmem:[#allocation12 + $0x7c] sm:$0xf]
    %v6136 = vunpack.c.l.b16 %v6072
    %v6137 = vunpack.c.l.b16 %v6073
    %v6138 = vunpack.c.l.b16 %v6074
    %v6139 = vunpack.c.l.b16 %v6075
    %v6140 = vunpack.c.l.b16 %v6076
    %v6141 = vunpack.c.l.b16 %v6077
    %v6142 = vunpack.c.l.b16 %v6078
    %v6143 = vunpack.c.l.b16 %v6079
    %v6144 = vunpack.c.l.b16 %v6080
    %v6145 = vunpack.c.l.b16 %v6081
    %v6146 = vunpack.c.l.b16 %v6082
    %v6147 = vunpack.c.l.b16 %v6083
    %v6148 = vunpack.c.l.b16 %v6084
    %v6149 = vunpack.c.l.b16 %v6085
    %v6150 = vunpack.c.l.b16 %v6086
    %v6151 = vunpack.c.l.b16 %v6087
    %v6152 = vunpack.c.l.b16 %v6088
    %v6153 = vunpack.c.l.b16 %v6089
    %v6154 = vunpack.c.l.b16 %v6090
    %v6155 = vunpack.c.l.b16 %v6091
    %v6156 = vunpack.c.l.b16 %v6092
    %v6157 = vunpack.c.l.b16 %v6093
    %v6158 = vunpack.c.l.b16 %v6094
    %v6159 = vunpack.c.l.b16 %v6095
    %v6160 = vunpack.c.l.b16 %v6096
    %v6161 = vunpack.c.l.b16 %v6097
    %v6162 = vunpack.c.l.b16 %v6098
    %v6163 = vunpack.c.l.b16 %v6099
    %v6164 = vunpack.c.l.b16 %v6100
    %v6165 = vunpack.c.l.b16 %v6101
    %v6166 = vunpack.c.l.b16 %v6102
    %v6167 = vunpack.c.l.b16 %v6103
    %v6168 = vpack.c.b16 %v6137, %v6136
    %v6169 = vpack.c.b16 %v6139, %v6138
    %v6170 = vpack.c.b16 %v6141, %v6140
    %v6171 = vpack.c.b16 %v6143, %v6142
    %v6172 = vpack.c.b16 %v6145, %v6144
    %v6173 = vpack.c.b16 %v6147, %v6146
    %v6174 = vpack.c.b16 %v6149, %v6148
    %v6175 = vpack.c.b16 %v6151, %v6150
    %v6176 = vpack.c.b16 %v6153, %v6152
    %v6177 = vpack.c.b16 %v6155, %v6154
    %v6178 = vpack.c.b16 %v6157, %v6156
    %v6179 = vpack.c.b16 %v6159, %v6158
    %v6180 = vpack.c.b16 %v6161, %v6160
    %v6181 = vpack.c.b16 %v6163, %v6162
    %v6182 = vpack.c.b16 %v6165, %v6164
    %v6183 = vpack.c.b16 %v6167, %v6166
    %6200 = vmatprep.subr.bf16.mxu0 0
    %6201 = vmatpush1.bf16.msra.mxu0 %v6168
    %6202 = vmatprep.subr.bf16.mxu0 0
    %6203 = vmatpush1.bf16.msra.mxu0 %v6169
    %6204 = vmatprep.subr.bf16.mxu0 0
    %6205 = vmatpush1.bf16.msra.mxu0 %v6170
    %6206 = vmatprep.subr.bf16.mxu0 0
    %6207 = vmatpush1.bf16.msra.mxu0 %v6171
    %6208 = vmatprep.subr.bf16.mxu0 0
    %6209 = vmatpush1.bf16.msra.mxu0 %v6172
    %6210 = vmatprep.subr.bf16.mxu0 0
    %6211 = vmatpush1.bf16.msra.mxu0 %v6173
    %6212 = vmatprep.subr.bf16.mxu0 0
    %6213 = vmatpush1.bf16.msra.mxu0 %v6174
    %6214 = vmatprep.subr.bf16.mxu0 0
    %6215 = vmatpush1.bf16.msra.mxu0 %v6175
    %6216 = vmatprep.subr.bf16.mxu0 0
    %6217 = vmatpush1.bf16.msra.mxu0 %v6176
    %6218 = vmatprep.subr.bf16.mxu0 0
    %6219 = vmatpush1.bf16.msra.mxu0 %v6177
    %6220 = vmatprep.subr.bf16.mxu0 0
    %6221 = vmatpush1.bf16.msra.mxu0 %v6178
    %6222 = vmatprep.subr.bf16.mxu0 0
    %6223 = vmatpush1.bf16.msra.mxu0 %v6179
    %6224 = vmatprep.subr.bf16.mxu0 0
    %6225 = vmatpush1.bf16.msra.mxu0 %v6180
    %6226 = vmatprep.subr.bf16.mxu0 0
    %6227 = vmatpush1.bf16.msra.mxu0 %v6181
    %6228 = vmatprep.subr.bf16.mxu0 0
    %6229 = vmatpush1.bf16.msra.mxu0 %v6182
    %6230 = vmatprep.subr.bf16.mxu0 0
    %6231 = vmatpush1.bf16.msra.mxu0 %v6183
    %6232 = vmatprep.mubr.bf16.mxu0 %v6065
    %6233 = vmatmul.mubr.bf16.gmra.mrb[0].mxu0 %v6064
    %v6234 = vpop.f32.mrb[0].mxu0
    %v6235 = vadd.f32 0.0, %v6234
    %v6236 = vpop.f32.mrb[0].mxu0
    %v6237 = vpop.f32.mrb[0].mxu0
    %v6238 = vadd.f32 0.0, %v6237
    %v6239 = vpop.f32.mrb[0].mxu0
    %6240 = vmatprep.mubr.bf16.mxu0 %v6067
    %6241 = vmatmul.mubr.bf16.gmra.mrb[0].mxu0 %v6066
    %v6242 = vpop.f32.mrb[0].mxu0
    %v6243 = vadd.f32 0.0, %v6242
    %v6244 = vpop.f32.mrb[0].mxu0
    %v6245 = vpop.f32.mrb[0].mxu0
    %v6246 = vadd.f32 0.0, %v6245
    %v6247 = vpop.f32.mrb[0].mxu0
    %6248 = vmatprep.mubr.bf16.mxu0 %v6069
    %6249 = vmatmul.mubr.bf16.gmra.mrb[0].mxu0 %v6068
    %v6250 = vpop.f32.mrb[0].mxu0
    %v6251 = vadd.f32 0.0, %v6250
    %v6252 = vpop.f32.mrb[0].mxu0
    %v6253 = vpop.f32.mrb[0].mxu0
    %v6254 = vadd.f32 0.0, %v6253
    %v6255 = vpop.f32.mrb[0].mxu0
    %6256 = vmatprep.mubr.bf16.mxu0 %v6071
    %6257 = vmatmul.mubr.bf16.gmra.mrb[0].mxu0 %v6070
    %v6258 = vpop.f32.mrb[0].mxu0
    %v6259 = vadd.f32 0.0, %v6258
    %v6260 = vpop.f32.mrb[0].mxu0
    %v6261 = vpop.f32.mrb[0].mxu0
    %v6262 = vadd.f32 0.0, %v6261
    %v6263 = vpop.f32.mrb[0].mxu0
    %6264 = vdwg.mxu0
    %v6265 = vld [vmem:[%s8] sm:$0xf]
    %v6266 = vld [vmem:[%s8 + $0x4] sm:$0xf]
    %v6267 = vld [vmem:[%s8 + $0x8] sm:$0xf]
    %v6268 = vld [vmem:[%s8 + $0xc] sm:$0xf]
    %v6269 = vld [vmem:[%s8 + $0x10] sm:$0xf]
    %v6270 = vld [vmem:[%s8 + $0x14] sm:$0xf]
    %v6271 = vld [vmem:[%s8 + $0x18] sm:$0xf]
    %v6272 = vld [vmem:[%s8 + $0x1c] sm:$0xf]
    %6273 = vmatprep.subr.mxu0 0.0
    %6274 = vmatpush1.xpose.msra.mxu0 %v6265
    %6275 = vmatprep.subr.mxu0 0.0
    %6276 = vmatpush1.xpose.msra.mxu0 0.0
    %6277 = vmatprep.subr.mxu0 0.0
    %6278 = vmatpush1.xpose.msra.mxu0 0.0
    %6279 = vmatprep.subr.mxu0 0.0
    %6280 = vmatpush1.xpose.msra.mxu0 0.0
    %6281 = vmatprep.subr.mxu0 0.0
    %6282 = vmatpush1.xpose.msra.mxu0 0.0
    %6283 = vmatprep.subr.mxu0 0.0
    %6284 = vmatpush1.xpose.msra.mxu0 0.0
    %6285 = vmatprep.subr.mxu0 0.0
    %6286 = vmatpush1.xpose.msra.mxu0 0.0
    %6287 = vmatprep.subr.mxu0 0.0
    %6288 = vmatpush1.xpose.msra.mxu0 0.0
    %6289 = vmatprep.subr.mxu0 0.0
    %6290 = vmatpush1.xpose.msra.mxu0 0.0
    %6291 = vmatprep.subr.mxu0 0.0
    %6292 = vmatpush1.xpose.msra.mxu0 0.0
    %6293 = vmatprep.subr.mxu0 0.0
    %6294 = vmatpush1.xpose.msra.mxu0 0.0
    %6295 = vmatprep.subr.mxu0 0.0
    %6296 = vmatpush1.xpose.msra.mxu0 0.0
    %6297 = vmatprep.subr.mxu0 0.0
    %6298 = vmatpush1.xpose.msra.mxu0 0.0
    %6299 = vmatprep.subr.mxu0 0.0
    %6300 = vmatpush1.xpose.msra.mxu0 0.0
    %6301 = vmatprep.subr.mxu0 0.0
    %6302 = vmatpush1.xpose.msra.mxu0 0.0
    %6303 = vmatprep.subr.mxu0 0.0
    %6304 = vmatpush1.xpose.msra.mxu0 0.0
    %6305 = vmatprep.subr.mxu0 0.0
    %6306 = vmatpush1.xpose.msra.mxu0 0.0
    %6307 = vmatprep.subr.mxu0 0.0
    %6308 = vmatpush1.xpose.msra.mxu0 0.0
    %6309 = vmatprep.subr.mxu0 0.0
    %6310 = vmatpush1.xpose.msra.mxu0 0.0
    %6311 = vmatprep.subr.mxu0 0.0
    %6312 = vmatpush1.xpose.msra.mxu0 0.0
    %6313 = vmatprep.subr.mxu0 0.0
    %6314 = vmatpush1.xpose.msra.mxu0 0.0
    %6315 = vmatprep.subr.mxu0 0.0
    %6316 = vmatpush1.xpose.msra.mxu0 0.0
    %6317 = vmatprep.subr.mxu0 0.0
    %6318 = vmatpush1.xpose.msra.mxu0 0.0
    %6319 = vmatprep.subr.mxu0 0.0
    %6320 = vmatpush1.xpose.msra.mxu0 0.0
    %6321 = vmatprep.subr.mxu0 0.0
    %6322 = vmatpush1.xpose.msra.mxu0 0.0
    %6323 = vmatprep.subr.mxu0 0.0
    %6324 = vmatpush1.xpose.msra.mxu0 0.0
    %6325 = vmatprep.subr.mxu0 0.0
    %6326 = vmatpush1.xpose.msra.mxu0 0.0
    %6327 = vmatprep.subr.mxu0 0.0
    %6328 = vmatpush1.xpose.msra.mxu0 0.0
    %6329 = vmatprep.subr.mxu0 0.0
    %6330 = vmatpush1.xpose.msra.mxu0 0.0
    %6331 = vmatprep.subr.mxu0 0.0
    %6332 = vmatpush1.xpose.msra.mxu0 0.0
    %6333 = vmatprep.subr.mxu0 0.0
    %6334 = vmatpush1.xpose.msra.mxu0 0.0
    %6335 = vmatprep.subr.mxu0 0.0
    %6336 = vmatpush1.xpose.msra.mxu0 0.0
    %6337 = vmatprep.mubr.f32.mxu0 0.0
    %6338 = vmatmul.mubr.f32.gmra.mrb[0].mxu0 %v6235
    %v6339 = vpop.f32.mrb[0].mxu0
    %v6340 = vadd.f32 0.0, %v6339
    %v6341 = vpop.f32.mrb[0].mxu0
    %6342 = vdwg.mxu0
    %6343 = vmatprep.subr.mxu0 0.0
    %6344 = vmatpush1.xpose.msra.mxu0 %v6266
    %6345 = vmatprep.subr.mxu0 0.0
    %6346 = vmatpush1.xpose.msra.mxu0 0.0
    %6347 = vmatprep.subr.mxu0 0.0
    %6348 = vmatpush1.xpose.msra.mxu0 0.0
    %6349 = vmatprep.subr.mxu0 0.0
    %6350 = vmatpush1.xpose.msra.mxu0 0.0
    %6351 = vmatprep.subr.mxu0 0.0
    %6352 = vmatpush1.xpose.msra.mxu0 0.0
    %6353 = vmatprep.subr.mxu0 0.0
    %6354 = vmatpush1.xpose.msra.mxu0 0.0
    %6355 = vmatprep.subr.mxu0 0.0
    %6356 = vmatpush1.xpose.msra.mxu0 0.0
    %6357 = vmatprep.subr.mxu0 0.0
    %6358 = vmatpush1.xpose.msra.mxu0 0.0
    %6359 = vmatprep.subr.mxu0 0.0
    %6360 = vmatpush1.xpose.msra.mxu0 0.0
    %6361 = vmatprep.subr.mxu0 0.0
    %6362 = vmatpush1.xpose.msra.mxu0 0.0
    %6363 = vmatprep.subr.mxu0 0.0
    %6364 = vmatpush1.xpose.msra.mxu0 0.0
    %6365 = vmatprep.subr.mxu0 0.0
    %6366 = vmatpush1.xpose.msra.mxu0 0.0
    %6367 = vmatprep.subr.mxu0 0.0
    %6368 = vmatpush1.xpose.msra.mxu0 0.0
    %6369 = vmatprep.subr.mxu0 0.0
    %6370 = vmatpush1.xpose.msra.mxu0 0.0
    %6371 = vmatprep.subr.mxu0 0.0
    %6372 = vmatpush1.xpose.msra.mxu0 0.0
    %6373 = vmatprep.subr.mxu0 0.0
    %6374 = vmatpush1.xpose.msra.mxu0 0.0
    %6375 = vmatprep.subr.mxu0 0.0
    %6376 = vmatpush1.xpose.msra.mxu0 0.0
    %6377 = vmatprep.subr.mxu0 0.0
    %6378 = vmatpush1.xpose.msra.mxu0 0.0
    %6379 = vmatprep.subr.mxu0 0.0
    %6380 = vmatpush1.xpose.msra.mxu0 0.0
    %6381 = vmatprep.subr.mxu0 0.0
    %6382 = vmatpush1.xpose.msra.mxu0 0.0
    %6383 = vmatprep.subr.mxu0 0.0
    %6384 = vmatpush1.xpose.msra.mxu0 0.0
    %6385 = vmatprep.subr.mxu0 0.0
    %6386 = vmatpush1.xpose.msra.mxu0 0.0
    %6387 = vmatprep.subr.mxu0 0.0
    %6388 = vmatpush1.xpose.msra.mxu0 0.0
    %6389 = vmatprep.subr.mxu0 0.0
    %6390 = vmatpush1.xpose.msra.mxu0 0.0
    %6391 = vmatprep.subr.mxu0 0.0
    %6392 = vmatpush1.xpose.msra.mxu0 0.0
    %6393 = vmatprep.subr.mxu0 0.0
    %6394 = vmatpush1.xpose.msra.mxu0 0.0
    %6395 = vmatprep.subr.mxu0 0.0
    %6396 = vmatpush1.xpose.msra.mxu0 0.0
    %6397 = vmatprep.subr.mxu0 0.0
    %6398 = vmatpush1.xpose.msra.mxu0 0.0
    %6399 = vmatprep.subr.mxu0 0.0
    %6400 = vmatpush1.xpose.msra.mxu0 0.0
    %6401 = vmatprep.subr.mxu0 0.0
    %6402 = vmatpush1.xpose.msra.mxu0 0.0
    %6403 = vmatprep.subr.mxu0 0.0
    %6404 = vmatpush1.xpose.msra.mxu0 0.0
    %6405 = vmatprep.subr.mxu0 0.0
    %6406 = vmatpush1.xpose.msra.mxu0 0.0
    %6407 = vmatprep.mubr.f32.mxu0 0.0
    %6408 = vmatmul.mubr.f32.gmra.mrb[0].mxu0 %v6238
    %v6409 = vpop.f32.mrb[0].mxu0
    %v6410 = vadd.f32 0.0, %v6409
    %v6411 = vpop.f32.mrb[0].mxu0
    %6412 = vdwg.mxu0
    %6413 = vmatprep.subr.mxu0 0.0
    %6414 = vmatpush1.xpose.msra.mxu0 %v6267
    %6415 = vmatprep.subr.mxu0 0.0
    %6416 = vmatpush1.xpose.msra.mxu0 0.0
    %6417 = vmatprep.subr.mxu0 0.0
    %6418 = vmatpush1.xpose.msra.mxu0 0.0
    %6419 = vmatprep.subr.mxu0 0.0
    %6420 = vmatpush1.xpose.msra.mxu0 0.0
    %6421 = vmatprep.subr.mxu0 0.0
    %6422 = vmatpush1.xpose.msra.mxu0 0.0
    %6423 = vmatprep.subr.mxu0 0.0
    %6424 = vmatpush1.xpose.msra.mxu0 0.0
    %6425 = vmatprep.subr.mxu0 0.0
    %6426 = vmatpush1.xpose.msra.mxu0 0.0
    %6427 = vmatprep.subr.mxu0 0.0
    %6428 = vmatpush1.xpose.msra.mxu0 0.0
    %6429 = vmatprep.subr.mxu0 0.0
    %6430 = vmatpush1.xpose.msra.mxu0 0.0
    %6431 = vmatprep.subr.mxu0 0.0
    %6432 = vmatpush1.xpose.msra.mxu0 0.0
    %6433 = vmatprep.subr.mxu0 0.0
    %6434 = vmatpush1.xpose.msra.mxu0 0.0
    %6435 = vmatprep.subr.mxu0 0.0
    %6436 = vmatpush1.xpose.msra.mxu0 0.0
    %6437 = vmatprep.subr.mxu0 0.0
    %6438 = vmatpush1.xpose.msra.mxu0 0.0
    %6439 = vmatprep.subr.mxu0 0.0
    %6440 = vmatpush1.xpose.msra.mxu0 0.0
    %6441 = vmatprep.subr.mxu0 0.0
    %6442 = vmatpush1.xpose.msra.mxu0 0.0
    %6443 = vmatprep.subr.mxu0 0.0
    %6444 = vmatpush1.xpose.msra.mxu0 0.0
    %6445 = vmatprep.subr.mxu0 0.0
    %6446 = vmatpush1.xpose.msra.mxu0 0.0
    %6447 = vmatprep.subr.mxu0 0.0
    %6448 = vmatpush1.xpose.msra.mxu0 0.0
    %6449 = vmatprep.subr.mxu0 0.0
    %6450 = vmatpush1.xpose.msra.mxu0 0.0
    %6451 = vmatprep.subr.mxu0 0.0
    %6452 = vmatpush1.xpose.msra.mxu0 0.0
    %6453 = vmatprep.subr.mxu0 0.0
    %6454 = vmatpush1.xpose.msra.mxu0 0.0
    %6455 = vmatprep.subr.mxu0 0.0
    %6456 = vmatpush1.xpose.msra.mxu0 0.0
    %6457 = vmatprep.subr.mxu0 0.0
    %6458 = vmatpush1.xpose.msra.mxu0 0.0
    %6459 = vmatprep.subr.mxu0 0.0
    %6460 = vmatpush1.xpose.msra.mxu0 0.0
    %6461 = vmatprep.subr.mxu0 0.0
    %6462 = vmatpush1.xpose.msra.mxu0 0.0
    %6463 = vmatprep.subr.mxu0 0.0
    %6464 = vmatpush1.xpose.msra.mxu0 0.0
    %6465 = vmatprep.subr.mxu0 0.0
    %6466 = vmatpush1.xpose.msra.mxu0 0.0
    %6467 = vmatprep.subr.mxu0 0.0
    %6468 = vmatpush1.xpose.msra.mxu0 0.0
    %6469 = vmatprep.subr.mxu0 0.0
    %6470 = vmatpush1.xpose.msra.mxu0 0.0
    %6471 = vmatprep.subr.mxu0 0.0
    %6472 = vmatpush1.xpose.msra.mxu0 0.0
    %6473 = vmatprep.subr.mxu0 0.0
    %6474 = vmatpush1.xpose.msra.mxu0 0.0
    %6475 = vmatprep.subr.mxu0 0.0
    %6476 = vmatpush1.xpose.msra.mxu0 0.0
    %6477 = vmatprep.mubr.f32.mxu0 0.0
    %6478 = vmatmul.mubr.f32.gmra.mrb[0].mxu0 %v6243
    %v6479 = vpop.f32.mrb[0].mxu0
    %v6480 = vadd.f32 0.0, %v6479
    %v6481 = vpop.f32.mrb[0].mxu0
    %6482 = vdwg.mxu0
    %6483 = vmatprep.subr.mxu0 0.0
    %6484 = vmatpush1.xpose.msra.mxu0 %v6268
    %6485 = vmatprep.subr.mxu0 0.0
    %6486 = vmatpush1.xpose.msra.mxu0 0.0
    %6487 = vmatprep.subr.mxu0 0.0
    %6488 = vmatpush1.xpose.msra.mxu0 0.0
    %6489 = vmatprep.subr.mxu0 0.0
    %6490 = vmatpush1.xpose.msra.mxu0 0.0
    %6491 = vmatprep.subr.mxu0 0.0
    %6492 = vmatpush1.xpose.msra.mxu0 0.0
    %6493 = vmatprep.subr.mxu0 0.0
    %6494 = vmatpush1.xpose.msra.mxu0 0.0
    %6495 = vmatprep.subr.mxu0 0.0
    %6496 = vmatpush1.xpose.msra.mxu0 0.0
    %6497 = vmatprep.subr.mxu0 0.0
    %6498 = vmatpush1.xpose.msra.mxu0 0.0
    %6499 = vmatprep.subr.mxu0 0.0
    %6500 = vmatpush1.xpose.msra.mxu0 0.0
    %6501 = vmatprep.subr.mxu0 0.0
    %6502 = vmatpush1.xpose.msra.mxu0 0.0
    %6503 = vmatprep.subr.mxu0 0.0
    %6504 = vmatpush1.xpose.msra.mxu0 0.0
    %6505 = vmatprep.subr.mxu0 0.0
    %6506 = vmatpush1.xpose.msra.mxu0 0.0
    %6507 = vmatprep.subr.mxu0 0.0
    %6508 = vmatpush1.xpose.msra.mxu0 0.0
    %6509 = vmatprep.subr.mxu0 0.0
    %6510 = vmatpush1.xpose.msra.mxu0 0.0
    %6511 = vmatprep.subr.mxu0 0.0
    %6512 = vmatpush1.xpose.msra.mxu0 0.0
    %6513 = vmatprep.subr.mxu0 0.0
    %6514 = vmatpush1.xpose.msra.mxu0 0.0
    %6515 = vmatprep.subr.mxu0 0.0
    %6516 = vmatpush1.xpose.msra.mxu0 0.0
    %6517 = vmatprep.subr.mxu0 0.0
    %6518 = vmatpush1.xpose.msra.mxu0 0.0
    %6519 = vmatprep.subr.mxu0 0.0
    %6520 = vmatpush1.xpose.msra.mxu0 0.0
    %6521 = vmatprep.subr.mxu0 0.0
    %6522 = vmatpush1.xpose.msra.mxu0 0.0
    %6523 = vmatprep.subr.mxu0 0.0
    %6524 = vmatpush1.xpose.msra.mxu0 0.0
    %6525 = vmatprep.subr.mxu0 0.0
    %6526 = vmatpush1.xpose.msra.mxu0 0.0
    %6527 = vmatprep.subr.mxu0 0.0
    %6528 = vmatpush1.xpose.msra.mxu0 0.0
    %6529 = vmatprep.subr.mxu0 0.0
    %6530 = vmatpush1.xpose.msra.mxu0 0.0
    %6531 = vmatprep.subr.mxu0 0.0
    %6532 = vmatpush1.xpose.msra.mxu0 0.0
    %6533 = vmatprep.subr.mxu0 0.0
    %6534 = vmatpush1.xpose.msra.mxu0 0.0
    %6535 = vmatprep.subr.mxu0 0.0
    %6536 = vmatpush1.xpose.msra.mxu0 0.0
    %6537 = vmatprep.subr.mxu0 0.0
    %6538 = vmatpush1.xpose.msra.mxu0 0.0
    %6539 = vmatprep.subr.mxu0 0.0
    %6540 = vmatpush1.xpose.msra.mxu0 0.0
    %6541 = vmatprep.subr.mxu0 0.0
    %6542 = vmatpush1.xpose.msra.mxu0 0.0
    %6543 = vmatprep.subr.mxu0 0.0
    %6544 = vmatpush1.xpose.msra.mxu0 0.0
    %6545 = vmatprep.subr.mxu0 0.0
    %6546 = vmatpush1.xpose.msra.mxu0 0.0
    %6547 = vmatprep.mubr.f32.mxu0 0.0
    %6548 = vmatmul.mubr.f32.gmra.mrb[0].mxu0 %v6246
    %v6549 = vpop.f32.mrb[0].mxu0
    %v6550 = vadd.f32 0.0, %v6549
    %v6551 = vpop.f32.mrb[0].mxu0
    %6552 = vdwg.mxu0
    %6553 = vmatprep.subr.mxu0 0.0
    %6554 = vmatpush1.xpose.msra.mxu0 %v6269
    %6555 = vmatprep.subr.mxu0 0.0
    %6556 = vmatpush1.xpose.msra.mxu0 0.0
    %6557 = vmatprep.subr.mxu0 0.0
    %6558 = vmatpush1.xpose.msra.mxu0 0.0
    %6559 = vmatprep.subr.mxu0 0.0
    %6560 = vmatpush1.xpose.msra.mxu0 0.0
    %6561 = vmatprep.subr.mxu0 0.0
    %6562 = vmatpush1.xpose.msra.mxu0 0.0
    %6563 = vmatprep.subr.mxu0 0.0
    %6564 = vmatpush1.xpose.msra.mxu0 0.0
    %6565 = vmatprep.subr.mxu0 0.0
    %6566 = vmatpush1.xpose.msra.mxu0 0.0
    %6567 = vmatprep.subr.mxu0 0.0
    %6568 = vmatpush1.xpose.msra.mxu0 0.0
    %6569 = vmatprep.subr.mxu0 0.0
    %6570 = vmatpush1.xpose.msra.mxu0 0.0
    %6571 = vmatprep.subr.mxu0 0.0
    %6572 = vmatpush1.xpose.msra.mxu0 0.0
    %6573 = vmatprep.subr.mxu0 0.0
    %6574 = vmatpush1.xpose.msra.mxu0 0.0
    %6575 = vmatprep.subr.mxu0 0.0
    %6576 = vmatpush1.xpose.msra.mxu0 0.0
    %6577 = vmatprep.subr.mxu0 0.0
    %6578 = vmatpush1.xpose.msra.mxu0 0.0
    %6579 = vmatprep.subr.mxu0 0.0
    %6580 = vmatpush1.xpose.msra.mxu0 0.0
    %6581 = vmatprep.subr.mxu0 0.0
    %6582 = vmatpush1.xpose.msra.mxu0 0.0
    %6583 = vmatprep.subr.mxu0 0.0
    %6584 = vmatpush1.xpose.msra.mxu0 0.0
    %6585 = vmatprep.subr.mxu0 0.0
    %6586 = vmatpush1.xpose.msra.mxu0 0.0
    %6587 = vmatprep.subr.mxu0 0.0
    %6588 = vmatpush1.xpose.msra.mxu0 0.0
    %6589 = vmatprep.subr.mxu0 0.0
    %6590 = vmatpush1.xpose.msra.mxu0 0.0
    %6591 = vmatprep.subr.mxu0 0.0
    %6592 = vmatpush1.xpose.msra.mxu0 0.0
    %6593 = vmatprep.subr.mxu0 0.0
    %6594 = vmatpush1.xpose.msra.mxu0 0.0
    %6595 = vmatprep.subr.mxu0 0.0
    %6596 = vmatpush1.xpose.msra.mxu0 0.0
    %6597 = vmatprep.subr.mxu0 0.0
    %6598 = vmatpush1.xpose.msra.mxu0 0.0
    %6599 = vmatprep.subr.mxu0 0.0
    %6600 = vmatpush1.xpose.msra.mxu0 0.0
    %6601 = vmatprep.subr.mxu0 0.0
    %6602 = vmatpush1.xpose.msra.mxu0 0.0
    %6603 = vmatprep.subr.mxu0 0.0
    %6604 = vmatpush1.xpose.msra.mxu0 0.0
    %6605 = vmatprep.subr.mxu0 0.0
    %6606 = vmatpush1.xpose.msra.mxu0 0.0
    %6607 = vmatprep.subr.mxu0 0.0
    %6608 = vmatpush1.xpose.msra.mxu0 0.0
    %6609 = vmatprep.subr.mxu0 0.0
    %6610 = vmatpush1.xpose.msra.mxu0 0.0
    %6611 = vmatprep.subr.mxu0 0.0
    %6612 = vmatpush1.xpose.msra.mxu0 0.0
    %6613 = vmatprep.subr.mxu0 0.0
    %6614 = vmatpush1.xpose.msra.mxu0 0.0
    %6615 = vmatprep.subr.mxu0 0.0
    %6616 = vmatpush1.xpose.msra.mxu0 0.0
    %6617 = vmatprep.mubr.f32.mxu0 0.0
    %6618 = vmatmul.mubr.f32.gmra.mrb[0].mxu0 %v6251
    %v6619 = vpop.f32.mrb[0].mxu0
    %v6620 = vadd.f32 0.0, %v6619
    %v6621 = vpop.f32.mrb[0].mxu0
    %6622 = vdwg.mxu0
    %6623 = vmatprep.subr.mxu0 0.0
    %6624 = vmatpush1.xpose.msra.mxu0 %v6270
    %6625 = vmatprep.subr.mxu0 0.0
    %6626 = vmatpush1.xpose.msra.mxu0 0.0
    %6627 = vmatprep.subr.mxu0 0.0
    %6628 = vmatpush1.xpose.msra.mxu0 0.0
    %6629 = vmatprep.subr.mxu0 0.0
    %6630 = vmatpush1.xpose.msra.mxu0 0.0
    %6631 = vmatprep.subr.mxu0 0.0
    %6632 = vmatpush1.xpose.msra.mxu0 0.0
    %6633 = vmatprep.subr.mxu0 0.0
    %6634 = vmatpush1.xpose.msra.mxu0 0.0
    %6635 = vmatprep.subr.mxu0 0.0
    %6636 = vmatpush1.xpose.msra.mxu0 0.0
    %6637 = vmatprep.subr.mxu0 0.0
    %6638 = vmatpush1.xpose.msra.mxu0 0.0
    %6639 = vmatprep.subr.mxu0 0.0
    %6640 = vmatpush1.xpose.msra.mxu0 0.0
    %6641 = vmatprep.subr.mxu0 0.0
    %6642 = vmatpush1.xpose.msra.mxu0 0.0
    %6643 = vmatprep.subr.mxu0 0.0
    %6644 = vmatpush1.xpose.msra.mxu0 0.0
    %6645 = vmatprep.subr.mxu0 0.0
    %6646 = vmatpush1.xpose.msra.mxu0 0.0
    %6647 = vmatprep.subr.mxu0 0.0
    %6648 = vmatpush1.xpose.msra.mxu0 0.0
    %6649 = vmatprep.subr.mxu0 0.0
    %6650 = vmatpush1.xpose.msra.mxu0 0.0
    %6651 = vmatprep.subr.mxu0 0.0
    %6652 = vmatpush1.xpose.msra.mxu0 0.0
    %6653 = vmatprep.subr.mxu0 0.0
    %6654 = vmatpush1.xpose.msra.mxu0 0.0
    %6655 = vmatprep.subr.mxu0 0.0
    %6656 = vmatpush1.xpose.msra.mxu0 0.0
    %6657 = vmatprep.subr.mxu0 0.0
    %6658 = vmatpush1.xpose.msra.mxu0 0.0
    %6659 = vmatprep.subr.mxu0 0.0
    %6660 = vmatpush1.xpose.msra.mxu0 0.0
    %6661 = vmatprep.subr.mxu0 0.0
    %6662 = vmatpush1.xpose.msra.mxu0 0.0
    %6663 = vmatprep.subr.mxu0 0.0
    %6664 = vmatpush1.xpose.msra.mxu0 0.0
    %6665 = vmatprep.subr.mxu0 0.0
    %6666 = vmatpush1.xpose.msra.mxu0 0.0
    %6667 = vmatprep.subr.mxu0 0.0
    %6668 = vmatpush1.xpose.msra.mxu0 0.0
    %6669 = vmatprep.subr.mxu0 0.0
    %6670 = vmatpush1.xpose.msra.mxu0 0.0
    %6671 = vmatprep.subr.mxu0 0.0
    %6672 = vmatpush1.xpose.msra.mxu0 0.0
    %6673 = vmatprep.subr.mxu0 0.0
    %6674 = vmatpush1.xpose.msra.mxu0 0.0
    %6675 = vmatprep.subr.mxu0 0.0
    %6676 = vmatpush1.xpose.msra.mxu0 0.0
    %6677 = vmatprep.subr.mxu0 0.0
    %6678 = vmatpush1.xpose.msra.mxu0 0.0
    %6679 = vmatprep.subr.mxu0 0.0
    %6680 = vmatpush1.xpose.msra.mxu0 0.0
    %6681 = vmatprep.subr.mxu0 0.0
    %6682 = vmatpush1.xpose.msra.mxu0 0.0
    %6683 = vmatprep.subr.mxu0 0.0
    %6684 = vmatpush1.xpose.msra.mxu0 0.0
    %6685 = vmatprep.subr.mxu0 0.0
    %6686 = vmatpush1.xpose.msra.mxu0 0.0
    %6687 = vmatprep.mubr.f32.mxu0 0.0
    %6688 = vmatmul.mubr.f32.gmra.mrb[0].mxu0 %v6254
    %v6689 = vpop.f32.mrb[0].mxu0
    %v6690 = vadd.f32 0.0, %v6689
    %v6691 = vpop.f32.mrb[0].mxu0
    %6692 = vdwg.mxu0
    %6693 = vmatprep.subr.mxu0 0.0
    %6694 = vmatpush1.xpose.msra.mxu0 %v6271
    %6695 = vmatprep.subr.mxu0 0.0
    %6696 = vmatpush1.xpose.msra.mxu0 0.0
    %6697 = vmatprep.subr.mxu0 0.0
    %6698 = vmatpush1.xpose.msra.mxu0 0.0
    %6699 = vmatprep.subr.mxu0 0.0
    %6700 = vmatpush1.xpose.msra.mxu0 0.0
    %6701 = vmatprep.subr.mxu0 0.0
    %6702 = vmatpush1.xpose.msra.mxu0 0.0
    %6703 = vmatprep.subr.mxu0 0.0
    %6704 = vmatpush1.xpose.msra.mxu0 0.0
    %6705 = vmatprep.subr.mxu0 0.0
    %6706 = vmatpush1.xpose.msra.mxu0 0.0
    %6707 = vmatprep.subr.mxu0 0.0
    %6708 = vmatpush1.xpose.msra.mxu0 0.0
    %6709 = vmatprep.subr.mxu0 0.0
    %6710 = vmatpush1.xpose.msra.mxu0 0.0
    %6711 = vmatprep.subr.mxu0 0.0
    %6712 = vmatpush1.xpose.msra.mxu0 0.0
    %6713 = vmatprep.subr.mxu0 0.0
    %6714 = vmatpush1.xpose.msra.mxu0 0.0
    %6715 = vmatprep.subr.mxu0 0.0
    %6716 = vmatpush1.xpose.msra.mxu0 0.0
    %6717 = vmatprep.subr.mxu0 0.0
    %6718 = vmatpush1.xpose.msra.mxu0 0.0
    %6719 = vmatprep.subr.mxu0 0.0
    %6720 = vmatpush1.xpose.msra.mxu0 0.0
    %6721 = vmatprep.subr.mxu0 0.0
    %6722 = vmatpush1.xpose.msra.mxu0 0.0
    %6723 = vmatprep.subr.mxu0 0.0
    %6724 = vmatpush1.xpose.msra.mxu0 0.0
    %6725 = vmatprep.subr.mxu0 0.0
    %6726 = vmatpush1.xpose.msra.mxu0 0.0
    %6727 = vmatprep.subr.mxu0 0.0
    %6728 = vmatpush1.xpose.msra.mxu0 0.0
    %6729 = vmatprep.subr.mxu0 0.0
    %6730 = vmatpush1.xpose.msra.mxu0 0.0
    %6731 = vmatprep.subr.mxu0 0.0
    %6732 = vmatpush1.xpose.msra.mxu0 0.0
    %6733 = vmatprep.subr.mxu0 0.0
    %6734 = vmatpush1.xpose.msra.mxu0 0.0
    %6735 = vmatprep.subr.mxu0 0.0
    %6736 = vmatpush1.xpose.msra.mxu0 0.0
    %6737 = vmatprep.subr.mxu0 0.0
    %6738 = vmatpush1.xpose.msra.mxu0 0.0
    %6739 = vmatprep.subr.mxu0 0.0
    %6740 = vmatpush1.xpose.msra.mxu0 0.0
    %6741 = vmatprep.subr.mxu0 0.0
    %6742 = vmatpush1.xpose.msra.mxu0 0.0
    %6743 = vmatprep.subr.mxu0 0.0
    %6744 = vmatpush1.xpose.msra.mxu0 0.0
    %6745 = vmatprep.subr.mxu0 0.0
    %6746 = vmatpush1.xpose.msra.mxu0 0.0
    %6747 = vmatprep.subr.mxu0 0.0
    %6748 = vmatpush1.xpose.msra.mxu0 0.0
    %6749 = vmatprep.subr.mxu0 0.0
    %6750 = vmatpush1.xpose.msra.mxu0 0.0
    %6751 = vmatprep.subr.mxu0 0.0
    %6752 = vmatpush1.xpose.msra.mxu0 0.0
    %6753 = vmatprep.subr.mxu0 0.0
    %6754 = vmatpush1.xpose.msra.mxu0 0.0
    %6755 = vmatprep.subr.mxu0 0.0
    %6756 = vmatpush1.xpose.msra.mxu0 0.0
    %6757 = vmatprep.mubr.f32.mxu0 0.0
    %6758 = vmatmul.mubr.f32.gmra.mrb[0].mxu0 %v6259
    %v6759 = vpop.f32.mrb[0].mxu0
    %v6760 = vadd.f32 0.0, %v6759
    %v6761 = vpop.f32.mrb[0].mxu0
    %6762 = vdwg.mxu0
    %6763 = vmatprep.subr.mxu0 0.0
    %6764 = vmatpush1.xpose.msra.mxu0 %v6272
    %6765 = vmatprep.subr.mxu0 0.0
    %6766 = vmatpush1.xpose.msra.mxu0 0.0
    %6767 = vmatprep.subr.mxu0 0.0
    %6768 = vmatpush1.xpose.msra.mxu0 0.0
    %6769 = vmatprep.subr.mxu0 0.0
    %6770 = vmatpush1.xpose.msra.mxu0 0.0
    %6771 = vmatprep.subr.mxu0 0.0
    %6772 = vmatpush1.xpose.msra.mxu0 0.0
    %6773 = vmatprep.subr.mxu0 0.0
    %6774 = vmatpush1.xpose.msra.mxu0 0.0
    %6775 = vmatprep.subr.mxu0 0.0
    %6776 = vmatpush1.xpose.msra.mxu0 0.0
    %6777 = vmatprep.subr.mxu0 0.0
    %6778 = vmatpush1.xpose.msra.mxu0 0.0
    %6779 = vmatprep.subr.mxu0 0.0
    %6780 = vmatpush1.xpose.msra.mxu0 0.0
    %6781 = vmatprep.subr.mxu0 0.0
    %6782 = vmatpush1.xpose.msra.mxu0 0.0
    %6783 = vmatprep.subr.mxu0 0.0
    %6784 = vmatpush1.xpose.msra.mxu0 0.0
    %6785 = vmatprep.subr.mxu0 0.0
    %6786 = vmatpush1.xpose.msra.mxu0 0.0
    %6787 = vmatprep.subr.mxu0 0.0
    %6788 = vmatpush1.xpose.msra.mxu0 0.0
    %6789 = vmatprep.subr.mxu0 0.0
    %6790 = vmatpush1.xpose.msra.mxu0 0.0
    %6791 = vmatprep.subr.mxu0 0.0
    %6792 = vmatpush1.xpose.msra.mxu0 0.0
    %6793 = vmatprep.subr.mxu0 0.0
    %6794 = vmatpush1.xpose.msra.mxu0 0.0
    %6795 = vmatprep.subr.mxu0 0.0
    %6796 = vmatpush1.xpose.msra.mxu0 0.0
    %6797 = vmatprep.subr.mxu0 0.0
    %6798 = vmatpush1.xpose.msra.mxu0 0.0
    %6799 = vmatprep.subr.mxu0 0.0
    %6800 = vmatpush1.xpose.msra.mxu0 0.0
    %6801 = vmatprep.subr.mxu0 0.0
    %6802 = vmatpush1.xpose.msra.mxu0 0.0
    %6803 = vmatprep.subr.mxu0 0.0
    %6804 = vmatpush1.xpose.msra.mxu0 0.0
    %6805 = vmatprep.subr.mxu0 0.0
    %6806 = vmatpush1.xpose.msra.mxu0 0.0
    %6807 = vmatprep.subr.mxu0 0.0
    %6808 = vmatpush1.xpose.msra.mxu0 0.0
    %6809 = vmatprep.subr.mxu0 0.0
    %6810 = vmatpush1.xpose.msra.mxu0 0.0
    %6811 = vmatprep.subr.mxu0 0.0
    %6812 = vmatpush1.xpose.msra.mxu0 0.0
    %6813 = vmatprep.subr.mxu0 0.0
    %6814 = vmatpush1.xpose.msra.mxu0 0.0
    %6815 = vmatprep.subr.mxu0 0.0
    %6816 = vmatpush1.xpose.msra.mxu0 0.0
    %6817 = vmatprep.subr.mxu0 0.0
    %6818 = vmatpush1.xpose.msra.mxu0 0.0
    %6819 = vmatprep.subr.mxu0 0.0
    %6820 = vmatpush1.xpose.msra.mxu0 0.0
    %6821 = vmatprep.subr.mxu0 0.0
    %6822 = vmatpush1.xpose.msra.mxu0 0.0
    %6823 = vmatprep.subr.mxu0 0.0
    %6824 = vmatpush1.xpose.msra.mxu0 0.0
    %6825 = vmatprep.subr.mxu0 0.0
    %6826 = vmatpush1.xpose.msra.mxu0 0.0
    %6827 = vmatprep.mubr.f32.mxu0 0.0
    %6828 = vmatmul.mubr.f32.gmra.mrb[0].mxu0 %v6262
    %v6829 = vpop.f32.mrb[0].mxu0
    %v6830 = vadd.f32 0.0, %v6829
    %v6831 = vpop.f32.mrb[0].mxu0
    %6832 = vdwg.mxu0
    %vm6833 = vcmask 31744
    %v6834 = vsel %vm6833, %v6340, -inf
    %6835 = vmax.xlane.f32.xlu0 %v6834
    %v6836 = vpop.xlane.xlu0 %6835
    %v6837 = vsel %vm6833, %v6410, -inf
    %6838 = vmax.xlane.f32.xlu0 %v6837
    %v6839 = vpop.xlane.xlu0 %6838
    %v6840 = vsel %vm6833, %v6480, -inf
    %6841 = vmax.xlane.f32.xlu0 %v6840
    %v6842 = vpop.xlane.xlu0 %6841
    %v6843 = vsel %vm6833, %v6550, -inf
    %6844 = vmax.xlane.f32.xlu0 %v6843
    %v6845 = vpop.xlane.xlu0 %6844
    %v6846 = vsel %vm6833, %v6620, -inf
    %6847 = vmax.xlane.f32.xlu0 %v6846
    %v6848 = vpop.xlane.xlu0 %6847
    %v6849 = vsel %vm6833, %v6690, -inf
    %6850 = vmax.xlane.f32.xlu0 %v6849
    %v6851 = vpop.xlane.xlu0 %6850
    %v6852 = vsel %vm6833, %v6760, -inf
    %6853 = vmax.xlane.f32.xlu0 %v6852
    %v6854 = vpop.xlane.xlu0 %6853
    %v6855 = vsel %vm6833, %v6830, -inf
    %6856 = vmax.xlane.f32.xlu0 %v6855
    %v6857 = vpop.xlane.xlu0 %6856
    %v6858 = vsub.f32 %v6340, %v6836
    %v6859 = vsub.f32 %v6410, %v6839
    %v6860 = vsub.f32 %v6480, %v6842
    %v6861 = vsub.f32 %v6550, %v6845
    %v6862 = vsub.f32 %v6620, %v6848
    %v6863 = vsub.f32 %v6690, %v6851
    %v6864 = vsub.f32 %v6760, %v6854
    %v6865 = vsub.f32 %v6830, %v6857
    %v6866 = vmul.f32 %v6858, 1.442695
    %v6867 = vpow.pop %v6866
    %v6868 = vmul.f32 %v6859, 1.442695
    %v6869 = vpow.pop %v6868
    %v6870 = vmul.f32 %v6860, 1.442695
    %v6871 = vpow.pop %v6870
    %v6872 = vmul.f32 %v6861, 1.442695
    %v6873 = vpow.pop %v6872
    %v6874 = vmul.f32 %v6862, 1.442695
    %v6875 = vpow.pop %v6874
    %v6876 = vmul.f32 %v6863, 1.442695
    %v6877 = vpow.pop %v6876
    %v6878 = vmul.f32 %v6864, 1.442695
    %v6879 = vpow.pop %v6878
    %v6880 = vmul.f32 %v6865, 1.442695
    %v6881 = vpow.pop %v6880
    %v6882 = vsel %vm6833, %v6867, 0.0
    %6883 = vadd.xlane.f32.xlu0 %v6882
    %v6884 = vpop.xlane.xlu0 %6883
    %v6885 = vsel %vm6833, %v6869, 0.0
    %6886 = vadd.xlane.f32.xlu0 %v6885
    %v6887 = vpop.xlane.xlu0 %6886
    %v6888 = vsel %vm6833, %v6871, 0.0
    %6889 = vadd.xlane.f32.xlu0 %v6888
    %v6890 = vpop.xlane.xlu0 %6889
    %v6891 = vsel %vm6833, %v6873, 0.0
    %6892 = vadd.xlane.f32.xlu0 %v6891
    %v6893 = vpop.xlane.xlu0 %6892
    %v6894 = vsel %vm6833, %v6875, 0.0
    %6895 = vadd.xlane.f32.xlu0 %v6894
    %v6896 = vpop.xlane.xlu0 %6895
    %v6897 = vsel %vm6833, %v6877, 0.0
    %6898 = vadd.xlane.f32.xlu0 %v6897
    %v6899 = vpop.xlane.xlu0 %6898
    %v6900 = vsel %vm6833, %v6879, 0.0
    %6901 = vadd.xlane.f32.xlu0 %v6900
    %v6902 = vpop.xlane.xlu0 %6901
    %v6903 = vsel %vm6833, %v6881, 0.0
    %6904 = vadd.xlane.f32.xlu0 %v6903
    %v6905 = vpop.xlane.xlu0 %6904
    %v6906 = vrcp.pop %v6884
    %v6907 = vmul.f32 %v6867, %v6906
    %v6908 = vrcp.pop %v6887
    %v6909 = vmul.f32 %v6869, %v6908
    %v6910 = vrcp.pop %v6890
    %v6911 = vmul.f32 %v6871, %v6910
    %v6912 = vrcp.pop %v6893
    %v6913 = vmul.f32 %v6873, %v6912
    %v6914 = vrcp.pop %v6896
    %v6915 = vmul.f32 %v6875, %v6914
    %v6916 = vrcp.pop %v6899
    %v6917 = vmul.f32 %v6877, %v6916
    %v6918 = vrcp.pop %v6902
    %v6919 = vmul.f32 %v6879, %v6918
    %v6920 = vrcp.pop %v6905
    %v6921 = vmul.f32 %v6881, %v6920
    %6922 = vst.msk [vmem:[%s12] sm:$0xff] %vm6833, %v6907
    %6923 = vst.msk [vmem:[%s12 + $0x8] sm:$0xff] %vm6833, %v6909
    %6924 = vst.msk [vmem:[%s12 + $0x10] sm:$0xff] %vm6833, %v6911
    %6925 = vst.msk [vmem:[%s12 + $0x18] sm:$0xff] %vm6833, %v6913
    %6926 = vst.msk [vmem:[%s12 + $0x20] sm:$0xff] %vm6833, %v6915
    %6927 = vst.msk [vmem:[%s12 + $0x28] sm:$0xff] %vm6833, %v6917
    %6928 = vst.msk [vmem:[%s12 + $0x30] sm:$0xff] %vm6833, %v6919
    %6929 = vst.msk [vmem:[%s12 + $0x38] sm:$0xff] %vm6833, %v6921
    %v6931 = vsel %vm6833, %v6907, 0
    %vm6933 = vcmask 1043456
    %v6935 = vsel %vm6933, %v6265, 0
    %6937 = vmatprep.subr.mxu0 0.0
    %6938 = vmatpush1.msra.mxu0 %v6935
    %6939 = vmatprep.subr.mxu0 0.0
    %6940 = vmatpush1.msra.mxu0 0.0
    %6941 = vmatprep.subr.mxu0 0.0
    %6942 = vmatpush1.msra.mxu0 0.0
    %6943 = vmatprep.subr.mxu0 0.0
    %6944 = vmatpush1.msra.mxu0 0.0
    %6945 = vmatprep.subr.mxu0 0.0
    %6946 = vmatpush1.msra.mxu0 0.0
    %6947 = vmatprep.subr.mxu0 0.0
    %6948 = vmatpush1.msra.mxu0 0.0
    %6949 = vmatprep.subr.mxu0 0.0
    %6950 = vmatpush1.msra.mxu0 0.0
    %6951 = vmatprep.subr.mxu0 0.0
    %6952 = vmatpush1.msra.mxu0 0.0
    %6953 = vmatprep.subr.mxu0 0.0
    %6954 = vmatpush1.msra.mxu0 0.0
    %6955 = vmatprep.subr.mxu0 0.0
    %6956 = vmatpush1.msra.mxu0 0.0
    %6957 = vmatprep.subr.mxu0 0.0
    %6958 = vmatpush1.msra.mxu0 0.0
    %6959 = vmatprep.subr.mxu0 0.0
    %6960 = vmatpush1.msra.mxu0 0.0
    %6961 = vmatprep.subr.mxu0 0.0
    %6962 = vmatpush1.msra.mxu0 0.0
    %6963 = vmatprep.subr.mxu0 0.0
    %6964 = vmatpush1.msra.mxu0 0.0
    %6965 = vmatprep.subr.mxu0 0.0
    %6966 = vmatpush1.msra.mxu0 0.0
    %6967 = vmatprep.subr.mxu0 0.0
    %6968 = vmatpush1.msra.mxu0 0.0
    %6969 = vmatprep.subr.mxu0 0.0
    %6970 = vmatpush1.msra.mxu0 0.0
    %6971 = vmatprep.subr.mxu0 0.0
    %6972 = vmatpush1.msra.mxu0 0.0
    %6973 = vmatprep.subr.mxu0 0.0
    %6974 = vmatpush1.msra.mxu0 0.0
    %6975 = vmatprep.subr.mxu0 0.0
    %6976 = vmatpush1.msra.mxu0 0.0
    %6977 = vmatprep.subr.mxu0 0.0
    %6978 = vmatpush1.msra.mxu0 0.0
    %6979 = vmatprep.subr.mxu0 0.0
    %6980 = vmatpush1.msra.mxu0 0.0
    %6981 = vmatprep.subr.mxu0 0.0
    %6982 = vmatpush1.msra.mxu0 0.0
    %6983 = vmatprep.subr.mxu0 0.0
    %6984 = vmatpush1.msra.mxu0 0.0
    %6985 = vmatprep.subr.mxu0 0.0
    %6986 = vmatpush1.msra.mxu0 0.0
    %6987 = vmatprep.subr.mxu0 0.0
    %6988 = vmatpush1.msra.mxu0 0.0
    %6989 = vmatprep.subr.mxu0 0.0
    %6990 = vmatpush1.msra.mxu0 0.0
    %6991 = vmatprep.subr.mxu0 0.0
    %6992 = vmatpush1.msra.mxu0 0.0
    %6993 = vmatprep.subr.mxu0 0.0
    %6994 = vmatpush1.msra.mxu0 0.0
    %6995 = vmatprep.subr.mxu0 0.0
    %6996 = vmatpush1.msra.mxu0 0.0
    %6997 = vmatprep.subr.mxu0 0.0
    %6998 = vmatpush1.msra.mxu0 0.0
    %6999 = vmatprep.subr.mxu0 0.0
    %7000 = vmatpush1.msra.mxu0 0.0
    %7001 = vmatprep.mubr.f32.mxu0 0.0
    %7002 = vmatmul.mubr.f32.gmra.mrb[0].mxu0 %v6931
    %v7003 = vpop.f32.mrb[0].mxu0
    %v7004 = vadd.f32 0.0, %v7003
    %v7005 = vpop.f32.mrb[0].mxu0
    %7006 = vdwg.mxu0
    %v7008 = vsel %vm6833, %v6909, 0
    %v7011 = vsel %vm6933, %v6266, 0
    %7013 = vmatprep.subr.mxu0 0.0
    %7014 = vmatpush1.msra.mxu0 %v7011
    %7015 = vmatprep.subr.mxu0 0.0
    %7016 = vmatpush1.msra.mxu0 0.0
    %7017 = vmatprep.subr.mxu0 0.0
    %7018 = vmatpush1.msra.mxu0 0.0
    %7019 = vmatprep.subr.mxu0 0.0
    %7020 = vmatpush1.msra.mxu0 0.0
    %7021 = vmatprep.subr.mxu0 0.0
    %7022 = vmatpush1.msra.mxu0 0.0
    %7023 = vmatprep.subr.mxu0 0.0
    %7024 = vmatpush1.msra.mxu0 0.0
    %7025 = vmatprep.subr.mxu0 0.0
    %7026 = vmatpush1.msra.mxu0 0.0
    %7027 = vmatprep.subr.mxu0 0.0
    %7028 = vmatpush1.msra.mxu0 0.0
    %7029 = vmatprep.subr.mxu0 0.0
    %7030 = vmatpush1.msra.mxu0 0.0
    %7031 = vmatprep.subr.mxu0 0.0
    %7032 = vmatpush1.msra.mxu0 0.0
    %7033 = vmatprep.subr.mxu0 0.0
    %7034 = vmatpush1.msra.mxu0 0.0
    %7035 = vmatprep.subr.mxu0 0.0
    %7036 = vmatpush1.msra.mxu0 0.0
    %7037 = vmatprep.subr.mxu0 0.0
    %7038 = vmatpush1.msra.mxu0 0.0
    %7039 = vmatprep.subr.mxu0 0.0
    %7040 = vmatpush1.msra.mxu0 0.0
    %7041 = vmatprep.subr.mxu0 0.0
    %7042 = vmatpush1.msra.mxu0 0.0
    %7043 = vmatprep.subr.mxu0 0.0
    %7044 = vmatpush1.msra.mxu0 0.0
    %7045 = vmatprep.subr.mxu0 0.0
    %7046 = vmatpush1.msra.mxu0 0.0
    %7047 = vmatprep.subr.mxu0 0.0
    %7048 = vmatpush1.msra.mxu0 0.0
    %7049 = vmatprep.subr.mxu0 0.0
    %7050 = vmatpush1.msra.mxu0 0.0
    %7051 = vmatprep.subr.mxu0 0.0
    %7052 = vmatpush1.msra.mxu0 0.0
    %7053 = vmatprep.subr.mxu0 0.0
    %7054 = vmatpush1.msra.mxu0 0.0
    %7055 = vmatprep.subr.mxu0 0.0
    %7056 = vmatpush1.msra.mxu0 0.0
    %7057 = vmatprep.subr.mxu0 0.0
    %7058 = vmatpush1.msra.mxu0 0.0
    %7059 = vmatprep.subr.mxu0 0.0
    %7060 = vmatpush1.msra.mxu0 0.0
    %7061 = vmatprep.subr.mxu0 0.0
    %7062 = vmatpush1.msra.mxu0 0.0
    %7063 = vmatprep.subr.mxu0 0.0
    %7064 = vmatpush1.msra.mxu0 0.0
    %7065 = vmatprep.subr.mxu0 0.0
    %7066 = vmatpush1.msra.mxu0 0.0
    %7067 = vmatprep.subr.mxu0 0.0
    %7068 = vmatpush1.msra.mxu0 0.0
    %7069 = vmatprep.subr.mxu0 0.0
    %7070 = vmatpush1.msra.mxu0 0.0
    %7071 = vmatprep.subr.mxu0 0.0
    %7072 = vmatpush1.msra.mxu0 0.0
    %7073 = vmatprep.subr.mxu0 0.0
    %7074 = vmatpush1.msra.mxu0 0.0
    %7075 = vmatprep.subr.mxu0 0.0
    %7076 = vmatpush1.msra.mxu0 0.0
    %7077 = vmatprep.mubr.f32.mxu0 0.0
    %7078 = vmatmul.mubr.f32.gmra.mrb[0].mxu0 %v7008
    %v7079 = vpop.f32.mrb[0].mxu0
    %v7080 = vadd.f32 0.0, %v7079
    %v7081 = vpop.f32.mrb[0].mxu0
    %7082 = vdwg.mxu0
    %v7084 = vsel %vm6833, %v6911, 0
    %v7087 = vsel %vm6933, %v6267, 0
    %7089 = vmatprep.subr.mxu0 0.0
    %7090 = vmatpush1.msra.mxu0 %v7087
    %7091 = vmatprep.subr.mxu0 0.0
    %7092 = vmatpush1.msra.mxu0 0.0
    %7093 = vmatprep.subr.mxu0 0.0
    %7094 = vmatpush1.msra.mxu0 0.0
    %7095 = vmatprep.subr.mxu0 0.0
    %7096 = vmatpush1.msra.mxu0 0.0
    %7097 = vmatprep.subr.mxu0 0.0
    %7098 = vmatpush1.msra.mxu0 0.0
    %7099 = vmatprep.subr.mxu0 0.0
    %7100 = vmatpush1.msra.mxu0 0.0
    %7101 = vmatprep.subr.mxu0 0.0
    %7102 = vmatpush1.msra.mxu0 0.0
    %7103 = vmatprep.subr.mxu0 0.0
    %7104 = vmatpush1.msra.mxu0 0.0
    %7105 = vmatprep.subr.mxu0 0.0
    %7106 = vmatpush1.msra.mxu0 0.0
    %7107 = vmatprep.subr.mxu0 0.0
    %7108 = vmatpush1.msra.mxu0 0.0
    %7109 = vmatprep.subr.mxu0 0.0
    %7110 = vmatpush1.msra.mxu0 0.0
    %7111 = vmatprep.subr.mxu0 0.0
    %7112 = vmatpush1.msra.mxu0 0.0
    %7113 = vmatprep.subr.mxu0 0.0
    %7114 = vmatpush1.msra.mxu0 0.0
    %7115 = vmatprep.subr.mxu0 0.0
    %7116 = vmatpush1.msra.mxu0 0.0
    %7117 = vmatprep.subr.mxu0 0.0
    %7118 = vmatpush1.msra.mxu0 0.0
    %7119 = vmatprep.subr.mxu0 0.0
    %7120 = vmatpush1.msra.mxu0 0.0
    %7121 = vmatprep.subr.mxu0 0.0
    %7122 = vmatpush1.msra.mxu0 0.0
    %7123 = vmatprep.subr.mxu0 0.0
    %7124 = vmatpush1.msra.mxu0 0.0
    %7125 = vmatprep.subr.mxu0 0.0
    %7126 = vmatpush1.msra.mxu0 0.0
    %7127 = vmatprep.subr.mxu0 0.0
    %7128 = vmatpush1.msra.mxu0 0.0
    %7129 = vmatprep.subr.mxu0 0.0
    %7130 = vmatpush1.msra.mxu0 0.0
    %7131 = vmatprep.subr.mxu0 0.0
    %7132 = vmatpush1.msra.mxu0 0.0
    %7133 = vmatprep.subr.mxu0 0.0
    %7134 = vmatpush1.msra.mxu0 0.0
    %7135 = vmatprep.subr.mxu0 0.0
    %7136 = vmatpush1.msra.mxu0 0.0
    %7137 = vmatprep.subr.mxu0 0.0
    %7138 = vmatpush1.msra.mxu0 0.0
    %7139 = vmatprep.subr.mxu0 0.0
    %7140 = vmatpush1.msra.mxu0 0.0
    %7141 = vmatprep.subr.mxu0 0.0
    %7142 = vmatpush1.msra.mxu0 0.0
    %7143 = vmatprep.subr.mxu0 0.0
    %7144 = vmatpush1.msra.mxu0 0.0
    %7145 = vmatprep.subr.mxu0 0.0
    %7146 = vmatpush1.msra.mxu0 0.0
    %7147 = vmatprep.subr.mxu0 0.0
    %7148 = vmatpush1.msra.mxu0 0.0
    %7149 = vmatprep.subr.mxu0 0.0
    %7150 = vmatpush1.msra.mxu0 0.0
    %7151 = vmatprep.subr.mxu0 0.0
    %7152 = vmatpush1.msra.mxu0 0.0
    %7153 = vmatprep.mubr.f32.mxu0 0.0
    %7154 = vmatmul.mubr.f32.gmra.mrb[0].mxu0 %v7084
    %v7155 = vpop.f32.mrb[0].mxu0
    %v7156 = vadd.f32 0.0, %v7155
    %v7157 = vpop.f32.mrb[0].mxu0
    %7158 = vdwg.mxu0
    %v7160 = vsel %vm6833, %v6913, 0
    %v7163 = vsel %vm6933, %v6268, 0
    %7165 = vmatprep.subr.mxu0 0.0
    %7166 = vmatpush1.msra.mxu0 %v7163
    %7167 = vmatprep.subr.mxu0 0.0
    %7168 = vmatpush1.msra.mxu0 0.0
    %7169 = vmatprep.subr.mxu0 0.0
    %7170 = vmatpush1.msra.mxu0 0.0
    %7171 = vmatprep.subr.mxu0 0.0
    %7172 = vmatpush1.msra.mxu0 0.0
    %7173 = vmatprep.subr.mxu0 0.0
    %7174 = vmatpush1.msra.mxu0 0.0
    %7175 = vmatprep.subr.mxu0 0.0
    %7176 = vmatpush1.msra.mxu0 0.0
    %7177 = vmatprep.subr.mxu0 0.0
    %7178 = vmatpush1.msra.mxu0 0.0
    %7179 = vmatprep.subr.mxu0 0.0
    %7180 = vmatpush1.msra.mxu0 0.0
    %7181 = vmatprep.subr.mxu0 0.0
    %7182 = vmatpush1.msra.mxu0 0.0
    %7183 = vmatprep.subr.mxu0 0.0
    %7184 = vmatpush1.msra.mxu0 0.0
    %7185 = vmatprep.subr.mxu0 0.0
    %7186 = vmatpush1.msra.mxu0 0.0
    %7187 = vmatprep.subr.mxu0 0.0
    %7188 = vmatpush1.msra.mxu0 0.0
    %7189 = vmatprep.subr.mxu0 0.0
    %7190 = vmatpush1.msra.mxu0 0.0
    %7191 = vmatprep.subr.mxu0 0.0
    %7192 = vmatpush1.msra.mxu0 0.0
    %7193 = vmatprep.subr.mxu0 0.0
    %7194 = vmatpush1.msra.mxu0 0.0
    %7195 = vmatprep.subr.mxu0 0.0
    %7196 = vmatpush1.msra.mxu0 0.0
    %7197 = vmatprep.subr.mxu0 0.0
    %7198 = vmatpush1.msra.mxu0 0.0
    %7199 = vmatprep.subr.mxu0 0.0
    %7200 = vmatpush1.msra.mxu0 0.0
    %7201 = vmatprep.subr.mxu0 0.0
    %7202 = vmatpush1.msra.mxu0 0.0
    %7203 = vmatprep.subr.mxu0 0.0
    %7204 = vmatpush1.msra.mxu0 0.0
    %7205 = vmatprep.subr.mxu0 0.0
    %7206 = vmatpush1.msra.mxu0 0.0
    %7207 = vmatprep.subr.mxu0 0.0
    %7208 = vmatpush1.msra.mxu0 0.0
    %7209 = vmatprep.subr.mxu0 0.0
    %7210 = vmatpush1.msra.mxu0 0.0
    %7211 = vmatprep.subr.mxu0 0.0
    %7212 = vmatpush1.msra.mxu0 0.0
    %7213 = vmatprep.subr.mxu0 0.0
    %7214 = vmatpush1.msra.mxu0 0.0
    %7215 = vmatprep.subr.mxu0 0.0
    %7216 = vmatpush1.msra.mxu0 0.0
    %7217 = vmatprep.subr.mxu0 0.0
    %7218 = vmatpush1.msra.mxu0 0.0
    %7219 = vmatprep.subr.mxu0 0.0
    %7220 = vmatpush1.msra.mxu0 0.0
    %7221 = vmatprep.subr.mxu0 0.0
    %7222 = vmatpush1.msra.mxu0 0.0
    %7223 = vmatprep.subr.mxu0 0.0
    %7224 = vmatpush1.msra.mxu0 0.0
    %7225 = vmatprep.subr.mxu0 0.0
    %7226 = vmatpush1.msra.mxu0 0.0
    %7227 = vmatprep.subr.mxu0 0.0
    %7228 = vmatpush1.msra.mxu0 0.0
    %7229 = vmatprep.mubr.f32.mxu0 0.0
    %7230 = vmatmul.mubr.f32.gmra.mrb[0].mxu0 %v7160
    %v7231 = vpop.f32.mrb[0].mxu0
    %v7232 = vadd.f32 0.0, %v7231
    %v7233 = vpop.f32.mrb[0].mxu0
    %7234 = vdwg.mxu0
    %v7236 = vsel %vm6833, %v6915, 0
    %v7239 = vsel %vm6933, %v6269, 0
    %7241 = vmatprep.subr.mxu0 0.0
    %7242 = vmatpush1.msra.mxu0 %v7239
    %7243 = vmatprep.subr.mxu0 0.0
    %7244 = vmatpush1.msra.mxu0 0.0
    %7245 = vmatprep.subr.mxu0 0.0
    %7246 = vmatpush1.msra.mxu0 0.0
    %7247 = vmatprep.subr.mxu0 0.0
    %7248 = vmatpush1.msra.mxu0 0.0
    %7249 = vmatprep.subr.mxu0 0.0
    %7250 = vmatpush1.msra.mxu0 0.0
    %7251 = vmatprep.subr.mxu0 0.0
    %7252 = vmatpush1.msra.mxu0 0.0
    %7253 = vmatprep.subr.mxu0 0.0
    %7254 = vmatpush1.msra.mxu0 0.0
    %7255 = vmatprep.subr.mxu0 0.0
    %7256 = vmatpush1.msra.mxu0 0.0
    %7257 = vmatprep.subr.mxu0 0.0
    %7258 = vmatpush1.msra.mxu0 0.0
    %7259 = vmatprep.subr.mxu0 0.0
    %7260 = vmatpush1.msra.mxu0 0.0
    %7261 = vmatprep.subr.mxu0 0.0
    %7262 = vmatpush1.msra.mxu0 0.0
    %7263 = vmatprep.subr.mxu0 0.0
    %7264 = vmatpush1.msra.mxu0 0.0
    %7265 = vmatprep.subr.mxu0 0.0
    %7266 = vmatpush1.msra.mxu0 0.0
    %7267 = vmatprep.subr.mxu0 0.0
    %7268 = vmatpush1.msra.mxu0 0.0
    %7269 = vmatprep.subr.mxu0 0.0
    %7270 = vmatpush1.msra.mxu0 0.0
    %7271 = vmatprep.subr.mxu0 0.0
    %7272 = vmatpush1.msra.mxu0 0.0
    %7273 = vmatprep.subr.mxu0 0.0
    %7274 = vmatpush1.msra.mxu0 0.0
    %7275 = vmatprep.subr.mxu0 0.0
    %7276 = vmatpush1.msra.mxu0 0.0
    %7277 = vmatprep.subr.mxu0 0.0
    %7278 = vmatpush1.msra.mxu0 0.0
    %7279 = vmatprep.subr.mxu0 0.0
    %7280 = vmatpush1.msra.mxu0 0.0
    %7281 = vmatprep.subr.mxu0 0.0
    %7282 = vmatpush1.msra.mxu0 0.0
    %7283 = vmatprep.subr.mxu0 0.0
    %7284 = vmatpush1.msra.mxu0 0.0
    %7285 = vmatprep.subr.mxu0 0.0
    %7286 = vmatpush1.msra.mxu0 0.0
    %7287 = vmatprep.subr.mxu0 0.0
    %7288 = vmatpush1.msra.mxu0 0.0
    %7289 = vmatprep.subr.mxu0 0.0
    %7290 = vmatpush1.msra.mxu0 0.0
    %7291 = vmatprep.subr.mxu0 0.0
    %7292 = vmatpush1.msra.mxu0 0.0
    %7293 = vmatprep.subr.mxu0 0.0
    %7294 = vmatpush1.msra.mxu0 0.0
    %7295 = vmatprep.subr.mxu0 0.0
    %7296 = vmatpush1.msra.mxu0 0.0
    %7297 = vmatprep.subr.mxu0 0.0
    %7298 = vmatpush1.msra.mxu0 0.0
    %7299 = vmatprep.subr.mxu0 0.0
    %7300 = vmatpush1.msra.mxu0 0.0
    %7301 = vmatprep.subr.mxu0 0.0
    %7302 = vmatpush1.msra.mxu0 0.0
    %7303 = vmatprep.subr.mxu0 0.0
    %7304 = vmatpush1.msra.mxu0 0.0
    %7305 = vmatprep.mubr.f32.mxu0 0.0
    %7306 = vmatmul.mubr.f32.gmra.mrb[0].mxu0 %v7236
    %v7307 = vpop.f32.mrb[0].mxu0
    %v7308 = vadd.f32 0.0, %v7307
    %v7309 = vpop.f32.mrb[0].mxu0
    %7310 = vdwg.mxu0
    %v7312 = vsel %vm6833, %v6917, 0
    %v7315 = vsel %vm6933, %v6270, 0
    %7317 = vmatprep.subr.mxu0 0.0
    %7318 = vmatpush1.msra.mxu0 %v7315
    %7319 = vmatprep.subr.mxu0 0.0
    %7320 = vmatpush1.msra.mxu0 0.0
    %7321 = vmatprep.subr.mxu0 0.0
    %7322 = vmatpush1.msra.mxu0 0.0
    %7323 = vmatprep.subr.mxu0 0.0
    %7324 = vmatpush1.msra.mxu0 0.0
    %7325 = vmatprep.subr.mxu0 0.0
    %7326 = vmatpush1.msra.mxu0 0.0
    %7327 = vmatprep.subr.mxu0 0.0
    %7328 = vmatpush1.msra.mxu0 0.0
    %7329 = vmatprep.subr.mxu0 0.0
    %7330 = vmatpush1.msra.mxu0 0.0
    %7331 = vmatprep.subr.mxu0 0.0
    %7332 = vmatpush1.msra.mxu0 0.0
    %7333 = vmatprep.subr.mxu0 0.0
    %7334 = vmatpush1.msra.mxu0 0.0
    %7335 = vmatprep.subr.mxu0 0.0
    %7336 = vmatpush1.msra.mxu0 0.0
    %7337 = vmatprep.subr.mxu0 0.0
    %7338 = vmatpush1.msra.mxu0 0.0
    %7339 = vmatprep.subr.mxu0 0.0
    %7340 = vmatpush1.msra.mxu0 0.0
    %7341 = vmatprep.subr.mxu0 0.0
    %7342 = vmatpush1.msra.mxu0 0.0
    %7343 = vmatprep.subr.mxu0 0.0
    %7344 = vmatpush1.msra.mxu0 0.0
    %7345 = vmatprep.subr.mxu0 0.0
    %7346 = vmatpush1.msra.mxu0 0.0
    %7347 = vmatprep.subr.mxu0 0.0
    %7348 = vmatpush1.msra.mxu0 0.0
    %7349 = vmatprep.subr.mxu0 0.0
    %7350 = vmatpush1.msra.mxu0 0.0
    %7351 = vmatprep.subr.mxu0 0.0
    %7352 = vmatpush1.msra.mxu0 0.0
    %7353 = vmatprep.subr.mxu0 0.0
    %7354 = vmatpush1.msra.mxu0 0.0
    %7355 = vmatprep.subr.mxu0 0.0
    %7356 = vmatpush1.msra.mxu0 0.0
    %7357 = vmatprep.subr.mxu0 0.0
    %7358 = vmatpush1.msra.mxu0 0.0
    %7359 = vmatprep.subr.mxu0 0.0
    %7360 = vmatpush1.msra.mxu0 0.0
    %7361 = vmatprep.subr.mxu0 0.0
    %7362 = vmatpush1.msra.mxu0 0.0
    %7363 = vmatprep.subr.mxu0 0.0
    %7364 = vmatpush1.msra.mxu0 0.0
    %7365 = vmatprep.subr.mxu0 0.0
    %7366 = vmatpush1.msra.mxu0 0.0
    %7367 = vmatprep.subr.mxu0 0.0
    %7368 = vmatpush1.msra.mxu0 0.0
    %7369 = vmatprep.subr.mxu0 0.0
    %7370 = vmatpush1.msra.mxu0 0.0
    %7371 = vmatprep.subr.mxu0 0.0
    %7372 = vmatpush1.msra.mxu0 0.0
    %7373 = vmatprep.subr.mxu0 0.0
    %7374 = vmatpush1.msra.mxu0 0.0
    %7375 = vmatprep.subr.mxu0 0.0
    %7376 = vmatpush1.msra.mxu0 0.0
    %7377 = vmatprep.subr.mxu0 0.0
    %7378 = vmatpush1.msra.mxu0 0.0
    %7379 = vmatprep.subr.mxu0 0.0
    %7380 = vmatpush1.msra.mxu0 0.0
    %7381 = vmatprep.mubr.f32.mxu0 0.0
    %7382 = vmatmul.mubr.f32.gmra.mrb[0].mxu0 %v7312
    %v7383 = vpop.f32.mrb[0].mxu0
    %v7384 = vadd.f32 0.0, %v7383
    %v7385 = vpop.f32.mrb[0].mxu0
    %7386 = vdwg.mxu0
    %v7388 = vsel %vm6833, %v6919, 0
    %v7391 = vsel %vm6933, %v6271, 0
    %7393 = vmatprep.subr.mxu0 0.0
    %7394 = vmatpush1.msra.mxu0 %v7391
    %7395 = vmatprep.subr.mxu0 0.0
    %7396 = vmatpush1.msra.mxu0 0.0
    %7397 = vmatprep.subr.mxu0 0.0
    %7398 = vmatpush1.msra.mxu0 0.0
    %7399 = vmatprep.subr.mxu0 0.0
    %7400 = vmatpush1.msra.mxu0 0.0
    %7401 = vmatprep.subr.mxu0 0.0
    %7402 = vmatpush1.msra.mxu0 0.0
    %7403 = vmatprep.subr.mxu0 0.0
    %7404 = vmatpush1.msra.mxu0 0.0
    %7405 = vmatprep.subr.mxu0 0.0
    %7406 = vmatpush1.msra.mxu0 0.0
    %7407 = vmatprep.subr.mxu0 0.0
    %7408 = vmatpush1.msra.mxu0 0.0
    %7409 = vmatprep.subr.mxu0 0.0
    %7410 = vmatpush1.msra.mxu0 0.0
    %7411 = vmatprep.subr.mxu0 0.0
    %7412 = vmatpush1.msra.mxu0 0.0
    %7413 = vmatprep.subr.mxu0 0.0
    %7414 = vmatpush1.msra.mxu0 0.0
    %7415 = vmatprep.subr.mxu0 0.0
    %7416 = vmatpush1.msra.mxu0 0.0
    %7417 = vmatprep.subr.mxu0 0.0
    %7418 = vmatpush1.msra.mxu0 0.0
    %7419 = vmatprep.subr.mxu0 0.0
    %7420 = vmatpush1.msra.mxu0 0.0
    %7421 = vmatprep.subr.mxu0 0.0
    %7422 = vmatpush1.msra.mxu0 0.0
    %7423 = vmatprep.subr.mxu0 0.0
    %7424 = vmatpush1.msra.mxu0 0.0
    %7425 = vmatprep.subr.mxu0 0.0
    %7426 = vmatpush1.msra.mxu0 0.0
    %7427 = vmatprep.subr.mxu0 0.0
    %7428 = vmatpush1.msra.mxu0 0.0
    %7429 = vmatprep.subr.mxu0 0.0
    %7430 = vmatpush1.msra.mxu0 0.0
    %7431 = vmatprep.subr.mxu0 0.0
    %7432 = vmatpush1.msra.mxu0 0.0
    %7433 = vmatprep.subr.mxu0 0.0
    %7434 = vmatpush1.msra.mxu0 0.0
    %7435 = vmatprep.subr.mxu0 0.0
    %7436 = vmatpush1.msra.mxu0 0.0
    %7437 = vmatprep.subr.mxu0 0.0
    %7438 = vmatpush1.msra.mxu0 0.0
    %7439 = vmatprep.subr.mxu0 0.0
    %7440 = vmatpush1.msra.mxu0 0.0
    %7441 = vmatprep.subr.mxu0 0.0
    %7442 = vmatpush1.msra.mxu0 0.0
    %7443 = vmatprep.subr.mxu0 0.0
    %7444 = vmatpush1.msra.mxu0 0.0
    %7445 = vmatprep.subr.mxu0 0.0
    %7446 = vmatpush1.msra.mxu0 0.0
    %7447 = vmatprep.subr.mxu0 0.0
    %7448 = vmatpush1.msra.mxu0 0.0
    %7449 = vmatprep.subr.mxu0 0.0
    %7450 = vmatpush1.msra.mxu0 0.0
    %7451 = vmatprep.subr.mxu0 0.0
    %7452 = vmatpush1.msra.mxu0 0.0
    %7453 = vmatprep.subr.mxu0 0.0
    %7454 = vmatpush1.msra.mxu0 0.0
    %7455 = vmatprep.subr.mxu0 0.0
    %7456 = vmatpush1.msra.mxu0 0.0
    %7457 = vmatprep.mubr.f32.mxu0 0.0
    %7458 = vmatmul.mubr.f32.gmra.mrb[0].mxu0 %v7388
    %v7459 = vpop.f32.mrb[0].mxu0
    %v7460 = vadd.f32 0.0, %v7459
    %v7461 = vpop.f32.mrb[0].mxu0
    %7462 = vdwg.mxu0
    %v7464 = vsel %vm6833, %v6921, 0
    %v7467 = vsel %vm6933, %v6272, 0
    %7469 = vmatprep.subr.mxu0 0.0
    %7470 = vmatpush1.msra.mxu0 %v7467
    %7471 = vmatprep.subr.mxu0 0.0
    %7472 = vmatpush1.msra.mxu0 0.0
    %7473 = vmatprep.subr.mxu0 0.0
    %7474 = vmatpush1.msra.mxu0 0.0
    %7475 = vmatprep.subr.mxu0 0.0
    %7476 = vmatpush1.msra.mxu0 0.0
    %7477 = vmatprep.subr.mxu0 0.0
    %7478 = vmatpush1.msra.mxu0 0.0
    %7479 = vmatprep.subr.mxu0 0.0
    %7480 = vmatpush1.msra.mxu0 0.0
    %7481 = vmatprep.subr.mxu0 0.0
    %7482 = vmatpush1.msra.mxu0 0.0
    %7483 = vmatprep.subr.mxu0 0.0
    %7484 = vmatpush1.msra.mxu0 0.0
    %7485 = vmatprep.subr.mxu0 0.0
    %7486 = vmatpush1.msra.mxu0 0.0
    %7487 = vmatprep.subr.mxu0 0.0
    %7488 = vmatpush1.msra.mxu0 0.0
    %7489 = vmatprep.subr.mxu0 0.0
    %7490 = vmatpush1.msra.mxu0 0.0
    %7491 = vmatprep.subr.mxu0 0.0
    %7492 = vmatpush1.msra.mxu0 0.0
    %7493 = vmatprep.subr.mxu0 0.0
    %7494 = vmatpush1.msra.mxu0 0.0
    %7495 = vmatprep.subr.mxu0 0.0
    %7496 = vmatpush1.msra.mxu0 0.0
    %7497 = vmatprep.subr.mxu0 0.0
    %7498 = vmatpush1.msra.mxu0 0.0
    %7499 = vmatprep.subr.mxu0 0.0
    %7500 = vmatpush1.msra.mxu0 0.0
    %7501 = vmatprep.subr.mxu0 0.0
    %7502 = vmatpush1.msra.mxu0 0.0
    %7503 = vmatprep.subr.mxu0 0.0
    %7504 = vmatpush1.msra.mxu0 0.0
    %7505 = vmatprep.subr.mxu0 0.0
    %7506 = vmatpush1.msra.mxu0 0.0
    %7507 = vmatprep.subr.mxu0 0.0
    %7508 = vmatpush1.msra.mxu0 0.0
    %7509 = vmatprep.subr.mxu0 0.0
    %7510 = vmatpush1.msra.mxu0 0.0
    %7511 = vmatprep.subr.mxu0 0.0
    %7512 = vmatpush1.msra.mxu0 0.0
    %7513 = vmatprep.subr.mxu0 0.0
    %7514 = vmatpush1.msra.mxu0 0.0
    %7515 = vmatprep.subr.mxu0 0.0
    %7516 = vmatpush1.msra.mxu0 0.0
    %7517 = vmatprep.subr.mxu0 0.0
    %7518 = vmatpush1.msra.mxu0 0.0
    %7519 = vmatprep.subr.mxu0 0.0
    %7520 = vmatpush1.msra.mxu0 0.0
    %7521 = vmatprep.subr.mxu0 0.0
    %7522 = vmatpush1.msra.mxu0 0.0
    %7523 = vmatprep.subr.mxu0 0.0
    %7524 = vmatpush1.msra.mxu0 0.0
    %7525 = vmatprep.subr.mxu0 0.0
    %7526 = vmatpush1.msra.mxu0 0.0
    %7527 = vmatprep.subr.mxu0 0.0
    %7528 = vmatpush1.msra.mxu0 0.0
    %7529 = vmatprep.subr.mxu0 0.0
    %7530 = vmatpush1.msra.mxu0 0.0
    %7531 = vmatprep.subr.mxu0 0.0
    %7532 = vmatpush1.msra.mxu0 0.0
    %7533 = vmatprep.mubr.f32.mxu0 0.0
    %7534 = vmatmul.mubr.f32.gmra.mrb[0].mxu0 %v7464
    %v7535 = vpop.f32.mrb[0].mxu0
    %v7536 = vadd.f32 0.0, %v7535
    %v7537 = vpop.f32.mrb[0].mxu0
    %7538 = vdwg.mxu0
    %7539 = vst [vmem:[#allocation15] sm:$0xff] %v7004
    %7540 = vst [vmem:[#allocation15 + $0x8] sm:$0xff] %v7080
    %7541 = vst [vmem:[#allocation15 + $0x10] sm:$0xff] %v7156
    %7542 = vst [vmem:[#allocation15 + $0x18] sm:$0xff] %v7232
    %7543 = vst [vmem:[#allocation15 + $0x20] sm:$0xff] %v7308
    %7544 = vst [vmem:[#allocation15 + $0x28] sm:$0xff] %v7384
    %7545 = vst [vmem:[#allocation15 + $0x30] sm:$0xff] %v7460
    %7546 = vst [vmem:[#allocation15 + $0x38] sm:$0xff] %v7536
    // Predicated region
    $region66: #{tpu_custom_call.1} parent=1 // pred_check
      _
    $region67: #{tpu_custom_call.1} parent=1 // pred_check_branch
      %7548 = sbr.rel (0) target = $region69
    $region68: #{tpu_custom_call.1} parent=1 // pred_region
      %s7550 = ssub.s32 2048, 2048
      %7551 = vsyncadd [#allocation5], %s7550
      %s7552 = sshll.u32 [#allocation14], 4
      %s7553 = int_to_ptr.vmem [resolvable:$true] %s7552
      %7558 = dma.vmem_to_hbm [thread:$0]  %s7553, 2048, %s10, [#allocation5], 256, 256, 16
    $region69: #{tpu_custom_call.1} parent=1 // pred_fallthru
      _
    // Predicated region
    $region70: #{tpu_custom_call.1} parent=1 // pred_check
      _
    $region71: #{tpu_custom_call.1} parent=1 // pred_check_branch
      %7560 = sbr.rel (0) target = $region73
    $region72: #{tpu_custom_call.1} parent=1 // pred_region
      %s7562 = ssub.s32 1024, 1024
      %7563 = vsyncadd [#allocation16], %s7562
      %s7564 = sshll.u32 [#allocation15], 4
      %s7565 = int_to_ptr.vmem [resolvable:$true] %s7564
      %7570 = dma.vmem_to_hbm [thread:$0]  %s7565, 1024, %s11, [#allocation16], 128, 128, 8
    $region73: #{tpu_custom_call.1} parent=1 // pred_fallthru
      _
    // Predicated region
    $region74: #{tpu_custom_call.1} parent=1 // pred_check
      _
    $region75: #{tpu_custom_call.1} parent=1 // pred_check_branch
      %7572 = sbr.rel (0) target = $region77
    $region76: #{tpu_custom_call.1} parent=1 // pred_region
      _
    $region77: #{tpu_custom_call.1} parent=1 // pred_fallthru
      _
    // Predicated region
    $region78: #{tpu_custom_call.1} parent=1 // pred_check
      _
    $region79: #{tpu_custom_call.1} parent=1 // pred_check_branch
      %7574 = sbr.rel (0) target = $region81
    $region80: #{tpu_custom_call.1} parent=1 // pred_region
      %7575 = dma.done [#allocation5], 2048
    $region81: #{tpu_custom_call.1} parent=1 // pred_fallthru
      _
    // Predicated region
    $region82: #{tpu_custom_call.1} parent=1 // pred_check
      _
    $region83: #{tpu_custom_call.1} parent=1 // pred_check_branch
      %7577 = sbr.rel (0) target = $region85
    $region84: #{tpu_custom_call.1} parent=1 // pred_region
      %7578 = dma.done [#allocation16], 1024
    $region85: #{tpu_custom_call.1} parent=1 // pred_fallthru
      _
    // Predicated region
    $region86: #{tpu_custom_call.1} parent=1 // pred_check
      _
    $region87: #{tpu_custom_call.1} parent=1 // pred_check_branch
      %7580 = sbr.rel (0) target = $region89
    $region88: #{tpu_custom_call.1} parent=1 // pred_region
      _
    $region89: #{tpu_custom_call.1} parent=1 // pred_fallthru
      _
    %7581 = vsyncpa [#allocation4], 1
    %7582 = vsyncpa [#allocation7], 1
    %7583 = vsyncpa [#allocation10], 1
    %7584 = vsyncpa [#allocation13], 1
    %7585 = vsyncpa [#allocation5], 1
    %7586 = vsyncpa [#allocation16], 1

</llo_original>
